<compile_context>
chip_gen: v5e
topology: v5e:2x2
jax: 0.10.0
libtpu: 0.0.40
codegen_flags: <defaults>
</compile_context>

<pallas_src>
import functools

import jax
import jax.numpy as jnp
from jax.experimental import pallas as pl
from jax.experimental.pallas import tpu as pltpu


# ----------------------------- shared math -----------------------------------
def _layer_norm(x, g, b, eps=1e-5):
    mu = jnp.mean(x, axis=-1, keepdims=True)
    var = jnp.mean(jnp.square(x - mu), axis=-1, keepdims=True)
    return (x - mu) * jax.lax.rsqrt(var + eps) * g + b


def _erf(z):
    # Abramowitz & Stegun 7.1.26 polynomial, |err| < 1.5e-7 (~f32 eps).
    # TODO(synk): switch to lax.erf once erf_p has a Mosaic lowering rule.
    a1, a2, a3, a4, a5 = 0.254829592, -0.284496736, 1.421413741, -1.453152027, 1.061405429
    p = 0.3275911
    az = jnp.abs(z)
    t = pl.reciprocal(1.0 + p * az, approx=True)          # EUP, VALU-free
    poly = ((((a5 * t + a4) * t + a3) * t + a2) * t + a1) * t
    e = 1.0 - poly * jnp.exp(-az * az)
    return jnp.where(z >= 0, e, -e)


def _gelu(z, compute_dtype):
    """GELU on the FFN hidden activations.

    f32 path (v5e/older): exact erf GELU, matching nn.GELU().
    bf16 path (v6e/v7x, packed-bf16 VALU/EUP): tanh-approx GELU -- halves the
    VALU op count and the h1 temporary; |tanh - erf| < 3e-3, far inside the
    bf16-matmul error already accepted downstream.
    """
    if compute_dtype == jnp.bfloat16:
        zb = z.astype(jnp.bfloat16)
        c = 0.7978845608028654                             # sqrt(2/pi)
        return 0.5 * zb * (1.0 + jnp.tanh(c * (zb + 0.044715 * (zb * zb * zb))))
    return 0.5 * z * (1.0 + _erf(z * 0.7071067811865476))


# ------------------------------ Pallas kernel ---------------------------------
def vit_kernel(x_ref, vec_ref, wqkv_ref, wo_ref, wff1_ref, wff2_ref,
               hvec_ref, whead_ref, out_ref, x_acc,
               *, heads, dim_head, seq, mlp_dim, pool, ffn_dtype):
    l = pl.program_id(1)                       # layer index (grid axis 1)
    n_layers = pl.num_programs(1)
    rows, d = x_acc.shape
    bb = rows // seq
    dh = dim_head
    hdh = heads * dh

    # Initialize the residual stream once per batch tile.
    @pl.when(l == 0)
    def _():
        x_acc[...] = x_ref[...].astype(jnp.float32)

    x = x_acc[...]                              # (rows, d) f32 residual stream

    vec = vec_ref[0]                            # (8, max(dim, mlp_dim)) f32 packed vectors
    ln1w, ln1b = vec[0:1, :d], vec[1:2, :d]
    bo = vec[2:3, :d]
    ln2w, ln2b = vec[3:4, :d], vec[4:5, :d]
    bff1 = vec[5:6, :mlp_dim]
    bff2 = vec[6:7, :d]

    # ---- PreNorm + head-batched multi-head self-attention + residual ----
    xn = _layer_norm(x, ln1w, ln1b)
    qkv = jnp.dot(xn.astype(jnp.bfloat16), wqkv_ref[0],
                  preferred_element_type=jnp.float32).astype(jnp.bfloat16)   # (rows, 3*hdh)

    def to_batched(base):
        # gather the per-head columns into a leading batch axis (no lane concat)
        parts = [qkv[:, base + h * dh: base + (h + 1) * dh].reshape(bb, seq, dh)
                 for h in range(heads)]
        return jnp.concatenate(parts, axis=0)   # (heads*bb, seq, dh), head-major batch

    q_b = to_batched(0)                         # scale already folded into wq on host
    k_b = to_batched(hdh)
    v_b = to_batched(2 * hdh)

    dots = jnp.einsum('bqe,bke->bqk', q_b, k_b,
                      preferred_element_type=jnp.float32)     # ONE push for all heads
    dots = dots - jnp.max(dots, axis=-1, keepdims=True)
    ex = jnp.exp(dots)
    attn = ex * pl.reciprocal(jnp.sum(ex, axis=-1, keepdims=True), approx=True)
    o_b = jnp.einsum('bqk,bke->bqe', attn.astype(jnp.bfloat16), v_b,
                     preferred_element_type=jnp.float32)      # (heads*bb, seq, dh)

    # heads-batched output projection; sum over the leading head axis replaces
    # the previous lane-dim concatenate.
    o_hrd = o_b.reshape(heads, rows, dh).astype(jnp.bfloat16)
    proj = jnp.einsum('hre,hed->hrd', o_hrd, wo_ref[0],
                      preferred_element_type=jnp.float32)     # (heads, rows, d)
    attn_out = proj[0]
    for h in range(1, heads):
        attn_out = attn_out + proj[h]
    x = x + attn_out + bo

    # ---- PreNorm + FeedForward (Linear -> GELU -> Linear) + residual ----
    xn = _layer_norm(x, ln2w, ln2b)
    h1 = jnp.dot(xn.astype(jnp.bfloat16), wff1_ref[0],
                 preferred_element_type=jnp.float32) + bff1
    h1 = _gelu(h1, ffn_dtype)
    h2 = jnp.dot(h1.astype(jnp.bfloat16), wff2_ref[0],
                 preferred_element_type=jnp.float32) + bff2
    x = x + h2
    x_acc[...] = x

    # ---- after the last layer: pool + mlp_head (LayerNorm -> Linear) ----
    @pl.when(l == n_layers - 1)
    def _():
        ncp = out_ref.shape[-1]                 # lane-dense (padded) logits width
        xf = x.reshape(bb, seq, d)
        pooled = jnp.mean(xf, axis=1) if pool == 'mean' else xf[:, 0, :]   # (bb, d)
        hv = hvec_ref[...]
        pooled = _layer_norm(pooled, hv[0:1, :d], hv[1:2, :d])
        logits = jnp.dot(pooled.astype(jnp.bfloat16), whead_ref[...],
                         preferred_element_type=jnp.float32) + hv[2:3, :ncp]
        out_ref[...] = logits.astype(out_ref.dtype)


# ------------------------------ wrapper helpers --------------------------------
def _ffn_compute_dtype():
    try:
        kind = jax.devices()[0].device_kind.lower()
    except Exception:
        return jnp.float32
    if ("v6" in kind) or ("v7" in kind) or ("7x" in kind):
        return jnp.bfloat16     # packed-bf16 VALU/EUP available
    return jnp.float32          # v5e and older: keep GELU in f32


def _vmem_limit_bytes():
    # Raise the 32 MiB scoped default toward physical VMEM (128 MiB on v5e/v6e,
    # 64 MiB on v7x), leaving headroom for Mosaic-internal scratch.
    try:
        cap = int(getattr(pltpu.get_tpu_info(), "vmem_capacity_bytes"))
    except Exception:
        cap = 64 * 1024 * 1024
    return int(min(cap - 16 * 1024 * 1024, 100 * 1024 * 1024))


def _pick_bb(b, s, dim, hdh, mlp_dim, heads, per_layer_w_bytes, vmem_budget):
    """Largest batch tile (sequences per grid step) fitting the VMEM budget.

    Bigger bb => fewer batch tiles => per-layer weights re-streamed from HBM
    fewer times and the per-grid-step overhead is amortized.  Keep >= 2 tiles
    so the "parallel" batch axis splits across TensorCores (megacore / v7x).
    """
    candidates = [bb for bb in range(8, b + 1, 8) if b % bb == 0]
    if not candidates:
        return b                                     # tiny batch: one full tile

    def est(bb):
        rows = bb * s
        act = 3 * rows * dim * 4                     # double-buffered block + x_acc
        work = rows * (24 * dim + 12 * hdh + 16 * mlp_dim + 4 * heads * dim)
        return act + 2 * per_layer_w_bytes + work

    fitting = [bb for bb in candidates if est(bb) <= vmem_budget // 2] or [candidates[0]]
    multi = [bb for bb in fitting if b // bb >= 2]
    return max(multi) if multi else max(fitting)


# ------------------------------ wrapper ----------------------------------------
def vit_forward(img, params, *, num_views, depth, heads, dim_head, pool='cls', bb=None):
    B, C, N = img.shape
    dim = C
    assert B % num_views == 0
    B0 = B // num_views

    # glue: (B, C, N) -> (B0, V, C, N) -> permute(0,3,1,2) -> (B0*N, V, C)
    x = img.reshape(B0, num_views, C, N)
    x = jnp.transpose(x, (0, 3, 1, 2)).reshape(B0 * N, num_views, C).astype(jnp.float32)
    b = x.shape[0]
    s = num_views + 1
    cls = jnp.broadcast_to(params['cls_token'].astype(jnp.float32), (b, 1, dim))
    tokens = jnp.concatenate([cls, x], axis=1).reshape(b * s, dim)     # 2-D slab

    hdh = heads * dim_head
    mlp_dim = params['wff1'].shape[-1]
    nc = params['w_head'].shape[-1]
    nc_pad = max(128, ((nc + 127) // 128) * 128)    # lane-dense logits store
    scale = dim_head ** -0.5

    # ---- weight prep: fuse heads, fold attention scale, cast matmul weights to bf16 ----
    def head_major(w):      # (depth, heads, dim, dh) -> (depth, dim, heads*dh)
        return jnp.transpose(w, (0, 2, 1, 3)).reshape(depth, dim, hdh)

    wqkv = jnp.concatenate([head_major(params['wq'] * scale),
                            head_major(params['wk']),
                            head_major(params['wv'])], axis=-1).astype(jnp.bfloat16)
    wo = params['wo'].astype(jnp.bfloat16)                   # (depth, heads, dh, dim)
    wff1 = params['wff1'].astype(jnp.bfloat16)
    wff2 = params['wff2'].astype(jnp.bfloat16)
    w_head = jnp.zeros((dim, nc_pad), jnp.float32).at[:, :nc].set(
        params['w_head'].astype(jnp.float32)).astype(jnp.bfloat16)

    # all seven per-layer vectors packed into ONE array -> one DMA per grid step
    maxw = max(dim, mlp_dim)
    vecs = jnp.zeros((depth, 8, maxw), jnp.float32)
    vecs = vecs.at[:, 0, :dim].set(params['ln1_w'])
    vecs = vecs.at[:, 1, :dim].set(params['ln1_b'])
    vecs = vecs.at[:, 2, :dim].set(params['bo'])
    vecs = vecs.at[:, 3, :dim].set(params['ln2_w'])
    vecs = vecs.at[:, 4, :dim].set(params['ln2_b'])
    vecs = vecs.at[:, 5, :mlp_dim].set(params['bff1'])
    vecs = vecs.at[:, 6, :dim].set(params['bff2'])

    w2 = max(dim, nc_pad)
    hvecs = jnp.zeros((8, w2), jnp.float32)
    hvecs = hvecs.at[0, :dim].set(params['hln_w'][0])
    hvecs = hvecs.at[1, :dim].set(params['hln_b'][0])
    hvecs = hvecs.at[2, :nc].set(params['b_head'][0])

    per_layer_w_bytes = (2 * (wqkv[0].size + wo[0].size + wff1[0].size + wff2[0].size)
                         + 4 * vecs[0].size)
    vmem_limit = _vmem_limit_bytes()
    if bb is None:
        bb = _pick_bb(b, s, dim, hdh, mlp_dim, heads, per_layer_w_bytes, vmem_limit)
    assert b % bb == 0
    rows = bb * s
    assert rows % 8 == 0 or bb == b, "bb*(num_views+1) must be sublane-aligned"
    assert bb % 8 == 0 or bb == b, "bb must be sublane-aligned for the logits store"

    # ---- BlockSpecs: batch tile on axis 0 ("parallel"), layer on axis 1 ("arbitrary") ----
    in_specs = [
        pl.BlockSpec((rows, dim), lambda i, l: (i, 0)),                      # tokens
        pl.BlockSpec((1, 8, maxw), lambda i, l: (l, 0, 0)),                  # packed vectors
        pl.BlockSpec((1, dim, 3 * hdh), lambda i, l: (l, 0, 0)),             # fused QKV
        pl.BlockSpec((1, heads, dim_head, dim), lambda i, l: (l, 0, 0, 0)),  # out-proj
        pl.BlockSpec((1, dim, mlp_dim), lambda i, l: (l, 0, 0)),             # FFN in
        pl.BlockSpec((1, mlp_dim, dim), lambda i, l: (l, 0, 0)),             # FFN out
        pl.BlockSpec((8, w2), lambda i, l: (0, 0)),                          # head vectors
        pl.BlockSpec((dim, nc_pad), lambda i, l: (0, 0)),                    # head weight
    ]

    # ---- advisory cost estimate for XLA's scheduler ----
    tiles = b // bb
    flops = int(2 * b * s * depth * (dim * 3 * hdh + 2 * s * hdh + hdh * dim
                                     + 2 * dim * mlp_dim) + 2 * b * dim * nc_pad)
    transcendentals = int(depth * b * (heads * s * s + s * mlp_dim))
    bytes_accessed = int(tokens.size * 4 + b * nc_pad * 4
                         + tiles * depth * per_layer_w_bytes
                         + 2 * w_head.size + 4 * hvecs.size)

    kernel = functools.partial(vit_kernel, heads=heads, dim_head=dim_head, seq=s,
                               mlp_dim=mlp_dim, pool=pool,
                               ffn_dtype=_ffn_compute_dtype())

    logits = pl.pallas_call(
        kernel,
        out_shape=jax.ShapeDtypeStruct((b, nc_pad), jnp.float32),
        grid_spec=pltpu.PrefetchScalarGridSpec(
            num_scalar_prefetch=0,
            grid=(tiles, depth),
            in_specs=in_specs,
            out_specs=pl.BlockSpec((bb, nc_pad), lambda i, l: (i, 0)),
            scratch_shapes=[pltpu.VMEM((rows, dim), jnp.float32)],  # residual stream
        ),
        compiler_params=pltpu.CompilerParams(
            dimension_semantics=("parallel", "arbitrary"),
            vmem_limit_bytes=vmem_limit),
        cost_estimate=pl.CostEstimate(flops=flops, transcendentals=transcendentals,
                                      bytes_accessed=bytes_accessed),
    )(tokens, vecs, wqkv, wo, wff1, wff2, hvecs, w_head)

    # glue: (b, nc_pad) -> slice -> (B0, N, nc) -> permute(0,2,1) -> (B0, nc, N)
    logits = logits[:, :nc]
    return jnp.transpose(logits.reshape(B0, N, nc), (0, 2, 1))


# ------------------------------ pure-JAX reference ------------------------------
def vit_reference(img, params, *, num_views, depth, heads, dim_head, pool='cls'):
    B, C, N = img.shape
    dim = C
    B0 = B // num_views
    x = img.reshape(B0, num_views, C, N)
    x = jnp.transpose(x, (0, 3, 1, 2)).reshape(B0 * N, num_views, C).astype(jnp.float32)
    b = x.shape[0]
    cls = jnp.broadcast_to(params['cls_token'], (b, 1, dim)).astype(jnp.float32)
    x = jnp.concatenate([cls, x], axis=1)
    scale = dim_head ** -0.5
    for l in range(depth):
        xn = _layer_norm(x, params['ln1_w'][l], params['ln1_b'][l])
        att = jnp.zeros_like(x)
        for h in range(heads):
            q = xn @ params['wq'][l, h]
            k = xn @ params['wk'][l, h]
            v = xn @ params['wv'][l, h]
            dots = jnp.einsum('bqe,bke->bqk', q, k) * scale
            attn = jax.nn.softmax(dots, axis=-1)
            att = att + jnp.einsum('bqk,bke->bqe', attn, v) @ params['wo'][l, h]
        x = x + att + params['bo'][l]
        xn = _layer_norm(x, params['ln2_w'][l], params['ln2_b'][l])
        h1 = jax.nn.gelu(xn @ params['wff1'][l] + params['bff1'][l], approximate=False)
        x = x + h1 @ params['wff2'][l] + params['bff2'][l]
    pooled = jnp.mean(x, axis=1) if pool == 'mean' else x[:, 0, :]
    pooled = _layer_norm(pooled, params['hln_w'][0], params['hln_b'][0])
    logits = pooled @ params['w_head'] + params['b_head'][0]
    nc = logits.shape[1]
    return jnp.transpose(logits.reshape(B0, N, nc), (0, 2, 1))


# ------------------------------ parameter init ----------------------------------
def init_params(key, *, num_classes, dim, depth, heads, dim_head, mlp_dim):
    ks = jax.random.split(key, 12)
    nrm = lambda k, shape, std=0.02: (std * jax.random.normal(k, shape)).astype(jnp.float32)
    return dict(
        cls_token=nrm(ks[0], (1, 1, dim), 1.0),
        ln1_w=jnp.ones((depth, dim), jnp.float32),
        ln1_b=jnp.zeros((depth, dim), jnp.float32),
        wq=nrm(ks[1], (depth, heads, dim, dim_head)),
        wk=nrm(ks[2], (depth, heads, dim, dim_head)),
        wv=nrm(ks[3], (depth, heads, dim, dim_head)),
        wo=nrm(ks[4], (depth, heads, dim_head, dim)),
        bo=nrm(ks[5], (depth, dim)),
        ln2_w=jnp.ones((depth, dim), jnp.float32),
        ln2_b=jnp.zeros((depth, dim), jnp.float32),
        wff1=nrm(ks[6], (depth, dim, mlp_dim)),
        bff1=nrm(ks[7], (depth, mlp_dim)),
        wff2=nrm(ks[8], (depth, mlp_dim, dim)),
        bff2=nrm(ks[9], (depth, dim)),
        hln_w=jnp.ones((1, dim), jnp.float32),
        hln_b=jnp.zeros((1, dim), jnp.float32),
        w_head=nrm(ks[10], (dim, num_classes)),
        b_head=nrm(ks[11], (1, num_classes)),
    )


if __name__ == "__main__":
    # small, self-consistent config: C == dim (required by the cls-token concat)
    num_views, num_classes = 7, 16
    dim, depth, heads, dim_head, mlp_dim = 32, 2, 4, 8, 64
    B0, N = 2, 16                       # img batch = B0 * num_views; b = B0*N = 32

    key = jax.random.PRNGKey(0)
    kimg, kparam = jax.random.split(key)
    img = jax.random.normal(kimg, (B0 * num_views, dim, N), dtype=jnp.float32)
    params = init_params(kparam, num_classes=num_classes, dim=dim, depth=depth,
                         heads=heads, dim_head=dim_head, mlp_dim=mlp_dim)

    # bb auto-picked (=16 here) -> 2 batch grid steps, 128 rows per tile.
    out = vit_forward(img, params, num_views=num_views, depth=depth, heads=heads,
                      dim_head=dim_head, pool='cls')
    out = jax.block_until_ready(out)

    ref = vit_reference(img, params, num_views=num_views, depth=depth, heads=heads,
                        dim_head=dim_head, pool='cls')

    assert out.shape == (B0, num_classes, N), out.shape
    max_err = float(jnp.max(jnp.abs(out - ref)))
    assert jnp.allclose(out, ref, atol=2e-2, rtol=2e-2), f"max abs err {max_err}"
    print("KERNEL_OK")
</pallas_src>

<mosaic_0001>
module attributes {stable_mosaic.version = 11 : i64} {
  func.func @vit_kernel(%arg0: i32, %arg1: i32, %arg2: memref<128x32xf32, #tpu.memory_space<vmem>>, %arg3: memref<1x8x64xf32, #tpu.memory_space<vmem>>, %arg4: memref<1x32x96xbf16, #tpu.memory_space<vmem>>, %arg5: memref<1x4x8x32xbf16, #tpu.memory_space<vmem>>, %arg6: memref<1x32x64xbf16, #tpu.memory_space<vmem>>, %arg7: memref<1x64x32xbf16, #tpu.memory_space<vmem>>, %arg8: memref<8x128xf32, #tpu.memory_space<vmem>>, %arg9: memref<32x128xbf16, #tpu.memory_space<vmem>>, %arg10: memref<16x128xf32, #tpu.memory_space<vmem>>, %arg11: memref<128x32xf32, #tpu.memory_space<vmem>>) attributes {dimension_semantics = [#tpu.dimension_semantics<parallel>, #tpu.dimension_semantics<arbitrary>], iteration_bounds = array<i64: 2, 2>, scalar_prefetch = 0 : i64, scratch_operands = 1 : i64, tpu.core_type = #tpu.core_type<tc>, window_params = [{transform_indices = @transform_0, window_bounds = array<i64: 128, 32>}, {transform_indices = @transform_1, window_bounds = array<i64: 1, 8, 64>}, {transform_indices = @transform_2, window_bounds = array<i64: 1, 32, 96>}, {transform_indices = @transform_3, window_bounds = array<i64: 1, 4, 8, 32>}, {transform_indices = @transform_4, window_bounds = array<i64: 1, 32, 64>}, {transform_indices = @transform_5, window_bounds = array<i64: 1, 64, 32>}, {pipeline_mode = #tpu.pipeline_mode<synchronous>, transform_indices = @transform_6, window_bounds = array<i64: 8, 128>}, {pipeline_mode = #tpu.pipeline_mode<synchronous>, transform_indices = @transform_7, window_bounds = array<i64: 32, 128>}, {transform_indices = @transform_8, window_bounds = array<i64: 16, 128>}]} {
    %c0_i32 = arith.constant 0 : i32
    %0 = arith.cmpi eq, %arg1, %c0_i32 : i32
    %1 = arith.extui %0 : i1 to i32
    %c0_i32_0 = arith.constant 0 : i32
    %2 = arith.cmpi ne, %1, %c0_i32_0 : i32
    scf.if %2 {
      %c0_52 = arith.constant 0 : index
      %c0_53 = arith.constant 0 : index
      %177 = vector.load %arg2[%c0_52, %c0_53] : memref<128x32xf32, #tpu.memory_space<vmem>>, vector<128x32xf32>
      %c0_54 = arith.constant 0 : index
      %c0_55 = arith.constant 0 : index
      %178 = vector.load %arg11[%c0_54, %c0_55] : memref<128x32xf32, #tpu.memory_space<vmem>>, vector<128x32xf32>
      tpu.vector_store %arg11[%c0_54, %c0_55], %177 {strides = array<i32>} : memref<128x32xf32, #tpu.memory_space<vmem>>, vector<128x32xf32>,
    } else {
    }
    %c0 = arith.constant 0 : index
    %c0_1 = arith.constant 0 : index
    %3 = vector.load %arg11[%c0, %c0_1] : memref<128x32xf32, #tpu.memory_space<vmem>>, vector<128x32xf32>
    %c0_2 = arith.constant 0 : index
    %c0_3 = arith.constant 0 : index
    %c0_4 = arith.constant 0 : index
    %4 = vector.load %arg3[%c0_2, %c0_3, %c0_4] : memref<1x8x64xf32, #tpu.memory_space<vmem>>, vector<1x8x64xf32>
    %5 = vector.shape_cast %4 : vector<1x8x64xf32> to vector<8x64xf32>
    %6 = vector.extract_strided_slice %5 {offsets = [0, 0], sizes = [1, 32], strides = [1, 1]} : vector<8x64xf32> to vector<1x32xf32>
    %7 = vector.extract_strided_slice %5 {offsets = [1, 0], sizes = [1, 32], strides = [1, 1]} : vector<8x64xf32> to vector<1x32xf32>
    %8 = vector.extract_strided_slice %5 {offsets = [2, 0], sizes = [1, 32], strides = [1, 1]} : vector<8x64xf32> to vector<1x32xf32>
    %9 = vector.extract_strided_slice %5 {offsets = [3, 0], sizes = [1, 32], strides = [1, 1]} : vector<8x64xf32> to vector<1x32xf32>
    %10 = vector.extract_strided_slice %5 {offsets = [4, 0], sizes = [1, 32], strides = [1, 1]} : vector<8x64xf32> to vector<1x32xf32>
    %11 = vector.extract_strided_slice %5 {offsets = [5, 0], sizes = [1, 64], strides = [1, 1]} : vector<8x64xf32> to vector<1x64xf32>
    %12 = vector.extract_strided_slice %5 {offsets = [6, 0], sizes = [1, 32], strides = [1, 1]} : vector<8x64xf32> to vector<1x32xf32>
    %cst = arith.constant dense<0.000000e+00> : vector<128xf32>
    %13 = vector.multi_reduction <add>, %3, %cst [1] : vector<128x32xf32> to vector<128xf32>
    %14 = vector.shape_cast %13 : vector<128xf32> to vector<128x1xf32>
    %cst_5 = arith.constant 3.200000e+01 : f32
    %15 = vector.broadcast %cst_5 : f32 to vector<128x1xf32>
    %16 = arith.divf %14, %15 : vector<128x1xf32>
    %17 = vector.broadcast %16 : vector<128x1xf32> to vector<128x32xf32>
    %18 = arith.subf %3, %17 : vector<128x32xf32>
    %19 = arith.mulf %18, %18 : vector<128x32xf32>
    %cst_6 = arith.constant dense<0.000000e+00> : vector<128xf32>
    %20 = vector.multi_reduction <add>, %19, %cst_6 [1] : vector<128x32xf32> to vector<128xf32>
    %21 = vector.shape_cast %20 : vector<128xf32> to vector<128x1xf32>
    %cst_7 = arith.constant 3.200000e+01 : f32
    %22 = vector.broadcast %cst_7 : f32 to vector<128x1xf32>
    %23 = arith.divf %21, %22 : vector<128x1xf32>
    %24 = vector.broadcast %16 : vector<128x1xf32> to vector<128x32xf32>
    %25 = arith.subf %3, %24 : vector<128x32xf32>
    %cst_8 = arith.constant 9.99999974E-6 : f32
    %26 = vector.broadcast %cst_8 : f32 to vector<128x1xf32>
    %27 = arith.addf %23, %26 : vector<128x1xf32>
    %28 = math.rsqrt %27 : vector<128x1xf32>
    %29 = vector.broadcast %28 : vector<128x1xf32> to vector<128x32xf32>
    %30 = arith.mulf %25, %29 : vector<128x32xf32>
    %31 = vector.broadcast %6 : vector<1x32xf32> to vector<128x32xf32>
    %32 = arith.mulf %30, %31 : vector<128x32xf32>
    %33 = vector.broadcast %7 : vector<1x32xf32> to vector<128x32xf32>
    %34 = arith.addf %32, %33 : vector<128x32xf32>
    %35 = arith.truncf %34 : vector<128x32xf32> to vector<128x32xbf16>
    %c0_9 = arith.constant 0 : index
    %c0_10 = arith.constant 0 : index
    %c0_11 = arith.constant 0 : index
    %36 = vector.load %arg4[%c0_9, %c0_10, %c0_11] : memref<1x32x96xbf16, #tpu.memory_space<vmem>>, vector<1x32x96xbf16>
    %37 = vector.shape_cast %36 : vector<1x32x96xbf16> to vector<32x96xbf16>
    %cst_12 = arith.constant dense<0.000000e+00> : vector<128x96xf32>
    %38 = tpu.matmul %35, %37, %cst_12 {dimension_numbers = #tpu.dot_dimension_numbers<[1], [0], [0], [1], [0, 0, 1, 1], [], []>} : vector<128x32xbf16>, vector<32x96xbf16>, vector<128x96xf32> -> vector<128x96xf32>
    %39 = arith.truncf %38 : vector<128x96xf32> to vector<128x96xbf16>
    %40 = vector.extract_strided_slice %39 {offsets = [0, 0], sizes = [128, 8], strides = [1, 1]} : vector<128x96xbf16> to vector<128x8xbf16>
    %41 = vector.shape_cast %40 : vector<128x8xbf16> to vector<16x8x8xbf16>
    %42 = vector.extract_strided_slice %39 {offsets = [0, 8], sizes = [128, 8], strides = [1, 1]} : vector<128x96xbf16> to vector<128x8xbf16>
    %43 = vector.shape_cast %42 : vector<128x8xbf16> to vector<16x8x8xbf16>
    %44 = vector.extract_strided_slice %39 {offsets = [0, 16], sizes = [128, 8], strides = [1, 1]} : vector<128x96xbf16> to vector<128x8xbf16>
    %45 = vector.shape_cast %44 : vector<128x8xbf16> to vector<16x8x8xbf16>
    %46 = vector.extract_strided_slice %39 {offsets = [0, 24], sizes = [128, 8], strides = [1, 1]} : vector<128x96xbf16> to vector<128x8xbf16>
    %47 = vector.shape_cast %46 : vector<128x8xbf16> to vector<16x8x8xbf16>
    %48 = tpu.concatenate %41, %43, %45, %47 in 0 : vector<16x8x8xbf16>, vector<16x8x8xbf16>, vector<16x8x8xbf16>, vector<16x8x8xbf16> -> vector<64x8x8xbf16>
    %49 = vector.extract_strided_slice %39 {offsets = [0, 32], sizes = [128, 8], strides = [1, 1]} : vector<128x96xbf16> to vector<128x8xbf16>
    %50 = vector.shape_cast %49 : vector<128x8xbf16> to vector<16x8x8xbf16>
    %51 = vector.extract_strided_slice %39 {offsets = [0, 40], sizes = [128, 8], strides = [1, 1]} : vector<128x96xbf16> to vector<128x8xbf16>
    %52 = vector.shape_cast %51 : vector<128x8xbf16> to vector<16x8x8xbf16>
    %53 = vector.extract_strided_slice %39 {offsets = [0, 48], sizes = [128, 8], strides = [1, 1]} : vector<128x96xbf16> to vector<128x8xbf16>
    %54 = vector.shape_cast %53 : vector<128x8xbf16> to vector<16x8x8xbf16>
    %55 = vector.extract_strided_slice %39 {offsets = [0, 56], sizes = [128, 8], strides = [1, 1]} : vector<128x96xbf16> to vector<128x8xbf16>
    %56 = vector.shape_cast %55 : vector<128x8xbf16> to vector<16x8x8xbf16>
    %57 = tpu.concatenate %50, %52, %54, %56 in 0 : vector<16x8x8xbf16>, vector<16x8x8xbf16>, vector<16x8x8xbf16>, vector<16x8x8xbf16> -> vector<64x8x8xbf16>
    %58 = vector.extract_strided_slice %39 {offsets = [0, 64], sizes = [128, 8], strides = [1, 1]} : vector<128x96xbf16> to vector<128x8xbf16>
    %59 = vector.shape_cast %58 : vector<128x8xbf16> to vector<16x8x8xbf16>
    %60 = vector.extract_strided_slice %39 {offsets = [0, 72], sizes = [128, 8], strides = [1, 1]} : vector<128x96xbf16> to vector<128x8xbf16>
    %61 = vector.shape_cast %60 : vector<128x8xbf16> to vector<16x8x8xbf16>
    %62 = vector.extract_strided_slice %39 {offsets = [0, 80], sizes = [128, 8], strides = [1, 1]} : vector<128x96xbf16> to vector<128x8xbf16>
    %63 = vector.shape_cast %62 : vector<128x8xbf16> to vector<16x8x8xbf16>
    %64 = vector.extract_strided_slice %39 {offsets = [0, 88], sizes = [128, 8], strides = [1, 1]} : vector<128x96xbf16> to vector<128x8xbf16>
    %65 = vector.shape_cast %64 : vector<128x8xbf16> to vector<16x8x8xbf16>
    %66 = tpu.concatenate %59, %61, %63, %65 in 0 : vector<16x8x8xbf16>, vector<16x8x8xbf16>, vector<16x8x8xbf16>, vector<16x8x8xbf16> -> vector<64x8x8xbf16>
    "tpu.trace_start"() <{level = 10 : i32, message = "bqe,bke->bqk"}> : () -> ()
    %cst_13 = arith.constant dense<0.000000e+00> : vector<64x8x8xf32>
    %67 = tpu.matmul %48, %57, %cst_13 {dimension_numbers = #tpu.dot_dimension_numbers<[2], [2], [1], [1], [0, 0, 0, 1, 1, 1], [0], [0]>} : vector<64x8x8xbf16>, vector<64x8x8xbf16>, vector<64x8x8xf32> -> vector<64x8x8xf32>
    "tpu.trace_stop"() : () -> ()
    %cst_14 = arith.constant dense<0xFF800000> : vector<64x8xf32>
    %68 = vector.multi_reduction <maximumf>, %67, %cst_14 [2] : vector<64x8x8xf32> to vector<64x8xf32>
    %69 = vector.shape_cast %68 : vector<64x8xf32> to vector<64x8x1xf32>
    %70 = vector.broadcast %69 : vector<64x8x1xf32> to vector<64x8x8xf32>
    %71 = arith.subf %67, %70 : vector<64x8x8xf32>
    %72 = math.exp %71 : vector<64x8x8xf32>
    %cst_15 = arith.constant dense<0.000000e+00> : vector<64x8xf32>
    %73 = vector.multi_reduction <add>, %72, %cst_15 [2] : vector<64x8x8xf32> to vector<64x8xf32>
    %74 = vector.shape_cast %73 : vector<64x8xf32> to vector<64x8x1xf32>
    %75 = tpu.reciprocal %74 {approx = true} : vector<64x8x1xf32> -> vector<64x8x1xf32>
    %76 = vector.broadcast %75 : vector<64x8x1xf32> to vector<64x8x8xf32>
    %77 = arith.mulf %72, %76 : vector<64x8x8xf32>
    %78 = arith.truncf %77 : vector<64x8x8xf32> to vector<64x8x8xbf16>
    "tpu.trace_start"() <{level = 10 : i32, message = "bqk,bke->bqe"}> : () -> ()
    %cst_16 = arith.constant dense<0.000000e+00> : vector<64x8x8xf32>
    %79 = tpu.matmul %78, %66, %cst_16 {dimension_numbers = #tpu.dot_dimension_numbers<[2], [1], [1], [2], [0, 0, 0, 1, 1, 2], [0], [0]>} : vector<64x8x8xbf16>, vector<64x8x8xbf16>, vector<64x8x8xf32> -> vector<64x8x8xf32>
    "tpu.trace_stop"() : () -> ()
    %80 = vector.shape_cast %79 : vector<64x8x8xf32> to vector<4x128x8xf32>
    %81 = arith.truncf %80 : vector<4x128x8xf32> to vector<4x128x8xbf16>
    %c0_17 = arith.constant 0 : index
    %c0_18 = arith.constant 0 : index
    %c0_19 = arith.constant 0 : index
    %c0_20 = arith.constant 0 : index
    %82 = vector.load %arg5[%c0_17, %c0_18, %c0_19, %c0_20] : memref<1x4x8x32xbf16, #tpu.memory_space<vmem>>, vector<1x4x8x32xbf16>
    %83 = vector.shape_cast %82 : vector<1x4x8x32xbf16> to vector<4x8x32xbf16>
    "tpu.trace_start"() <{level = 10 : i32, message = "hre,hed->hrd"}> : () -> ()
    %cst_21 = arith.constant dense<0.000000e+00> : vector<4x128x32xf32>
    %84 = tpu.matmul %81, %83, %cst_21 {dimension_numbers = #tpu.dot_dimension_numbers<[2], [1], [1], [2], [0, 0, 0, 1, 1, 2], [0], [0]>} : vector<4x128x8xbf16>, vector<4x8x32xbf16>, vector<4x128x32xf32> -> vector<4x128x32xf32>
    "tpu.trace_stop"() : () -> ()
    %85 = vector.extract_strided_slice %84 {offsets = [0, 0, 0], sizes = [1, 128, 32], strides = [1, 1, 1]} : vector<4x128x32xf32> to vector<1x128x32xf32>
    %86 = vector.shape_cast %85 : vector<1x128x32xf32> to vector<128x32xf32>
    %87 = vector.extract_strided_slice %84 {offsets = [1, 0, 0], sizes = [1, 128, 32], strides = [1, 1, 1]} : vector<4x128x32xf32> to vector<1x128x32xf32>
    %88 = vector.shape_cast %87 : vector<1x128x32xf32> to vector<128x32xf32>
    %89 = arith.addf %86, %88 : vector<128x32xf32>
    %90 = vector.extract_strided_slice %84 {offsets = [2, 0, 0], sizes = [1, 128, 32], strides = [1, 1, 1]} : vector<4x128x32xf32> to vector<1x128x32xf32>
    %91 = vector.shape_cast %90 : vector<1x128x32xf32> to vector<128x32xf32>
    %92 = arith.addf %89, %91 : vector<128x32xf32>
    %93 = vector.extract_strided_slice %84 {offsets = [3, 0, 0], sizes = [1, 128, 32], strides = [1, 1, 1]} : vector<4x128x32xf32> to vector<1x128x32xf32>
    %94 = vector.shape_cast %93 : vector<1x128x32xf32> to vector<128x32xf32>
    %95 = arith.addf %92, %94 : vector<128x32xf32>
    %96 = arith.addf %3, %95 : vector<128x32xf32>
    %97 = vector.broadcast %8 : vector<1x32xf32> to vector<128x32xf32>
    %98 = arith.addf %96, %97 : vector<128x32xf32>
    %cst_22 = arith.constant dense<0.000000e+00> : vector<128xf32>
    %99 = vector.multi_reduction <add>, %98, %cst_22 [1] : vector<128x32xf32> to vector<128xf32>
    %100 = vector.shape_cast %99 : vector<128xf32> to vector<128x1xf32>
    %cst_23 = arith.constant 3.200000e+01 : f32
    %101 = vector.broadcast %cst_23 : f32 to vector<128x1xf32>
    %102 = arith.divf %100, %101 : vector<128x1xf32>
    %103 = vector.broadcast %102 : vector<128x1xf32> to vector<128x32xf32>
    %104 = arith.subf %98, %103 : vector<128x32xf32>
    %105 = arith.mulf %104, %104 : vector<128x32xf32>
    %cst_24 = arith.constant dense<0.000000e+00> : vector<128xf32>
    %106 = vector.multi_reduction <add>, %105, %cst_24 [1] : vector<128x32xf32> to vector<128xf32>
    %107 = vector.shape_cast %106 : vector<128xf32> to vector<128x1xf32>
    %cst_25 = arith.constant 3.200000e+01 : f32
    %108 = vector.broadcast %cst_25 : f32 to vector<128x1xf32>
    %109 = arith.divf %107, %108 : vector<128x1xf32>
    %110 = vector.broadcast %102 : vector<128x1xf32> to vector<128x32xf32>
    %111 = arith.subf %98, %110 : vector<128x32xf32>
    %cst_26 = arith.constant 9.99999974E-6 : f32
    %112 = vector.broadcast %cst_26 : f32 to vector<128x1xf32>
    %113 = arith.addf %109, %112 : vector<128x1xf32>
    %114 = math.rsqrt %113 : vector<128x1xf32>
    %115 = vector.broadcast %114 : vector<128x1xf32> to vector<128x32xf32>
    %116 = arith.mulf %111, %115 : vector<128x32xf32>
    %117 = vector.broadcast %9 : vector<1x32xf32> to vector<128x32xf32>
    %118 = arith.mulf %116, %117 : vector<128x32xf32>
    %119 = vector.broadcast %10 : vector<1x32xf32> to vector<128x32xf32>
    %120 = arith.addf %118, %119 : vector<128x32xf32>
    %121 = arith.truncf %120 : vector<128x32xf32> to vector<128x32xbf16>
    %c0_27 = arith.constant 0 : index
    %c0_28 = arith.constant 0 : index
    %c0_29 = arith.constant 0 : index
    %122 = vector.load %arg6[%c0_27, %c0_28, %c0_29] : memref<1x32x64xbf16, #tpu.memory_space<vmem>>, vector<1x32x64xbf16>
    %123 = vector.shape_cast %122 : vector<1x32x64xbf16> to vector<32x64xbf16>
    %cst_30 = arith.constant dense<0.000000e+00> : vector<128x64xf32>
    %124 = tpu.matmul %121, %123, %cst_30 {dimension_numbers = #tpu.dot_dimension_numbers<[1], [0], [0], [1], [0, 0, 1, 1], [], []>} : vector<128x32xbf16>, vector<32x64xbf16>, vector<128x64xf32> -> vector<128x64xf32>
    %125 = vector.broadcast %11 : vector<1x64xf32> to vector<128x64xf32>
    %126 = arith.addf %124, %125 : vector<128x64xf32>
    %cst_31 = arith.constant 5.000000e-01 : f32
    %127 = vector.broadcast %cst_31 : f32 to vector<128x64xf32>
    %128 = arith.mulf %127, %126 : vector<128x64xf32>
    %cst_32 = arith.constant 0.707106769 : f32
    %129 = vector.broadcast %cst_32 : f32 to vector<128x64xf32>
    %130 = arith.mulf %126, %129 : vector<128x64xf32>
    %131 = math.absf %130 : vector<128x64xf32>
    %cst_33 = arith.constant 0.327591091 : f32
    %132 = vector.broadcast %cst_33 : f32 to vector<128x64xf32>
    %133 = arith.mulf %132, %131 : vector<128x64xf32>
    %cst_34 = arith.constant 1.000000e+00 : f32
    %134 = vector.broadcast %cst_34 : f32 to vector<128x64xf32>
    %135 = arith.addf %134, %133 : vector<128x64xf32>
    %136 = tpu.reciprocal %135 {approx = true} : vector<128x64xf32> -> vector<128x64xf32>
    %cst_35 = arith.constant 1.06140542 : f32
    %137 = vector.broadcast %cst_35 : f32 to vector<128x64xf32>
    %138 = arith.mulf %137, %136 : vector<128x64xf32>
    %cst_36 = arith.constant -1.45315206 : f32
    %139 = vector.broadcast %cst_36 : f32 to vector<128x64xf32>
    %140 = arith.addf %138, %139 : vector<128x64xf32>
    %141 = arith.mulf %140, %136 : vector<128x64xf32>
    %cst_37 = arith.constant 1.42141378 : f32
    %142 = vector.broadcast %cst_37 : f32 to vector<128x64xf32>
    %143 = arith.addf %141, %142 : vector<128x64xf32>
    %144 = arith.mulf %143, %136 : vector<128x64xf32>
    %cst_38 = arith.constant -0.284496725 : f32
    %145 = vector.broadcast %cst_38 : f32 to vector<128x64xf32>
    %146 = arith.addf %144, %145 : vector<128x64xf32>
    %147 = arith.mulf %146, %136 : vector<128x64xf32>
    %cst_39 = arith.constant 0.254829586 : f32
    %148 = vector.broadcast %cst_39 : f32 to vector<128x64xf32>
    %149 = arith.addf %147, %148 : vector<128x64xf32>
    %150 = arith.mulf %149, %136 : vector<128x64xf32>
    %cst_40 = arith.constant 0.000000e+00 : f32
    %151 = vector.broadcast %cst_40 : f32 to vector<128x64xf32>
    %152 = arith.subf %151, %131 : vector<128x64xf32>
    %153 = arith.mulf %152, %131 : vector<128x64xf32>
    %154 = math.exp %153 : vector<128x64xf32>
    %155 = arith.mulf %150, %154 : vector<128x64xf32>
    %cst_41 = arith.constant 1.000000e+00 : f32
    %156 = vector.broadcast %cst_41 : f32 to vector<128x64xf32>
    %157 = arith.subf %156, %155 : vector<128x64xf32>
    %cst_42 = arith.constant 0.000000e+00 : f32
    %158 = vector.broadcast %cst_42 : f32 to vector<128x64xf32>
    %159 = arith.cmpf oge, %130, %158 : vector<128x64xf32>
    %cst_43 = arith.constant 0.000000e+00 : f32
    %160 = vector.broadcast %cst_43 : f32 to vector<128x64xf32>
    %161 = arith.subf %160, %157 : vector<128x64xf32>
    %162 = arith.select %159, %157, %161 : vector<128x64xi1>, vector<128x64xf32>
    %cst_44 = arith.constant 1.000000e+00 : f32
    %163 = vector.broadcast %cst_44 : f32 to vector<128x64xf32>
    %164 = arith.addf %163, %162 : vector<128x64xf32>
    %165 = arith.mulf %128, %164 : vector<128x64xf32>
    %166 = arith.truncf %165 : vector<128x64xf32> to vector<128x64xbf16>
    %c0_45 = arith.constant 0 : index
    %c0_46 = arith.constant 0 : index
    %c0_47 = arith.constant 0 : index
    %167 = vector.load %arg7[%c0_45, %c0_46, %c0_47] : memref<1x64x32xbf16, #tpu.memory_space<vmem>>, vector<1x64x32xbf16>
    %168 = vector.shape_cast %167 : vector<1x64x32xbf16> to vector<64x32xbf16>
    %cst_48 = arith.constant dense<0.000000e+00> : vector<128x32xf32>
    %169 = tpu.matmul %166, %168, %cst_48 {dimension_numbers = #tpu.dot_dimension_numbers<[1], [0], [0], [1], [0, 0, 1, 1], [], []>} : vector<128x64xbf16>, vector<64x32xbf16>, vector<128x32xf32> -> vector<128x32xf32>
    %170 = vector.broadcast %12 : vector<1x32xf32> to vector<128x32xf32>
    %171 = arith.addf %169, %170 : vector<128x32xf32>
    %172 = arith.addf %98, %171 : vector<128x32xf32>
    %c0_49 = arith.constant 0 : index
    %c0_50 = arith.constant 0 : index
    %173 = vector.load %arg11[%c0_49, %c0_50] : memref<128x32xf32, #tpu.memory_space<vmem>>, vector<128x32xf32>
    tpu.vector_store %arg11[%c0_49, %c0_50], %172 {strides = array<i32>} : memref<128x32xf32, #tpu.memory_space<vmem>>, vector<128x32xf32>,
    %c1_i32 = arith.constant 1 : i32
    %174 = arith.cmpi eq, %arg1, %c1_i32 : i32
    %175 = arith.extui %174 : i1 to i32
    %c0_i32_51 = arith.constant 0 : i32
    %176 = arith.cmpi ne, %175, %c0_i32_51 : i32
    scf.if %176 {
      %177 = vector.shape_cast %172 : vector<128x32xf32> to vector<16x8x32xf32>
      %178 = vector.extract_strided_slice %177 {offsets = [0, 0, 0], sizes = [16, 1, 32], strides = [1, 1, 1]} : vector<16x8x32xf32> to vector<16x1x32xf32>
      %179 = vector.shape_cast %178 : vector<16x1x32xf32> to vector<16x32xf32>
      %c0_52 = arith.constant 0 : index
      %c0_53 = arith.constant 0 : index
      %180 = vector.load %arg8[%c0_52, %c0_53] : memref<8x128xf32, #tpu.memory_space<vmem>>, vector<8x128xf32>
      %181 = vector.extract_strided_slice %180 {offsets = [0, 0], sizes = [1, 32], strides = [1, 1]} : vector<8x128xf32> to vector<1x32xf32>
      %182 = vector.extract_strided_slice %180 {offsets = [1, 0], sizes = [1, 32], strides = [1, 1]} : vector<8x128xf32> to vector<1x32xf32>
      %cst_54 = arith.constant dense<0.000000e+00> : vector<16xf32>
      %183 = vector.multi_reduction <add>, %179, %cst_54 [1] : vector<16x32xf32> to vector<16xf32>
      %184 = vector.shape_cast %183 : vector<16xf32> to vector<16x1xf32>
      %cst_55 = arith.constant 3.200000e+01 : f32
      %185 = vector.broadcast %cst_55 : f32 to vector<16x1xf32>
      %186 = arith.divf %184, %185 : vector<16x1xf32>
      %187 = vector.broadcast %186 : vector<16x1xf32> to vector<16x32xf32>
      %188 = arith.subf %179, %187 : vector<16x32xf32>
      %189 = arith.mulf %188, %188 : vector<16x32xf32>
      %cst_56 = arith.constant dense<0.000000e+00> : vector<16xf32>
      %190 = vector.multi_reduction <add>, %189, %cst_56 [1] : vector<16x32xf32> to vector<16xf32>
      %191 = vector.shape_cast %190 : vector<16xf32> to vector<16x1xf32>
      %cst_57 = arith.constant 3.200000e+01 : f32
      %192 = vector.broadcast %cst_57 : f32 to vector<16x1xf32>
      %193 = arith.divf %191, %192 : vector<16x1xf32>
      %194 = vector.broadcast %186 : vector<16x1xf32> to vector<16x32xf32>
      %195 = arith.subf %179, %194 : vector<16x32xf32>
      %cst_58 = arith.constant 9.99999974E-6 : f32
      %196 = vector.broadcast %cst_58 : f32 to vector<16x1xf32>
      %197 = arith.addf %193, %196 : vector<16x1xf32>
      %198 = math.rsqrt %197 : vector<16x1xf32>
      %199 = vector.broadcast %198 : vector<16x1xf32> to vector<16x32xf32>
      %200 = arith.mulf %195, %199 : vector<16x32xf32>
      %201 = vector.broadcast %181 : vector<1x32xf32> to vector<16x32xf32>
      %202 = arith.mulf %200, %201 : vector<16x32xf32>
      %203 = vector.broadcast %182 : vector<1x32xf32> to vector<16x32xf32>
      %204 = arith.addf %202, %203 : vector<16x32xf32>
      %205 = arith.truncf %204 : vector<16x32xf32> to vector<16x32xbf16>
      %c0_59 = arith.constant 0 : index
      %c0_60 = arith.constant 0 : index
      %206 = vector.load %arg9[%c0_59, %c0_60] : memref<32x128xbf16, #tpu.memory_space<vmem>>, vector<32x128xbf16>
      %cst_61 = arith.constant dense<0.000000e+00> : vector<16x128xf32>
      %207 = tpu.matmul %205, %206, %cst_61 {dimension_numbers = #tpu.dot_dimension_numbers<[1], [0], [0], [1], [0, 0, 1, 1], [], []>} : vector<16x32xbf16>, vector<32x128xbf16>, vector<16x128xf32> -> vector<16x128xf32>
      %208 = vector.extract_strided_slice %180 {offsets = [2, 0], sizes = [1, 128], strides = [1, 1]} : vector<8x128xf32> to vector<1x128xf32>
      %209 = vector.broadcast %208 : vector<1x128xf32> to vector<16x128xf32>
      %210 = arith.addf %207, %209 : vector<16x128xf32>
      %c0_62 = arith.constant 0 : index
      %c0_63 = arith.constant 0 : index
      %211 = vector.load %arg10[%c0_62, %c0_63] : memref<16x128xf32, #tpu.memory_space<vmem>>, vector<16x128xf32>
      tpu.vector_store %arg10[%c0_62, %c0_63], %210 {strides = array<i32>} : memref<16x128xf32, #tpu.memory_space<vmem>>, vector<16x128xf32>,
    } else {
    }
    return
  }
  func.func @transform_0(%arg0: i32, %arg1: i32) -> (i32, i32) {
    %c0_i32 = arith.constant 0 : i32
    %c0_i32_0 = arith.constant 0 : i32
    return %arg0, %c0_i32 : i32, i32
  }
  func.func @transform_1(%arg0: i32, %arg1: i32) -> (i32, i32, i32) {
    %c0_i32 = arith.constant 0 : i32
    %c0_i32_0 = arith.constant 0 : i32
    %c0_i32_1 = arith.constant 0 : i32
    return %arg1, %c0_i32, %c0_i32_0 : i32, i32, i32
  }
  func.func @transform_2(%arg0: i32, %arg1: i32) -> (i32, i32, i32) {
    %c0_i32 = arith.constant 0 : i32
    %c0_i32_0 = arith.constant 0 : i32
    %c0_i32_1 = arith.constant 0 : i32
    return %arg1, %c0_i32, %c0_i32_0 : i32, i32, i32
  }
  func.func @transform_3(%arg0: i32, %arg1: i32) -> (i32, i32, i32, i32) {
    %c0_i32 = arith.constant 0 : i32
    %c0_i32_0 = arith.constant 0 : i32
    %c0_i32_1 = arith.constant 0 : i32
    %c0_i32_2 = arith.constant 0 : i32
    return %arg1, %c0_i32, %c0_i32_0, %c0_i32_1 : i32, i32, i32, i32
  }
  func.func @transform_4(%arg0: i32, %arg1: i32) -> (i32, i32, i32) {
    %c0_i32 = arith.constant 0 : i32
    %c0_i32_0 = arith.constant 0 : i32
    %c0_i32_1 = arith.constant 0 : i32
    return %arg1, %c0_i32, %c0_i32_0 : i32, i32, i32
  }
  func.func @transform_5(%arg0: i32, %arg1: i32) -> (i32, i32, i32) {
    %c0_i32 = arith.constant 0 : i32
    %c0_i32_0 = arith.constant 0 : i32
    %c0_i32_1 = arith.constant 0 : i32
    return %arg1, %c0_i32, %c0_i32_0 : i32, i32, i32
  }
  func.func @transform_6(%arg0: i32, %arg1: i32) -> (i32, i32) {
    %c0_i32 = arith.constant 0 : i32
    %c0_i32_0 = arith.constant 0 : i32
    %c0_i32_1 = arith.constant 0 : i32
    return %c0_i32, %c0_i32_0 : i32, i32
  }
  func.func @transform_7(%arg0: i32, %arg1: i32) -> (i32, i32) {
    %c0_i32 = arith.constant 0 : i32
    %c0_i32_0 = arith.constant 0 : i32
    %c0_i32_1 = arith.constant 0 : i32
    return %c0_i32, %c0_i32_0 : i32, i32
  }
  func.func @transform_8(%arg0: i32, %arg1: i32) -> (i32, i32) {
    %c0_i32 = arith.constant 0 : i32
    %c0_i32_0 = arith.constant 0 : i32
    return %arg0, %c0_i32 : i32, i32
  }
}

</mosaic_0001>

<llo_original>
// kernel: tpu_custom_call.1
$region0: #{tpu_custom_call.1}
  #allocation0 [shape = 'u32[]', space=smem, size = 0x4, offset = 0x4, fixed_abs, tag = 'smem constant byte address 0x4 - core index']
  #allocation1 [shape = 'u32[72,128]{1,0:T(1,128)}', space=vmem, size = 0x9000, scoped, tag = 'internal scratch']
  #allocation2 [shape = 'f32[128,32]{1,0:T(8,128)}', space=vmem, size = 0x10000, scoped, tag = 'scratch operand']
  %s0 = inlined_call_operand.vmem [shape: f32[256,32], index: 0, kind: input, shape index: {}]
  %s1 = inlined_call_operand.vmem [shape: f32[2,8,64], index: 1, kind: input, shape index: {}]
  %s2 = inlined_call_operand.vmem [shape: bf16[2,32,96], index: 2, kind: input, shape index: {}]
  %s3 = inlined_call_operand.vmem [shape: bf16[2,4,8,32], index: 3, kind: input, shape index: {}]
  %s4 = inlined_call_operand.vmem [shape: bf16[2,32,64], index: 4, kind: input, shape index: {}]
  %s5 = inlined_call_operand.vmem [shape: bf16[2,64,32], index: 5, kind: input, shape index: {}]
  %s6 = inlined_call_operand.vmem [shape: f32[8,128], index: 6, kind: input, shape index: {}]
  %s7 = inlined_call_operand.vmem [shape: bf16[32,128], index: 7, kind: input, shape index: {}]
  %s8 = inlined_call_operand.hbm [shape: f32[32,128], index: 8, kind: output, shape index: {}]
  %s9 = sld [smem:[#allocation0]]
  $region73: #{tpu_custom_call.1} parent=0
    _
  %s11 = ssub.s32 1, %s9
  %s12 = scalar_select 0, %s11, %s9
  $region1: #{tpu_custom_call.1} parent=0
    #allocation3 [shape = 'u8[16384]{0}', space=vmem, size = 0x4000, scoped, tag = 'output window, operand 0']
    #allocation4 [shape = 's32[2]{0}', space=sflag, size = 0x8, scoped, tag = 'scoped memory for tpu_custom_call.1']
    %13 = vsyncpa [#allocation4], 0
    %s14 = scalar_lea.sflag [#allocation4], 1
    %15 = vsyncpa %s14, 0
    loop: start=0, step=1, limit=6
    $region2: #{tpu_custom_call.1} parent=1 // loop_pre_header
      _
    $region3: #{tpu_custom_call.1} parent=1 // loop_header
      %s17 = sphi 0, %s21
      %p18 = scmp.ge.s32.totalorder %s17, 6
      %s24 = sphi 0, %s36
      %s25 = sphi 0, %s32
      %s26 = sphi 0, %s24
      %s27 = sphi 0, %s25
      %s28 = sphi 0, %s26
      %s29 = sphi 0, %s27
      %s39 = sphi 0, %s41
      %s42 = sphi 0, %s39
      %s43 = sphi 0, %s42
      %s59 = sphi 0, %s43
      %s65 = sphi 0, %s67
      %s68 = sphi 0, %s65
      %s69 = sphi 0, %s68
      %s85 = sphi 0, %s69
      %s91 = sphi 0, %s93
      %s94 = sphi 0, %s91
      %s95 = sphi 0, %s94
      %s111 = sphi 0, %s95
      %s117 = sphi 0, %s119
      %s120 = sphi 0, %s117
      %s121 = sphi 0, %s120
      %s137 = sphi 0, %s121
      %s143 = sphi 0, %s145
      %s146 = sphi 0, %s143
      %s147 = sphi 0, %s146
      %s163 = sphi 0, %s147
      %s169 = sphi 0, %s171
      %s172 = sphi 0, %s169
      %s173 = sphi 0, %s172
      %s189 = sphi 0, %s173
      %s193 = sphi 0, %s193
      %s195 = sphi 0, %s193
      %s196 = sphi 0, %s195
      %s210 = sphi 0, %s196
      %s214 = sphi 0, %s214
      %s216 = sphi 0, %s214
      %s217 = sphi 0, %s216
      %s231 = sphi 0, %s217
      %s237 = sphi 0, %s239
      %s240 = sphi 0, %s237
      %s241 = sphi 0, %s240
      %s257 = sphi 0, %s241
    $region4: #{tpu_custom_call.1} parent=1 // loop_header_branch
      %20 = sbr.rel (%p18) target = $region8
    $region5: #{tpu_custom_call.1} parent=1 // loop_body
      %s22 = ssub.s32 %s17, 1
      %s23 = ssub.s32 %s17, 2
      %s30 = sadd.s32 1, %s25
      %p31 = scmp.ge.s32.totalorder %s30, 2
      %s32 = scalar_select %p31, 0, %s30
      %s33 = sadd.s32 1, %s24
      %s34 = scalar_select %p31, %s33, %s24
      %p35 = scmp.ge.s32.totalorder %s34, 2
      %s36 = scalar_select %p35, 0, %s34
      %s37 = ssub.s32 %s24, %s36
      %p38 = scmp.eq.s32.totalorder %s37, 0
      %s40 = sadd.s32 %s39, 1
      %s41 = scalar_select %p38, %s39, %s40
      %p44 = pneg %p38
      %p45 = scmp.eq.s32.totalorder %s17, 3
      %p46 = por %p44, %p45
      %p47 = scmp.ne.s32.totalorder %s39, %s42
      %p48 = scmp.eq.s32.totalorder %s17, 0
      %p49 = por %p47, %p48
      %p50 = scmp.ne.s32.totalorder %s39, %s42
      %p51 = scmp.eq.s32.totalorder %s22, 3
      %p52 = por %p50, %p51
      %p53 = scmp.ne.s32.totalorder %s42, %s43
      %p54 = scmp.eq.s32.totalorder %s22, 0
      %p55 = por %p53, %p54
      %p56 = scmp.ne.s32.totalorder %s42, %s43
      %p57 = scmp.eq.s32.totalorder %s23, 3
      %p58 = por %p56, %p57
      %p60 = scmp.ne.s32.totalorder %s43, %s59
      %p61 = scmp.eq.s32.totalorder %s23, 0
      %p62 = por %p60, %p61
      %s63 = ssub.s32 %s25, %s32
      %p64 = scmp.eq.s32.totalorder %s63, 0
      %s66 = sadd.s32 %s65, 1
      %s67 = scalar_select %p64, %s65, %s66
      %p70 = pneg %p64
      %p71 = scmp.eq.s32.totalorder %s17, 3
      %p72 = por %p70, %p71
      %p73 = scmp.ne.s32.totalorder %s65, %s68
      %p74 = scmp.eq.s32.totalorder %s17, 0
      %p75 = por %p73, %p74
      %p76 = scmp.ne.s32.totalorder %s65, %s68
      %p77 = scmp.eq.s32.totalorder %s22, 3
      %p78 = por %p76, %p77
      %p79 = scmp.ne.s32.totalorder %s68, %s69
      %p80 = scmp.eq.s32.totalorder %s22, 0
      %p81 = por %p79, %p80
      %p82 = scmp.ne.s32.totalorder %s68, %s69
      %p83 = scmp.eq.s32.totalorder %s23, 3
      %p84 = por %p82, %p83
      %p86 = scmp.ne.s32.totalorder %s69, %s85
      %p87 = scmp.eq.s32.totalorder %s23, 0
      %p88 = por %p86, %p87
      %s89 = ssub.s32 %s25, %s32
      %p90 = scmp.eq.s32.totalorder %s89, 0
      %s92 = sadd.s32 %s91, 1
      %s93 = scalar_select %p90, %s91, %s92
      %p96 = pneg %p90
      %p97 = scmp.eq.s32.totalorder %s17, 3
      %p98 = por %p96, %p97
      %p99 = scmp.ne.s32.totalorder %s91, %s94
      %p100 = scmp.eq.s32.totalorder %s17, 0
      %p101 = por %p99, %p100
      %p102 = scmp.ne.s32.totalorder %s91, %s94
      %p103 = scmp.eq.s32.totalorder %s22, 3
      %p104 = por %p102, %p103
      %p105 = scmp.ne.s32.totalorder %s94, %s95
      %p106 = scmp.eq.s32.totalorder %s22, 0
      %p107 = por %p105, %p106
      %p108 = scmp.ne.s32.totalorder %s94, %s95
      %p109 = scmp.eq.s32.totalorder %s23, 3
      %p110 = por %p108, %p109
      %p112 = scmp.ne.s32.totalorder %s95, %s111
      %p113 = scmp.eq.s32.totalorder %s23, 0
      %p114 = por %p112, %p113
      %s115 = ssub.s32 %s25, %s32
      %p116 = scmp.eq.s32.totalorder %s115, 0
      %s118 = sadd.s32 %s117, 1
      %s119 = scalar_select %p116, %s117, %s118
      %p122 = pneg %p116
      %p123 = scmp.eq.s32.totalorder %s17, 3
      %p124 = por %p122, %p123
      %p125 = scmp.ne.s32.totalorder %s117, %s120
      %p126 = scmp.eq.s32.totalorder %s17, 0
      %p127 = por %p125, %p126
      %p128 = scmp.ne.s32.totalorder %s117, %s120
      %p129 = scmp.eq.s32.totalorder %s22, 3
      %p130 = por %p128, %p129
      %p131 = scmp.ne.s32.totalorder %s120, %s121
      %p132 = scmp.eq.s32.totalorder %s22, 0
      %p133 = por %p131, %p132
      %p134 = scmp.ne.s32.totalorder %s120, %s121
      %p135 = scmp.eq.s32.totalorder %s23, 3
      %p136 = por %p134, %p135
      %p138 = scmp.ne.s32.totalorder %s121, %s137
      %p139 = scmp.eq.s32.totalorder %s23, 0
      %p140 = por %p138, %p139
      %s141 = ssub.s32 %s25, %s32
      %p142 = scmp.eq.s32.totalorder %s141, 0
      %s144 = sadd.s32 %s143, 1
      %s145 = scalar_select %p142, %s143, %s144
      %p148 = pneg %p142
      %p149 = scmp.eq.s32.totalorder %s17, 3
      %p150 = por %p148, %p149
      %p151 = scmp.ne.s32.totalorder %s143, %s146
      %p152 = scmp.eq.s32.totalorder %s17, 0
      %p153 = por %p151, %p152
      %p154 = scmp.ne.s32.totalorder %s143, %s146
      %p155 = scmp.eq.s32.totalorder %s22, 3
      %p156 = por %p154, %p155
      %p157 = scmp.ne.s32.totalorder %s146, %s147
      %p158 = scmp.eq.s32.totalorder %s22, 0
      %p159 = por %p157, %p158
      %p160 = scmp.ne.s32.totalorder %s146, %s147
      %p161 = scmp.eq.s32.totalorder %s23, 3
      %p162 = por %p160, %p161
      %p164 = scmp.ne.s32.totalorder %s147, %s163
      %p165 = scmp.eq.s32.totalorder %s23, 0
      %p166 = por %p164, %p165
      %s167 = ssub.s32 %s25, %s32
      %p168 = scmp.eq.s32.totalorder %s167, 0
      %s170 = sadd.s32 %s169, 1
      %s171 = scalar_select %p168, %s169, %s170
      %p174 = pneg %p168
      %p175 = scmp.eq.s32.totalorder %s17, 3
      %p176 = por %p174, %p175
      %p177 = scmp.ne.s32.totalorder %s169, %s172
      %p178 = scmp.eq.s32.totalorder %s17, 0
      %p179 = por %p177, %p178
      %p180 = scmp.ne.s32.totalorder %s169, %s172
      %p181 = scmp.eq.s32.totalorder %s22, 3
      %p182 = por %p180, %p181
      %p183 = scmp.ne.s32.totalorder %s172, %s173
      %p184 = scmp.eq.s32.totalorder %s22, 0
      %p185 = por %p183, %p184
      %p186 = scmp.ne.s32.totalorder %s172, %s173
      %p187 = scmp.eq.s32.totalorder %s23, 3
      %p188 = por %p186, %p187
      %p190 = scmp.ne.s32.totalorder %s173, %s189
      %p191 = scmp.eq.s32.totalorder %s23, 0
      %p192 = por %p190, %p191
      %s194 = sadd.s32 %s193, 1
      %p197 = scmp.eq.s32.totalorder %s17, 3
      %p198 = scmp.ne.s32.totalorder %s193, %s195
      %p199 = scmp.eq.s32.totalorder %s17, 0
      %p200 = por %p198, %p199
      %p201 = scmp.ne.s32.totalorder %s193, %s195
      %p202 = scmp.eq.s32.totalorder %s22, 3
      %p203 = por %p201, %p202
      %p204 = scmp.ne.s32.totalorder %s195, %s196
      %p205 = scmp.eq.s32.totalorder %s22, 0
      %p206 = por %p204, %p205
      %p207 = scmp.ne.s32.totalorder %s195, %s196
      %p208 = scmp.eq.s32.totalorder %s23, 3
      %p209 = por %p207, %p208
      %p211 = scmp.ne.s32.totalorder %s196, %s210
      %p212 = scmp.eq.s32.totalorder %s23, 0
      %p213 = por %p211, %p212
      %s215 = sadd.s32 %s214, 1
      %p218 = scmp.eq.s32.totalorder %s17, 3
      %p219 = scmp.ne.s32.totalorder %s214, %s216
      %p220 = scmp.eq.s32.totalorder %s17, 0
      %p221 = por %p219, %p220
      %p222 = scmp.ne.s32.totalorder %s214, %s216
      %p223 = scmp.eq.s32.totalorder %s22, 3
      %p224 = por %p222, %p223
      %p225 = scmp.ne.s32.totalorder %s216, %s217
      %p226 = scmp.eq.s32.totalorder %s22, 0
      %p227 = por %p225, %p226
      %p228 = scmp.ne.s32.totalorder %s216, %s217
      %p229 = scmp.eq.s32.totalorder %s23, 3
      %p230 = por %p228, %p229
      %p232 = scmp.ne.s32.totalorder %s217, %s231
      %p233 = scmp.eq.s32.totalorder %s23, 0
      %p234 = por %p232, %p233
      %s235 = ssub.s32 %s24, %s36
      %p236 = scmp.eq.s32.totalorder %s235, 0
      %s238 = sadd.s32 %s237, 1
      %s239 = scalar_select %p236, %s237, %s238
      %p242 = pneg %p236
      %p243 = scmp.eq.s32.totalorder %s17, 3
      %p244 = por %p242, %p243
      %p245 = scmp.ne.s32.totalorder %s237, %s240
      %p246 = scmp.eq.s32.totalorder %s17, 0
      %p247 = por %p245, %p246
      %p248 = scmp.ne.s32.totalorder %s237, %s240
      %p249 = scmp.eq.s32.totalorder %s22, 3
      %p250 = por %p248, %p249
      %p251 = scmp.ne.s32.totalorder %s240, %s241
      %p252 = scmp.eq.s32.totalorder %s22, 0
      %p253 = por %p251, %p252
      %p254 = scmp.ne.s32.totalorder %s240, %s241
      %p255 = scmp.eq.s32.totalorder %s23, 3
      %p256 = por %p254, %p255
      %p258 = scmp.ne.s32.totalorder %s241, %s257
      %p259 = scmp.eq.s32.totalorder %s23, 0
      %p260 = por %p258, %p259
      %p261 = scmp.le.s32.totalorder 1, %s17
      %p262 = scmp.lt.s32.totalorder %s17, 5
      %p263 = pnand %p261, %p262
      %p264 = pneg %p263
      // Predicated region
      $region9: #{tpu_custom_call.1} parent=5 // pred_check
        _
      $region10: #{tpu_custom_call.1} parent=5 // pred_check_branch
        %266 = sbr.rel (%p263) target = $region12
      $region11: #{tpu_custom_call.1} parent=5 // pred_region
        %s267 = ssub.s32 %s17, 1
        // Predicated region
        $region13: #{tpu_custom_call.1} parent=11 // pred_check
          %p268 = pneg %p206
        $region14: #{tpu_custom_call.1} parent=11 // pred_check_branch
          %270 = sbr.rel (%p268) target = $region16
        $region15: #{tpu_custom_call.1} parent=11 // pred_region
          _
        $region16: #{tpu_custom_call.1} parent=11 // pred_fallthru
          _
        // Predicated region
        $region17: #{tpu_custom_call.1} parent=11 // pred_check
          %p271 = pneg %p227
        $region18: #{tpu_custom_call.1} parent=11 // pred_check_branch
          %273 = sbr.rel (%p271) target = $region20
        $region19: #{tpu_custom_call.1} parent=11 // pred_region
          _
        $region20: #{tpu_custom_call.1} parent=11 // pred_fallthru
          _
      $region12: #{tpu_custom_call.1} parent=5 // pred_fallthru
        _
      %p274 = scmp.lt.s32.totalorder %s17, 4
      // Predicated region
      $region21: #{tpu_custom_call.1} parent=5 // pred_check
        %p275 = pneg %p274
      $region22: #{tpu_custom_call.1} parent=5 // pred_check_branch
        %277 = sbr.rel (%p275) target = $region24
      $region23: #{tpu_custom_call.1} parent=5 // pred_region
        // Predicated region
        $region25: #{tpu_custom_call.1} parent=23 // pred_check
          %p278 = pneg %p49
        $region26: #{tpu_custom_call.1} parent=23 // pred_check_branch
          %280 = sbr.rel (%p278) target = $region28
        $region27: #{tpu_custom_call.1} parent=23 // pred_region
          %s281 = smul.u32 16, %s24
          %p282 = scmp.lt.s32.totalorder %s281, 31
          %s283 = scalar_select %p282, %s281, 31
          %s284 = smul.addr %s283, 8
          %s285 = scalar_lea.vmem %s0, %s284
          %s286 = smul.u32 16, %s24
        $region28: #{tpu_custom_call.1} parent=23 // pred_fallthru
          _
        // Predicated region
        $region29: #{tpu_custom_call.1} parent=23 // pred_check
          %p287 = pneg %p75
        $region30: #{tpu_custom_call.1} parent=23 // pred_check_branch
          %289 = sbr.rel (%p287) target = $region32
        $region31: #{tpu_custom_call.1} parent=23 // pred_region
          %p290 = scmp.lt.s32.totalorder %s25, 1
          %s291 = scalar_select %p290, %s25, 1
          %s292 = smul.addr %s291, 8
          %s293 = scalar_lea.vmem %s1, %s292
        $region32: #{tpu_custom_call.1} parent=23 // pred_fallthru
          _
        // Predicated region
        $region33: #{tpu_custom_call.1} parent=23 // pred_check
          %p294 = pneg %p101
        $region34: #{tpu_custom_call.1} parent=23 // pred_check_branch
          %296 = sbr.rel (%p294) target = $region36
        $region35: #{tpu_custom_call.1} parent=23 // pred_region
          %p297 = scmp.lt.s32.totalorder %s25, 1
          %s298 = scalar_select %p297, %s25, 1
          %s299 = smul.addr %s298, 4
          %s300 = smul.addr %s299, 4
          %s301 = scalar_lea.vmem %s2, %s300
        $region36: #{tpu_custom_call.1} parent=23 // pred_fallthru
          _
        // Predicated region
        $region37: #{tpu_custom_call.1} parent=23 // pred_check
          %p302 = pneg %p127
        $region38: #{tpu_custom_call.1} parent=23 // pred_check_branch
          %304 = sbr.rel (%p302) target = $region40
        $region39: #{tpu_custom_call.1} parent=23 // pred_region
          %p305 = scmp.lt.s32.totalorder %s25, 1
          %s306 = scalar_select %p305, %s25, 1
          %s307 = smul.addr %s306, 4
          %s308 = smul.addr %s307, 4
          %s309 = scalar_lea.vmem %s3, %s308
        $region40: #{tpu_custom_call.1} parent=23 // pred_fallthru
          _
        // Predicated region
        $region41: #{tpu_custom_call.1} parent=23 // pred_check
          %p310 = pneg %p153
        $region42: #{tpu_custom_call.1} parent=23 // pred_check_branch
          %312 = sbr.rel (%p310) target = $region44
        $region43: #{tpu_custom_call.1} parent=23 // pred_region
          %p313 = scmp.lt.s32.totalorder %s25, 1
          %s314 = scalar_select %p313, %s25, 1
          %s315 = smul.addr %s314, 4
          %s316 = smul.addr %s315, 4
          %s317 = scalar_lea.vmem %s4, %s316
        $region44: #{tpu_custom_call.1} parent=23 // pred_fallthru
          _
        // Predicated region
        $region45: #{tpu_custom_call.1} parent=23 // pred_check
          %p318 = pneg %p179
        $region46: #{tpu_custom_call.1} parent=23 // pred_check_branch
          %320 = sbr.rel (%p318) target = $region48
        $region47: #{tpu_custom_call.1} parent=23 // pred_region
          %p321 = scmp.lt.s32.totalorder %s25, 1
          %s322 = scalar_select %p321, %s25, 1
          %s323 = smul.addr %s322, 8
          %s324 = smul.addr %s323, 4
          %s325 = scalar_lea.vmem %s5, %s324
        $region48: #{tpu_custom_call.1} parent=23 // pred_fallthru
          _
      $region24: #{tpu_custom_call.1} parent=5 // pred_fallthru
        _
      %p326 = scmp.le.s32.totalorder 1, %s17
      %p327 = scmp.lt.s32.totalorder %s17, 5
      %p328 = pnand %p326, %p327
      %p329 = pneg %p328
      // Predicated region
      $region49: #{tpu_custom_call.1} parent=5 // pred_check
        _
      $region50: #{tpu_custom_call.1} parent=5 // pred_check_branch
        %331 = sbr.rel (%p328) target = $region52
      $region51: #{tpu_custom_call.1} parent=5 // pred_region
        %s332 = ssub.s32 %s17, 1
        %s333 = smul.u32 16, %s26
        %p334 = scmp.lt.s32.totalorder %s333, 31
        %s335 = scalar_select %p334, %s333, 31
        %s336 = smul.addr %s335, 8
        %s337 = scalar_lea.vmem %s0, %s336
        %p338 = pneg %p55
        %p339 = pneg %p52
        %p340 = scmp.lt.s32.totalorder %s27, 1
        %s341 = scalar_select %p340, %s27, 1
        %s342 = smul.addr %s341, 8
        %s343 = scalar_lea.vmem %s1, %s342
        %p344 = pneg %p81
        %p345 = pneg %p78
        %p346 = scmp.lt.s32.totalorder %s27, 1
        %s347 = scalar_select %p346, %s27, 1
        %s348 = smul.addr %s347, 4
        %s349 = smul.addr %s348, 4
        %s350 = scalar_lea.vmem %s2, %s349
        %p351 = pneg %p107
        %p352 = pneg %p104
        %p353 = scmp.lt.s32.totalorder %s27, 1
        %s354 = scalar_select %p353, %s27, 1
        %s355 = smul.addr %s354, 4
        %s356 = smul.addr %s355, 4
        %s357 = scalar_lea.vmem %s3, %s356
        %p358 = pneg %p133
        %p359 = pneg %p130
        %p360 = scmp.lt.s32.totalorder %s27, 1
        %s361 = scalar_select %p360, %s27, 1
        %s362 = smul.addr %s361, 4
        %s363 = smul.addr %s362, 4
        %s364 = scalar_lea.vmem %s4, %s363
        %p365 = pneg %p159
        %p366 = pneg %p156
        %p367 = scmp.lt.s32.totalorder %s27, 1
        %s368 = scalar_select %p367, %s27, 1
        %s369 = smul.addr %s368, 8
        %s370 = smul.addr %s369, 4
        %s371 = scalar_lea.vmem %s5, %s370
        %p372 = pneg %p185
        %p373 = pneg %p182
        %p374 = pneg %p206
        %p375 = pneg %p203
        %p376 = pneg %p227
        %p377 = pneg %p224
        %p378 = pneg %p253
        %p379 = pneg %p250
        %s380 = sand.u32 %s240, 1
        %s381 = scalar_lea.sflag [#allocation4], %s380
        %s382 = sand.u32 %s240, 1
        %s383 = smul.addr %s382, 16
        %s384 = scalar_lea.vmem [#allocation3], %s383
        %s385 = smul.u32 16, %s26
        %p386 = scmp.lt.s32.totalorder %s385, 31
        %s387 = scalar_select %p386, %s385, 31
        %s388 = smul.addr %s387, 8
        %s389 = scalar_lea.vmem %s0, %s388
        %s390 = smul.u32 16, %s26
        %p391 = scmp.lt.s32.totalorder %s27, 1
        %s392 = scalar_select %p391, %s27, 1
        %s393 = smul.addr %s392, 8
        %s394 = scalar_lea.vmem %s1, %s393
        %p395 = scmp.lt.s32.totalorder %s27, 1
        %s396 = scalar_select %p395, %s27, 1
        %s397 = smul.addr %s396, 4
        %s398 = smul.addr %s397, 4
        %s399 = scalar_lea.vmem %s2, %s398
        %p400 = scmp.lt.s32.totalorder %s27, 1
        %s401 = scalar_select %p400, %s27, 1
        %s402 = smul.addr %s401, 4
        %s403 = smul.addr %s402, 4
        %s404 = scalar_lea.vmem %s3, %s403
        %p405 = scmp.lt.s32.totalorder %s27, 1
        %s406 = scalar_select %p405, %s27, 1
        %s407 = smul.addr %s406, 4
        %s408 = smul.addr %s407, 4
        %s409 = scalar_lea.vmem %s4, %s408
        %p410 = scmp.lt.s32.totalorder %s27, 1
        %s411 = scalar_select %p410, %s27, 1
        %s412 = smul.addr %s411, 8
        %s413 = smul.addr %s412, 4
        %s414 = scalar_lea.vmem %s5, %s413
        %s415 = smul.u32 2, %s26
        %p417 = scmp.eq.s32.totalorder %s27, 0
        // Predicated region
        $region53: #{tpu_custom_call.1} parent=51 // pred_check
          %p418 = pneg %p417
        $region54: #{tpu_custom_call.1} parent=51 // pred_check_branch
          %420 = sbr.rel (%p418) target = $region56
        $region55: #{tpu_custom_call.1} parent=51 // pred_region
          %v421 = vld [vmem:[%s389] sm:$0xff]
          %v422 = vld [vmem:[%s389 + $0x8] sm:$0xff]
          %v423 = vld [vmem:[%s389 + $0x10] sm:$0xff]
          %v424 = vld [vmem:[%s389 + $0x18] sm:$0xff]
          %v425 = vld [vmem:[%s389 + $0x20] sm:$0xff]
          %v426 = vld [vmem:[%s389 + $0x28] sm:$0xff]
          %v427 = vld [vmem:[%s389 + $0x30] sm:$0xff]
          %v428 = vld [vmem:[%s389 + $0x38] sm:$0xff]
          %v429 = vld [vmem:[%s389 + $0x40] sm:$0xff]
          %v430 = vld [vmem:[%s389 + $0x48] sm:$0xff]
          %v431 = vld [vmem:[%s389 + $0x50] sm:$0xff]
          %v432 = vld [vmem:[%s389 + $0x58] sm:$0xff]
          %v433 = vld [vmem:[%s389 + $0x60] sm:$0xff]
          %v434 = vld [vmem:[%s389 + $0x68] sm:$0xff]
          %v435 = vld [vmem:[%s389 + $0x70] sm:$0xff]
          %v436 = vld [vmem:[%s389 + $0x78] sm:$0xff]
          %vm437 = vcmask 261120
          %438 = vst.msk [vmem:[#allocation2] sm:$0xff] %vm437, %v421
          %439 = vst.msk [vmem:[#allocation2 + $0x8] sm:$0xff] %vm437, %v422
          %440 = vst.msk [vmem:[#allocation2 + $0x10] sm:$0xff] %vm437, %v423
          %441 = vst.msk [vmem:[#allocation2 + $0x18] sm:$0xff] %vm437, %v424
          %442 = vst.msk [vmem:[#allocation2 + $0x20] sm:$0xff] %vm437, %v425
          %443 = vst.msk [vmem:[#allocation2 + $0x28] sm:$0xff] %vm437, %v426
          %444 = vst.msk [vmem:[#allocation2 + $0x30] sm:$0xff] %vm437, %v427
          %445 = vst.msk [vmem:[#allocation2 + $0x38] sm:$0xff] %vm437, %v428
          %446 = vst.msk [vmem:[#allocation2 + $0x40] sm:$0xff] %vm437, %v429
          %447 = vst.msk [vmem:[#allocation2 + $0x48] sm:$0xff] %vm437, %v430
          %448 = vst.msk [vmem:[#allocation2 + $0x50] sm:$0xff] %vm437, %v431
          %449 = vst.msk [vmem:[#allocation2 + $0x58] sm:$0xff] %vm437, %v432
          %450 = vst.msk [vmem:[#allocation2 + $0x60] sm:$0xff] %vm437, %v433
          %451 = vst.msk [vmem:[#allocation2 + $0x68] sm:$0xff] %vm437, %v434
          %452 = vst.msk [vmem:[#allocation2 + $0x70] sm:$0xff] %vm437, %v435
          %453 = vst.msk [vmem:[#allocation2 + $0x78] sm:$0xff] %vm437, %v436
        $region56: #{tpu_custom_call.1} parent=51 // pred_fallthru
          _
        %v454 = vld [vmem:[#allocation2] sm:$0xff]
        %v455 = vld [vmem:[#allocation2 + $0x8] sm:$0xff]
        %v456 = vld [vmem:[#allocation2 + $0x10] sm:$0xff]
        %v457 = vld [vmem:[#allocation2 + $0x18] sm:$0xff]
        %v458 = vld [vmem:[#allocation2 + $0x20] sm:$0xff]
        %v459 = vld [vmem:[#allocation2 + $0x28] sm:$0xff]
        %v460 = vld [vmem:[#allocation2 + $0x30] sm:$0xff]
        %v461 = vld [vmem:[#allocation2 + $0x38] sm:$0xff]
        %v462 = vld [vmem:[#allocation2 + $0x40] sm:$0xff]
        %v463 = vld [vmem:[#allocation2 + $0x48] sm:$0xff]
        %v464 = vld [vmem:[#allocation2 + $0x50] sm:$0xff]
        %v465 = vld [vmem:[#allocation2 + $0x58] sm:$0xff]
        %v466 = vld [vmem:[#allocation2 + $0x60] sm:$0xff]
        %v467 = vld [vmem:[#allocation2 + $0x68] sm:$0xff]
        %v468 = vld [vmem:[#allocation2 + $0x70] sm:$0xff]
        %v469 = vld [vmem:[#allocation2 + $0x78] sm:$0xff]
        %v470 = vld [vmem:[%s394] sm:$0xff]
        %vm471 = vcmask 261120
        %v472 = vsel %vm471, %v454, 0.0
        %473 = vadd.xlane.f32.xlu0 %v472
        %v474 = vpop.xlane.xlu0 %473
        %v475 = vsel %vm471, %v455, 0.0
        %476 = vadd.xlane.f32.xlu0 %v475
        %v477 = vpop.xlane.xlu0 %476
        %v478 = vsel %vm471, %v456, 0.0
        %479 = vadd.xlane.f32.xlu0 %v478
        %v480 = vpop.xlane.xlu0 %479
        %v481 = vsel %vm471, %v457, 0.0
        %482 = vadd.xlane.f32.xlu0 %v481
        %v483 = vpop.xlane.xlu0 %482
        %v484 = vsel %vm471, %v458, 0.0
        %485 = vadd.xlane.f32.xlu0 %v484
        %v486 = vpop.xlane.xlu0 %485
        %v487 = vsel %vm471, %v459, 0.0
        %488 = vadd.xlane.f32.xlu0 %v487
        %v489 = vpop.xlane.xlu0 %488
        %v490 = vsel %vm471, %v460, 0.0
        %491 = vadd.xlane.f32.xlu0 %v490
        %v492 = vpop.xlane.xlu0 %491
        %v493 = vsel %vm471, %v461, 0.0
        %494 = vadd.xlane.f32.xlu0 %v493
        %v495 = vpop.xlane.xlu0 %494
        %v496 = vsel %vm471, %v462, 0.0
        %497 = vadd.xlane.f32.xlu0 %v496
        %v498 = vpop.xlane.xlu0 %497
        %v499 = vsel %vm471, %v463, 0.0
        %500 = vadd.xlane.f32.xlu0 %v499
        %v501 = vpop.xlane.xlu0 %500
        %v502 = vsel %vm471, %v464, 0.0
        %503 = vadd.xlane.f32.xlu0 %v502
        %v504 = vpop.xlane.xlu0 %503
        %v505 = vsel %vm471, %v465, 0.0
        %506 = vadd.xlane.f32.xlu0 %v505
        %v507 = vpop.xlane.xlu0 %506
        %v508 = vsel %vm471, %v466, 0.0
        %509 = vadd.xlane.f32.xlu0 %v508
        %v510 = vpop.xlane.xlu0 %509
        %v511 = vsel %vm471, %v467, 0.0
        %512 = vadd.xlane.f32.xlu0 %v511
        %v513 = vpop.xlane.xlu0 %512
        %v514 = vsel %vm471, %v468, 0.0
        %515 = vadd.xlane.f32.xlu0 %v514
        %v516 = vpop.xlane.xlu0 %515
        %v517 = vsel %vm471, %v469, 0.0
        %518 = vadd.xlane.f32.xlu0 %v517
        %v519 = vpop.xlane.xlu0 %518
        %v520 = vrcp.pop 32.0
        %v521 = vmul.f32 32.0, %v520
        %v522 = vsub.f32 1.0, %v521
        %v523 = vmul.f32 %v520, %v522
        %v524 = vadd.f32 %v520, %v523
        %vm525 = vweird.f32 %v520
        %v526 = vsel %vm525, %v520, %v524
        %v527 = vmul.f32 %v474, %v526
        %v528 = vmul.f32 %v477, %v526
        %v529 = vmul.f32 %v480, %v526
        %v530 = vmul.f32 %v483, %v526
        %v531 = vmul.f32 %v486, %v526
        %v532 = vmul.f32 %v489, %v526
        %v533 = vmul.f32 %v492, %v526
        %v534 = vmul.f32 %v495, %v526
        %v535 = vmul.f32 %v498, %v526
        %v536 = vmul.f32 %v501, %v526
        %v537 = vmul.f32 %v504, %v526
        %v538 = vmul.f32 %v507, %v526
        %v539 = vmul.f32 %v510, %v526
        %v540 = vmul.f32 %v513, %v526
        %v541 = vmul.f32 %v516, %v526
        %v542 = vmul.f32 %v519, %v526
        %v543 = vsub.f32 %v454, %v527
        %v544 = vsub.f32 %v455, %v528
        %v545 = vsub.f32 %v456, %v529
        %v546 = vsub.f32 %v457, %v530
        %v547 = vsub.f32 %v458, %v531
        %v548 = vsub.f32 %v459, %v532
        %v549 = vsub.f32 %v460, %v533
        %v550 = vsub.f32 %v461, %v534
        %v551 = vsub.f32 %v462, %v535
        %v552 = vsub.f32 %v463, %v536
        %v553 = vsub.f32 %v464, %v537
        %v554 = vsub.f32 %v465, %v538
        %v555 = vsub.f32 %v466, %v539
        %v556 = vsub.f32 %v467, %v540
        %v557 = vsub.f32 %v468, %v541
        %v558 = vsub.f32 %v469, %v542
        %v559 = vmul.f32 %v543, %v543
        %v560 = vmul.f32 %v544, %v544
        %v561 = vmul.f32 %v545, %v545
        %v562 = vmul.f32 %v546, %v546
        %v563 = vmul.f32 %v547, %v547
        %v564 = vmul.f32 %v548, %v548
        %v565 = vmul.f32 %v549, %v549
        %v566 = vmul.f32 %v550, %v550
        %v567 = vmul.f32 %v551, %v551
        %v568 = vmul.f32 %v552, %v552
        %v569 = vmul.f32 %v553, %v553
        %v570 = vmul.f32 %v554, %v554
        %v571 = vmul.f32 %v555, %v555
        %v572 = vmul.f32 %v556, %v556
        %v573 = vmul.f32 %v557, %v557
        %v574 = vmul.f32 %v558, %v558
        %v575 = vsel %vm471, %v559, 0.0
        %576 = vadd.xlane.f32.xlu0 %v575
        %v577 = vpop.xlane.xlu0 %576
        %v578 = vsel %vm471, %v560, 0.0
        %579 = vadd.xlane.f32.xlu0 %v578
        %v580 = vpop.xlane.xlu0 %579
        %v581 = vsel %vm471, %v561, 0.0
        %582 = vadd.xlane.f32.xlu0 %v581
        %v583 = vpop.xlane.xlu0 %582
        %v584 = vsel %vm471, %v562, 0.0
        %585 = vadd.xlane.f32.xlu0 %v584
        %v586 = vpop.xlane.xlu0 %585
        %v587 = vsel %vm471, %v563, 0.0
        %588 = vadd.xlane.f32.xlu0 %v587
        %v589 = vpop.xlane.xlu0 %588
        %v590 = vsel %vm471, %v564, 0.0
        %591 = vadd.xlane.f32.xlu0 %v590
        %v592 = vpop.xlane.xlu0 %591
        %v593 = vsel %vm471, %v565, 0.0
        %594 = vadd.xlane.f32.xlu0 %v593
        %v595 = vpop.xlane.xlu0 %594
        %v596 = vsel %vm471, %v566, 0.0
        %597 = vadd.xlane.f32.xlu0 %v596
        %v598 = vpop.xlane.xlu0 %597
        %v599 = vsel %vm471, %v567, 0.0
        %600 = vadd.xlane.f32.xlu0 %v599
        %v601 = vpop.xlane.xlu0 %600
        %v602 = vsel %vm471, %v568, 0.0
        %603 = vadd.xlane.f32.xlu0 %v602
        %v604 = vpop.xlane.xlu0 %603
        %v605 = vsel %vm471, %v569, 0.0
        %606 = vadd.xlane.f32.xlu0 %v605
        %v607 = vpop.xlane.xlu0 %606
        %v608 = vsel %vm471, %v570, 0.0
        %609 = vadd.xlane.f32.xlu0 %v608
        %v610 = vpop.xlane.xlu0 %609
        %v611 = vsel %vm471, %v571, 0.0
        %612 = vadd.xlane.f32.xlu0 %v611
        %v613 = vpop.xlane.xlu0 %612
        %v614 = vsel %vm471, %v572, 0.0
        %615 = vadd.xlane.f32.xlu0 %v614
        %v616 = vpop.xlane.xlu0 %615
        %v617 = vsel %vm471, %v573, 0.0
        %618 = vadd.xlane.f32.xlu0 %v617
        %v619 = vpop.xlane.xlu0 %618
        %v620 = vsel %vm471, %v574, 0.0
        %621 = vadd.xlane.f32.xlu0 %v620
        %v622 = vpop.xlane.xlu0 %621
        %v623 = vmul.f32 %v577, %v526
        %v624 = vmul.f32 %v580, %v526
        %v625 = vmul.f32 %v583, %v526
        %v626 = vmul.f32 %v586, %v526
        %v627 = vmul.f32 %v589, %v526
        %v628 = vmul.f32 %v592, %v526
        %v629 = vmul.f32 %v595, %v526
        %v630 = vmul.f32 %v598, %v526
        %v631 = vmul.f32 %v601, %v526
        %v632 = vmul.f32 %v604, %v526
        %v633 = vmul.f32 %v607, %v526
        %v634 = vmul.f32 %v610, %v526
        %v635 = vmul.f32 %v613, %v526
        %v636 = vmul.f32 %v616, %v526
        %v637 = vmul.f32 %v619, %v526
        %v638 = vmul.f32 %v622, %v526
        %v639 = vadd.f32 %v623, 1e-05
        %v640 = vadd.f32 %v624, 1e-05
        %v641 = vadd.f32 %v625, 1e-05
        %v642 = vadd.f32 %v626, 1e-05
        %v643 = vadd.f32 %v627, 1e-05
        %v644 = vadd.f32 %v628, 1e-05
        %v645 = vadd.f32 %v629, 1e-05
        %v646 = vadd.f32 %v630, 1e-05
        %v647 = vadd.f32 %v631, 1e-05
        %v648 = vadd.f32 %v632, 1e-05
        %v649 = vadd.f32 %v633, 1e-05
        %v650 = vadd.f32 %v634, 1e-05
        %v651 = vadd.f32 %v635, 1e-05
        %v652 = vadd.f32 %v636, 1e-05
        %v653 = vadd.f32 %v637, 1e-05
        %v654 = vadd.f32 %v638, 1e-05
        %v655 = vrsqrt.pop %v639
        %v656 = vmul.f32 %v655, %v639
        %v657 = vmul.f32 %v656, %v655
        %v658 = vmul.f32 0.5, %v657
        %v659 = vsub.f32 1.5, %v658
        %v660 = vmul.f32 %v655, %v659
        %vm661 = vweird.f32 %v639
        %vm662 = vweird.f32 %v655
        %vm663 = vmor %vm661, %vm662
        %v664 = vsel %vm663, %v655, %v660
        %v665 = vrsqrt.pop %v640
        %v666 = vmul.f32 %v665, %v640
        %v667 = vmul.f32 %v666, %v665
        %v668 = vmul.f32 0.5, %v667
        %v669 = vsub.f32 1.5, %v668
        %v670 = vmul.f32 %v665, %v669
        %vm671 = vweird.f32 %v640
        %vm672 = vweird.f32 %v665
        %vm673 = vmor %vm671, %vm672
        %v674 = vsel %vm673, %v665, %v670
        %v675 = vrsqrt.pop %v641
        %v676 = vmul.f32 %v675, %v641
        %v677 = vmul.f32 %v676, %v675
        %v678 = vmul.f32 0.5, %v677
        %v679 = vsub.f32 1.5, %v678
        %v680 = vmul.f32 %v675, %v679
        %vm681 = vweird.f32 %v641
        %vm682 = vweird.f32 %v675
        %vm683 = vmor %vm681, %vm682
        %v684 = vsel %vm683, %v675, %v680
        %v685 = vrsqrt.pop %v642
        %v686 = vmul.f32 %v685, %v642
        %v687 = vmul.f32 %v686, %v685
        %v688 = vmul.f32 0.5, %v687
        %v689 = vsub.f32 1.5, %v688
        %v690 = vmul.f32 %v685, %v689
        %vm691 = vweird.f32 %v642
        %vm692 = vweird.f32 %v685
        %vm693 = vmor %vm691, %vm692
        %v694 = vsel %vm693, %v685, %v690
        %v695 = vrsqrt.pop %v643
        %v696 = vmul.f32 %v695, %v643
        %v697 = vmul.f32 %v696, %v695
        %v698 = vmul.f32 0.5, %v697
        %v699 = vsub.f32 1.5, %v698
        %v700 = vmul.f32 %v695, %v699
        %vm701 = vweird.f32 %v643
        %vm702 = vweird.f32 %v695
        %vm703 = vmor %vm701, %vm702
        %v704 = vsel %vm703, %v695, %v700
        %v705 = vrsqrt.pop %v644
        %v706 = vmul.f32 %v705, %v644
        %v707 = vmul.f32 %v706, %v705
        %v708 = vmul.f32 0.5, %v707
        %v709 = vsub.f32 1.5, %v708
        %v710 = vmul.f32 %v705, %v709
        %vm711 = vweird.f32 %v644
        %vm712 = vweird.f32 %v705
        %vm713 = vmor %vm711, %vm712
        %v714 = vsel %vm713, %v705, %v710
        %v715 = vrsqrt.pop %v645
        %v716 = vmul.f32 %v715, %v645
        %v717 = vmul.f32 %v716, %v715
        %v718 = vmul.f32 0.5, %v717
        %v719 = vsub.f32 1.5, %v718
        %v720 = vmul.f32 %v715, %v719
        %vm721 = vweird.f32 %v645
        %vm722 = vweird.f32 %v715
        %vm723 = vmor %vm721, %vm722
        %v724 = vsel %vm723, %v715, %v720
        %v725 = vrsqrt.pop %v646
        %v726 = vmul.f32 %v725, %v646
        %v727 = vmul.f32 %v726, %v725
        %v728 = vmul.f32 0.5, %v727
        %v729 = vsub.f32 1.5, %v728
        %v730 = vmul.f32 %v725, %v729
        %vm731 = vweird.f32 %v646
        %vm732 = vweird.f32 %v725
        %vm733 = vmor %vm731, %vm732
        %v734 = vsel %vm733, %v725, %v730
        %v735 = vrsqrt.pop %v647
        %v736 = vmul.f32 %v735, %v647
        %v737 = vmul.f32 %v736, %v735
        %v738 = vmul.f32 0.5, %v737
        %v739 = vsub.f32 1.5, %v738
        %v740 = vmul.f32 %v735, %v739
        %vm741 = vweird.f32 %v647
        %vm742 = vweird.f32 %v735
        %vm743 = vmor %vm741, %vm742
        %v744 = vsel %vm743, %v735, %v740
        %v745 = vrsqrt.pop %v648
        %v746 = vmul.f32 %v745, %v648
        %v747 = vmul.f32 %v746, %v745
        %v748 = vmul.f32 0.5, %v747
        %v749 = vsub.f32 1.5, %v748
        %v750 = vmul.f32 %v745, %v749
        %vm751 = vweird.f32 %v648
        %vm752 = vweird.f32 %v745
        %vm753 = vmor %vm751, %vm752
        %v754 = vsel %vm753, %v745, %v750
        %v755 = vrsqrt.pop %v649
        %v756 = vmul.f32 %v755, %v649
        %v757 = vmul.f32 %v756, %v755
        %v758 = vmul.f32 0.5, %v757
        %v759 = vsub.f32 1.5, %v758
        %v760 = vmul.f32 %v755, %v759
        %vm761 = vweird.f32 %v649
        %vm762 = vweird.f32 %v755
        %vm763 = vmor %vm761, %vm762
        %v764 = vsel %vm763, %v755, %v760
        %v765 = vrsqrt.pop %v650
        %v766 = vmul.f32 %v765, %v650
        %v767 = vmul.f32 %v766, %v765
        %v768 = vmul.f32 0.5, %v767
        %v769 = vsub.f32 1.5, %v768
        %v770 = vmul.f32 %v765, %v769
        %vm771 = vweird.f32 %v650
        %vm772 = vweird.f32 %v765
        %vm773 = vmor %vm771, %vm772
        %v774 = vsel %vm773, %v765, %v770
        %v775 = vrsqrt.pop %v651
        %v776 = vmul.f32 %v775, %v651
        %v777 = vmul.f32 %v776, %v775
        %v778 = vmul.f32 0.5, %v777
        %v779 = vsub.f32 1.5, %v778
        %v780 = vmul.f32 %v775, %v779
        %vm781 = vweird.f32 %v651
        %vm782 = vweird.f32 %v775
        %vm783 = vmor %vm781, %vm782
        %v784 = vsel %vm783, %v775, %v780
        %v785 = vrsqrt.pop %v652
        %v786 = vmul.f32 %v785, %v652
        %v787 = vmul.f32 %v786, %v785
        %v788 = vmul.f32 0.5, %v787
        %v789 = vsub.f32 1.5, %v788
        %v790 = vmul.f32 %v785, %v789
        %vm791 = vweird.f32 %v652
        %vm792 = vweird.f32 %v785
        %vm793 = vmor %vm791, %vm792
        %v794 = vsel %vm793, %v785, %v790
        %v795 = vrsqrt.pop %v653
        %v796 = vmul.f32 %v795, %v653
        %v797 = vmul.f32 %v796, %v795
        %v798 = vmul.f32 0.5, %v797
        %v799 = vsub.f32 1.5, %v798
        %v800 = vmul.f32 %v795, %v799
        %vm801 = vweird.f32 %v653
        %vm802 = vweird.f32 %v795
        %vm803 = vmor %vm801, %vm802
        %v804 = vsel %vm803, %v795, %v800
        %v805 = vrsqrt.pop %v654
        %v806 = vmul.f32 %v805, %v654
        %v807 = vmul.f32 %v806, %v805
        %v808 = vmul.f32 0.5, %v807
        %v809 = vsub.f32 1.5, %v808
        %v810 = vmul.f32 %v805, %v809
        %vm811 = vweird.f32 %v654
        %vm812 = vweird.f32 %v805
        %vm813 = vmor %vm811, %vm812
        %v814 = vsel %vm813, %v805, %v810
        %v815 = vmul.f32 %v543, %v664
        %v816 = vmul.f32 %v544, %v674
        %v817 = vmul.f32 %v545, %v684
        %v818 = vmul.f32 %v546, %v694
        %v819 = vmul.f32 %v547, %v704
        %v820 = vmul.f32 %v548, %v714
        %v821 = vmul.f32 %v549, %v724
        %v822 = vmul.f32 %v550, %v734
        %v823 = vmul.f32 %v551, %v744
        %v824 = vmul.f32 %v552, %v754
        %v825 = vmul.f32 %v553, %v764
        %v826 = vmul.f32 %v554, %v774
        %v827 = vmul.f32 %v555, %v784
        %v828 = vmul.f32 %v556, %v794
        %v829 = vmul.f32 %v557, %v804
        %v830 = vmul.f32 %v558, %v814
        %v831 = vperm.slane %v470, 0
        %v832 = vmul.f32 %v815, %v831
        %v833 = vmul.f32 %v816, %v831
        %v834 = vmul.f32 %v817, %v831
        %v835 = vmul.f32 %v818, %v831
        %v836 = vmul.f32 %v819, %v831
        %v837 = vmul.f32 %v820, %v831
        %v838 = vmul.f32 %v821, %v831
        %v839 = vmul.f32 %v822, %v831
        %v840 = vmul.f32 %v823, %v831
        %v841 = vmul.f32 %v824, %v831
        %v842 = vmul.f32 %v825, %v831
        %v843 = vmul.f32 %v826, %v831
        %v844 = vmul.f32 %v827, %v831
        %v845 = vmul.f32 %v828, %v831
        %v846 = vmul.f32 %v829, %v831
        %v847 = vmul.f32 %v830, %v831
        %v848 = vperm.slane %v470, 1
        %v849 = vadd.f32 %v832, %v848
        %v850 = vadd.f32 %v833, %v848
        %v851 = vadd.f32 %v834, %v848
        %v852 = vadd.f32 %v835, %v848
        %v853 = vadd.f32 %v836, %v848
        %v854 = vadd.f32 %v837, %v848
        %v855 = vadd.f32 %v838, %v848
        %v856 = vadd.f32 %v839, %v848
        %v857 = vadd.f32 %v840, %v848
        %v858 = vadd.f32 %v841, %v848
        %v859 = vadd.f32 %v842, %v848
        %v860 = vadd.f32 %v843, %v848
        %v861 = vadd.f32 %v844, %v848
        %v862 = vadd.f32 %v845, %v848
        %v863 = vadd.f32 %v846, %v848
        %v864 = vadd.f32 %v847, %v848
        %v865 = vpack.c.bf16 %v850, %v849
        %v866 = vpack.c.bf16 %v852, %v851
        %v867 = vpack.c.bf16 %v854, %v853
        %v868 = vpack.c.bf16 %v856, %v855
        %v869 = vpack.c.bf16 %v858, %v857
        %v870 = vpack.c.bf16 %v860, %v859
        %v871 = vpack.c.bf16 %v862, %v861
        %v872 = vpack.c.bf16 %v864, %v863
        %v873 = vld [vmem:[%s399] sm:$0xf]
        %v874 = vld [vmem:[%s399 + $0x4] sm:$0xf]
        %v875 = vld [vmem:[%s399 + $0x8] sm:$0xf]
        %v876 = vld [vmem:[%s399 + $0xc] sm:$0xf]
        %v881 = vunpack.c.l.b16 %v873
        %v882 = vunpack.c.l.b16 %v874
        %v883 = vunpack.c.l.b16 %v875
        %v884 = vunpack.c.l.b16 %v876
        %v885 = vpack.c.b16 %v882, %v881
        %v886 = vpack.c.b16 %v884, %v883
        %v890 = vsel %vm471, %v865, 0
        %v893 = vsel %vm471, %v866, 0
        %v896 = vsel %vm471, %v867, 0
        %v899 = vsel %vm471, %v868, 0
        %v902 = vsel %vm471, %v869, 0
        %v905 = vsel %vm471, %v870, 0
        %v908 = vsel %vm471, %v871, 0
        %v911 = vsel %vm471, %v872, 0
        %913 = vmatpush.bf16.msra.mxu0 0
        %914 = vmatpush.bf16.msra.mxu0 0
        %915 = vmatpush.bf16.msra.mxu0 0
        %916 = vmatpush.bf16.msra.mxu0 0
        %917 = vmatpush.bf16.msra.mxu0 0
        %918 = vmatpush.bf16.msra.mxu0 0
        %919 = vmatpush.bf16.msra.mxu0 %v886
        %920 = vmatpush.bf16.msra.mxu0 %v885
        %921 = vmatmul.bf16.gmra.mxu0 %v890
        %v922 = vpop.f32.mrf.mxu0
        %v923 = vadd.f32 0.0, %v922
        %v924 = vpop.f32.mrf.mxu0
        %v925 = vadd.f32 0.0, %v924
        %926 = vmatmul.bf16.gmra.mxu0 %v893
        %v927 = vpop.f32.mrf.mxu0
        %v928 = vadd.f32 0.0, %v927
        %v929 = vpop.f32.mrf.mxu0
        %v930 = vadd.f32 0.0, %v929
        %931 = vmatmul.bf16.gmra.mxu0 %v896
        %v932 = vpop.f32.mrf.mxu0
        %v933 = vadd.f32 0.0, %v932
        %v934 = vpop.f32.mrf.mxu0
        %v935 = vadd.f32 0.0, %v934
        %936 = vmatmul.bf16.gmra.mxu0 %v899
        %v937 = vpop.f32.mrf.mxu0
        %v938 = vadd.f32 0.0, %v937
        %v939 = vpop.f32.mrf.mxu0
        %v940 = vadd.f32 0.0, %v939
        %941 = vmatmul.bf16.gmra.mxu0 %v902
        %v942 = vpop.f32.mrf.mxu0
        %v943 = vadd.f32 0.0, %v942
        %v944 = vpop.f32.mrf.mxu0
        %v945 = vadd.f32 0.0, %v944
        %946 = vmatmul.bf16.gmra.mxu0 %v905
        %v947 = vpop.f32.mrf.mxu0
        %v948 = vadd.f32 0.0, %v947
        %v949 = vpop.f32.mrf.mxu0
        %v950 = vadd.f32 0.0, %v949
        %951 = vmatmul.bf16.gmra.mxu0 %v908
        %v952 = vpop.f32.mrf.mxu0
        %v953 = vadd.f32 0.0, %v952
        %v954 = vpop.f32.mrf.mxu0
        %v955 = vadd.f32 0.0, %v954
        %956 = vmatmul.bf16.gmra.mxu0 %v911
        %v957 = vpop.f32.mrf.mxu0
        %v958 = vadd.f32 0.0, %v957
        %v959 = vpop.f32.mrf.mxu0
        %v960 = vadd.f32 0.0, %v959
        %961 = vdwg.mxu0
        %v962 = vpack.c.bf16 %v923, %v923
        %v963 = vpack.c.bf16 %v925, %v925
        %v964 = vpack.c.bf16 %v928, %v928
        %v965 = vpack.c.bf16 %v930, %v930
        %v966 = vpack.c.bf16 %v933, %v933
        %v967 = vpack.c.bf16 %v935, %v935
        %v968 = vpack.c.bf16 %v938, %v938
        %v969 = vpack.c.bf16 %v940, %v940
        %v970 = vpack.c.bf16 %v943, %v943
        %v971 = vpack.c.bf16 %v945, %v945
        %v972 = vpack.c.bf16 %v948, %v948
        %v973 = vpack.c.bf16 %v950, %v950
        %v974 = vpack.c.bf16 %v953, %v953
        %v975 = vpack.c.bf16 %v955, %v955
        %v976 = vpack.c.bf16 %v958, %v958
        %v977 = vpack.c.bf16 %v960, %v960
        %994 = vrot.lane.b32.xlu0 %v962, 120
        %v995 = vpop.permute.xlu0 %994
        %996 = vrot.lane.b32.xlu0 %v963, 120
        %v997 = vpop.permute.xlu0 %996
        %998 = vrot.lane.b32.xlu0 %v964, 120
        %v999 = vpop.permute.xlu0 %998
        %1000 = vrot.lane.b32.xlu0 %v965, 120
        %v1001 = vpop.permute.xlu0 %1000
        %1002 = vrot.lane.b32.xlu0 %v966, 120
        %v1003 = vpop.permute.xlu0 %1002
        %1004 = vrot.lane.b32.xlu0 %v967, 120
        %v1005 = vpop.permute.xlu0 %1004
        %1006 = vrot.lane.b32.xlu0 %v968, 120
        %v1007 = vpop.permute.xlu0 %1006
        %1008 = vrot.lane.b32.xlu0 %v969, 120
        %v1009 = vpop.permute.xlu0 %1008
        %1010 = vrot.lane.b32.xlu0 %v970, 120
        %v1011 = vpop.permute.xlu0 %1010
        %1012 = vrot.lane.b32.xlu0 %v971, 120
        %v1013 = vpop.permute.xlu0 %1012
        %1014 = vrot.lane.b32.xlu0 %v972, 120
        %v1015 = vpop.permute.xlu0 %1014
        %1016 = vrot.lane.b32.xlu0 %v973, 120
        %v1017 = vpop.permute.xlu0 %1016
        %1018 = vrot.lane.b32.xlu0 %v974, 120
        %v1019 = vpop.permute.xlu0 %1018
        %1020 = vrot.lane.b32.xlu0 %v975, 120
        %v1021 = vpop.permute.xlu0 %1020
        %1022 = vrot.lane.b32.xlu0 %v976, 120
        %v1023 = vpop.permute.xlu0 %1022
        %1024 = vrot.lane.b32.xlu0 %v977, 120
        %v1025 = vpop.permute.xlu0 %1024
        %1026 = vrot.lane.b32.xlu0 %v962, 112
        %v1027 = vpop.permute.xlu0 %1026
        %1028 = vrot.lane.b32.xlu0 %v963, 112
        %v1029 = vpop.permute.xlu0 %1028
        %1030 = vrot.lane.b32.xlu0 %v964, 112
        %v1031 = vpop.permute.xlu0 %1030
        %1032 = vrot.lane.b32.xlu0 %v965, 112
        %v1033 = vpop.permute.xlu0 %1032
        %1034 = vrot.lane.b32.xlu0 %v966, 112
        %v1035 = vpop.permute.xlu0 %1034
        %1036 = vrot.lane.b32.xlu0 %v967, 112
        %v1037 = vpop.permute.xlu0 %1036
        %1038 = vrot.lane.b32.xlu0 %v968, 112
        %v1039 = vpop.permute.xlu0 %1038
        %1040 = vrot.lane.b32.xlu0 %v969, 112
        %v1041 = vpop.permute.xlu0 %1040
        %1042 = vrot.lane.b32.xlu0 %v970, 112
        %v1043 = vpop.permute.xlu0 %1042
        %1044 = vrot.lane.b32.xlu0 %v971, 112
        %v1045 = vpop.permute.xlu0 %1044
        %1046 = vrot.lane.b32.xlu0 %v972, 112
        %v1047 = vpop.permute.xlu0 %1046
        %1048 = vrot.lane.b32.xlu0 %v973, 112
        %v1049 = vpop.permute.xlu0 %1048
        %1050 = vrot.lane.b32.xlu0 %v974, 112
        %v1051 = vpop.permute.xlu0 %1050
        %1052 = vrot.lane.b32.xlu0 %v975, 112
        %v1053 = vpop.permute.xlu0 %1052
        %1054 = vrot.lane.b32.xlu0 %v976, 112
        %v1055 = vpop.permute.xlu0 %1054
        %1056 = vrot.lane.b32.xlu0 %v977, 112
        %v1057 = vpop.permute.xlu0 %1056
        %1058 = vrot.lane.b32.xlu0 %v962, 104
        %v1059 = vpop.permute.xlu0 %1058
        %1060 = vrot.lane.b32.xlu0 %v963, 104
        %v1061 = vpop.permute.xlu0 %1060
        %1062 = vrot.lane.b32.xlu0 %v964, 104
        %v1063 = vpop.permute.xlu0 %1062
        %1064 = vrot.lane.b32.xlu0 %v965, 104
        %v1065 = vpop.permute.xlu0 %1064
        %1066 = vrot.lane.b32.xlu0 %v966, 104
        %v1067 = vpop.permute.xlu0 %1066
        %1068 = vrot.lane.b32.xlu0 %v967, 104
        %v1069 = vpop.permute.xlu0 %1068
        %1070 = vrot.lane.b32.xlu0 %v968, 104
        %v1071 = vpop.permute.xlu0 %1070
        %1072 = vrot.lane.b32.xlu0 %v969, 104
        %v1073 = vpop.permute.xlu0 %1072
        %1074 = vrot.lane.b32.xlu0 %v970, 104
        %v1075 = vpop.permute.xlu0 %1074
        %1076 = vrot.lane.b32.xlu0 %v971, 104
        %v1077 = vpop.permute.xlu0 %1076
        %1078 = vrot.lane.b32.xlu0 %v972, 104
        %v1079 = vpop.permute.xlu0 %1078
        %1080 = vrot.lane.b32.xlu0 %v973, 104
        %v1081 = vpop.permute.xlu0 %1080
        %1082 = vrot.lane.b32.xlu0 %v974, 104
        %v1083 = vpop.permute.xlu0 %1082
        %1084 = vrot.lane.b32.xlu0 %v975, 104
        %v1085 = vpop.permute.xlu0 %1084
        %1086 = vrot.lane.b32.xlu0 %v976, 104
        %v1087 = vpop.permute.xlu0 %1086
        %1088 = vrot.lane.b32.xlu0 %v977, 104
        %v1089 = vpop.permute.xlu0 %1088
        %v1090 = vunpack.c.l.b16 %v962
        %v1091 = vpack.c.b16 %v1090, %v1090
        %1092 = vrot.lane.b32.xlu0 %v1091, 96
        %v1093 = vpop.permute.xlu0 %1092
        %vm1094 = vcmask 64512
        %v1096 = vsel %vm1094, %v962, 0
        %v1099 = vsel %vm1094, %v1093, 0
        %1101 = vmatpush.bf16.xpose.msra.mxu0 0
        %1102 = vmatpush.bf16.xpose.msra.mxu0 0
        %1103 = vmatpush.bf16.xpose.msra.mxu0 0
        %1104 = vmatpush.bf16.xpose.msra.mxu0 0
        %1105 = vmatpush.bf16.xpose.msra.mxu0 0
        %1106 = vmatpush.bf16.xpose.msra.mxu0 0
        %1107 = vmatpush.bf16.xpose.msra.mxu0 0
        %1108 = vmatpush.bf16.xpose.msra.mxu0 %v1099
        %1109 = vmatmul.bf16.gmra.mxu0 %v1096
        %v1110 = vpop.f32.mrf.mxu0
        %v1111 = vadd.f32 0.0, %v1110
        %v1112 = vpop.f32.mrf.mxu0
        %1113 = vdwg.mxu0
        %v1114 = vunpack.c.l.b16 %v963
        %v1115 = vpack.c.b16 %v1114, %v1114
        %1116 = vrot.lane.b32.xlu0 %v1115, 96
        %v1117 = vpop.permute.xlu0 %1116
        %v1119 = vsel %vm1094, %v963, 0
        %v1122 = vsel %vm1094, %v1117, 0
        %1124 = vmatpush.bf16.xpose.msra.mxu0 0
        %1125 = vmatpush.bf16.xpose.msra.mxu0 0
        %1126 = vmatpush.bf16.xpose.msra.mxu0 0
        %1127 = vmatpush.bf16.xpose.msra.mxu0 0
        %1128 = vmatpush.bf16.xpose.msra.mxu0 0
        %1129 = vmatpush.bf16.xpose.msra.mxu0 0
        %1130 = vmatpush.bf16.xpose.msra.mxu0 0
        %1131 = vmatpush.bf16.xpose.msra.mxu0 %v1122
        %1132 = vmatmul.bf16.gmra.mxu0 %v1119
        %v1133 = vpop.f32.mrf.mxu0
        %v1134 = vadd.f32 0.0, %v1133
        %v1135 = vpop.f32.mrf.mxu0
        %1136 = vdwg.mxu0
        %v1137 = vunpack.c.l.b16 %v964
        %v1138 = vpack.c.b16 %v1137, %v1137
        %1139 = vrot.lane.b32.xlu0 %v1138, 96
        %v1140 = vpop.permute.xlu0 %1139
        %v1142 = vsel %vm1094, %v964, 0
        %v1145 = vsel %vm1094, %v1140, 0
        %1147 = vmatpush.bf16.xpose.msra.mxu0 0
        %1148 = vmatpush.bf16.xpose.msra.mxu0 0
        %1149 = vmatpush.bf16.xpose.msra.mxu0 0
        %1150 = vmatpush.bf16.xpose.msra.mxu0 0
        %1151 = vmatpush.bf16.xpose.msra.mxu0 0
        %1152 = vmatpush.bf16.xpose.msra.mxu0 0
        %1153 = vmatpush.bf16.xpose.msra.mxu0 0
        %1154 = vmatpush.bf16.xpose.msra.mxu0 %v1145
        %1155 = vmatmul.bf16.gmra.mxu0 %v1142
        %v1156 = vpop.f32.mrf.mxu0
        %v1157 = vadd.f32 0.0, %v1156
        %v1158 = vpop.f32.mrf.mxu0
        %1159 = vdwg.mxu0
        %v1160 = vunpack.c.l.b16 %v965
        %v1161 = vpack.c.b16 %v1160, %v1160
        %1162 = vrot.lane.b32.xlu0 %v1161, 96
        %v1163 = vpop.permute.xlu0 %1162
        %v1165 = vsel %vm1094, %v965, 0
        %v1168 = vsel %vm1094, %v1163, 0
        %1170 = vmatpush.bf16.xpose.msra.mxu0 0
        %1171 = vmatpush.bf16.xpose.msra.mxu0 0
        %1172 = vmatpush.bf16.xpose.msra.mxu0 0
        %1173 = vmatpush.bf16.xpose.msra.mxu0 0
        %1174 = vmatpush.bf16.xpose.msra.mxu0 0
        %1175 = vmatpush.bf16.xpose.msra.mxu0 0
        %1176 = vmatpush.bf16.xpose.msra.mxu0 0
        %1177 = vmatpush.bf16.xpose.msra.mxu0 %v1168
        %1178 = vmatmul.bf16.gmra.mxu0 %v1165
        %v1179 = vpop.f32.mrf.mxu0
        %v1180 = vadd.f32 0.0, %v1179
        %v1181 = vpop.f32.mrf.mxu0
        %1182 = vdwg.mxu0
        %v1183 = vunpack.c.l.b16 %v966
        %v1184 = vpack.c.b16 %v1183, %v1183
        %1185 = vrot.lane.b32.xlu0 %v1184, 96
        %v1186 = vpop.permute.xlu0 %1185
        %v1188 = vsel %vm1094, %v966, 0
        %v1191 = vsel %vm1094, %v1186, 0
        %1193 = vmatpush.bf16.xpose.msra.mxu0 0
        %1194 = vmatpush.bf16.xpose.msra.mxu0 0
        %1195 = vmatpush.bf16.xpose.msra.mxu0 0
        %1196 = vmatpush.bf16.xpose.msra.mxu0 0
        %1197 = vmatpush.bf16.xpose.msra.mxu0 0
        %1198 = vmatpush.bf16.xpose.msra.mxu0 0
        %1199 = vmatpush.bf16.xpose.msra.mxu0 0
        %1200 = vmatpush.bf16.xpose.msra.mxu0 %v1191
        %1201 = vmatmul.bf16.gmra.mxu0 %v1188
        %v1202 = vpop.f32.mrf.mxu0
        %v1203 = vadd.f32 0.0, %v1202
        %v1204 = vpop.f32.mrf.mxu0
        %1205 = vdwg.mxu0
        %v1206 = vunpack.c.l.b16 %v967
        %v1207 = vpack.c.b16 %v1206, %v1206
        %1208 = vrot.lane.b32.xlu0 %v1207, 96
        %v1209 = vpop.permute.xlu0 %1208
        %v1211 = vsel %vm1094, %v967, 0
        %v1214 = vsel %vm1094, %v1209, 0
        %1216 = vmatpush.bf16.xpose.msra.mxu0 0
        %1217 = vmatpush.bf16.xpose.msra.mxu0 0
        %1218 = vmatpush.bf16.xpose.msra.mxu0 0
        %1219 = vmatpush.bf16.xpose.msra.mxu0 0
        %1220 = vmatpush.bf16.xpose.msra.mxu0 0
        %1221 = vmatpush.bf16.xpose.msra.mxu0 0
        %1222 = vmatpush.bf16.xpose.msra.mxu0 0
        %1223 = vmatpush.bf16.xpose.msra.mxu0 %v1214
        %1224 = vmatmul.bf16.gmra.mxu0 %v1211
        %v1225 = vpop.f32.mrf.mxu0
        %v1226 = vadd.f32 0.0, %v1225
        %v1227 = vpop.f32.mrf.mxu0
        %1228 = vdwg.mxu0
        %v1229 = vunpack.c.l.b16 %v968
        %v1230 = vpack.c.b16 %v1229, %v1229
        %1231 = vrot.lane.b32.xlu0 %v1230, 96
        %v1232 = vpop.permute.xlu0 %1231
        %v1234 = vsel %vm1094, %v968, 0
        %v1237 = vsel %vm1094, %v1232, 0
        %1239 = vmatpush.bf16.xpose.msra.mxu0 0
        %1240 = vmatpush.bf16.xpose.msra.mxu0 0
        %1241 = vmatpush.bf16.xpose.msra.mxu0 0
        %1242 = vmatpush.bf16.xpose.msra.mxu0 0
        %1243 = vmatpush.bf16.xpose.msra.mxu0 0
        %1244 = vmatpush.bf16.xpose.msra.mxu0 0
        %1245 = vmatpush.bf16.xpose.msra.mxu0 0
        %1246 = vmatpush.bf16.xpose.msra.mxu0 %v1237
        %1247 = vmatmul.bf16.gmra.mxu0 %v1234
        %v1248 = vpop.f32.mrf.mxu0
        %v1249 = vadd.f32 0.0, %v1248
        %v1250 = vpop.f32.mrf.mxu0
        %1251 = vdwg.mxu0
        %v1252 = vunpack.c.l.b16 %v969
        %v1253 = vpack.c.b16 %v1252, %v1252
        %1254 = vrot.lane.b32.xlu0 %v1253, 96
        %v1255 = vpop.permute.xlu0 %1254
        %v1257 = vsel %vm1094, %v969, 0
        %v1260 = vsel %vm1094, %v1255, 0
        %1262 = vmatpush.bf16.xpose.msra.mxu0 0
        %1263 = vmatpush.bf16.xpose.msra.mxu0 0
        %1264 = vmatpush.bf16.xpose.msra.mxu0 0
        %1265 = vmatpush.bf16.xpose.msra.mxu0 0
        %1266 = vmatpush.bf16.xpose.msra.mxu0 0
        %1267 = vmatpush.bf16.xpose.msra.mxu0 0
        %1268 = vmatpush.bf16.xpose.msra.mxu0 0
        %1269 = vmatpush.bf16.xpose.msra.mxu0 %v1260
        %1270 = vmatmul.bf16.gmra.mxu0 %v1257
        %v1271 = vpop.f32.mrf.mxu0
        %v1272 = vadd.f32 0.0, %v1271
        %v1273 = vpop.f32.mrf.mxu0
        %1274 = vdwg.mxu0
        %v1275 = vunpack.c.l.b16 %v970
        %v1276 = vpack.c.b16 %v1275, %v1275
        %1277 = vrot.lane.b32.xlu0 %v1276, 96
        %v1278 = vpop.permute.xlu0 %1277
        %v1280 = vsel %vm1094, %v970, 0
        %v1283 = vsel %vm1094, %v1278, 0
        %1285 = vmatpush.bf16.xpose.msra.mxu0 0
        %1286 = vmatpush.bf16.xpose.msra.mxu0 0
        %1287 = vmatpush.bf16.xpose.msra.mxu0 0
        %1288 = vmatpush.bf16.xpose.msra.mxu0 0
        %1289 = vmatpush.bf16.xpose.msra.mxu0 0
        %1290 = vmatpush.bf16.xpose.msra.mxu0 0
        %1291 = vmatpush.bf16.xpose.msra.mxu0 0
        %1292 = vmatpush.bf16.xpose.msra.mxu0 %v1283
        %1293 = vmatmul.bf16.gmra.mxu0 %v1280
        %v1294 = vpop.f32.mrf.mxu0
        %v1295 = vadd.f32 0.0, %v1294
        %v1296 = vpop.f32.mrf.mxu0
        %1297 = vdwg.mxu0
        %v1298 = vunpack.c.l.b16 %v971
        %v1299 = vpack.c.b16 %v1298, %v1298
        %1300 = vrot.lane.b32.xlu0 %v1299, 96
        %v1301 = vpop.permute.xlu0 %1300
        %v1303 = vsel %vm1094, %v971, 0
        %v1306 = vsel %vm1094, %v1301, 0
        %1308 = vmatpush.bf16.xpose.msra.mxu0 0
        %1309 = vmatpush.bf16.xpose.msra.mxu0 0
        %1310 = vmatpush.bf16.xpose.msra.mxu0 0
        %1311 = vmatpush.bf16.xpose.msra.mxu0 0
        %1312 = vmatpush.bf16.xpose.msra.mxu0 0
        %1313 = vmatpush.bf16.xpose.msra.mxu0 0
        %1314 = vmatpush.bf16.xpose.msra.mxu0 0
        %1315 = vmatpush.bf16.xpose.msra.mxu0 %v1306
        %1316 = vmatmul.bf16.gmra.mxu0 %v1303
        %v1317 = vpop.f32.mrf.mxu0
        %v1318 = vadd.f32 0.0, %v1317
        %v1319 = vpop.f32.mrf.mxu0
        %1320 = vdwg.mxu0
        %v1321 = vunpack.c.l.b16 %v972
        %v1322 = vpack.c.b16 %v1321, %v1321
        %1323 = vrot.lane.b32.xlu0 %v1322, 96
        %v1324 = vpop.permute.xlu0 %1323
        %v1326 = vsel %vm1094, %v972, 0
        %v1329 = vsel %vm1094, %v1324, 0
        %1331 = vmatpush.bf16.xpose.msra.mxu0 0
        %1332 = vmatpush.bf16.xpose.msra.mxu0 0
        %1333 = vmatpush.bf16.xpose.msra.mxu0 0
        %1334 = vmatpush.bf16.xpose.msra.mxu0 0
        %1335 = vmatpush.bf16.xpose.msra.mxu0 0
        %1336 = vmatpush.bf16.xpose.msra.mxu0 0
        %1337 = vmatpush.bf16.xpose.msra.mxu0 0
        %1338 = vmatpush.bf16.xpose.msra.mxu0 %v1329
        %1339 = vmatmul.bf16.gmra.mxu0 %v1326
        %v1340 = vpop.f32.mrf.mxu0
        %v1341 = vadd.f32 0.0, %v1340
        %v1342 = vpop.f32.mrf.mxu0
        %1343 = vdwg.mxu0
        %v1344 = vunpack.c.l.b16 %v973
        %v1345 = vpack.c.b16 %v1344, %v1344
        %1346 = vrot.lane.b32.xlu0 %v1345, 96
        %v1347 = vpop.permute.xlu0 %1346
        %v1349 = vsel %vm1094, %v973, 0
        %v1352 = vsel %vm1094, %v1347, 0
        %1354 = vmatpush.bf16.xpose.msra.mxu0 0
        %1355 = vmatpush.bf16.xpose.msra.mxu0 0
        %1356 = vmatpush.bf16.xpose.msra.mxu0 0
        %1357 = vmatpush.bf16.xpose.msra.mxu0 0
        %1358 = vmatpush.bf16.xpose.msra.mxu0 0
        %1359 = vmatpush.bf16.xpose.msra.mxu0 0
        %1360 = vmatpush.bf16.xpose.msra.mxu0 0
        %1361 = vmatpush.bf16.xpose.msra.mxu0 %v1352
        %1362 = vmatmul.bf16.gmra.mxu0 %v1349
        %v1363 = vpop.f32.mrf.mxu0
        %v1364 = vadd.f32 0.0, %v1363
        %v1365 = vpop.f32.mrf.mxu0
        %1366 = vdwg.mxu0
        %v1367 = vunpack.c.l.b16 %v974
        %v1368 = vpack.c.b16 %v1367, %v1367
        %1369 = vrot.lane.b32.xlu0 %v1368, 96
        %v1370 = vpop.permute.xlu0 %1369
        %v1372 = vsel %vm1094, %v974, 0
        %v1375 = vsel %vm1094, %v1370, 0
        %1377 = vmatpush.bf16.xpose.msra.mxu0 0
        %1378 = vmatpush.bf16.xpose.msra.mxu0 0
        %1379 = vmatpush.bf16.xpose.msra.mxu0 0
        %1380 = vmatpush.bf16.xpose.msra.mxu0 0
        %1381 = vmatpush.bf16.xpose.msra.mxu0 0
        %1382 = vmatpush.bf16.xpose.msra.mxu0 0
        %1383 = vmatpush.bf16.xpose.msra.mxu0 0
        %1384 = vmatpush.bf16.xpose.msra.mxu0 %v1375
        %1385 = vmatmul.bf16.gmra.mxu0 %v1372
        %v1386 = vpop.f32.mrf.mxu0
        %v1387 = vadd.f32 0.0, %v1386
        %v1388 = vpop.f32.mrf.mxu0
        %1389 = vdwg.mxu0
        %v1390 = vunpack.c.l.b16 %v975
        %v1391 = vpack.c.b16 %v1390, %v1390
        %1392 = vrot.lane.b32.xlu0 %v1391, 96
        %v1393 = vpop.permute.xlu0 %1392
        %v1395 = vsel %vm1094, %v975, 0
        %v1398 = vsel %vm1094, %v1393, 0
        %1400 = vmatpush.bf16.xpose.msra.mxu0 0
        %1401 = vmatpush.bf16.xpose.msra.mxu0 0
        %1402 = vmatpush.bf16.xpose.msra.mxu0 0
        %1403 = vmatpush.bf16.xpose.msra.mxu0 0
        %1404 = vmatpush.bf16.xpose.msra.mxu0 0
        %1405 = vmatpush.bf16.xpose.msra.mxu0 0
        %1406 = vmatpush.bf16.xpose.msra.mxu0 0
        %1407 = vmatpush.bf16.xpose.msra.mxu0 %v1398
        %1408 = vmatmul.bf16.gmra.mxu0 %v1395
        %v1409 = vpop.f32.mrf.mxu0
        %v1410 = vadd.f32 0.0, %v1409
        %v1411 = vpop.f32.mrf.mxu0
        %1412 = vdwg.mxu0
        %v1413 = vunpack.c.l.b16 %v976
        %v1414 = vpack.c.b16 %v1413, %v1413
        %1415 = vrot.lane.b32.xlu0 %v1414, 96
        %v1416 = vpop.permute.xlu0 %1415
        %v1418 = vsel %vm1094, %v976, 0
        %v1421 = vsel %vm1094, %v1416, 0
        %1423 = vmatpush.bf16.xpose.msra.mxu0 0
        %1424 = vmatpush.bf16.xpose.msra.mxu0 0
        %1425 = vmatpush.bf16.xpose.msra.mxu0 0
        %1426 = vmatpush.bf16.xpose.msra.mxu0 0
        %1427 = vmatpush.bf16.xpose.msra.mxu0 0
        %1428 = vmatpush.bf16.xpose.msra.mxu0 0
        %1429 = vmatpush.bf16.xpose.msra.mxu0 0
        %1430 = vmatpush.bf16.xpose.msra.mxu0 %v1421
        %1431 = vmatmul.bf16.gmra.mxu0 %v1418
        %v1432 = vpop.f32.mrf.mxu0
        %v1433 = vadd.f32 0.0, %v1432
        %v1434 = vpop.f32.mrf.mxu0
        %1435 = vdwg.mxu0
        %v1436 = vunpack.c.l.b16 %v977
        %v1437 = vpack.c.b16 %v1436, %v1436
        %1438 = vrot.lane.b32.xlu0 %v1437, 96
        %v1439 = vpop.permute.xlu0 %1438
        %v1441 = vsel %vm1094, %v977, 0
        %v1444 = vsel %vm1094, %v1439, 0
        %1446 = vmatpush.bf16.xpose.msra.mxu0 0
        %1447 = vmatpush.bf16.xpose.msra.mxu0 0
        %1448 = vmatpush.bf16.xpose.msra.mxu0 0
        %1449 = vmatpush.bf16.xpose.msra.mxu0 0
        %1450 = vmatpush.bf16.xpose.msra.mxu0 0
        %1451 = vmatpush.bf16.xpose.msra.mxu0 0
        %1452 = vmatpush.bf16.xpose.msra.mxu0 0
        %1453 = vmatpush.bf16.xpose.msra.mxu0 %v1444
        %1454 = vmatmul.bf16.gmra.mxu0 %v1441
        %v1455 = vpop.f32.mrf.mxu0
        %v1456 = vadd.f32 0.0, %v1455
        %v1457 = vpop.f32.mrf.mxu0
        %1458 = vdwg.mxu0
        %v1459 = vunpack.c.l.b16 %v995
        %v1460 = vpack.c.b16 %v1459, %v1459
        %1461 = vrot.lane.b32.xlu0 %v1460, 96
        %v1462 = vpop.permute.xlu0 %1461
        %v1464 = vsel %vm1094, %v995, 0
        %v1467 = vsel %vm1094, %v1462, 0
        %1469 = vmatpush.bf16.xpose.msra.mxu0 0
        %1470 = vmatpush.bf16.xpose.msra.mxu0 0
        %1471 = vmatpush.bf16.xpose.msra.mxu0 0
        %1472 = vmatpush.bf16.xpose.msra.mxu0 0
        %1473 = vmatpush.bf16.xpose.msra.mxu0 0
        %1474 = vmatpush.bf16.xpose.msra.mxu0 0
        %1475 = vmatpush.bf16.xpose.msra.mxu0 0
        %1476 = vmatpush.bf16.xpose.msra.mxu0 %v1467
        %1477 = vmatmul.bf16.gmra.mxu0 %v1464
        %v1478 = vpop.f32.mrf.mxu0
        %v1479 = vadd.f32 0.0, %v1478
        %v1480 = vpop.f32.mrf.mxu0
        %1481 = vdwg.mxu0
        %v1482 = vunpack.c.l.b16 %v997
        %v1483 = vpack.c.b16 %v1482, %v1482
        %1484 = vrot.lane.b32.xlu0 %v1483, 96
        %v1485 = vpop.permute.xlu0 %1484
        %v1487 = vsel %vm1094, %v997, 0
        %v1490 = vsel %vm1094, %v1485, 0
        %1492 = vmatpush.bf16.xpose.msra.mxu0 0
        %1493 = vmatpush.bf16.xpose.msra.mxu0 0
        %1494 = vmatpush.bf16.xpose.msra.mxu0 0
        %1495 = vmatpush.bf16.xpose.msra.mxu0 0
        %1496 = vmatpush.bf16.xpose.msra.mxu0 0
        %1497 = vmatpush.bf16.xpose.msra.mxu0 0
        %1498 = vmatpush.bf16.xpose.msra.mxu0 0
        %1499 = vmatpush.bf16.xpose.msra.mxu0 %v1490
        %1500 = vmatmul.bf16.gmra.mxu0 %v1487
        %v1501 = vpop.f32.mrf.mxu0
        %v1502 = vadd.f32 0.0, %v1501
        %v1503 = vpop.f32.mrf.mxu0
        %1504 = vdwg.mxu0
        %v1505 = vunpack.c.l.b16 %v999
        %v1506 = vpack.c.b16 %v1505, %v1505
        %1507 = vrot.lane.b32.xlu0 %v1506, 96
        %v1508 = vpop.permute.xlu0 %1507
        %v1510 = vsel %vm1094, %v999, 0
        %v1513 = vsel %vm1094, %v1508, 0
        %1515 = vmatpush.bf16.xpose.msra.mxu0 0
        %1516 = vmatpush.bf16.xpose.msra.mxu0 0
        %1517 = vmatpush.bf16.xpose.msra.mxu0 0
        %1518 = vmatpush.bf16.xpose.msra.mxu0 0
        %1519 = vmatpush.bf16.xpose.msra.mxu0 0
        %1520 = vmatpush.bf16.xpose.msra.mxu0 0
        %1521 = vmatpush.bf16.xpose.msra.mxu0 0
        %1522 = vmatpush.bf16.xpose.msra.mxu0 %v1513
        %1523 = vmatmul.bf16.gmra.mxu0 %v1510
        %v1524 = vpop.f32.mrf.mxu0
        %v1525 = vadd.f32 0.0, %v1524
        %v1526 = vpop.f32.mrf.mxu0
        %1527 = vdwg.mxu0
        %v1528 = vunpack.c.l.b16 %v1001
        %v1529 = vpack.c.b16 %v1528, %v1528
        %1530 = vrot.lane.b32.xlu0 %v1529, 96
        %v1531 = vpop.permute.xlu0 %1530
        %v1533 = vsel %vm1094, %v1001, 0
        %v1536 = vsel %vm1094, %v1531, 0
        %1538 = vmatpush.bf16.xpose.msra.mxu0 0
        %1539 = vmatpush.bf16.xpose.msra.mxu0 0
        %1540 = vmatpush.bf16.xpose.msra.mxu0 0
        %1541 = vmatpush.bf16.xpose.msra.mxu0 0
        %1542 = vmatpush.bf16.xpose.msra.mxu0 0
        %1543 = vmatpush.bf16.xpose.msra.mxu0 0
        %1544 = vmatpush.bf16.xpose.msra.mxu0 0
        %1545 = vmatpush.bf16.xpose.msra.mxu0 %v1536
        %1546 = vmatmul.bf16.gmra.mxu0 %v1533
        %v1547 = vpop.f32.mrf.mxu0
        %v1548 = vadd.f32 0.0, %v1547
        %v1549 = vpop.f32.mrf.mxu0
        %1550 = vdwg.mxu0
        %v1551 = vunpack.c.l.b16 %v1003
        %v1552 = vpack.c.b16 %v1551, %v1551
        %1553 = vrot.lane.b32.xlu0 %v1552, 96
        %v1554 = vpop.permute.xlu0 %1553
        %v1556 = vsel %vm1094, %v1003, 0
        %v1559 = vsel %vm1094, %v1554, 0
        %1561 = vmatpush.bf16.xpose.msra.mxu0 0
        %1562 = vmatpush.bf16.xpose.msra.mxu0 0
        %1563 = vmatpush.bf16.xpose.msra.mxu0 0
        %1564 = vmatpush.bf16.xpose.msra.mxu0 0
        %1565 = vmatpush.bf16.xpose.msra.mxu0 0
        %1566 = vmatpush.bf16.xpose.msra.mxu0 0
        %1567 = vmatpush.bf16.xpose.msra.mxu0 0
        %1568 = vmatpush.bf16.xpose.msra.mxu0 %v1559
        %1569 = vmatmul.bf16.gmra.mxu0 %v1556
        %v1570 = vpop.f32.mrf.mxu0
        %v1571 = vadd.f32 0.0, %v1570
        %v1572 = vpop.f32.mrf.mxu0
        %1573 = vdwg.mxu0
        %v1574 = vunpack.c.l.b16 %v1005
        %v1575 = vpack.c.b16 %v1574, %v1574
        %1576 = vrot.lane.b32.xlu0 %v1575, 96
        %v1577 = vpop.permute.xlu0 %1576
        %v1579 = vsel %vm1094, %v1005, 0
        %v1582 = vsel %vm1094, %v1577, 0
        %1584 = vmatpush.bf16.xpose.msra.mxu0 0
        %1585 = vmatpush.bf16.xpose.msra.mxu0 0
        %1586 = vmatpush.bf16.xpose.msra.mxu0 0
        %1587 = vmatpush.bf16.xpose.msra.mxu0 0
        %1588 = vmatpush.bf16.xpose.msra.mxu0 0
        %1589 = vmatpush.bf16.xpose.msra.mxu0 0
        %1590 = vmatpush.bf16.xpose.msra.mxu0 0
        %1591 = vmatpush.bf16.xpose.msra.mxu0 %v1582
        %1592 = vmatmul.bf16.gmra.mxu0 %v1579
        %v1593 = vpop.f32.mrf.mxu0
        %v1594 = vadd.f32 0.0, %v1593
        %v1595 = vpop.f32.mrf.mxu0
        %1596 = vdwg.mxu0
        %v1597 = vunpack.c.l.b16 %v1007
        %v1598 = vpack.c.b16 %v1597, %v1597
        %1599 = vrot.lane.b32.xlu0 %v1598, 96
        %v1600 = vpop.permute.xlu0 %1599
        %v1602 = vsel %vm1094, %v1007, 0
        %v1605 = vsel %vm1094, %v1600, 0
        %1607 = vmatpush.bf16.xpose.msra.mxu0 0
        %1608 = vmatpush.bf16.xpose.msra.mxu0 0
        %1609 = vmatpush.bf16.xpose.msra.mxu0 0
        %1610 = vmatpush.bf16.xpose.msra.mxu0 0
        %1611 = vmatpush.bf16.xpose.msra.mxu0 0
        %1612 = vmatpush.bf16.xpose.msra.mxu0 0
        %1613 = vmatpush.bf16.xpose.msra.mxu0 0
        %1614 = vmatpush.bf16.xpose.msra.mxu0 %v1605
        %1615 = vmatmul.bf16.gmra.mxu0 %v1602
        %v1616 = vpop.f32.mrf.mxu0
        %v1617 = vadd.f32 0.0, %v1616
        %v1618 = vpop.f32.mrf.mxu0
        %1619 = vdwg.mxu0
        %v1620 = vunpack.c.l.b16 %v1009
        %v1621 = vpack.c.b16 %v1620, %v1620
        %1622 = vrot.lane.b32.xlu0 %v1621, 96
        %v1623 = vpop.permute.xlu0 %1622
        %v1625 = vsel %vm1094, %v1009, 0
        %v1628 = vsel %vm1094, %v1623, 0
        %1630 = vmatpush.bf16.xpose.msra.mxu0 0
        %1631 = vmatpush.bf16.xpose.msra.mxu0 0
        %1632 = vmatpush.bf16.xpose.msra.mxu0 0
        %1633 = vmatpush.bf16.xpose.msra.mxu0 0
        %1634 = vmatpush.bf16.xpose.msra.mxu0 0
        %1635 = vmatpush.bf16.xpose.msra.mxu0 0
        %1636 = vmatpush.bf16.xpose.msra.mxu0 0
        %1637 = vmatpush.bf16.xpose.msra.mxu0 %v1628
        %1638 = vmatmul.bf16.gmra.mxu0 %v1625
        %v1639 = vpop.f32.mrf.mxu0
        %v1640 = vadd.f32 0.0, %v1639
        %v1641 = vpop.f32.mrf.mxu0
        %1642 = vdwg.mxu0
        %v1643 = vunpack.c.l.b16 %v1011
        %v1644 = vpack.c.b16 %v1643, %v1643
        %1645 = vrot.lane.b32.xlu0 %v1644, 96
        %v1646 = vpop.permute.xlu0 %1645
        %v1648 = vsel %vm1094, %v1011, 0
        %v1651 = vsel %vm1094, %v1646, 0
        %1653 = vmatpush.bf16.xpose.msra.mxu0 0
        %1654 = vmatpush.bf16.xpose.msra.mxu0 0
        %1655 = vmatpush.bf16.xpose.msra.mxu0 0
        %1656 = vmatpush.bf16.xpose.msra.mxu0 0
        %1657 = vmatpush.bf16.xpose.msra.mxu0 0
        %1658 = vmatpush.bf16.xpose.msra.mxu0 0
        %1659 = vmatpush.bf16.xpose.msra.mxu0 0
        %1660 = vmatpush.bf16.xpose.msra.mxu0 %v1651
        %1661 = vmatmul.bf16.gmra.mxu0 %v1648
        %v1662 = vpop.f32.mrf.mxu0
        %v1663 = vadd.f32 0.0, %v1662
        %v1664 = vpop.f32.mrf.mxu0
        %1665 = vdwg.mxu0
        %v1666 = vunpack.c.l.b16 %v1013
        %v1667 = vpack.c.b16 %v1666, %v1666
        %1668 = vrot.lane.b32.xlu0 %v1667, 96
        %v1669 = vpop.permute.xlu0 %1668
        %v1671 = vsel %vm1094, %v1013, 0
        %v1674 = vsel %vm1094, %v1669, 0
        %1676 = vmatpush.bf16.xpose.msra.mxu0 0
        %1677 = vmatpush.bf16.xpose.msra.mxu0 0
        %1678 = vmatpush.bf16.xpose.msra.mxu0 0
        %1679 = vmatpush.bf16.xpose.msra.mxu0 0
        %1680 = vmatpush.bf16.xpose.msra.mxu0 0
        %1681 = vmatpush.bf16.xpose.msra.mxu0 0
        %1682 = vmatpush.bf16.xpose.msra.mxu0 0
        %1683 = vmatpush.bf16.xpose.msra.mxu0 %v1674
        %1684 = vmatmul.bf16.gmra.mxu0 %v1671
        %v1685 = vpop.f32.mrf.mxu0
        %v1686 = vadd.f32 0.0, %v1685
        %v1687 = vpop.f32.mrf.mxu0
        %1688 = vdwg.mxu0
        %v1689 = vunpack.c.l.b16 %v1015
        %v1690 = vpack.c.b16 %v1689, %v1689
        %1691 = vrot.lane.b32.xlu0 %v1690, 96
        %v1692 = vpop.permute.xlu0 %1691
        %v1694 = vsel %vm1094, %v1015, 0
        %v1697 = vsel %vm1094, %v1692, 0
        %1699 = vmatpush.bf16.xpose.msra.mxu0 0
        %1700 = vmatpush.bf16.xpose.msra.mxu0 0
        %1701 = vmatpush.bf16.xpose.msra.mxu0 0
        %1702 = vmatpush.bf16.xpose.msra.mxu0 0
        %1703 = vmatpush.bf16.xpose.msra.mxu0 0
        %1704 = vmatpush.bf16.xpose.msra.mxu0 0
        %1705 = vmatpush.bf16.xpose.msra.mxu0 0
        %1706 = vmatpush.bf16.xpose.msra.mxu0 %v1697
        %1707 = vmatmul.bf16.gmra.mxu0 %v1694
        %v1708 = vpop.f32.mrf.mxu0
        %v1709 = vadd.f32 0.0, %v1708
        %v1710 = vpop.f32.mrf.mxu0
        %1711 = vdwg.mxu0
        %v1712 = vunpack.c.l.b16 %v1017
        %v1713 = vpack.c.b16 %v1712, %v1712
        %1714 = vrot.lane.b32.xlu0 %v1713, 96
        %v1715 = vpop.permute.xlu0 %1714
        %v1717 = vsel %vm1094, %v1017, 0
        %v1720 = vsel %vm1094, %v1715, 0
        %1722 = vmatpush.bf16.xpose.msra.mxu0 0
        %1723 = vmatpush.bf16.xpose.msra.mxu0 0
        %1724 = vmatpush.bf16.xpose.msra.mxu0 0
        %1725 = vmatpush.bf16.xpose.msra.mxu0 0
        %1726 = vmatpush.bf16.xpose.msra.mxu0 0
        %1727 = vmatpush.bf16.xpose.msra.mxu0 0
        %1728 = vmatpush.bf16.xpose.msra.mxu0 0
        %1729 = vmatpush.bf16.xpose.msra.mxu0 %v1720
        %1730 = vmatmul.bf16.gmra.mxu0 %v1717
        %v1731 = vpop.f32.mrf.mxu0
        %v1732 = vadd.f32 0.0, %v1731
        %v1733 = vpop.f32.mrf.mxu0
        %1734 = vdwg.mxu0
        %v1735 = vunpack.c.l.b16 %v1019
        %v1736 = vpack.c.b16 %v1735, %v1735
        %1737 = vrot.lane.b32.xlu0 %v1736, 96
        %v1738 = vpop.permute.xlu0 %1737
        %v1740 = vsel %vm1094, %v1019, 0
        %v1743 = vsel %vm1094, %v1738, 0
        %1745 = vmatpush.bf16.xpose.msra.mxu0 0
        %1746 = vmatpush.bf16.xpose.msra.mxu0 0
        %1747 = vmatpush.bf16.xpose.msra.mxu0 0
        %1748 = vmatpush.bf16.xpose.msra.mxu0 0
        %1749 = vmatpush.bf16.xpose.msra.mxu0 0
        %1750 = vmatpush.bf16.xpose.msra.mxu0 0
        %1751 = vmatpush.bf16.xpose.msra.mxu0 0
        %1752 = vmatpush.bf16.xpose.msra.mxu0 %v1743
        %1753 = vmatmul.bf16.gmra.mxu0 %v1740
        %v1754 = vpop.f32.mrf.mxu0
        %v1755 = vadd.f32 0.0, %v1754
        %v1756 = vpop.f32.mrf.mxu0
        %1757 = vdwg.mxu0
        %v1758 = vunpack.c.l.b16 %v1021
        %v1759 = vpack.c.b16 %v1758, %v1758
        %1760 = vrot.lane.b32.xlu0 %v1759, 96
        %v1761 = vpop.permute.xlu0 %1760
        %v1763 = vsel %vm1094, %v1021, 0
        %v1766 = vsel %vm1094, %v1761, 0
        %1768 = vmatpush.bf16.xpose.msra.mxu0 0
        %1769 = vmatpush.bf16.xpose.msra.mxu0 0
        %1770 = vmatpush.bf16.xpose.msra.mxu0 0
        %1771 = vmatpush.bf16.xpose.msra.mxu0 0
        %1772 = vmatpush.bf16.xpose.msra.mxu0 0
        %1773 = vmatpush.bf16.xpose.msra.mxu0 0
        %1774 = vmatpush.bf16.xpose.msra.mxu0 0
        %1775 = vmatpush.bf16.xpose.msra.mxu0 %v1766
        %1776 = vmatmul.bf16.gmra.mxu0 %v1763
        %v1777 = vpop.f32.mrf.mxu0
        %v1778 = vadd.f32 0.0, %v1777
        %v1779 = vpop.f32.mrf.mxu0
        %1780 = vdwg.mxu0
        %v1781 = vunpack.c.l.b16 %v1023
        %v1782 = vpack.c.b16 %v1781, %v1781
        %1783 = vrot.lane.b32.xlu0 %v1782, 96
        %v1784 = vpop.permute.xlu0 %1783
        %v1786 = vsel %vm1094, %v1023, 0
        %v1789 = vsel %vm1094, %v1784, 0
        %1791 = vmatpush.bf16.xpose.msra.mxu0 0
        %1792 = vmatpush.bf16.xpose.msra.mxu0 0
        %1793 = vmatpush.bf16.xpose.msra.mxu0 0
        %1794 = vmatpush.bf16.xpose.msra.mxu0 0
        %1795 = vmatpush.bf16.xpose.msra.mxu0 0
        %1796 = vmatpush.bf16.xpose.msra.mxu0 0
        %1797 = vmatpush.bf16.xpose.msra.mxu0 0
        %1798 = vmatpush.bf16.xpose.msra.mxu0 %v1789
        %1799 = vmatmul.bf16.gmra.mxu0 %v1786
        %v1800 = vpop.f32.mrf.mxu0
        %v1801 = vadd.f32 0.0, %v1800
        %v1802 = vpop.f32.mrf.mxu0
        %1803 = vdwg.mxu0
        %v1804 = vunpack.c.l.b16 %v1025
        %v1805 = vpack.c.b16 %v1804, %v1804
        %1806 = vrot.lane.b32.xlu0 %v1805, 96
        %v1807 = vpop.permute.xlu0 %1806
        %v1809 = vsel %vm1094, %v1025, 0
        %v1812 = vsel %vm1094, %v1807, 0
        %1814 = vmatpush.bf16.xpose.msra.mxu0 0
        %1815 = vmatpush.bf16.xpose.msra.mxu0 0
        %1816 = vmatpush.bf16.xpose.msra.mxu0 0
        %1817 = vmatpush.bf16.xpose.msra.mxu0 0
        %1818 = vmatpush.bf16.xpose.msra.mxu0 0
        %1819 = vmatpush.bf16.xpose.msra.mxu0 0
        %1820 = vmatpush.bf16.xpose.msra.mxu0 0
        %1821 = vmatpush.bf16.xpose.msra.mxu0 %v1812
        %1822 = vmatmul.bf16.gmra.mxu0 %v1809
        %v1823 = vpop.f32.mrf.mxu0
        %v1824 = vadd.f32 0.0, %v1823
        %v1825 = vpop.f32.mrf.mxu0
        %1826 = vdwg.mxu0
        %v1827 = vunpack.c.l.b16 %v1027
        %v1828 = vpack.c.b16 %v1827, %v1827
        %1829 = vrot.lane.b32.xlu0 %v1828, 96
        %v1830 = vpop.permute.xlu0 %1829
        %v1832 = vsel %vm1094, %v1027, 0
        %v1835 = vsel %vm1094, %v1830, 0
        %1837 = vmatpush.bf16.xpose.msra.mxu0 0
        %1838 = vmatpush.bf16.xpose.msra.mxu0 0
        %1839 = vmatpush.bf16.xpose.msra.mxu0 0
        %1840 = vmatpush.bf16.xpose.msra.mxu0 0
        %1841 = vmatpush.bf16.xpose.msra.mxu0 0
        %1842 = vmatpush.bf16.xpose.msra.mxu0 0
        %1843 = vmatpush.bf16.xpose.msra.mxu0 0
        %1844 = vmatpush.bf16.xpose.msra.mxu0 %v1835
        %1845 = vmatmul.bf16.gmra.mxu0 %v1832
        %v1846 = vpop.f32.mrf.mxu0
        %v1847 = vadd.f32 0.0, %v1846
        %v1848 = vpop.f32.mrf.mxu0
        %1849 = vdwg.mxu0
        %v1850 = vunpack.c.l.b16 %v1029
        %v1851 = vpack.c.b16 %v1850, %v1850
        %1852 = vrot.lane.b32.xlu0 %v1851, 96
        %v1853 = vpop.permute.xlu0 %1852
        %v1855 = vsel %vm1094, %v1029, 0
        %v1858 = vsel %vm1094, %v1853, 0
        %1860 = vmatpush.bf16.xpose.msra.mxu0 0
        %1861 = vmatpush.bf16.xpose.msra.mxu0 0
        %1862 = vmatpush.bf16.xpose.msra.mxu0 0
        %1863 = vmatpush.bf16.xpose.msra.mxu0 0
        %1864 = vmatpush.bf16.xpose.msra.mxu0 0
        %1865 = vmatpush.bf16.xpose.msra.mxu0 0
        %1866 = vmatpush.bf16.xpose.msra.mxu0 0
        %1867 = vmatpush.bf16.xpose.msra.mxu0 %v1858
        %1868 = vmatmul.bf16.gmra.mxu0 %v1855
        %v1869 = vpop.f32.mrf.mxu0
        %v1870 = vadd.f32 0.0, %v1869
        %v1871 = vpop.f32.mrf.mxu0
        %1872 = vdwg.mxu0
        %v1873 = vunpack.c.l.b16 %v1031
        %v1874 = vpack.c.b16 %v1873, %v1873
        %1875 = vrot.lane.b32.xlu0 %v1874, 96
        %v1876 = vpop.permute.xlu0 %1875
        %v1878 = vsel %vm1094, %v1031, 0
        %v1881 = vsel %vm1094, %v1876, 0
        %1883 = vmatpush.bf16.xpose.msra.mxu0 0
        %1884 = vmatpush.bf16.xpose.msra.mxu0 0
        %1885 = vmatpush.bf16.xpose.msra.mxu0 0
        %1886 = vmatpush.bf16.xpose.msra.mxu0 0
        %1887 = vmatpush.bf16.xpose.msra.mxu0 0
        %1888 = vmatpush.bf16.xpose.msra.mxu0 0
        %1889 = vmatpush.bf16.xpose.msra.mxu0 0
        %1890 = vmatpush.bf16.xpose.msra.mxu0 %v1881
        %1891 = vmatmul.bf16.gmra.mxu0 %v1878
        %v1892 = vpop.f32.mrf.mxu0
        %v1893 = vadd.f32 0.0, %v1892
        %v1894 = vpop.f32.mrf.mxu0
        %1895 = vdwg.mxu0
        %v1896 = vunpack.c.l.b16 %v1033
        %v1897 = vpack.c.b16 %v1896, %v1896
        %1898 = vrot.lane.b32.xlu0 %v1897, 96
        %v1899 = vpop.permute.xlu0 %1898
        %v1901 = vsel %vm1094, %v1033, 0
        %v1904 = vsel %vm1094, %v1899, 0
        %1906 = vmatpush.bf16.xpose.msra.mxu0 0
        %1907 = vmatpush.bf16.xpose.msra.mxu0 0
        %1908 = vmatpush.bf16.xpose.msra.mxu0 0
        %1909 = vmatpush.bf16.xpose.msra.mxu0 0
        %1910 = vmatpush.bf16.xpose.msra.mxu0 0
        %1911 = vmatpush.bf16.xpose.msra.mxu0 0
        %1912 = vmatpush.bf16.xpose.msra.mxu0 0
        %1913 = vmatpush.bf16.xpose.msra.mxu0 %v1904
        %1914 = vmatmul.bf16.gmra.mxu0 %v1901
        %v1915 = vpop.f32.mrf.mxu0
        %v1916 = vadd.f32 0.0, %v1915
        %v1917 = vpop.f32.mrf.mxu0
        %1918 = vdwg.mxu0
        %v1919 = vunpack.c.l.b16 %v1035
        %v1920 = vpack.c.b16 %v1919, %v1919
        %1921 = vrot.lane.b32.xlu0 %v1920, 96
        %v1922 = vpop.permute.xlu0 %1921
        %v1924 = vsel %vm1094, %v1035, 0
        %v1927 = vsel %vm1094, %v1922, 0
        %1929 = vmatpush.bf16.xpose.msra.mxu0 0
        %1930 = vmatpush.bf16.xpose.msra.mxu0 0
        %1931 = vmatpush.bf16.xpose.msra.mxu0 0
        %1932 = vmatpush.bf16.xpose.msra.mxu0 0
        %1933 = vmatpush.bf16.xpose.msra.mxu0 0
        %1934 = vmatpush.bf16.xpose.msra.mxu0 0
        %1935 = vmatpush.bf16.xpose.msra.mxu0 0
        %1936 = vmatpush.bf16.xpose.msra.mxu0 %v1927
        %1937 = vmatmul.bf16.gmra.mxu0 %v1924
        %v1938 = vpop.f32.mrf.mxu0
        %v1939 = vadd.f32 0.0, %v1938
        %v1940 = vpop.f32.mrf.mxu0
        %1941 = vdwg.mxu0
        %v1942 = vunpack.c.l.b16 %v1037
        %v1943 = vpack.c.b16 %v1942, %v1942
        %1944 = vrot.lane.b32.xlu0 %v1943, 96
        %v1945 = vpop.permute.xlu0 %1944
        %v1947 = vsel %vm1094, %v1037, 0
        %v1950 = vsel %vm1094, %v1945, 0
        %1952 = vmatpush.bf16.xpose.msra.mxu0 0
        %1953 = vmatpush.bf16.xpose.msra.mxu0 0
        %1954 = vmatpush.bf16.xpose.msra.mxu0 0
        %1955 = vmatpush.bf16.xpose.msra.mxu0 0
        %1956 = vmatpush.bf16.xpose.msra.mxu0 0
        %1957 = vmatpush.bf16.xpose.msra.mxu0 0
        %1958 = vmatpush.bf16.xpose.msra.mxu0 0
        %1959 = vmatpush.bf16.xpose.msra.mxu0 %v1950
        %1960 = vmatmul.bf16.gmra.mxu0 %v1947
        %v1961 = vpop.f32.mrf.mxu0
        %v1962 = vadd.f32 0.0, %v1961
        %v1963 = vpop.f32.mrf.mxu0
        %1964 = vdwg.mxu0
        %v1965 = vunpack.c.l.b16 %v1039
        %v1966 = vpack.c.b16 %v1965, %v1965
        %1967 = vrot.lane.b32.xlu0 %v1966, 96
        %v1968 = vpop.permute.xlu0 %1967
        %v1970 = vsel %vm1094, %v1039, 0
        %v1973 = vsel %vm1094, %v1968, 0
        %1975 = vmatpush.bf16.xpose.msra.mxu0 0
        %1976 = vmatpush.bf16.xpose.msra.mxu0 0
        %1977 = vmatpush.bf16.xpose.msra.mxu0 0
        %1978 = vmatpush.bf16.xpose.msra.mxu0 0
        %1979 = vmatpush.bf16.xpose.msra.mxu0 0
        %1980 = vmatpush.bf16.xpose.msra.mxu0 0
        %1981 = vmatpush.bf16.xpose.msra.mxu0 0
        %1982 = vmatpush.bf16.xpose.msra.mxu0 %v1973
        %1983 = vmatmul.bf16.gmra.mxu0 %v1970
        %v1984 = vpop.f32.mrf.mxu0
        %v1985 = vadd.f32 0.0, %v1984
        %v1986 = vpop.f32.mrf.mxu0
        %1987 = vdwg.mxu0
        %v1988 = vunpack.c.l.b16 %v1041
        %v1989 = vpack.c.b16 %v1988, %v1988
        %1990 = vrot.lane.b32.xlu0 %v1989, 96
        %v1991 = vpop.permute.xlu0 %1990
        %v1993 = vsel %vm1094, %v1041, 0
        %v1996 = vsel %vm1094, %v1991, 0
        %1998 = vmatpush.bf16.xpose.msra.mxu0 0
        %1999 = vmatpush.bf16.xpose.msra.mxu0 0
        %2000 = vmatpush.bf16.xpose.msra.mxu0 0
        %2001 = vmatpush.bf16.xpose.msra.mxu0 0
        %2002 = vmatpush.bf16.xpose.msra.mxu0 0
        %2003 = vmatpush.bf16.xpose.msra.mxu0 0
        %2004 = vmatpush.bf16.xpose.msra.mxu0 0
        %2005 = vmatpush.bf16.xpose.msra.mxu0 %v1996
        %2006 = vmatmul.bf16.gmra.mxu0 %v1993
        %v2007 = vpop.f32.mrf.mxu0
        %v2008 = vadd.f32 0.0, %v2007
        %v2009 = vpop.f32.mrf.mxu0
        %2010 = vdwg.mxu0
        %v2011 = vunpack.c.l.b16 %v1043
        %v2012 = vpack.c.b16 %v2011, %v2011
        %2013 = vrot.lane.b32.xlu0 %v2012, 96
        %v2014 = vpop.permute.xlu0 %2013
        %v2016 = vsel %vm1094, %v1043, 0
        %v2019 = vsel %vm1094, %v2014, 0
        %2021 = vmatpush.bf16.xpose.msra.mxu0 0
        %2022 = vmatpush.bf16.xpose.msra.mxu0 0
        %2023 = vmatpush.bf16.xpose.msra.mxu0 0
        %2024 = vmatpush.bf16.xpose.msra.mxu0 0
        %2025 = vmatpush.bf16.xpose.msra.mxu0 0
        %2026 = vmatpush.bf16.xpose.msra.mxu0 0
        %2027 = vmatpush.bf16.xpose.msra.mxu0 0
        %2028 = vmatpush.bf16.xpose.msra.mxu0 %v2019
        %2029 = vmatmul.bf16.gmra.mxu0 %v2016
        %v2030 = vpop.f32.mrf.mxu0
        %v2031 = vadd.f32 0.0, %v2030
        %v2032 = vpop.f32.mrf.mxu0
        %2033 = vdwg.mxu0
        %v2034 = vunpack.c.l.b16 %v1045
        %v2035 = vpack.c.b16 %v2034, %v2034
        %2036 = vrot.lane.b32.xlu0 %v2035, 96
        %v2037 = vpop.permute.xlu0 %2036
        %v2039 = vsel %vm1094, %v1045, 0
        %v2042 = vsel %vm1094, %v2037, 0
        %2044 = vmatpush.bf16.xpose.msra.mxu0 0
        %2045 = vmatpush.bf16.xpose.msra.mxu0 0
        %2046 = vmatpush.bf16.xpose.msra.mxu0 0
        %2047 = vmatpush.bf16.xpose.msra.mxu0 0
        %2048 = vmatpush.bf16.xpose.msra.mxu0 0
        %2049 = vmatpush.bf16.xpose.msra.mxu0 0
        %2050 = vmatpush.bf16.xpose.msra.mxu0 0
        %2051 = vmatpush.bf16.xpose.msra.mxu0 %v2042
        %2052 = vmatmul.bf16.gmra.mxu0 %v2039
        %v2053 = vpop.f32.mrf.mxu0
        %v2054 = vadd.f32 0.0, %v2053
        %v2055 = vpop.f32.mrf.mxu0
        %2056 = vdwg.mxu0
        %v2057 = vunpack.c.l.b16 %v1047
        %v2058 = vpack.c.b16 %v2057, %v2057
        %2059 = vrot.lane.b32.xlu0 %v2058, 96
        %v2060 = vpop.permute.xlu0 %2059
        %v2062 = vsel %vm1094, %v1047, 0
        %v2065 = vsel %vm1094, %v2060, 0
        %2067 = vmatpush.bf16.xpose.msra.mxu0 0
        %2068 = vmatpush.bf16.xpose.msra.mxu0 0
        %2069 = vmatpush.bf16.xpose.msra.mxu0 0
        %2070 = vmatpush.bf16.xpose.msra.mxu0 0
        %2071 = vmatpush.bf16.xpose.msra.mxu0 0
        %2072 = vmatpush.bf16.xpose.msra.mxu0 0
        %2073 = vmatpush.bf16.xpose.msra.mxu0 0
        %2074 = vmatpush.bf16.xpose.msra.mxu0 %v2065
        %2075 = vmatmul.bf16.gmra.mxu0 %v2062
        %v2076 = vpop.f32.mrf.mxu0
        %v2077 = vadd.f32 0.0, %v2076
        %v2078 = vpop.f32.mrf.mxu0
        %2079 = vdwg.mxu0
        %v2080 = vunpack.c.l.b16 %v1049
        %v2081 = vpack.c.b16 %v2080, %v2080
        %2082 = vrot.lane.b32.xlu0 %v2081, 96
        %v2083 = vpop.permute.xlu0 %2082
        %v2085 = vsel %vm1094, %v1049, 0
        %v2088 = vsel %vm1094, %v2083, 0
        %2090 = vmatpush.bf16.xpose.msra.mxu0 0
        %2091 = vmatpush.bf16.xpose.msra.mxu0 0
        %2092 = vmatpush.bf16.xpose.msra.mxu0 0
        %2093 = vmatpush.bf16.xpose.msra.mxu0 0
        %2094 = vmatpush.bf16.xpose.msra.mxu0 0
        %2095 = vmatpush.bf16.xpose.msra.mxu0 0
        %2096 = vmatpush.bf16.xpose.msra.mxu0 0
        %2097 = vmatpush.bf16.xpose.msra.mxu0 %v2088
        %2098 = vmatmul.bf16.gmra.mxu0 %v2085
        %v2099 = vpop.f32.mrf.mxu0
        %v2100 = vadd.f32 0.0, %v2099
        %v2101 = vpop.f32.mrf.mxu0
        %2102 = vdwg.mxu0
        %v2103 = vunpack.c.l.b16 %v1051
        %v2104 = vpack.c.b16 %v2103, %v2103
        %2105 = vrot.lane.b32.xlu0 %v2104, 96
        %v2106 = vpop.permute.xlu0 %2105
        %v2108 = vsel %vm1094, %v1051, 0
        %v2111 = vsel %vm1094, %v2106, 0
        %2113 = vmatpush.bf16.xpose.msra.mxu0 0
        %2114 = vmatpush.bf16.xpose.msra.mxu0 0
        %2115 = vmatpush.bf16.xpose.msra.mxu0 0
        %2116 = vmatpush.bf16.xpose.msra.mxu0 0
        %2117 = vmatpush.bf16.xpose.msra.mxu0 0
        %2118 = vmatpush.bf16.xpose.msra.mxu0 0
        %2119 = vmatpush.bf16.xpose.msra.mxu0 0
        %2120 = vmatpush.bf16.xpose.msra.mxu0 %v2111
        %2121 = vmatmul.bf16.gmra.mxu0 %v2108
        %v2122 = vpop.f32.mrf.mxu0
        %v2123 = vadd.f32 0.0, %v2122
        %v2124 = vpop.f32.mrf.mxu0
        %2125 = vdwg.mxu0
        %v2126 = vunpack.c.l.b16 %v1053
        %v2127 = vpack.c.b16 %v2126, %v2126
        %2128 = vrot.lane.b32.xlu0 %v2127, 96
        %v2129 = vpop.permute.xlu0 %2128
        %v2131 = vsel %vm1094, %v1053, 0
        %v2134 = vsel %vm1094, %v2129, 0
        %2136 = vmatpush.bf16.xpose.msra.mxu0 0
        %2137 = vmatpush.bf16.xpose.msra.mxu0 0
        %2138 = vmatpush.bf16.xpose.msra.mxu0 0
        %2139 = vmatpush.bf16.xpose.msra.mxu0 0
        %2140 = vmatpush.bf16.xpose.msra.mxu0 0
        %2141 = vmatpush.bf16.xpose.msra.mxu0 0
        %2142 = vmatpush.bf16.xpose.msra.mxu0 0
        %2143 = vmatpush.bf16.xpose.msra.mxu0 %v2134
        %2144 = vmatmul.bf16.gmra.mxu0 %v2131
        %v2145 = vpop.f32.mrf.mxu0
        %v2146 = vadd.f32 0.0, %v2145
        %v2147 = vpop.f32.mrf.mxu0
        %2148 = vdwg.mxu0
        %v2149 = vunpack.c.l.b16 %v1055
        %v2150 = vpack.c.b16 %v2149, %v2149
        %2151 = vrot.lane.b32.xlu0 %v2150, 96
        %v2152 = vpop.permute.xlu0 %2151
        %v2154 = vsel %vm1094, %v1055, 0
        %v2157 = vsel %vm1094, %v2152, 0
        %2159 = vmatpush.bf16.xpose.msra.mxu0 0
        %2160 = vmatpush.bf16.xpose.msra.mxu0 0
        %2161 = vmatpush.bf16.xpose.msra.mxu0 0
        %2162 = vmatpush.bf16.xpose.msra.mxu0 0
        %2163 = vmatpush.bf16.xpose.msra.mxu0 0
        %2164 = vmatpush.bf16.xpose.msra.mxu0 0
        %2165 = vmatpush.bf16.xpose.msra.mxu0 0
        %2166 = vmatpush.bf16.xpose.msra.mxu0 %v2157
        %2167 = vmatmul.bf16.gmra.mxu0 %v2154
        %v2168 = vpop.f32.mrf.mxu0
        %v2169 = vadd.f32 0.0, %v2168
        %v2170 = vpop.f32.mrf.mxu0
        %2171 = vdwg.mxu0
        %v2172 = vunpack.c.l.b16 %v1057
        %v2173 = vpack.c.b16 %v2172, %v2172
        %2174 = vrot.lane.b32.xlu0 %v2173, 96
        %v2175 = vpop.permute.xlu0 %2174
        %v2177 = vsel %vm1094, %v1057, 0
        %v2180 = vsel %vm1094, %v2175, 0
        %2182 = vmatpush.bf16.xpose.msra.mxu0 0
        %2183 = vmatpush.bf16.xpose.msra.mxu0 0
        %2184 = vmatpush.bf16.xpose.msra.mxu0 0
        %2185 = vmatpush.bf16.xpose.msra.mxu0 0
        %2186 = vmatpush.bf16.xpose.msra.mxu0 0
        %2187 = vmatpush.bf16.xpose.msra.mxu0 0
        %2188 = vmatpush.bf16.xpose.msra.mxu0 0
        %2189 = vmatpush.bf16.xpose.msra.mxu0 %v2180
        %2190 = vmatmul.bf16.gmra.mxu0 %v2177
        %v2191 = vpop.f32.mrf.mxu0
        %v2192 = vadd.f32 0.0, %v2191
        %v2193 = vpop.f32.mrf.mxu0
        %2194 = vdwg.mxu0
        %v2195 = vunpack.c.l.b16 %v1059
        %v2196 = vpack.c.b16 %v2195, %v2195
        %2197 = vrot.lane.b32.xlu0 %v2196, 96
        %v2198 = vpop.permute.xlu0 %2197
        %v2200 = vsel %vm1094, %v1059, 0
        %v2203 = vsel %vm1094, %v2198, 0
        %2205 = vmatpush.bf16.xpose.msra.mxu0 0
        %2206 = vmatpush.bf16.xpose.msra.mxu0 0
        %2207 = vmatpush.bf16.xpose.msra.mxu0 0
        %2208 = vmatpush.bf16.xpose.msra.mxu0 0
        %2209 = vmatpush.bf16.xpose.msra.mxu0 0
        %2210 = vmatpush.bf16.xpose.msra.mxu0 0
        %2211 = vmatpush.bf16.xpose.msra.mxu0 0
        %2212 = vmatpush.bf16.xpose.msra.mxu0 %v2203
        %2213 = vmatmul.bf16.gmra.mxu0 %v2200
        %v2214 = vpop.f32.mrf.mxu0
        %v2215 = vadd.f32 0.0, %v2214
        %v2216 = vpop.f32.mrf.mxu0
        %2217 = vdwg.mxu0
        %v2218 = vunpack.c.l.b16 %v1061
        %v2219 = vpack.c.b16 %v2218, %v2218
        %2220 = vrot.lane.b32.xlu0 %v2219, 96
        %v2221 = vpop.permute.xlu0 %2220
        %v2223 = vsel %vm1094, %v1061, 0
        %v2226 = vsel %vm1094, %v2221, 0
        %2228 = vmatpush.bf16.xpose.msra.mxu0 0
        %2229 = vmatpush.bf16.xpose.msra.mxu0 0
        %2230 = vmatpush.bf16.xpose.msra.mxu0 0
        %2231 = vmatpush.bf16.xpose.msra.mxu0 0
        %2232 = vmatpush.bf16.xpose.msra.mxu0 0
        %2233 = vmatpush.bf16.xpose.msra.mxu0 0
        %2234 = vmatpush.bf16.xpose.msra.mxu0 0
        %2235 = vmatpush.bf16.xpose.msra.mxu0 %v2226
        %2236 = vmatmul.bf16.gmra.mxu0 %v2223
        %v2237 = vpop.f32.mrf.mxu0
        %v2238 = vadd.f32 0.0, %v2237
        %v2239 = vpop.f32.mrf.mxu0
        %2240 = vdwg.mxu0
        %v2241 = vunpack.c.l.b16 %v1063
        %v2242 = vpack.c.b16 %v2241, %v2241
        %2243 = vrot.lane.b32.xlu0 %v2242, 96
        %v2244 = vpop.permute.xlu0 %2243
        %v2246 = vsel %vm1094, %v1063, 0
        %v2249 = vsel %vm1094, %v2244, 0
        %2251 = vmatpush.bf16.xpose.msra.mxu0 0
        %2252 = vmatpush.bf16.xpose.msra.mxu0 0
        %2253 = vmatpush.bf16.xpose.msra.mxu0 0
        %2254 = vmatpush.bf16.xpose.msra.mxu0 0
        %2255 = vmatpush.bf16.xpose.msra.mxu0 0
        %2256 = vmatpush.bf16.xpose.msra.mxu0 0
        %2257 = vmatpush.bf16.xpose.msra.mxu0 0
        %2258 = vmatpush.bf16.xpose.msra.mxu0 %v2249
        %2259 = vmatmul.bf16.gmra.mxu0 %v2246
        %v2260 = vpop.f32.mrf.mxu0
        %v2261 = vadd.f32 0.0, %v2260
        %v2262 = vpop.f32.mrf.mxu0
        %2263 = vdwg.mxu0
        %v2264 = vunpack.c.l.b16 %v1065
        %v2265 = vpack.c.b16 %v2264, %v2264
        %2266 = vrot.lane.b32.xlu0 %v2265, 96
        %v2267 = vpop.permute.xlu0 %2266
        %v2269 = vsel %vm1094, %v1065, 0
        %v2272 = vsel %vm1094, %v2267, 0
        %2274 = vmatpush.bf16.xpose.msra.mxu0 0
        %2275 = vmatpush.bf16.xpose.msra.mxu0 0
        %2276 = vmatpush.bf16.xpose.msra.mxu0 0
        %2277 = vmatpush.bf16.xpose.msra.mxu0 0
        %2278 = vmatpush.bf16.xpose.msra.mxu0 0
        %2279 = vmatpush.bf16.xpose.msra.mxu0 0
        %2280 = vmatpush.bf16.xpose.msra.mxu0 0
        %2281 = vmatpush.bf16.xpose.msra.mxu0 %v2272
        %2282 = vmatmul.bf16.gmra.mxu0 %v2269
        %v2283 = vpop.f32.mrf.mxu0
        %v2284 = vadd.f32 0.0, %v2283
        %v2285 = vpop.f32.mrf.mxu0
        %2286 = vdwg.mxu0
        %v2287 = vunpack.c.l.b16 %v1067
        %v2288 = vpack.c.b16 %v2287, %v2287
        %2289 = vrot.lane.b32.xlu0 %v2288, 96
        %v2290 = vpop.permute.xlu0 %2289
        %v2292 = vsel %vm1094, %v1067, 0
        %v2295 = vsel %vm1094, %v2290, 0
        %2297 = vmatpush.bf16.xpose.msra.mxu0 0
        %2298 = vmatpush.bf16.xpose.msra.mxu0 0
        %2299 = vmatpush.bf16.xpose.msra.mxu0 0
        %2300 = vmatpush.bf16.xpose.msra.mxu0 0
        %2301 = vmatpush.bf16.xpose.msra.mxu0 0
        %2302 = vmatpush.bf16.xpose.msra.mxu0 0
        %2303 = vmatpush.bf16.xpose.msra.mxu0 0
        %2304 = vmatpush.bf16.xpose.msra.mxu0 %v2295
        %2305 = vmatmul.bf16.gmra.mxu0 %v2292
        %v2306 = vpop.f32.mrf.mxu0
        %v2307 = vadd.f32 0.0, %v2306
        %v2308 = vpop.f32.mrf.mxu0
        %2309 = vdwg.mxu0
        %v2310 = vunpack.c.l.b16 %v1069
        %v2311 = vpack.c.b16 %v2310, %v2310
        %2312 = vrot.lane.b32.xlu0 %v2311, 96
        %v2313 = vpop.permute.xlu0 %2312
        %v2315 = vsel %vm1094, %v1069, 0
        %v2318 = vsel %vm1094, %v2313, 0
        %2320 = vmatpush.bf16.xpose.msra.mxu0 0
        %2321 = vmatpush.bf16.xpose.msra.mxu0 0
        %2322 = vmatpush.bf16.xpose.msra.mxu0 0
        %2323 = vmatpush.bf16.xpose.msra.mxu0 0
        %2324 = vmatpush.bf16.xpose.msra.mxu0 0
        %2325 = vmatpush.bf16.xpose.msra.mxu0 0
        %2326 = vmatpush.bf16.xpose.msra.mxu0 0
        %2327 = vmatpush.bf16.xpose.msra.mxu0 %v2318
        %2328 = vmatmul.bf16.gmra.mxu0 %v2315
        %v2329 = vpop.f32.mrf.mxu0
        %v2330 = vadd.f32 0.0, %v2329
        %v2331 = vpop.f32.mrf.mxu0
        %2332 = vdwg.mxu0
        %v2333 = vunpack.c.l.b16 %v1071
        %v2334 = vpack.c.b16 %v2333, %v2333
        %2335 = vrot.lane.b32.xlu0 %v2334, 96
        %v2336 = vpop.permute.xlu0 %2335
        %v2338 = vsel %vm1094, %v1071, 0
        %v2341 = vsel %vm1094, %v2336, 0
        %2343 = vmatpush.bf16.xpose.msra.mxu0 0
        %2344 = vmatpush.bf16.xpose.msra.mxu0 0
        %2345 = vmatpush.bf16.xpose.msra.mxu0 0
        %2346 = vmatpush.bf16.xpose.msra.mxu0 0
        %2347 = vmatpush.bf16.xpose.msra.mxu0 0
        %2348 = vmatpush.bf16.xpose.msra.mxu0 0
        %2349 = vmatpush.bf16.xpose.msra.mxu0 0
        %2350 = vmatpush.bf16.xpose.msra.mxu0 %v2341
        %2351 = vmatmul.bf16.gmra.mxu0 %v2338
        %v2352 = vpop.f32.mrf.mxu0
        %v2353 = vadd.f32 0.0, %v2352
        %v2354 = vpop.f32.mrf.mxu0
        %2355 = vdwg.mxu0
        %v2356 = vunpack.c.l.b16 %v1073
        %v2357 = vpack.c.b16 %v2356, %v2356
        %2358 = vrot.lane.b32.xlu0 %v2357, 96
        %v2359 = vpop.permute.xlu0 %2358
        %v2361 = vsel %vm1094, %v1073, 0
        %v2364 = vsel %vm1094, %v2359, 0
        %2366 = vmatpush.bf16.xpose.msra.mxu0 0
        %2367 = vmatpush.bf16.xpose.msra.mxu0 0
        %2368 = vmatpush.bf16.xpose.msra.mxu0 0
        %2369 = vmatpush.bf16.xpose.msra.mxu0 0
        %2370 = vmatpush.bf16.xpose.msra.mxu0 0
        %2371 = vmatpush.bf16.xpose.msra.mxu0 0
        %2372 = vmatpush.bf16.xpose.msra.mxu0 0
        %2373 = vmatpush.bf16.xpose.msra.mxu0 %v2364
        %2374 = vmatmul.bf16.gmra.mxu0 %v2361
        %v2375 = vpop.f32.mrf.mxu0
        %v2376 = vadd.f32 0.0, %v2375
        %v2377 = vpop.f32.mrf.mxu0
        %2378 = vdwg.mxu0
        %v2379 = vunpack.c.l.b16 %v1075
        %v2380 = vpack.c.b16 %v2379, %v2379
        %2381 = vrot.lane.b32.xlu0 %v2380, 96
        %v2382 = vpop.permute.xlu0 %2381
        %v2384 = vsel %vm1094, %v1075, 0
        %v2387 = vsel %vm1094, %v2382, 0
        %2389 = vmatpush.bf16.xpose.msra.mxu0 0
        %2390 = vmatpush.bf16.xpose.msra.mxu0 0
        %2391 = vmatpush.bf16.xpose.msra.mxu0 0
        %2392 = vmatpush.bf16.xpose.msra.mxu0 0
        %2393 = vmatpush.bf16.xpose.msra.mxu0 0
        %2394 = vmatpush.bf16.xpose.msra.mxu0 0
        %2395 = vmatpush.bf16.xpose.msra.mxu0 0
        %2396 = vmatpush.bf16.xpose.msra.mxu0 %v2387
        %2397 = vmatmul.bf16.gmra.mxu0 %v2384
        %v2398 = vpop.f32.mrf.mxu0
        %v2399 = vadd.f32 0.0, %v2398
        %v2400 = vpop.f32.mrf.mxu0
        %2401 = vdwg.mxu0
        %v2402 = vunpack.c.l.b16 %v1077
        %v2403 = vpack.c.b16 %v2402, %v2402
        %2404 = vrot.lane.b32.xlu0 %v2403, 96
        %v2405 = vpop.permute.xlu0 %2404
        %v2407 = vsel %vm1094, %v1077, 0
        %v2410 = vsel %vm1094, %v2405, 0
        %2412 = vmatpush.bf16.xpose.msra.mxu0 0
        %2413 = vmatpush.bf16.xpose.msra.mxu0 0
        %2414 = vmatpush.bf16.xpose.msra.mxu0 0
        %2415 = vmatpush.bf16.xpose.msra.mxu0 0
        %2416 = vmatpush.bf16.xpose.msra.mxu0 0
        %2417 = vmatpush.bf16.xpose.msra.mxu0 0
        %2418 = vmatpush.bf16.xpose.msra.mxu0 0
        %2419 = vmatpush.bf16.xpose.msra.mxu0 %v2410
        %2420 = vmatmul.bf16.gmra.mxu0 %v2407
        %v2421 = vpop.f32.mrf.mxu0
        %v2422 = vadd.f32 0.0, %v2421
        %v2423 = vpop.f32.mrf.mxu0
        %2424 = vdwg.mxu0
        %v2425 = vunpack.c.l.b16 %v1079
        %v2426 = vpack.c.b16 %v2425, %v2425
        %2427 = vrot.lane.b32.xlu0 %v2426, 96
        %v2428 = vpop.permute.xlu0 %2427
        %v2430 = vsel %vm1094, %v1079, 0
        %v2433 = vsel %vm1094, %v2428, 0
        %2435 = vmatpush.bf16.xpose.msra.mxu0 0
        %2436 = vmatpush.bf16.xpose.msra.mxu0 0
        %2437 = vmatpush.bf16.xpose.msra.mxu0 0
        %2438 = vmatpush.bf16.xpose.msra.mxu0 0
        %2439 = vmatpush.bf16.xpose.msra.mxu0 0
        %2440 = vmatpush.bf16.xpose.msra.mxu0 0
        %2441 = vmatpush.bf16.xpose.msra.mxu0 0
        %2442 = vmatpush.bf16.xpose.msra.mxu0 %v2433
        %2443 = vmatmul.bf16.gmra.mxu0 %v2430
        %v2444 = vpop.f32.mrf.mxu0
        %v2445 = vadd.f32 0.0, %v2444
        %v2446 = vpop.f32.mrf.mxu0
        %2447 = vdwg.mxu0
        %v2448 = vunpack.c.l.b16 %v1081
        %v2449 = vpack.c.b16 %v2448, %v2448
        %2450 = vrot.lane.b32.xlu0 %v2449, 96
        %v2451 = vpop.permute.xlu0 %2450
        %v2453 = vsel %vm1094, %v1081, 0
        %v2456 = vsel %vm1094, %v2451, 0
        %2458 = vmatpush.bf16.xpose.msra.mxu0 0
        %2459 = vmatpush.bf16.xpose.msra.mxu0 0
        %2460 = vmatpush.bf16.xpose.msra.mxu0 0
        %2461 = vmatpush.bf16.xpose.msra.mxu0 0
        %2462 = vmatpush.bf16.xpose.msra.mxu0 0
        %2463 = vmatpush.bf16.xpose.msra.mxu0 0
        %2464 = vmatpush.bf16.xpose.msra.mxu0 0
        %2465 = vmatpush.bf16.xpose.msra.mxu0 %v2456
        %2466 = vmatmul.bf16.gmra.mxu0 %v2453
        %v2467 = vpop.f32.mrf.mxu0
        %v2468 = vadd.f32 0.0, %v2467
        %v2469 = vpop.f32.mrf.mxu0
        %2470 = vdwg.mxu0
        %v2471 = vunpack.c.l.b16 %v1083
        %v2472 = vpack.c.b16 %v2471, %v2471
        %2473 = vrot.lane.b32.xlu0 %v2472, 96
        %v2474 = vpop.permute.xlu0 %2473
        %v2476 = vsel %vm1094, %v1083, 0
        %v2479 = vsel %vm1094, %v2474, 0
        %2481 = vmatpush.bf16.xpose.msra.mxu0 0
        %2482 = vmatpush.bf16.xpose.msra.mxu0 0
        %2483 = vmatpush.bf16.xpose.msra.mxu0 0
        %2484 = vmatpush.bf16.xpose.msra.mxu0 0
        %2485 = vmatpush.bf16.xpose.msra.mxu0 0
        %2486 = vmatpush.bf16.xpose.msra.mxu0 0
        %2487 = vmatpush.bf16.xpose.msra.mxu0 0
        %2488 = vmatpush.bf16.xpose.msra.mxu0 %v2479
        %2489 = vmatmul.bf16.gmra.mxu0 %v2476
        %v2490 = vpop.f32.mrf.mxu0
        %v2491 = vadd.f32 0.0, %v2490
        %v2492 = vpop.f32.mrf.mxu0
        %2493 = vdwg.mxu0
        %v2494 = vunpack.c.l.b16 %v1085
        %v2495 = vpack.c.b16 %v2494, %v2494
        %2496 = vrot.lane.b32.xlu0 %v2495, 96
        %v2497 = vpop.permute.xlu0 %2496
        %v2499 = vsel %vm1094, %v1085, 0
        %v2502 = vsel %vm1094, %v2497, 0
        %2504 = vmatpush.bf16.xpose.msra.mxu0 0
        %2505 = vmatpush.bf16.xpose.msra.mxu0 0
        %2506 = vmatpush.bf16.xpose.msra.mxu0 0
        %2507 = vmatpush.bf16.xpose.msra.mxu0 0
        %2508 = vmatpush.bf16.xpose.msra.mxu0 0
        %2509 = vmatpush.bf16.xpose.msra.mxu0 0
        %2510 = vmatpush.bf16.xpose.msra.mxu0 0
        %2511 = vmatpush.bf16.xpose.msra.mxu0 %v2502
        %2512 = vmatmul.bf16.gmra.mxu0 %v2499
        %v2513 = vpop.f32.mrf.mxu0
        %v2514 = vadd.f32 0.0, %v2513
        %v2515 = vpop.f32.mrf.mxu0
        %2516 = vdwg.mxu0
        %v2517 = vunpack.c.l.b16 %v1087
        %v2518 = vpack.c.b16 %v2517, %v2517
        %2519 = vrot.lane.b32.xlu0 %v2518, 96
        %v2520 = vpop.permute.xlu0 %2519
        %v2522 = vsel %vm1094, %v1087, 0
        %v2525 = vsel %vm1094, %v2520, 0
        %2527 = vmatpush.bf16.xpose.msra.mxu0 0
        %2528 = vmatpush.bf16.xpose.msra.mxu0 0
        %2529 = vmatpush.bf16.xpose.msra.mxu0 0
        %2530 = vmatpush.bf16.xpose.msra.mxu0 0
        %2531 = vmatpush.bf16.xpose.msra.mxu0 0
        %2532 = vmatpush.bf16.xpose.msra.mxu0 0
        %2533 = vmatpush.bf16.xpose.msra.mxu0 0
        %2534 = vmatpush.bf16.xpose.msra.mxu0 %v2525
        %2535 = vmatmul.bf16.gmra.mxu0 %v2522
        %v2536 = vpop.f32.mrf.mxu0
        %v2537 = vadd.f32 0.0, %v2536
        %v2538 = vpop.f32.mrf.mxu0
        %2539 = vdwg.mxu0
        %v2540 = vunpack.c.l.b16 %v1089
        %v2541 = vpack.c.b16 %v2540, %v2540
        %2542 = vrot.lane.b32.xlu0 %v2541, 96
        %v2543 = vpop.permute.xlu0 %2542
        %v2545 = vsel %vm1094, %v1089, 0
        %v2548 = vsel %vm1094, %v2543, 0
        %2550 = vmatpush.bf16.xpose.msra.mxu0 0
        %2551 = vmatpush.bf16.xpose.msra.mxu0 0
        %2552 = vmatpush.bf16.xpose.msra.mxu0 0
        %2553 = vmatpush.bf16.xpose.msra.mxu0 0
        %2554 = vmatpush.bf16.xpose.msra.mxu0 0
        %2555 = vmatpush.bf16.xpose.msra.mxu0 0
        %2556 = vmatpush.bf16.xpose.msra.mxu0 0
        %2557 = vmatpush.bf16.xpose.msra.mxu0 %v2548
        %2558 = vmatmul.bf16.gmra.mxu0 %v2545
        %v2559 = vpop.f32.mrf.mxu0
        %v2560 = vadd.f32 0.0, %v2559
        %v2561 = vpop.f32.mrf.mxu0
        %2562 = vdwg.mxu0
        %v2563 = vsel %vm1094, %v1111, -inf
        %2564 = vmax.xlane.f32.xlu0 %v2563
        %v2565 = vpop.xlane.xlu0 %2564
        %v2566 = vsel %vm1094, %v1134, -inf
        %2567 = vmax.xlane.f32.xlu0 %v2566
        %v2568 = vpop.xlane.xlu0 %2567
        %v2569 = vsel %vm1094, %v1157, -inf
        %2570 = vmax.xlane.f32.xlu0 %v2569
        %v2571 = vpop.xlane.xlu0 %2570
        %v2572 = vsel %vm1094, %v1180, -inf
        %2573 = vmax.xlane.f32.xlu0 %v2572
        %v2574 = vpop.xlane.xlu0 %2573
        %v2575 = vsel %vm1094, %v1203, -inf
        %2576 = vmax.xlane.f32.xlu0 %v2575
        %v2577 = vpop.xlane.xlu0 %2576
        %v2578 = vsel %vm1094, %v1226, -inf
        %2579 = vmax.xlane.f32.xlu0 %v2578
        %v2580 = vpop.xlane.xlu0 %2579
        %v2581 = vsel %vm1094, %v1249, -inf
        %2582 = vmax.xlane.f32.xlu0 %v2581
        %v2583 = vpop.xlane.xlu0 %2582
        %v2584 = vsel %vm1094, %v1272, -inf
        %2585 = vmax.xlane.f32.xlu0 %v2584
        %v2586 = vpop.xlane.xlu0 %2585
        %v2587 = vsel %vm1094, %v1295, -inf
        %2588 = vmax.xlane.f32.xlu0 %v2587
        %v2589 = vpop.xlane.xlu0 %2588
        %v2590 = vsel %vm1094, %v1318, -inf
        %2591 = vmax.xlane.f32.xlu0 %v2590
        %v2592 = vpop.xlane.xlu0 %2591
        %v2593 = vsel %vm1094, %v1341, -inf
        %2594 = vmax.xlane.f32.xlu0 %v2593
        %v2595 = vpop.xlane.xlu0 %2594
        %v2596 = vsel %vm1094, %v1364, -inf
        %2597 = vmax.xlane.f32.xlu0 %v2596
        %v2598 = vpop.xlane.xlu0 %2597
        %v2599 = vsel %vm1094, %v1387, -inf
        %2600 = vmax.xlane.f32.xlu0 %v2599
        %v2601 = vpop.xlane.xlu0 %2600
        %v2602 = vsel %vm1094, %v1410, -inf
        %2603 = vmax.xlane.f32.xlu0 %v2602
        %v2604 = vpop.xlane.xlu0 %2603
        %v2605 = vsel %vm1094, %v1433, -inf
        %2606 = vmax.xlane.f32.xlu0 %v2605
        %v2607 = vpop.xlane.xlu0 %2606
        %v2608 = vsel %vm1094, %v1456, -inf
        %2609 = vmax.xlane.f32.xlu0 %v2608
        %v2610 = vpop.xlane.xlu0 %2609
        %v2611 = vsel %vm1094, %v1479, -inf
        %2612 = vmax.xlane.f32.xlu0 %v2611
        %v2613 = vpop.xlane.xlu0 %2612
        %v2614 = vsel %vm1094, %v1502, -inf
        %2615 = vmax.xlane.f32.xlu0 %v2614
        %v2616 = vpop.xlane.xlu0 %2615
        %v2617 = vsel %vm1094, %v1525, -inf
        %2618 = vmax.xlane.f32.xlu0 %v2617
        %v2619 = vpop.xlane.xlu0 %2618
        %v2620 = vsel %vm1094, %v1548, -inf
        %2621 = vmax.xlane.f32.xlu0 %v2620
        %v2622 = vpop.xlane.xlu0 %2621
        %v2623 = vsel %vm1094, %v1571, -inf
        %2624 = vmax.xlane.f32.xlu0 %v2623
        %v2625 = vpop.xlane.xlu0 %2624
        %v2626 = vsel %vm1094, %v1594, -inf
        %2627 = vmax.xlane.f32.xlu0 %v2626
        %v2628 = vpop.xlane.xlu0 %2627
        %v2629 = vsel %vm1094, %v1617, -inf
        %2630 = vmax.xlane.f32.xlu0 %v2629
        %v2631 = vpop.xlane.xlu0 %2630
        %v2632 = vsel %vm1094, %v1640, -inf
        %2633 = vmax.xlane.f32.xlu0 %v2632
        %v2634 = vpop.xlane.xlu0 %2633
        %v2635 = vsel %vm1094, %v1663, -inf
        %2636 = vmax.xlane.f32.xlu0 %v2635
        %v2637 = vpop.xlane.xlu0 %2636
        %v2638 = vsel %vm1094, %v1686, -inf
        %2639 = vmax.xlane.f32.xlu0 %v2638
        %v2640 = vpop.xlane.xlu0 %2639
        %v2641 = vsel %vm1094, %v1709, -inf
        %2642 = vmax.xlane.f32.xlu0 %v2641
        %v2643 = vpop.xlane.xlu0 %2642
        %v2644 = vsel %vm1094, %v1732, -inf
        %2645 = vmax.xlane.f32.xlu0 %v2644
        %v2646 = vpop.xlane.xlu0 %2645
        %v2647 = vsel %vm1094, %v1755, -inf
        %2648 = vmax.xlane.f32.xlu0 %v2647
        %v2649 = vpop.xlane.xlu0 %2648
        %v2650 = vsel %vm1094, %v1778, -inf
        %2651 = vmax.xlane.f32.xlu0 %v2650
        %v2652 = vpop.xlane.xlu0 %2651
        %v2653 = vsel %vm1094, %v1801, -inf
        %2654 = vmax.xlane.f32.xlu0 %v2653
        %v2655 = vpop.xlane.xlu0 %2654
        %v2656 = vsel %vm1094, %v1824, -inf
        %2657 = vmax.xlane.f32.xlu0 %v2656
        %v2658 = vpop.xlane.xlu0 %2657
        %v2659 = vsel %vm1094, %v1847, -inf
        %2660 = vmax.xlane.f32.xlu0 %v2659
        %v2661 = vpop.xlane.xlu0 %2660
        %v2662 = vsel %vm1094, %v1870, -inf
        %2663 = vmax.xlane.f32.xlu0 %v2662
        %v2664 = vpop.xlane.xlu0 %2663
        %v2665 = vsel %vm1094, %v1893, -inf
        %2666 = vmax.xlane.f32.xlu0 %v2665
        %v2667 = vpop.xlane.xlu0 %2666
        %v2668 = vsel %vm1094, %v1916, -inf
        %2669 = vmax.xlane.f32.xlu0 %v2668
        %v2670 = vpop.xlane.xlu0 %2669
        %v2671 = vsel %vm1094, %v1939, -inf
        %2672 = vmax.xlane.f32.xlu0 %v2671
        %v2673 = vpop.xlane.xlu0 %2672
        %v2674 = vsel %vm1094, %v1962, -inf
        %2675 = vmax.xlane.f32.xlu0 %v2674
        %v2676 = vpop.xlane.xlu0 %2675
        %v2677 = vsel %vm1094, %v1985, -inf
        %2678 = vmax.xlane.f32.xlu0 %v2677
        %v2679 = vpop.xlane.xlu0 %2678
        %v2680 = vsel %vm1094, %v2008, -inf
        %2681 = vmax.xlane.f32.xlu0 %v2680
        %v2682 = vpop.xlane.xlu0 %2681
        %v2683 = vsel %vm1094, %v2031, -inf
        %2684 = vmax.xlane.f32.xlu0 %v2683
        %v2685 = vpop.xlane.xlu0 %2684
        %v2686 = vsel %vm1094, %v2054, -inf
        %2687 = vmax.xlane.f32.xlu0 %v2686
        %v2688 = vpop.xlane.xlu0 %2687
        %v2689 = vsel %vm1094, %v2077, -inf
        %2690 = vmax.xlane.f32.xlu0 %v2689
        %v2691 = vpop.xlane.xlu0 %2690
        %v2692 = vsel %vm1094, %v2100, -inf
        %2693 = vmax.xlane.f32.xlu0 %v2692
        %v2694 = vpop.xlane.xlu0 %2693
        %v2695 = vsel %vm1094, %v2123, -inf
        %2696 = vmax.xlane.f32.xlu0 %v2695
        %v2697 = vpop.xlane.xlu0 %2696
        %v2698 = vsel %vm1094, %v2146, -inf
        %2699 = vmax.xlane.f32.xlu0 %v2698
        %v2700 = vpop.xlane.xlu0 %2699
        %v2701 = vsel %vm1094, %v2169, -inf
        %2702 = vmax.xlane.f32.xlu0 %v2701
        %v2703 = vpop.xlane.xlu0 %2702
        %v2704 = vsel %vm1094, %v2192, -inf
        %2705 = vmax.xlane.f32.xlu0 %v2704
        %v2706 = vpop.xlane.xlu0 %2705
        %v2707 = vsel %vm1094, %v2215, -inf
        %2708 = vmax.xlane.f32.xlu0 %v2707
        %v2709 = vpop.xlane.xlu0 %2708
        %v2710 = vsel %vm1094, %v2238, -inf
        %2711 = vmax.xlane.f32.xlu0 %v2710
        %v2712 = vpop.xlane.xlu0 %2711
        %v2713 = vsel %vm1094, %v2261, -inf
        %2714 = vmax.xlane.f32.xlu0 %v2713
        %v2715 = vpop.xlane.xlu0 %2714
        %v2716 = vsel %vm1094, %v2284, -inf
        %2717 = vmax.xlane.f32.xlu0 %v2716
        %v2718 = vpop.xlane.xlu0 %2717
        %v2719 = vsel %vm1094, %v2307, -inf
        %2720 = vmax.xlane.f32.xlu0 %v2719
        %v2721 = vpop.xlane.xlu0 %2720
        %v2722 = vsel %vm1094, %v2330, -inf
        %2723 = vmax.xlane.f32.xlu0 %v2722
        %v2724 = vpop.xlane.xlu0 %2723
        %v2725 = vsel %vm1094, %v2353, -inf
        %2726 = vmax.xlane.f32.xlu0 %v2725
        %v2727 = vpop.xlane.xlu0 %2726
        %v2728 = vsel %vm1094, %v2376, -inf
        %2729 = vmax.xlane.f32.xlu0 %v2728
        %v2730 = vpop.xlane.xlu0 %2729
        %v2731 = vsel %vm1094, %v2399, -inf
        %2732 = vmax.xlane.f32.xlu0 %v2731
        %v2733 = vpop.xlane.xlu0 %2732
        %v2734 = vsel %vm1094, %v2422, -inf
        %2735 = vmax.xlane.f32.xlu0 %v2734
        %v2736 = vpop.xlane.xlu0 %2735
        %v2737 = vsel %vm1094, %v2445, -inf
        %2738 = vmax.xlane.f32.xlu0 %v2737
        %v2739 = vpop.xlane.xlu0 %2738
        %v2740 = vsel %vm1094, %v2468, -inf
        %2741 = vmax.xlane.f32.xlu0 %v2740
        %v2742 = vpop.xlane.xlu0 %2741
        %v2743 = vsel %vm1094, %v2491, -inf
        %2744 = vmax.xlane.f32.xlu0 %v2743
        %v2745 = vpop.xlane.xlu0 %2744
        %v2746 = vsel %vm1094, %v2514, -inf
        %2747 = vmax.xlane.f32.xlu0 %v2746
        %v2748 = vpop.xlane.xlu0 %2747
        %v2749 = vsel %vm1094, %v2537, -inf
        %2750 = vmax.xlane.f32.xlu0 %v2749
        %v2751 = vpop.xlane.xlu0 %2750
        %v2752 = vsel %vm1094, %v2560, -inf
        %2753 = vmax.xlane.f32.xlu0 %v2752
        %v2754 = vpop.xlane.xlu0 %2753
        %v2755 = vsub.f32 %v1111, %v2565
        %v2756 = vsub.f32 %v1134, %v2568
        %v2757 = vsub.f32 %v1157, %v2571
        %v2758 = vsub.f32 %v1180, %v2574
        %v2759 = vsub.f32 %v1203, %v2577
        %v2760 = vsub.f32 %v1226, %v2580
        %v2761 = vsub.f32 %v1249, %v2583
        %v2762 = vsub.f32 %v1272, %v2586
        %v2763 = vsub.f32 %v1295, %v2589
        %v2764 = vsub.f32 %v1318, %v2592
        %v2765 = vsub.f32 %v1341, %v2595
        %v2766 = vsub.f32 %v1364, %v2598
        %v2767 = vsub.f32 %v1387, %v2601
        %v2768 = vsub.f32 %v1410, %v2604
        %v2769 = vsub.f32 %v1433, %v2607
        %v2770 = vsub.f32 %v1456, %v2610
        %v2771 = vsub.f32 %v1479, %v2613
        %v2772 = vsub.f32 %v1502, %v2616
        %v2773 = vsub.f32 %v1525, %v2619
        %v2774 = vsub.f32 %v1548, %v2622
        %v2775 = vsub.f32 %v1571, %v2625
        %v2776 = vsub.f32 %v1594, %v2628
        %v2777 = vsub.f32 %v1617, %v2631
        %v2778 = vsub.f32 %v1640, %v2634
        %v2779 = vsub.f32 %v1663, %v2637
        %v2780 = vsub.f32 %v1686, %v2640
        %v2781 = vsub.f32 %v1709, %v2643
        %v2782 = vsub.f32 %v1732, %v2646
        %v2783 = vsub.f32 %v1755, %v2649
        %v2784 = vsub.f32 %v1778, %v2652
        %v2785 = vsub.f32 %v1801, %v2655
        %v2786 = vsub.f32 %v1824, %v2658
        %v2787 = vsub.f32 %v1847, %v2661
        %v2788 = vsub.f32 %v1870, %v2664
        %v2789 = vsub.f32 %v1893, %v2667
        %v2790 = vsub.f32 %v1916, %v2670
        %v2791 = vsub.f32 %v1939, %v2673
        %v2792 = vsub.f32 %v1962, %v2676
        %v2793 = vsub.f32 %v1985, %v2679
        %v2794 = vsub.f32 %v2008, %v2682
        %v2795 = vsub.f32 %v2031, %v2685
        %v2796 = vsub.f32 %v2054, %v2688
        %v2797 = vsub.f32 %v2077, %v2691
        %v2798 = vsub.f32 %v2100, %v2694
        %v2799 = vsub.f32 %v2123, %v2697
        %v2800 = vsub.f32 %v2146, %v2700
        %v2801 = vsub.f32 %v2169, %v2703
        %v2802 = vsub.f32 %v2192, %v2706
        %v2803 = vsub.f32 %v2215, %v2709
        %v2804 = vsub.f32 %v2238, %v2712
        %v2805 = vsub.f32 %v2261, %v2715
        %v2806 = vsub.f32 %v2284, %v2718
        %v2807 = vsub.f32 %v2307, %v2721
        %v2808 = vsub.f32 %v2330, %v2724
        %v2809 = vsub.f32 %v2353, %v2727
        %v2810 = vsub.f32 %v2376, %v2730
        %v2811 = vsub.f32 %v2399, %v2733
        %v2812 = vsub.f32 %v2422, %v2736
        %v2813 = vsub.f32 %v2445, %v2739
        %v2814 = vsub.f32 %v2468, %v2742
        %v2815 = vsub.f32 %v2491, %v2745
        %v2816 = vsub.f32 %v2514, %v2748
        %v2817 = vsub.f32 %v2537, %v2751
        %v2818 = vsub.f32 %v2560, %v2754
        %v2819 = vmul.f32 %v2755, 1.442695
        %v2820 = vpow.pop %v2819
        %v2821 = vmul.f32 %v2756, 1.442695
        %v2822 = vpow.pop %v2821
        %v2823 = vmul.f32 %v2757, 1.442695
        %v2824 = vpow.pop %v2823
        %v2825 = vmul.f32 %v2758, 1.442695
        %v2826 = vpow.pop %v2825
        %v2827 = vmul.f32 %v2759, 1.442695
        %v2828 = vpow.pop %v2827
        %v2829 = vmul.f32 %v2760, 1.442695
        %v2830 = vpow.pop %v2829
        %v2831 = vmul.f32 %v2761, 1.442695
        %v2832 = vpow.pop %v2831
        %v2833 = vmul.f32 %v2762, 1.442695
        %v2834 = vpow.pop %v2833
        %v2835 = vmul.f32 %v2763, 1.442695
        %v2836 = vpow.pop %v2835
        %v2837 = vmul.f32 %v2764, 1.442695
        %v2838 = vpow.pop %v2837
        %v2839 = vmul.f32 %v2765, 1.442695
        %v2840 = vpow.pop %v2839
        %v2841 = vmul.f32 %v2766, 1.442695
        %v2842 = vpow.pop %v2841
        %v2843 = vmul.f32 %v2767, 1.442695
        %v2844 = vpow.pop %v2843
        %v2845 = vmul.f32 %v2768, 1.442695
        %v2846 = vpow.pop %v2845
        %v2847 = vmul.f32 %v2769, 1.442695
        %v2848 = vpow.pop %v2847
        %v2849 = vmul.f32 %v2770, 1.442695
        %v2850 = vpow.pop %v2849
        %v2851 = vmul.f32 %v2771, 1.442695
        %v2852 = vpow.pop %v2851
        %v2853 = vmul.f32 %v2772, 1.442695
        %v2854 = vpow.pop %v2853
        %v2855 = vmul.f32 %v2773, 1.442695
        %v2856 = vpow.pop %v2855
        %v2857 = vmul.f32 %v2774, 1.442695
        %v2858 = vpow.pop %v2857
        %v2859 = vmul.f32 %v2775, 1.442695
        %v2860 = vpow.pop %v2859
        %v2861 = vmul.f32 %v2776, 1.442695
        %v2862 = vpow.pop %v2861
        %v2863 = vmul.f32 %v2777, 1.442695
        %v2864 = vpow.pop %v2863
        %v2865 = vmul.f32 %v2778, 1.442695
        %v2866 = vpow.pop %v2865
        %v2867 = vmul.f32 %v2779, 1.442695
        %v2868 = vpow.pop %v2867
        %v2869 = vmul.f32 %v2780, 1.442695
        %v2870 = vpow.pop %v2869
        %v2871 = vmul.f32 %v2781, 1.442695
        %v2872 = vpow.pop %v2871
        %v2873 = vmul.f32 %v2782, 1.442695
        %v2874 = vpow.pop %v2873
        %v2875 = vmul.f32 %v2783, 1.442695
        %v2876 = vpow.pop %v2875
        %v2877 = vmul.f32 %v2784, 1.442695
        %v2878 = vpow.pop %v2877
        %v2879 = vmul.f32 %v2785, 1.442695
        %v2880 = vpow.pop %v2879
        %v2881 = vmul.f32 %v2786, 1.442695
        %v2882 = vpow.pop %v2881
        %v2883 = vmul.f32 %v2787, 1.442695
        %v2884 = vpow.pop %v2883
        %v2885 = vmul.f32 %v2788, 1.442695
        %v2886 = vpow.pop %v2885
        %v2887 = vmul.f32 %v2789, 1.442695
        %v2888 = vpow.pop %v2887
        %v2889 = vmul.f32 %v2790, 1.442695
        %v2890 = vpow.pop %v2889
        %v2891 = vmul.f32 %v2791, 1.442695
        %v2892 = vpow.pop %v2891
        %v2893 = vmul.f32 %v2792, 1.442695
        %v2894 = vpow.pop %v2893
        %v2895 = vmul.f32 %v2793, 1.442695
        %v2896 = vpow.pop %v2895
        %v2897 = vmul.f32 %v2794, 1.442695
        %v2898 = vpow.pop %v2897
        %v2899 = vmul.f32 %v2795, 1.442695
        %v2900 = vpow.pop %v2899
        %v2901 = vmul.f32 %v2796, 1.442695
        %v2902 = vpow.pop %v2901
        %v2903 = vmul.f32 %v2797, 1.442695
        %v2904 = vpow.pop %v2903
        %v2905 = vmul.f32 %v2798, 1.442695
        %v2906 = vpow.pop %v2905
        %v2907 = vmul.f32 %v2799, 1.442695
        %v2908 = vpow.pop %v2907
        %v2909 = vmul.f32 %v2800, 1.442695
        %v2910 = vpow.pop %v2909
        %v2911 = vmul.f32 %v2801, 1.442695
        %v2912 = vpow.pop %v2911
        %v2913 = vmul.f32 %v2802, 1.442695
        %v2914 = vpow.pop %v2913
        %v2915 = vmul.f32 %v2803, 1.442695
        %v2916 = vpow.pop %v2915
        %v2917 = vmul.f32 %v2804, 1.442695
        %v2918 = vpow.pop %v2917
        %v2919 = vmul.f32 %v2805, 1.442695
        %v2920 = vpow.pop %v2919
        %v2921 = vmul.f32 %v2806, 1.442695
        %v2922 = vpow.pop %v2921
        %v2923 = vmul.f32 %v2807, 1.442695
        %v2924 = vpow.pop %v2923
        %v2925 = vmul.f32 %v2808, 1.442695
        %v2926 = vpow.pop %v2925
        %v2927 = vmul.f32 %v2809, 1.442695
        %v2928 = vpow.pop %v2927
        %v2929 = vmul.f32 %v2810, 1.442695
        %v2930 = vpow.pop %v2929
        %v2931 = vmul.f32 %v2811, 1.442695
        %v2932 = vpow.pop %v2931
        %v2933 = vmul.f32 %v2812, 1.442695
        %v2934 = vpow.pop %v2933
        %v2935 = vmul.f32 %v2813, 1.442695
        %v2936 = vpow.pop %v2935
        %v2937 = vmul.f32 %v2814, 1.442695
        %v2938 = vpow.pop %v2937
        %v2939 = vmul.f32 %v2815, 1.442695
        %v2940 = vpow.pop %v2939
        %v2941 = vmul.f32 %v2816, 1.442695
        %v2942 = vpow.pop %v2941
        %v2943 = vmul.f32 %v2817, 1.442695
        %v2944 = vpow.pop %v2943
        %v2945 = vmul.f32 %v2818, 1.442695
        %v2946 = vpow.pop %v2945
        %v2947 = vsel %vm1094, %v2820, 0.0
        %2948 = vadd.xlane.f32.xlu0 %v2947
        %v2949 = vpop.xlane.xlu0 %2948
        %v2950 = vsel %vm1094, %v2822, 0.0
        %2951 = vadd.xlane.f32.xlu0 %v2950
        %v2952 = vpop.xlane.xlu0 %2951
        %v2953 = vsel %vm1094, %v2824, 0.0
        %2954 = vadd.xlane.f32.xlu0 %v2953
        %v2955 = vpop.xlane.xlu0 %2954
        %v2956 = vsel %vm1094, %v2826, 0.0
        %2957 = vadd.xlane.f32.xlu0 %v2956
        %v2958 = vpop.xlane.xlu0 %2957
        %v2959 = vsel %vm1094, %v2828, 0.0
        %2960 = vadd.xlane.f32.xlu0 %v2959
        %v2961 = vpop.xlane.xlu0 %2960
        %v2962 = vsel %vm1094, %v2830, 0.0
        %2963 = vadd.xlane.f32.xlu0 %v2962
        %v2964 = vpop.xlane.xlu0 %2963
        %v2965 = vsel %vm1094, %v2832, 0.0
        %2966 = vadd.xlane.f32.xlu0 %v2965
        %v2967 = vpop.xlane.xlu0 %2966
        %v2968 = vsel %vm1094, %v2834, 0.0
        %2969 = vadd.xlane.f32.xlu0 %v2968
        %v2970 = vpop.xlane.xlu0 %2969
        %v2971 = vsel %vm1094, %v2836, 0.0
        %2972 = vadd.xlane.f32.xlu0 %v2971
        %v2973 = vpop.xlane.xlu0 %2972
        %v2974 = vsel %vm1094, %v2838, 0.0
        %2975 = vadd.xlane.f32.xlu0 %v2974
        %v2976 = vpop.xlane.xlu0 %2975
        %v2977 = vsel %vm1094, %v2840, 0.0
        %2978 = vadd.xlane.f32.xlu0 %v2977
        %v2979 = vpop.xlane.xlu0 %2978
        %v2980 = vsel %vm1094, %v2842, 0.0
        %2981 = vadd.xlane.f32.xlu0 %v2980
        %v2982 = vpop.xlane.xlu0 %2981
        %v2983 = vsel %vm1094, %v2844, 0.0
        %2984 = vadd.xlane.f32.xlu0 %v2983
        %v2985 = vpop.xlane.xlu0 %2984
        %v2986 = vsel %vm1094, %v2846, 0.0
        %2987 = vadd.xlane.f32.xlu0 %v2986
        %v2988 = vpop.xlane.xlu0 %2987
        %v2989 = vsel %vm1094, %v2848, 0.0
        %2990 = vadd.xlane.f32.xlu0 %v2989
        %v2991 = vpop.xlane.xlu0 %2990
        %v2992 = vsel %vm1094, %v2850, 0.0
        %2993 = vadd.xlane.f32.xlu0 %v2992
        %v2994 = vpop.xlane.xlu0 %2993
        %v2995 = vsel %vm1094, %v2852, 0.0
        %2996 = vadd.xlane.f32.xlu0 %v2995
        %v2997 = vpop.xlane.xlu0 %2996
        %v2998 = vsel %vm1094, %v2854, 0.0
        %2999 = vadd.xlane.f32.xlu0 %v2998
        %v3000 = vpop.xlane.xlu0 %2999
        %v3001 = vsel %vm1094, %v2856, 0.0
        %3002 = vadd.xlane.f32.xlu0 %v3001
        %v3003 = vpop.xlane.xlu0 %3002
        %v3004 = vsel %vm1094, %v2858, 0.0
        %3005 = vadd.xlane.f32.xlu0 %v3004
        %v3006 = vpop.xlane.xlu0 %3005
        %v3007 = vsel %vm1094, %v2860, 0.0
        %3008 = vadd.xlane.f32.xlu0 %v3007
        %v3009 = vpop.xlane.xlu0 %3008
        %v3010 = vsel %vm1094, %v2862, 0.0
        %3011 = vadd.xlane.f32.xlu0 %v3010
        %v3012 = vpop.xlane.xlu0 %3011
        %v3013 = vsel %vm1094, %v2864, 0.0
        %3014 = vadd.xlane.f32.xlu0 %v3013
        %v3015 = vpop.xlane.xlu0 %3014
        %v3016 = vsel %vm1094, %v2866, 0.0
        %3017 = vadd.xlane.f32.xlu0 %v3016
        %v3018 = vpop.xlane.xlu0 %3017
        %v3019 = vsel %vm1094, %v2868, 0.0
        %3020 = vadd.xlane.f32.xlu0 %v3019
        %v3021 = vpop.xlane.xlu0 %3020
        %v3022 = vsel %vm1094, %v2870, 0.0
        %3023 = vadd.xlane.f32.xlu0 %v3022
        %v3024 = vpop.xlane.xlu0 %3023
        %v3025 = vsel %vm1094, %v2872, 0.0
        %3026 = vadd.xlane.f32.xlu0 %v3025
        %v3027 = vpop.xlane.xlu0 %3026
        %v3028 = vsel %vm1094, %v2874, 0.0
        %3029 = vadd.xlane.f32.xlu0 %v3028
        %v3030 = vpop.xlane.xlu0 %3029
        %v3031 = vsel %vm1094, %v2876, 0.0
        %3032 = vadd.xlane.f32.xlu0 %v3031
        %v3033 = vpop.xlane.xlu0 %3032
        %v3034 = vsel %vm1094, %v2878, 0.0
        %3035 = vadd.xlane.f32.xlu0 %v3034
        %v3036 = vpop.xlane.xlu0 %3035
        %v3037 = vsel %vm1094, %v2880, 0.0
        %3038 = vadd.xlane.f32.xlu0 %v3037
        %v3039 = vpop.xlane.xlu0 %3038
        %v3040 = vsel %vm1094, %v2882, 0.0
        %3041 = vadd.xlane.f32.xlu0 %v3040
        %v3042 = vpop.xlane.xlu0 %3041
        %v3043 = vsel %vm1094, %v2884, 0.0
        %3044 = vadd.xlane.f32.xlu0 %v3043
        %v3045 = vpop.xlane.xlu0 %3044
        %v3046 = vsel %vm1094, %v2886, 0.0
        %3047 = vadd.xlane.f32.xlu0 %v3046
        %v3048 = vpop.xlane.xlu0 %3047
        %v3049 = vsel %vm1094, %v2888, 0.0
        %3050 = vadd.xlane.f32.xlu0 %v3049
        %v3051 = vpop.xlane.xlu0 %3050
        %v3052 = vsel %vm1094, %v2890, 0.0
        %3053 = vadd.xlane.f32.xlu0 %v3052
        %v3054 = vpop.xlane.xlu0 %3053
        %v3055 = vsel %vm1094, %v2892, 0.0
        %3056 = vadd.xlane.f32.xlu0 %v3055
        %v3057 = vpop.xlane.xlu0 %3056
        %v3058 = vsel %vm1094, %v2894, 0.0
        %3059 = vadd.xlane.f32.xlu0 %v3058
        %v3060 = vpop.xlane.xlu0 %3059
        %v3061 = vsel %vm1094, %v2896, 0.0
        %3062 = vadd.xlane.f32.xlu0 %v3061
        %v3063 = vpop.xlane.xlu0 %3062
        %v3064 = vsel %vm1094, %v2898, 0.0
        %3065 = vadd.xlane.f32.xlu0 %v3064
        %v3066 = vpop.xlane.xlu0 %3065
        %v3067 = vsel %vm1094, %v2900, 0.0
        %3068 = vadd.xlane.f32.xlu0 %v3067
        %v3069 = vpop.xlane.xlu0 %3068
        %v3070 = vsel %vm1094, %v2902, 0.0
        %3071 = vadd.xlane.f32.xlu0 %v3070
        %v3072 = vpop.xlane.xlu0 %3071
        %v3073 = vsel %vm1094, %v2904, 0.0
        %3074 = vadd.xlane.f32.xlu0 %v3073
        %v3075 = vpop.xlane.xlu0 %3074
        %v3076 = vsel %vm1094, %v2906, 0.0
        %3077 = vadd.xlane.f32.xlu0 %v3076
        %v3078 = vpop.xlane.xlu0 %3077
        %v3079 = vsel %vm1094, %v2908, 0.0
        %3080 = vadd.xlane.f32.xlu0 %v3079
        %v3081 = vpop.xlane.xlu0 %3080
        %v3082 = vsel %vm1094, %v2910, 0.0
        %3083 = vadd.xlane.f32.xlu0 %v3082
        %v3084 = vpop.xlane.xlu0 %3083
        %v3085 = vsel %vm1094, %v2912, 0.0
        %3086 = vadd.xlane.f32.xlu0 %v3085
        %v3087 = vpop.xlane.xlu0 %3086
        %v3088 = vsel %vm1094, %v2914, 0.0
        %3089 = vadd.xlane.f32.xlu0 %v3088
        %v3090 = vpop.xlane.xlu0 %3089
        %v3091 = vsel %vm1094, %v2916, 0.0
        %3092 = vadd.xlane.f32.xlu0 %v3091
        %v3093 = vpop.xlane.xlu0 %3092
        %v3094 = vsel %vm1094, %v2918, 0.0
        %3095 = vadd.xlane.f32.xlu0 %v3094
        %v3096 = vpop.xlane.xlu0 %3095
        %v3097 = vsel %vm1094, %v2920, 0.0
        %3098 = vadd.xlane.f32.xlu0 %v3097
        %v3099 = vpop.xlane.xlu0 %3098
        %v3100 = vsel %vm1094, %v2922, 0.0
        %3101 = vadd.xlane.f32.xlu0 %v3100
        %v3102 = vpop.xlane.xlu0 %3101
        %v3103 = vsel %vm1094, %v2924, 0.0
        %3104 = vadd.xlane.f32.xlu0 %v3103
        %v3105 = vpop.xlane.xlu0 %3104
        %v3106 = vsel %vm1094, %v2926, 0.0
        %3107 = vadd.xlane.f32.xlu0 %v3106
        %v3108 = vpop.xlane.xlu0 %3107
        %v3109 = vsel %vm1094, %v2928, 0.0
        %3110 = vadd.xlane.f32.xlu0 %v3109
        %v3111 = vpop.xlane.xlu0 %3110
        %v3112 = vsel %vm1094, %v2930, 0.0
        %3113 = vadd.xlane.f32.xlu0 %v3112
        %v3114 = vpop.xlane.xlu0 %3113
        %v3115 = vsel %vm1094, %v2932, 0.0
        %3116 = vadd.xlane.f32.xlu0 %v3115
        %v3117 = vpop.xlane.xlu0 %3116
        %v3118 = vsel %vm1094, %v2934, 0.0
        %3119 = vadd.xlane.f32.xlu0 %v3118
        %v3120 = vpop.xlane.xlu0 %3119
        %v3121 = vsel %vm1094, %v2936, 0.0
        %3122 = vadd.xlane.f32.xlu0 %v3121
        %v3123 = vpop.xlane.xlu0 %3122
        %v3124 = vsel %vm1094, %v2938, 0.0
        %3125 = vadd.xlane.f32.xlu0 %v3124
        %v3126 = vpop.xlane.xlu0 %3125
        %v3127 = vsel %vm1094, %v2940, 0.0
        %3128 = vadd.xlane.f32.xlu0 %v3127
        %v3129 = vpop.xlane.xlu0 %3128
        %v3130 = vsel %vm1094, %v2942, 0.0
        %3131 = vadd.xlane.f32.xlu0 %v3130
        %v3132 = vpop.xlane.xlu0 %3131
        %v3133 = vsel %vm1094, %v2944, 0.0
        %3134 = vadd.xlane.f32.xlu0 %v3133
        %v3135 = vpop.xlane.xlu0 %3134
        %v3136 = vsel %vm1094, %v2946, 0.0
        %3137 = vadd.xlane.f32.xlu0 %v3136
        %v3138 = vpop.xlane.xlu0 %3137
        %v3139 = vrcp.pop %v2949
        %v3140 = vrcp.pop %v2952
        %v3141 = vrcp.pop %v2955
        %v3142 = vrcp.pop %v2958
        %v3143 = vrcp.pop %v2961
        %v3144 = vrcp.pop %v2964
        %v3145 = vrcp.pop %v2967
        %v3146 = vrcp.pop %v2970
        %v3147 = vrcp.pop %v2973
        %v3148 = vrcp.pop %v2976
        %v3149 = vrcp.pop %v2979
        %v3150 = vrcp.pop %v2982
        %v3151 = vrcp.pop %v2985
        %v3152 = vrcp.pop %v2988
        %v3153 = vrcp.pop %v2991
        %v3154 = vrcp.pop %v2994
        %v3155 = vrcp.pop %v2997
        %v3156 = vrcp.pop %v3000
        %v3157 = vrcp.pop %v3003
        %v3158 = vrcp.pop %v3006
        %v3159 = vrcp.pop %v3009
        %v3160 = vrcp.pop %v3012
        %v3161 = vrcp.pop %v3015
        %v3162 = vrcp.pop %v3018
        %v3163 = vrcp.pop %v3021
        %v3164 = vrcp.pop %v3024
        %v3165 = vrcp.pop %v3027
        %v3166 = vrcp.pop %v3030
        %v3167 = vrcp.pop %v3033
        %v3168 = vrcp.pop %v3036
        %v3169 = vrcp.pop %v3039
        %v3170 = vrcp.pop %v3042
        %v3171 = vrcp.pop %v3045
        %v3172 = vrcp.pop %v3048
        %v3173 = vrcp.pop %v3051
        %v3174 = vrcp.pop %v3054
        %v3175 = vrcp.pop %v3057
        %v3176 = vrcp.pop %v3060
        %v3177 = vrcp.pop %v3063
        %v3178 = vrcp.pop %v3066
        %v3179 = vrcp.pop %v3069
        %v3180 = vrcp.pop %v3072
        %v3181 = vrcp.pop %v3075
        %v3182 = vrcp.pop %v3078
        %v3183 = vrcp.pop %v3081
        %v3184 = vrcp.pop %v3084
        %v3185 = vrcp.pop %v3087
        %v3186 = vrcp.pop %v3090
        %v3187 = vrcp.pop %v3093
        %v3188 = vrcp.pop %v3096
        %v3189 = vrcp.pop %v3099
        %v3190 = vrcp.pop %v3102
        %v3191 = vrcp.pop %v3105
        %v3192 = vrcp.pop %v3108
        %v3193 = vrcp.pop %v3111
        %v3194 = vrcp.pop %v3114
        %v3195 = vrcp.pop %v3117
        %v3196 = vrcp.pop %v3120
        %v3197 = vrcp.pop %v3123
        %v3198 = vrcp.pop %v3126
        %v3199 = vrcp.pop %v3129
        %v3200 = vrcp.pop %v3132
        %v3201 = vrcp.pop %v3135
        %v3202 = vrcp.pop %v3138
        %v3203 = vmul.f32 %v2820, %v3139
        %v3204 = vmul.f32 %v2822, %v3140
        %v3205 = vmul.f32 %v2824, %v3141
        %v3206 = vmul.f32 %v2826, %v3142
        %v3207 = vmul.f32 %v2828, %v3143
        %v3208 = vmul.f32 %v2830, %v3144
        %v3209 = vmul.f32 %v2832, %v3145
        %v3210 = vmul.f32 %v2834, %v3146
        %v3211 = vmul.f32 %v2836, %v3147
        %v3212 = vmul.f32 %v2838, %v3148
        %v3213 = vmul.f32 %v2840, %v3149
        %v3214 = vmul.f32 %v2842, %v3150
        %v3215 = vmul.f32 %v2844, %v3151
        %v3216 = vmul.f32 %v2846, %v3152
        %v3217 = vmul.f32 %v2848, %v3153
        %v3218 = vmul.f32 %v2850, %v3154
        %v3219 = vmul.f32 %v2852, %v3155
        %v3220 = vmul.f32 %v2854, %v3156
        %v3221 = vmul.f32 %v2856, %v3157
        %v3222 = vmul.f32 %v2858, %v3158
        %v3223 = vmul.f32 %v2860, %v3159
        %v3224 = vmul.f32 %v2862, %v3160
        %v3225 = vmul.f32 %v2864, %v3161
        %v3226 = vmul.f32 %v2866, %v3162
        %v3227 = vmul.f32 %v2868, %v3163
        %v3228 = vmul.f32 %v2870, %v3164
        %v3229 = vmul.f32 %v2872, %v3165
        %v3230 = vmul.f32 %v2874, %v3166
        %v3231 = vmul.f32 %v2876, %v3167
        %v3232 = vmul.f32 %v2878, %v3168
        %v3233 = vmul.f32 %v2880, %v3169
        %v3234 = vmul.f32 %v2882, %v3170
        %v3235 = vmul.f32 %v2884, %v3171
        %v3236 = vmul.f32 %v2886, %v3172
        %v3237 = vmul.f32 %v2888, %v3173
        %v3238 = vmul.f32 %v2890, %v3174
        %v3239 = vmul.f32 %v2892, %v3175
        %v3240 = vmul.f32 %v2894, %v3176
        %v3241 = vmul.f32 %v2896, %v3177
        %v3242 = vmul.f32 %v2898, %v3178
        %v3243 = vmul.f32 %v2900, %v3179
        %v3244 = vmul.f32 %v2902, %v3180
        %v3245 = vmul.f32 %v2904, %v3181
        %v3246 = vmul.f32 %v2906, %v3182
        %v3247 = vmul.f32 %v2908, %v3183
        %v3248 = vmul.f32 %v2910, %v3184
        %v3249 = vmul.f32 %v2912, %v3185
        %v3250 = vmul.f32 %v2914, %v3186
        %v3251 = vmul.f32 %v2916, %v3187
        %v3252 = vmul.f32 %v2918, %v3188
        %v3253 = vmul.f32 %v2920, %v3189
        %v3254 = vmul.f32 %v2922, %v3190
        %v3255 = vmul.f32 %v2924, %v3191
        %v3256 = vmul.f32 %v2926, %v3192
        %v3257 = vmul.f32 %v2928, %v3193
        %v3258 = vmul.f32 %v2930, %v3194
        %v3259 = vmul.f32 %v2932, %v3195
        %v3260 = vmul.f32 %v2934, %v3196
        %v3261 = vmul.f32 %v2936, %v3197
        %v3262 = vmul.f32 %v2938, %v3198
        %v3263 = vmul.f32 %v2940, %v3199
        %v3264 = vmul.f32 %v2942, %v3200
        %v3265 = vmul.f32 %v2944, %v3201
        %v3266 = vmul.f32 %v2946, %v3202
        %v3267 = vpack.c.bf16 %v3203, %v3203
        %v3268 = vpack.c.bf16 %v3204, %v3204
        %v3269 = vpack.c.bf16 %v3205, %v3205
        %v3270 = vpack.c.bf16 %v3206, %v3206
        %v3271 = vpack.c.bf16 %v3207, %v3207
        %v3272 = vpack.c.bf16 %v3208, %v3208
        %v3273 = vpack.c.bf16 %v3209, %v3209
        %v3274 = vpack.c.bf16 %v3210, %v3210
        %v3275 = vpack.c.bf16 %v3211, %v3211
        %v3276 = vpack.c.bf16 %v3212, %v3212
        %v3277 = vpack.c.bf16 %v3213, %v3213
        %v3278 = vpack.c.bf16 %v3214, %v3214
        %v3279 = vpack.c.bf16 %v3215, %v3215
        %v3280 = vpack.c.bf16 %v3216, %v3216
        %v3281 = vpack.c.bf16 %v3217, %v3217
        %v3282 = vpack.c.bf16 %v3218, %v3218
        %v3283 = vpack.c.bf16 %v3219, %v3219
        %v3284 = vpack.c.bf16 %v3220, %v3220
        %v3285 = vpack.c.bf16 %v3221, %v3221
        %v3286 = vpack.c.bf16 %v3222, %v3222
        %v3287 = vpack.c.bf16 %v3223, %v3223
        %v3288 = vpack.c.bf16 %v3224, %v3224
        %v3289 = vpack.c.bf16 %v3225, %v3225
        %v3290 = vpack.c.bf16 %v3226, %v3226
        %v3291 = vpack.c.bf16 %v3227, %v3227
        %v3292 = vpack.c.bf16 %v3228, %v3228
        %v3293 = vpack.c.bf16 %v3229, %v3229
        %v3294 = vpack.c.bf16 %v3230, %v3230
        %v3295 = vpack.c.bf16 %v3231, %v3231
        %v3296 = vpack.c.bf16 %v3232, %v3232
        %v3297 = vpack.c.bf16 %v3233, %v3233
        %v3298 = vpack.c.bf16 %v3234, %v3234
        %v3299 = vpack.c.bf16 %v3235, %v3235
        %v3300 = vpack.c.bf16 %v3236, %v3236
        %v3301 = vpack.c.bf16 %v3237, %v3237
        %v3302 = vpack.c.bf16 %v3238, %v3238
        %v3303 = vpack.c.bf16 %v3239, %v3239
        %v3304 = vpack.c.bf16 %v3240, %v3240
        %v3305 = vpack.c.bf16 %v3241, %v3241
        %v3306 = vpack.c.bf16 %v3242, %v3242
        %v3307 = vpack.c.bf16 %v3243, %v3243
        %v3308 = vpack.c.bf16 %v3244, %v3244
        %v3309 = vpack.c.bf16 %v3245, %v3245
        %v3310 = vpack.c.bf16 %v3246, %v3246
        %v3311 = vpack.c.bf16 %v3247, %v3247
        %v3312 = vpack.c.bf16 %v3248, %v3248
        %v3313 = vpack.c.bf16 %v3249, %v3249
        %v3314 = vpack.c.bf16 %v3250, %v3250
        %v3315 = vpack.c.bf16 %v3251, %v3251
        %v3316 = vpack.c.bf16 %v3252, %v3252
        %v3317 = vpack.c.bf16 %v3253, %v3253
        %v3318 = vpack.c.bf16 %v3254, %v3254
        %v3319 = vpack.c.bf16 %v3255, %v3255
        %v3320 = vpack.c.bf16 %v3256, %v3256
        %v3321 = vpack.c.bf16 %v3257, %v3257
        %v3322 = vpack.c.bf16 %v3258, %v3258
        %v3323 = vpack.c.bf16 %v3259, %v3259
        %v3324 = vpack.c.bf16 %v3260, %v3260
        %v3325 = vpack.c.bf16 %v3261, %v3261
        %v3326 = vpack.c.bf16 %v3262, %v3262
        %v3327 = vpack.c.bf16 %v3263, %v3263
        %v3328 = vpack.c.bf16 %v3264, %v3264
        %v3329 = vpack.c.bf16 %v3265, %v3265
        %v3330 = vpack.c.bf16 %v3266, %v3266
        %3331 = vrot.lane.b32.xlu0 %v1091, 64
        %v3332 = vpop.permute.xlu0 %3331
        %v3334 = vsel %vm1094, %v3267, 0
        %vm3336 = vcmask 1043456
        %v3338 = vsel %vm3336, %v3332, 0
        %3340 = vmatpush.bf16.msra.mxu0 0
        %3341 = vmatpush.bf16.msra.mxu0 0
        %3342 = vmatpush.bf16.msra.mxu0 0
        %3343 = vmatpush.bf16.msra.mxu0 0
        %3344 = vmatpush.bf16.msra.mxu0 0
        %3345 = vmatpush.bf16.msra.mxu0 0
        %3346 = vmatpush.bf16.msra.mxu0 0
        %3347 = vmatpush.bf16.msra.mxu0 %v3338
        %3348 = vmatmul.bf16.gmra.mxu0 %v3334
        %v3349 = vpop.f32.mrf.mxu0
        %v3350 = vadd.f32 0.0, %v3349
        %v3351 = vpop.f32.mrf.mxu0
        %3352 = vdwg.mxu0
        %3353 = vrot.lane.b32.xlu0 %v1115, 64
        %v3354 = vpop.permute.xlu0 %3353
        %v3356 = vsel %vm1094, %v3268, 0
        %v3359 = vsel %vm3336, %v3354, 0
        %3361 = vmatpush.bf16.msra.mxu0 0
        %3362 = vmatpush.bf16.msra.mxu0 0
        %3363 = vmatpush.bf16.msra.mxu0 0
        %3364 = vmatpush.bf16.msra.mxu0 0
        %3365 = vmatpush.bf16.msra.mxu0 0
        %3366 = vmatpush.bf16.msra.mxu0 0
        %3367 = vmatpush.bf16.msra.mxu0 0
        %3368 = vmatpush.bf16.msra.mxu0 %v3359
        %3369 = vmatmul.bf16.gmra.mxu0 %v3356
        %v3370 = vpop.f32.mrf.mxu0
        %v3371 = vadd.f32 0.0, %v3370
        %v3372 = vpop.f32.mrf.mxu0
        %3373 = vdwg.mxu0
        %3374 = vrot.lane.b32.xlu0 %v1138, 64
        %v3375 = vpop.permute.xlu0 %3374
        %v3377 = vsel %vm1094, %v3269, 0
        %v3380 = vsel %vm3336, %v3375, 0
        %3382 = vmatpush.bf16.msra.mxu0 0
        %3383 = vmatpush.bf16.msra.mxu0 0
        %3384 = vmatpush.bf16.msra.mxu0 0
        %3385 = vmatpush.bf16.msra.mxu0 0
        %3386 = vmatpush.bf16.msra.mxu0 0
        %3387 = vmatpush.bf16.msra.mxu0 0
        %3388 = vmatpush.bf16.msra.mxu0 0
        %3389 = vmatpush.bf16.msra.mxu0 %v3380
        %3390 = vmatmul.bf16.gmra.mxu0 %v3377
        %v3391 = vpop.f32.mrf.mxu0
        %v3392 = vadd.f32 0.0, %v3391
        %v3393 = vpop.f32.mrf.mxu0
        %3394 = vdwg.mxu0
        %3395 = vrot.lane.b32.xlu0 %v1161, 64
        %v3396 = vpop.permute.xlu0 %3395
        %v3398 = vsel %vm1094, %v3270, 0
        %v3401 = vsel %vm3336, %v3396, 0
        %3403 = vmatpush.bf16.msra.mxu0 0
        %3404 = vmatpush.bf16.msra.mxu0 0
        %3405 = vmatpush.bf16.msra.mxu0 0
        %3406 = vmatpush.bf16.msra.mxu0 0
        %3407 = vmatpush.bf16.msra.mxu0 0
        %3408 = vmatpush.bf16.msra.mxu0 0
        %3409 = vmatpush.bf16.msra.mxu0 0
        %3410 = vmatpush.bf16.msra.mxu0 %v3401
        %3411 = vmatmul.bf16.gmra.mxu0 %v3398
        %v3412 = vpop.f32.mrf.mxu0
        %v3413 = vadd.f32 0.0, %v3412
        %v3414 = vpop.f32.mrf.mxu0
        %3415 = vdwg.mxu0
        %3416 = vrot.lane.b32.xlu0 %v1184, 64
        %v3417 = vpop.permute.xlu0 %3416
        %v3419 = vsel %vm1094, %v3271, 0
        %v3422 = vsel %vm3336, %v3417, 0
        %3424 = vmatpush.bf16.msra.mxu0 0
        %3425 = vmatpush.bf16.msra.mxu0 0
        %3426 = vmatpush.bf16.msra.mxu0 0
        %3427 = vmatpush.bf16.msra.mxu0 0
        %3428 = vmatpush.bf16.msra.mxu0 0
        %3429 = vmatpush.bf16.msra.mxu0 0
        %3430 = vmatpush.bf16.msra.mxu0 0
        %3431 = vmatpush.bf16.msra.mxu0 %v3422
        %3432 = vmatmul.bf16.gmra.mxu0 %v3419
        %v3433 = vpop.f32.mrf.mxu0
        %v3434 = vadd.f32 0.0, %v3433
        %v3435 = vpop.f32.mrf.mxu0
        %3436 = vdwg.mxu0
        %3437 = vrot.lane.b32.xlu0 %v1207, 64
        %v3438 = vpop.permute.xlu0 %3437
        %v3440 = vsel %vm1094, %v3272, 0
        %v3443 = vsel %vm3336, %v3438, 0
        %3445 = vmatpush.bf16.msra.mxu0 0
        %3446 = vmatpush.bf16.msra.mxu0 0
        %3447 = vmatpush.bf16.msra.mxu0 0
        %3448 = vmatpush.bf16.msra.mxu0 0
        %3449 = vmatpush.bf16.msra.mxu0 0
        %3450 = vmatpush.bf16.msra.mxu0 0
        %3451 = vmatpush.bf16.msra.mxu0 0
        %3452 = vmatpush.bf16.msra.mxu0 %v3443
        %3453 = vmatmul.bf16.gmra.mxu0 %v3440
        %v3454 = vpop.f32.mrf.mxu0
        %v3455 = vadd.f32 0.0, %v3454
        %v3456 = vpop.f32.mrf.mxu0
        %3457 = vdwg.mxu0
        %3458 = vrot.lane.b32.xlu0 %v1230, 64
        %v3459 = vpop.permute.xlu0 %3458
        %v3461 = vsel %vm1094, %v3273, 0
        %v3464 = vsel %vm3336, %v3459, 0
        %3466 = vmatpush.bf16.msra.mxu0 0
        %3467 = vmatpush.bf16.msra.mxu0 0
        %3468 = vmatpush.bf16.msra.mxu0 0
        %3469 = vmatpush.bf16.msra.mxu0 0
        %3470 = vmatpush.bf16.msra.mxu0 0
        %3471 = vmatpush.bf16.msra.mxu0 0
        %3472 = vmatpush.bf16.msra.mxu0 0
        %3473 = vmatpush.bf16.msra.mxu0 %v3464
        %3474 = vmatmul.bf16.gmra.mxu0 %v3461
        %v3475 = vpop.f32.mrf.mxu0
        %v3476 = vadd.f32 0.0, %v3475
        %v3477 = vpop.f32.mrf.mxu0
        %3478 = vdwg.mxu0
        %3479 = vrot.lane.b32.xlu0 %v1253, 64
        %v3480 = vpop.permute.xlu0 %3479
        %v3482 = vsel %vm1094, %v3274, 0
        %v3485 = vsel %vm3336, %v3480, 0
        %3487 = vmatpush.bf16.msra.mxu0 0
        %3488 = vmatpush.bf16.msra.mxu0 0
        %3489 = vmatpush.bf16.msra.mxu0 0
        %3490 = vmatpush.bf16.msra.mxu0 0
        %3491 = vmatpush.bf16.msra.mxu0 0
        %3492 = vmatpush.bf16.msra.mxu0 0
        %3493 = vmatpush.bf16.msra.mxu0 0
        %3494 = vmatpush.bf16.msra.mxu0 %v3485
        %3495 = vmatmul.bf16.gmra.mxu0 %v3482
        %v3496 = vpop.f32.mrf.mxu0
        %v3497 = vadd.f32 0.0, %v3496
        %v3498 = vpop.f32.mrf.mxu0
        %3499 = vdwg.mxu0
        %3500 = vrot.lane.b32.xlu0 %v1276, 64
        %v3501 = vpop.permute.xlu0 %3500
        %v3503 = vsel %vm1094, %v3275, 0
        %v3506 = vsel %vm3336, %v3501, 0
        %3508 = vmatpush.bf16.msra.mxu0 0
        %3509 = vmatpush.bf16.msra.mxu0 0
        %3510 = vmatpush.bf16.msra.mxu0 0
        %3511 = vmatpush.bf16.msra.mxu0 0
        %3512 = vmatpush.bf16.msra.mxu0 0
        %3513 = vmatpush.bf16.msra.mxu0 0
        %3514 = vmatpush.bf16.msra.mxu0 0
        %3515 = vmatpush.bf16.msra.mxu0 %v3506
        %3516 = vmatmul.bf16.gmra.mxu0 %v3503
        %v3517 = vpop.f32.mrf.mxu0
        %v3518 = vadd.f32 0.0, %v3517
        %v3519 = vpop.f32.mrf.mxu0
        %3520 = vdwg.mxu0
        %3521 = vrot.lane.b32.xlu0 %v1299, 64
        %v3522 = vpop.permute.xlu0 %3521
        %v3524 = vsel %vm1094, %v3276, 0
        %v3527 = vsel %vm3336, %v3522, 0
        %3529 = vmatpush.bf16.msra.mxu0 0
        %3530 = vmatpush.bf16.msra.mxu0 0
        %3531 = vmatpush.bf16.msra.mxu0 0
        %3532 = vmatpush.bf16.msra.mxu0 0
        %3533 = vmatpush.bf16.msra.mxu0 0
        %3534 = vmatpush.bf16.msra.mxu0 0
        %3535 = vmatpush.bf16.msra.mxu0 0
        %3536 = vmatpush.bf16.msra.mxu0 %v3527
        %3537 = vmatmul.bf16.gmra.mxu0 %v3524
        %v3538 = vpop.f32.mrf.mxu0
        %v3539 = vadd.f32 0.0, %v3538
        %v3540 = vpop.f32.mrf.mxu0
        %3541 = vdwg.mxu0
        %3542 = vrot.lane.b32.xlu0 %v1322, 64
        %v3543 = vpop.permute.xlu0 %3542
        %v3545 = vsel %vm1094, %v3277, 0
        %v3548 = vsel %vm3336, %v3543, 0
        %3550 = vmatpush.bf16.msra.mxu0 0
        %3551 = vmatpush.bf16.msra.mxu0 0
        %3552 = vmatpush.bf16.msra.mxu0 0
        %3553 = vmatpush.bf16.msra.mxu0 0
        %3554 = vmatpush.bf16.msra.mxu0 0
        %3555 = vmatpush.bf16.msra.mxu0 0
        %3556 = vmatpush.bf16.msra.mxu0 0
        %3557 = vmatpush.bf16.msra.mxu0 %v3548
        %3558 = vmatmul.bf16.gmra.mxu0 %v3545
        %v3559 = vpop.f32.mrf.mxu0
        %v3560 = vadd.f32 0.0, %v3559
        %v3561 = vpop.f32.mrf.mxu0
        %3562 = vdwg.mxu0
        %3563 = vrot.lane.b32.xlu0 %v1345, 64
        %v3564 = vpop.permute.xlu0 %3563
        %v3566 = vsel %vm1094, %v3278, 0
        %v3569 = vsel %vm3336, %v3564, 0
        %3571 = vmatpush.bf16.msra.mxu0 0
        %3572 = vmatpush.bf16.msra.mxu0 0
        %3573 = vmatpush.bf16.msra.mxu0 0
        %3574 = vmatpush.bf16.msra.mxu0 0
        %3575 = vmatpush.bf16.msra.mxu0 0
        %3576 = vmatpush.bf16.msra.mxu0 0
        %3577 = vmatpush.bf16.msra.mxu0 0
        %3578 = vmatpush.bf16.msra.mxu0 %v3569
        %3579 = vmatmul.bf16.gmra.mxu0 %v3566
        %v3580 = vpop.f32.mrf.mxu0
        %v3581 = vadd.f32 0.0, %v3580
        %v3582 = vpop.f32.mrf.mxu0
        %3583 = vdwg.mxu0
        %3584 = vrot.lane.b32.xlu0 %v1368, 64
        %v3585 = vpop.permute.xlu0 %3584
        %v3587 = vsel %vm1094, %v3279, 0
        %v3590 = vsel %vm3336, %v3585, 0
        %3592 = vmatpush.bf16.msra.mxu0 0
        %3593 = vmatpush.bf16.msra.mxu0 0
        %3594 = vmatpush.bf16.msra.mxu0 0
        %3595 = vmatpush.bf16.msra.mxu0 0
        %3596 = vmatpush.bf16.msra.mxu0 0
        %3597 = vmatpush.bf16.msra.mxu0 0
        %3598 = vmatpush.bf16.msra.mxu0 0
        %3599 = vmatpush.bf16.msra.mxu0 %v3590
        %3600 = vmatmul.bf16.gmra.mxu0 %v3587
        %v3601 = vpop.f32.mrf.mxu0
        %v3602 = vadd.f32 0.0, %v3601
        %v3603 = vpop.f32.mrf.mxu0
        %3604 = vdwg.mxu0
        %3605 = vrot.lane.b32.xlu0 %v1391, 64
        %v3606 = vpop.permute.xlu0 %3605
        %v3608 = vsel %vm1094, %v3280, 0
        %v3611 = vsel %vm3336, %v3606, 0
        %3613 = vmatpush.bf16.msra.mxu0 0
        %3614 = vmatpush.bf16.msra.mxu0 0
        %3615 = vmatpush.bf16.msra.mxu0 0
        %3616 = vmatpush.bf16.msra.mxu0 0
        %3617 = vmatpush.bf16.msra.mxu0 0
        %3618 = vmatpush.bf16.msra.mxu0 0
        %3619 = vmatpush.bf16.msra.mxu0 0
        %3620 = vmatpush.bf16.msra.mxu0 %v3611
        %3621 = vmatmul.bf16.gmra.mxu0 %v3608
        %v3622 = vpop.f32.mrf.mxu0
        %v3623 = vadd.f32 0.0, %v3622
        %v3624 = vpop.f32.mrf.mxu0
        %3625 = vdwg.mxu0
        %3626 = vrot.lane.b32.xlu0 %v1414, 64
        %v3627 = vpop.permute.xlu0 %3626
        %v3629 = vsel %vm1094, %v3281, 0
        %v3632 = vsel %vm3336, %v3627, 0
        %3634 = vmatpush.bf16.msra.mxu0 0
        %3635 = vmatpush.bf16.msra.mxu0 0
        %3636 = vmatpush.bf16.msra.mxu0 0
        %3637 = vmatpush.bf16.msra.mxu0 0
        %3638 = vmatpush.bf16.msra.mxu0 0
        %3639 = vmatpush.bf16.msra.mxu0 0
        %3640 = vmatpush.bf16.msra.mxu0 0
        %3641 = vmatpush.bf16.msra.mxu0 %v3632
        %3642 = vmatmul.bf16.gmra.mxu0 %v3629
        %v3643 = vpop.f32.mrf.mxu0
        %v3644 = vadd.f32 0.0, %v3643
        %v3645 = vpop.f32.mrf.mxu0
        %3646 = vdwg.mxu0
        %3647 = vrot.lane.b32.xlu0 %v1437, 64
        %v3648 = vpop.permute.xlu0 %3647
        %v3650 = vsel %vm1094, %v3282, 0
        %v3653 = vsel %vm3336, %v3648, 0
        %3655 = vmatpush.bf16.msra.mxu0 0
        %3656 = vmatpush.bf16.msra.mxu0 0
        %3657 = vmatpush.bf16.msra.mxu0 0
        %3658 = vmatpush.bf16.msra.mxu0 0
        %3659 = vmatpush.bf16.msra.mxu0 0
        %3660 = vmatpush.bf16.msra.mxu0 0
        %3661 = vmatpush.bf16.msra.mxu0 0
        %3662 = vmatpush.bf16.msra.mxu0 %v3653
        %3663 = vmatmul.bf16.gmra.mxu0 %v3650
        %v3664 = vpop.f32.mrf.mxu0
        %v3665 = vadd.f32 0.0, %v3664
        %v3666 = vpop.f32.mrf.mxu0
        %3667 = vdwg.mxu0
        %3668 = vrot.lane.b32.xlu0 %v1460, 64
        %v3669 = vpop.permute.xlu0 %3668
        %v3671 = vsel %vm1094, %v3283, 0
        %v3674 = vsel %vm3336, %v3669, 0
        %3676 = vmatpush.bf16.msra.mxu0 0
        %3677 = vmatpush.bf16.msra.mxu0 0
        %3678 = vmatpush.bf16.msra.mxu0 0
        %3679 = vmatpush.bf16.msra.mxu0 0
        %3680 = vmatpush.bf16.msra.mxu0 0
        %3681 = vmatpush.bf16.msra.mxu0 0
        %3682 = vmatpush.bf16.msra.mxu0 0
        %3683 = vmatpush.bf16.msra.mxu0 %v3674
        %3684 = vmatmul.bf16.gmra.mxu0 %v3671
        %v3685 = vpop.f32.mrf.mxu0
        %v3686 = vadd.f32 0.0, %v3685
        %v3687 = vpop.f32.mrf.mxu0
        %3688 = vdwg.mxu0
        %3689 = vrot.lane.b32.xlu0 %v1483, 64
        %v3690 = vpop.permute.xlu0 %3689
        %v3692 = vsel %vm1094, %v3284, 0
        %v3695 = vsel %vm3336, %v3690, 0
        %3697 = vmatpush.bf16.msra.mxu0 0
        %3698 = vmatpush.bf16.msra.mxu0 0
        %3699 = vmatpush.bf16.msra.mxu0 0
        %3700 = vmatpush.bf16.msra.mxu0 0
        %3701 = vmatpush.bf16.msra.mxu0 0
        %3702 = vmatpush.bf16.msra.mxu0 0
        %3703 = vmatpush.bf16.msra.mxu0 0
        %3704 = vmatpush.bf16.msra.mxu0 %v3695
        %3705 = vmatmul.bf16.gmra.mxu0 %v3692
        %v3706 = vpop.f32.mrf.mxu0
        %v3707 = vadd.f32 0.0, %v3706
        %v3708 = vpop.f32.mrf.mxu0
        %3709 = vdwg.mxu0
        %3710 = vrot.lane.b32.xlu0 %v1506, 64
        %v3711 = vpop.permute.xlu0 %3710
        %v3713 = vsel %vm1094, %v3285, 0
        %v3716 = vsel %vm3336, %v3711, 0
        %3718 = vmatpush.bf16.msra.mxu0 0
        %3719 = vmatpush.bf16.msra.mxu0 0
        %3720 = vmatpush.bf16.msra.mxu0 0
        %3721 = vmatpush.bf16.msra.mxu0 0
        %3722 = vmatpush.bf16.msra.mxu0 0
        %3723 = vmatpush.bf16.msra.mxu0 0
        %3724 = vmatpush.bf16.msra.mxu0 0
        %3725 = vmatpush.bf16.msra.mxu0 %v3716
        %3726 = vmatmul.bf16.gmra.mxu0 %v3713
        %v3727 = vpop.f32.mrf.mxu0
        %v3728 = vadd.f32 0.0, %v3727
        %v3729 = vpop.f32.mrf.mxu0
        %3730 = vdwg.mxu0
        %3731 = vrot.lane.b32.xlu0 %v1529, 64
        %v3732 = vpop.permute.xlu0 %3731
        %v3734 = vsel %vm1094, %v3286, 0
        %v3737 = vsel %vm3336, %v3732, 0
        %3739 = vmatpush.bf16.msra.mxu0 0
        %3740 = vmatpush.bf16.msra.mxu0 0
        %3741 = vmatpush.bf16.msra.mxu0 0
        %3742 = vmatpush.bf16.msra.mxu0 0
        %3743 = vmatpush.bf16.msra.mxu0 0
        %3744 = vmatpush.bf16.msra.mxu0 0
        %3745 = vmatpush.bf16.msra.mxu0 0
        %3746 = vmatpush.bf16.msra.mxu0 %v3737
        %3747 = vmatmul.bf16.gmra.mxu0 %v3734
        %v3748 = vpop.f32.mrf.mxu0
        %v3749 = vadd.f32 0.0, %v3748
        %v3750 = vpop.f32.mrf.mxu0
        %3751 = vdwg.mxu0
        %3752 = vrot.lane.b32.xlu0 %v1552, 64
        %v3753 = vpop.permute.xlu0 %3752
        %v3755 = vsel %vm1094, %v3287, 0
        %v3758 = vsel %vm3336, %v3753, 0
        %3760 = vmatpush.bf16.msra.mxu0 0
        %3761 = vmatpush.bf16.msra.mxu0 0
        %3762 = vmatpush.bf16.msra.mxu0 0
        %3763 = vmatpush.bf16.msra.mxu0 0
        %3764 = vmatpush.bf16.msra.mxu0 0
        %3765 = vmatpush.bf16.msra.mxu0 0
        %3766 = vmatpush.bf16.msra.mxu0 0
        %3767 = vmatpush.bf16.msra.mxu0 %v3758
        %3768 = vmatmul.bf16.gmra.mxu0 %v3755
        %v3769 = vpop.f32.mrf.mxu0
        %v3770 = vadd.f32 0.0, %v3769
        %v3771 = vpop.f32.mrf.mxu0
        %3772 = vdwg.mxu0
        %3773 = vrot.lane.b32.xlu0 %v1575, 64
        %v3774 = vpop.permute.xlu0 %3773
        %v3776 = vsel %vm1094, %v3288, 0
        %v3779 = vsel %vm3336, %v3774, 0
        %3781 = vmatpush.bf16.msra.mxu0 0
        %3782 = vmatpush.bf16.msra.mxu0 0
        %3783 = vmatpush.bf16.msra.mxu0 0
        %3784 = vmatpush.bf16.msra.mxu0 0
        %3785 = vmatpush.bf16.msra.mxu0 0
        %3786 = vmatpush.bf16.msra.mxu0 0
        %3787 = vmatpush.bf16.msra.mxu0 0
        %3788 = vmatpush.bf16.msra.mxu0 %v3779
        %3789 = vmatmul.bf16.gmra.mxu0 %v3776
        %v3790 = vpop.f32.mrf.mxu0
        %v3791 = vadd.f32 0.0, %v3790
        %v3792 = vpop.f32.mrf.mxu0
        %3793 = vdwg.mxu0
        %3794 = vrot.lane.b32.xlu0 %v1598, 64
        %v3795 = vpop.permute.xlu0 %3794
        %v3797 = vsel %vm1094, %v3289, 0
        %v3800 = vsel %vm3336, %v3795, 0
        %3802 = vmatpush.bf16.msra.mxu0 0
        %3803 = vmatpush.bf16.msra.mxu0 0
        %3804 = vmatpush.bf16.msra.mxu0 0
        %3805 = vmatpush.bf16.msra.mxu0 0
        %3806 = vmatpush.bf16.msra.mxu0 0
        %3807 = vmatpush.bf16.msra.mxu0 0
        %3808 = vmatpush.bf16.msra.mxu0 0
        %3809 = vmatpush.bf16.msra.mxu0 %v3800
        %3810 = vmatmul.bf16.gmra.mxu0 %v3797
        %v3811 = vpop.f32.mrf.mxu0
        %v3812 = vadd.f32 0.0, %v3811
        %v3813 = vpop.f32.mrf.mxu0
        %3814 = vdwg.mxu0
        %3815 = vrot.lane.b32.xlu0 %v1621, 64
        %v3816 = vpop.permute.xlu0 %3815
        %v3818 = vsel %vm1094, %v3290, 0
        %v3821 = vsel %vm3336, %v3816, 0
        %3823 = vmatpush.bf16.msra.mxu0 0
        %3824 = vmatpush.bf16.msra.mxu0 0
        %3825 = vmatpush.bf16.msra.mxu0 0
        %3826 = vmatpush.bf16.msra.mxu0 0
        %3827 = vmatpush.bf16.msra.mxu0 0
        %3828 = vmatpush.bf16.msra.mxu0 0
        %3829 = vmatpush.bf16.msra.mxu0 0
        %3830 = vmatpush.bf16.msra.mxu0 %v3821
        %3831 = vmatmul.bf16.gmra.mxu0 %v3818
        %v3832 = vpop.f32.mrf.mxu0
        %v3833 = vadd.f32 0.0, %v3832
        %v3834 = vpop.f32.mrf.mxu0
        %3835 = vdwg.mxu0
        %3836 = vrot.lane.b32.xlu0 %v1644, 64
        %v3837 = vpop.permute.xlu0 %3836
        %v3839 = vsel %vm1094, %v3291, 0
        %v3842 = vsel %vm3336, %v3837, 0
        %3844 = vmatpush.bf16.msra.mxu0 0
        %3845 = vmatpush.bf16.msra.mxu0 0
        %3846 = vmatpush.bf16.msra.mxu0 0
        %3847 = vmatpush.bf16.msra.mxu0 0
        %3848 = vmatpush.bf16.msra.mxu0 0
        %3849 = vmatpush.bf16.msra.mxu0 0
        %3850 = vmatpush.bf16.msra.mxu0 0
        %3851 = vmatpush.bf16.msra.mxu0 %v3842
        %3852 = vmatmul.bf16.gmra.mxu0 %v3839
        %v3853 = vpop.f32.mrf.mxu0
        %v3854 = vadd.f32 0.0, %v3853
        %v3855 = vpop.f32.mrf.mxu0
        %3856 = vdwg.mxu0
        %3857 = vrot.lane.b32.xlu0 %v1667, 64
        %v3858 = vpop.permute.xlu0 %3857
        %v3860 = vsel %vm1094, %v3292, 0
        %v3863 = vsel %vm3336, %v3858, 0
        %3865 = vmatpush.bf16.msra.mxu0 0
        %3866 = vmatpush.bf16.msra.mxu0 0
        %3867 = vmatpush.bf16.msra.mxu0 0
        %3868 = vmatpush.bf16.msra.mxu0 0
        %3869 = vmatpush.bf16.msra.mxu0 0
        %3870 = vmatpush.bf16.msra.mxu0 0
        %3871 = vmatpush.bf16.msra.mxu0 0
        %3872 = vmatpush.bf16.msra.mxu0 %v3863
        %3873 = vmatmul.bf16.gmra.mxu0 %v3860
        %v3874 = vpop.f32.mrf.mxu0
        %v3875 = vadd.f32 0.0, %v3874
        %v3876 = vpop.f32.mrf.mxu0
        %3877 = vdwg.mxu0
        %3878 = vrot.lane.b32.xlu0 %v1690, 64
        %v3879 = vpop.permute.xlu0 %3878
        %v3881 = vsel %vm1094, %v3293, 0
        %v3884 = vsel %vm3336, %v3879, 0
        %3886 = vmatpush.bf16.msra.mxu0 0
        %3887 = vmatpush.bf16.msra.mxu0 0
        %3888 = vmatpush.bf16.msra.mxu0 0
        %3889 = vmatpush.bf16.msra.mxu0 0
        %3890 = vmatpush.bf16.msra.mxu0 0
        %3891 = vmatpush.bf16.msra.mxu0 0
        %3892 = vmatpush.bf16.msra.mxu0 0
        %3893 = vmatpush.bf16.msra.mxu0 %v3884
        %3894 = vmatmul.bf16.gmra.mxu0 %v3881
        %v3895 = vpop.f32.mrf.mxu0
        %v3896 = vadd.f32 0.0, %v3895
        %v3897 = vpop.f32.mrf.mxu0
        %3898 = vdwg.mxu0
        %3899 = vrot.lane.b32.xlu0 %v1713, 64
        %v3900 = vpop.permute.xlu0 %3899
        %v3902 = vsel %vm1094, %v3294, 0
        %v3905 = vsel %vm3336, %v3900, 0
        %3907 = vmatpush.bf16.msra.mxu0 0
        %3908 = vmatpush.bf16.msra.mxu0 0
        %3909 = vmatpush.bf16.msra.mxu0 0
        %3910 = vmatpush.bf16.msra.mxu0 0
        %3911 = vmatpush.bf16.msra.mxu0 0
        %3912 = vmatpush.bf16.msra.mxu0 0
        %3913 = vmatpush.bf16.msra.mxu0 0
        %3914 = vmatpush.bf16.msra.mxu0 %v3905
        %3915 = vmatmul.bf16.gmra.mxu0 %v3902
        %v3916 = vpop.f32.mrf.mxu0
        %v3917 = vadd.f32 0.0, %v3916
        %v3918 = vpop.f32.mrf.mxu0
        %3919 = vdwg.mxu0
        %3920 = vrot.lane.b32.xlu0 %v1736, 64
        %v3921 = vpop.permute.xlu0 %3920
        %v3923 = vsel %vm1094, %v3295, 0
        %v3926 = vsel %vm3336, %v3921, 0
        %3928 = vmatpush.bf16.msra.mxu0 0
        %3929 = vmatpush.bf16.msra.mxu0 0
        %3930 = vmatpush.bf16.msra.mxu0 0
        %3931 = vmatpush.bf16.msra.mxu0 0
        %3932 = vmatpush.bf16.msra.mxu0 0
        %3933 = vmatpush.bf16.msra.mxu0 0
        %3934 = vmatpush.bf16.msra.mxu0 0
        %3935 = vmatpush.bf16.msra.mxu0 %v3926
        %3936 = vmatmul.bf16.gmra.mxu0 %v3923
        %v3937 = vpop.f32.mrf.mxu0
        %v3938 = vadd.f32 0.0, %v3937
        %v3939 = vpop.f32.mrf.mxu0
        %3940 = vdwg.mxu0
        %3941 = vrot.lane.b32.xlu0 %v1759, 64
        %v3942 = vpop.permute.xlu0 %3941
        %v3944 = vsel %vm1094, %v3296, 0
        %v3947 = vsel %vm3336, %v3942, 0
        %3949 = vmatpush.bf16.msra.mxu0 0
        %3950 = vmatpush.bf16.msra.mxu0 0
        %3951 = vmatpush.bf16.msra.mxu0 0
        %3952 = vmatpush.bf16.msra.mxu0 0
        %3953 = vmatpush.bf16.msra.mxu0 0
        %3954 = vmatpush.bf16.msra.mxu0 0
        %3955 = vmatpush.bf16.msra.mxu0 0
        %3956 = vmatpush.bf16.msra.mxu0 %v3947
        %3957 = vmatmul.bf16.gmra.mxu0 %v3944
        %v3958 = vpop.f32.mrf.mxu0
        %v3959 = vadd.f32 0.0, %v3958
        %v3960 = vpop.f32.mrf.mxu0
        %3961 = vdwg.mxu0
        %3962 = vrot.lane.b32.xlu0 %v1782, 64
        %v3963 = vpop.permute.xlu0 %3962
        %v3965 = vsel %vm1094, %v3297, 0
        %v3968 = vsel %vm3336, %v3963, 0
        %3970 = vmatpush.bf16.msra.mxu0 0
        %3971 = vmatpush.bf16.msra.mxu0 0
        %3972 = vmatpush.bf16.msra.mxu0 0
        %3973 = vmatpush.bf16.msra.mxu0 0
        %3974 = vmatpush.bf16.msra.mxu0 0
        %3975 = vmatpush.bf16.msra.mxu0 0
        %3976 = vmatpush.bf16.msra.mxu0 0
        %3977 = vmatpush.bf16.msra.mxu0 %v3968
        %3978 = vmatmul.bf16.gmra.mxu0 %v3965
        %v3979 = vpop.f32.mrf.mxu0
        %v3980 = vadd.f32 0.0, %v3979
        %v3981 = vpop.f32.mrf.mxu0
        %3982 = vdwg.mxu0
        %3983 = vrot.lane.b32.xlu0 %v1805, 64
        %v3984 = vpop.permute.xlu0 %3983
        %v3986 = vsel %vm1094, %v3298, 0
        %v3989 = vsel %vm3336, %v3984, 0
        %3991 = vmatpush.bf16.msra.mxu0 0
        %3992 = vmatpush.bf16.msra.mxu0 0
        %3993 = vmatpush.bf16.msra.mxu0 0
        %3994 = vmatpush.bf16.msra.mxu0 0
        %3995 = vmatpush.bf16.msra.mxu0 0
        %3996 = vmatpush.bf16.msra.mxu0 0
        %3997 = vmatpush.bf16.msra.mxu0 0
        %3998 = vmatpush.bf16.msra.mxu0 %v3989
        %3999 = vmatmul.bf16.gmra.mxu0 %v3986
        %v4000 = vpop.f32.mrf.mxu0
        %v4001 = vadd.f32 0.0, %v4000
        %v4002 = vpop.f32.mrf.mxu0
        %4003 = vdwg.mxu0
        %4004 = vrot.lane.b32.xlu0 %v1828, 64
        %v4005 = vpop.permute.xlu0 %4004
        %v4007 = vsel %vm1094, %v3299, 0
        %v4010 = vsel %vm3336, %v4005, 0
        %4012 = vmatpush.bf16.msra.mxu0 0
        %4013 = vmatpush.bf16.msra.mxu0 0
        %4014 = vmatpush.bf16.msra.mxu0 0
        %4015 = vmatpush.bf16.msra.mxu0 0
        %4016 = vmatpush.bf16.msra.mxu0 0
        %4017 = vmatpush.bf16.msra.mxu0 0
        %4018 = vmatpush.bf16.msra.mxu0 0
        %4019 = vmatpush.bf16.msra.mxu0 %v4010
        %4020 = vmatmul.bf16.gmra.mxu0 %v4007
        %v4021 = vpop.f32.mrf.mxu0
        %v4022 = vadd.f32 0.0, %v4021
        %v4023 = vpop.f32.mrf.mxu0
        %4024 = vdwg.mxu0
        %4025 = vrot.lane.b32.xlu0 %v1851, 64
        %v4026 = vpop.permute.xlu0 %4025
        %v4028 = vsel %vm1094, %v3300, 0
        %v4031 = vsel %vm3336, %v4026, 0
        %4033 = vmatpush.bf16.msra.mxu0 0
        %4034 = vmatpush.bf16.msra.mxu0 0
        %4035 = vmatpush.bf16.msra.mxu0 0
        %4036 = vmatpush.bf16.msra.mxu0 0
        %4037 = vmatpush.bf16.msra.mxu0 0
        %4038 = vmatpush.bf16.msra.mxu0 0
        %4039 = vmatpush.bf16.msra.mxu0 0
        %4040 = vmatpush.bf16.msra.mxu0 %v4031
        %4041 = vmatmul.bf16.gmra.mxu0 %v4028
        %v4042 = vpop.f32.mrf.mxu0
        %v4043 = vadd.f32 0.0, %v4042
        %v4044 = vpop.f32.mrf.mxu0
        %4045 = vdwg.mxu0
        %4046 = vrot.lane.b32.xlu0 %v1874, 64
        %v4047 = vpop.permute.xlu0 %4046
        %v4049 = vsel %vm1094, %v3301, 0
        %v4052 = vsel %vm3336, %v4047, 0
        %4054 = vmatpush.bf16.msra.mxu0 0
        %4055 = vmatpush.bf16.msra.mxu0 0
        %4056 = vmatpush.bf16.msra.mxu0 0
        %4057 = vmatpush.bf16.msra.mxu0 0
        %4058 = vmatpush.bf16.msra.mxu0 0
        %4059 = vmatpush.bf16.msra.mxu0 0
        %4060 = vmatpush.bf16.msra.mxu0 0
        %4061 = vmatpush.bf16.msra.mxu0 %v4052
        %4062 = vmatmul.bf16.gmra.mxu0 %v4049
        %v4063 = vpop.f32.mrf.mxu0
        %v4064 = vadd.f32 0.0, %v4063
        %v4065 = vpop.f32.mrf.mxu0
        %4066 = vdwg.mxu0
        %4067 = vrot.lane.b32.xlu0 %v1897, 64
        %v4068 = vpop.permute.xlu0 %4067
        %v4070 = vsel %vm1094, %v3302, 0
        %v4073 = vsel %vm3336, %v4068, 0
        %4075 = vmatpush.bf16.msra.mxu0 0
        %4076 = vmatpush.bf16.msra.mxu0 0
        %4077 = vmatpush.bf16.msra.mxu0 0
        %4078 = vmatpush.bf16.msra.mxu0 0
        %4079 = vmatpush.bf16.msra.mxu0 0
        %4080 = vmatpush.bf16.msra.mxu0 0
        %4081 = vmatpush.bf16.msra.mxu0 0
        %4082 = vmatpush.bf16.msra.mxu0 %v4073
        %4083 = vmatmul.bf16.gmra.mxu0 %v4070
        %v4084 = vpop.f32.mrf.mxu0
        %v4085 = vadd.f32 0.0, %v4084
        %v4086 = vpop.f32.mrf.mxu0
        %4087 = vdwg.mxu0
        %4088 = vrot.lane.b32.xlu0 %v1920, 64
        %v4089 = vpop.permute.xlu0 %4088
        %v4091 = vsel %vm1094, %v3303, 0
        %v4094 = vsel %vm3336, %v4089, 0
        %4096 = vmatpush.bf16.msra.mxu0 0
        %4097 = vmatpush.bf16.msra.mxu0 0
        %4098 = vmatpush.bf16.msra.mxu0 0
        %4099 = vmatpush.bf16.msra.mxu0 0
        %4100 = vmatpush.bf16.msra.mxu0 0
        %4101 = vmatpush.bf16.msra.mxu0 0
        %4102 = vmatpush.bf16.msra.mxu0 0
        %4103 = vmatpush.bf16.msra.mxu0 %v4094
        %4104 = vmatmul.bf16.gmra.mxu0 %v4091
        %v4105 = vpop.f32.mrf.mxu0
        %v4106 = vadd.f32 0.0, %v4105
        %v4107 = vpop.f32.mrf.mxu0
        %4108 = vdwg.mxu0
        %4109 = vrot.lane.b32.xlu0 %v1943, 64
        %v4110 = vpop.permute.xlu0 %4109
        %v4112 = vsel %vm1094, %v3304, 0
        %v4115 = vsel %vm3336, %v4110, 0
        %4117 = vmatpush.bf16.msra.mxu0 0
        %4118 = vmatpush.bf16.msra.mxu0 0
        %4119 = vmatpush.bf16.msra.mxu0 0
        %4120 = vmatpush.bf16.msra.mxu0 0
        %4121 = vmatpush.bf16.msra.mxu0 0
        %4122 = vmatpush.bf16.msra.mxu0 0
        %4123 = vmatpush.bf16.msra.mxu0 0
        %4124 = vmatpush.bf16.msra.mxu0 %v4115
        %4125 = vmatmul.bf16.gmra.mxu0 %v4112
        %v4126 = vpop.f32.mrf.mxu0
        %v4127 = vadd.f32 0.0, %v4126
        %v4128 = vpop.f32.mrf.mxu0
        %4129 = vdwg.mxu0
        %4130 = vrot.lane.b32.xlu0 %v1966, 64
        %v4131 = vpop.permute.xlu0 %4130
        %v4133 = vsel %vm1094, %v3305, 0
        %v4136 = vsel %vm3336, %v4131, 0
        %4138 = vmatpush.bf16.msra.mxu0 0
        %4139 = vmatpush.bf16.msra.mxu0 0
        %4140 = vmatpush.bf16.msra.mxu0 0
        %4141 = vmatpush.bf16.msra.mxu0 0
        %4142 = vmatpush.bf16.msra.mxu0 0
        %4143 = vmatpush.bf16.msra.mxu0 0
        %4144 = vmatpush.bf16.msra.mxu0 0
        %4145 = vmatpush.bf16.msra.mxu0 %v4136
        %4146 = vmatmul.bf16.gmra.mxu0 %v4133
        %v4147 = vpop.f32.mrf.mxu0
        %v4148 = vadd.f32 0.0, %v4147
        %v4149 = vpop.f32.mrf.mxu0
        %4150 = vdwg.mxu0
        %4151 = vrot.lane.b32.xlu0 %v1989, 64
        %v4152 = vpop.permute.xlu0 %4151
        %v4154 = vsel %vm1094, %v3306, 0
        %v4157 = vsel %vm3336, %v4152, 0
        %4159 = vmatpush.bf16.msra.mxu0 0
        %4160 = vmatpush.bf16.msra.mxu0 0
        %4161 = vmatpush.bf16.msra.mxu0 0
        %4162 = vmatpush.bf16.msra.mxu0 0
        %4163 = vmatpush.bf16.msra.mxu0 0
        %4164 = vmatpush.bf16.msra.mxu0 0
        %4165 = vmatpush.bf16.msra.mxu0 0
        %4166 = vmatpush.bf16.msra.mxu0 %v4157
        %4167 = vmatmul.bf16.gmra.mxu0 %v4154
        %v4168 = vpop.f32.mrf.mxu0
        %v4169 = vadd.f32 0.0, %v4168
        %v4170 = vpop.f32.mrf.mxu0
        %4171 = vdwg.mxu0
        %4172 = vrot.lane.b32.xlu0 %v2012, 64
        %v4173 = vpop.permute.xlu0 %4172
        %v4175 = vsel %vm1094, %v3307, 0
        %v4178 = vsel %vm3336, %v4173, 0
        %4180 = vmatpush.bf16.msra.mxu0 0
        %4181 = vmatpush.bf16.msra.mxu0 0
        %4182 = vmatpush.bf16.msra.mxu0 0
        %4183 = vmatpush.bf16.msra.mxu0 0
        %4184 = vmatpush.bf16.msra.mxu0 0
        %4185 = vmatpush.bf16.msra.mxu0 0
        %4186 = vmatpush.bf16.msra.mxu0 0
        %4187 = vmatpush.bf16.msra.mxu0 %v4178
        %4188 = vmatmul.bf16.gmra.mxu0 %v4175
        %v4189 = vpop.f32.mrf.mxu0
        %v4190 = vadd.f32 0.0, %v4189
        %v4191 = vpop.f32.mrf.mxu0
        %4192 = vdwg.mxu0
        %4193 = vrot.lane.b32.xlu0 %v2035, 64
        %v4194 = vpop.permute.xlu0 %4193
        %v4196 = vsel %vm1094, %v3308, 0
        %v4199 = vsel %vm3336, %v4194, 0
        %4201 = vmatpush.bf16.msra.mxu0 0
        %4202 = vmatpush.bf16.msra.mxu0 0
        %4203 = vmatpush.bf16.msra.mxu0 0
        %4204 = vmatpush.bf16.msra.mxu0 0
        %4205 = vmatpush.bf16.msra.mxu0 0
        %4206 = vmatpush.bf16.msra.mxu0 0
        %4207 = vmatpush.bf16.msra.mxu0 0
        %4208 = vmatpush.bf16.msra.mxu0 %v4199
        %4209 = vmatmul.bf16.gmra.mxu0 %v4196
        %v4210 = vpop.f32.mrf.mxu0
        %v4211 = vadd.f32 0.0, %v4210
        %v4212 = vpop.f32.mrf.mxu0
        %4213 = vdwg.mxu0
        %4214 = vrot.lane.b32.xlu0 %v2058, 64
        %v4215 = vpop.permute.xlu0 %4214
        %v4217 = vsel %vm1094, %v3309, 0
        %v4220 = vsel %vm3336, %v4215, 0
        %4222 = vmatpush.bf16.msra.mxu0 0
        %4223 = vmatpush.bf16.msra.mxu0 0
        %4224 = vmatpush.bf16.msra.mxu0 0
        %4225 = vmatpush.bf16.msra.mxu0 0
        %4226 = vmatpush.bf16.msra.mxu0 0
        %4227 = vmatpush.bf16.msra.mxu0 0
        %4228 = vmatpush.bf16.msra.mxu0 0
        %4229 = vmatpush.bf16.msra.mxu0 %v4220
        %4230 = vmatmul.bf16.gmra.mxu0 %v4217
        %v4231 = vpop.f32.mrf.mxu0
        %v4232 = vadd.f32 0.0, %v4231
        %v4233 = vpop.f32.mrf.mxu0
        %4234 = vdwg.mxu0
        %4235 = vrot.lane.b32.xlu0 %v2081, 64
        %v4236 = vpop.permute.xlu0 %4235
        %v4238 = vsel %vm1094, %v3310, 0
        %v4241 = vsel %vm3336, %v4236, 0
        %4243 = vmatpush.bf16.msra.mxu0 0
        %4244 = vmatpush.bf16.msra.mxu0 0
        %4245 = vmatpush.bf16.msra.mxu0 0
        %4246 = vmatpush.bf16.msra.mxu0 0
        %4247 = vmatpush.bf16.msra.mxu0 0
        %4248 = vmatpush.bf16.msra.mxu0 0
        %4249 = vmatpush.bf16.msra.mxu0 0
        %4250 = vmatpush.bf16.msra.mxu0 %v4241
        %4251 = vmatmul.bf16.gmra.mxu0 %v4238
        %v4252 = vpop.f32.mrf.mxu0
        %v4253 = vadd.f32 0.0, %v4252
        %v4254 = vpop.f32.mrf.mxu0
        %4255 = vdwg.mxu0
        %4256 = vrot.lane.b32.xlu0 %v2104, 64
        %v4257 = vpop.permute.xlu0 %4256
        %v4259 = vsel %vm1094, %v3311, 0
        %v4262 = vsel %vm3336, %v4257, 0
        %4264 = vmatpush.bf16.msra.mxu0 0
        %4265 = vmatpush.bf16.msra.mxu0 0
        %4266 = vmatpush.bf16.msra.mxu0 0
        %4267 = vmatpush.bf16.msra.mxu0 0
        %4268 = vmatpush.bf16.msra.mxu0 0
        %4269 = vmatpush.bf16.msra.mxu0 0
        %4270 = vmatpush.bf16.msra.mxu0 0
        %4271 = vmatpush.bf16.msra.mxu0 %v4262
        %4272 = vmatmul.bf16.gmra.mxu0 %v4259
        %v4273 = vpop.f32.mrf.mxu0
        %v4274 = vadd.f32 0.0, %v4273
        %v4275 = vpop.f32.mrf.mxu0
        %4276 = vdwg.mxu0
        %4277 = vrot.lane.b32.xlu0 %v2127, 64
        %v4278 = vpop.permute.xlu0 %4277
        %v4280 = vsel %vm1094, %v3312, 0
        %v4283 = vsel %vm3336, %v4278, 0
        %4285 = vmatpush.bf16.msra.mxu0 0
        %4286 = vmatpush.bf16.msra.mxu0 0
        %4287 = vmatpush.bf16.msra.mxu0 0
        %4288 = vmatpush.bf16.msra.mxu0 0
        %4289 = vmatpush.bf16.msra.mxu0 0
        %4290 = vmatpush.bf16.msra.mxu0 0
        %4291 = vmatpush.bf16.msra.mxu0 0
        %4292 = vmatpush.bf16.msra.mxu0 %v4283
        %4293 = vmatmul.bf16.gmra.mxu0 %v4280
        %v4294 = vpop.f32.mrf.mxu0
        %v4295 = vadd.f32 0.0, %v4294
        %v4296 = vpop.f32.mrf.mxu0
        %4297 = vdwg.mxu0
        %4298 = vrot.lane.b32.xlu0 %v2150, 64
        %v4299 = vpop.permute.xlu0 %4298
        %v4301 = vsel %vm1094, %v3313, 0
        %v4304 = vsel %vm3336, %v4299, 0
        %4306 = vmatpush.bf16.msra.mxu0 0
        %4307 = vmatpush.bf16.msra.mxu0 0
        %4308 = vmatpush.bf16.msra.mxu0 0
        %4309 = vmatpush.bf16.msra.mxu0 0
        %4310 = vmatpush.bf16.msra.mxu0 0
        %4311 = vmatpush.bf16.msra.mxu0 0
        %4312 = vmatpush.bf16.msra.mxu0 0
        %4313 = vmatpush.bf16.msra.mxu0 %v4304
        %4314 = vmatmul.bf16.gmra.mxu0 %v4301
        %v4315 = vpop.f32.mrf.mxu0
        %v4316 = vadd.f32 0.0, %v4315
        %v4317 = vpop.f32.mrf.mxu0
        %4318 = vdwg.mxu0
        %4319 = vrot.lane.b32.xlu0 %v2173, 64
        %v4320 = vpop.permute.xlu0 %4319
        %v4322 = vsel %vm1094, %v3314, 0
        %v4325 = vsel %vm3336, %v4320, 0
        %4327 = vmatpush.bf16.msra.mxu0 0
        %4328 = vmatpush.bf16.msra.mxu0 0
        %4329 = vmatpush.bf16.msra.mxu0 0
        %4330 = vmatpush.bf16.msra.mxu0 0
        %4331 = vmatpush.bf16.msra.mxu0 0
        %4332 = vmatpush.bf16.msra.mxu0 0
        %4333 = vmatpush.bf16.msra.mxu0 0
        %4334 = vmatpush.bf16.msra.mxu0 %v4325
        %4335 = vmatmul.bf16.gmra.mxu0 %v4322
        %v4336 = vpop.f32.mrf.mxu0
        %v4337 = vadd.f32 0.0, %v4336
        %v4338 = vpop.f32.mrf.mxu0
        %4339 = vdwg.mxu0
        %4340 = vrot.lane.b32.xlu0 %v2196, 64
        %v4341 = vpop.permute.xlu0 %4340
        %v4343 = vsel %vm1094, %v3315, 0
        %v4346 = vsel %vm3336, %v4341, 0
        %4348 = vmatpush.bf16.msra.mxu0 0
        %4349 = vmatpush.bf16.msra.mxu0 0
        %4350 = vmatpush.bf16.msra.mxu0 0
        %4351 = vmatpush.bf16.msra.mxu0 0
        %4352 = vmatpush.bf16.msra.mxu0 0
        %4353 = vmatpush.bf16.msra.mxu0 0
        %4354 = vmatpush.bf16.msra.mxu0 0
        %4355 = vmatpush.bf16.msra.mxu0 %v4346
        %4356 = vmatmul.bf16.gmra.mxu0 %v4343
        %v4357 = vpop.f32.mrf.mxu0
        %v4358 = vadd.f32 0.0, %v4357
        %v4359 = vpop.f32.mrf.mxu0
        %4360 = vdwg.mxu0
        %4361 = vrot.lane.b32.xlu0 %v2219, 64
        %v4362 = vpop.permute.xlu0 %4361
        %v4364 = vsel %vm1094, %v3316, 0
        %v4367 = vsel %vm3336, %v4362, 0
        %4369 = vmatpush.bf16.msra.mxu0 0
        %4370 = vmatpush.bf16.msra.mxu0 0
        %4371 = vmatpush.bf16.msra.mxu0 0
        %4372 = vmatpush.bf16.msra.mxu0 0
        %4373 = vmatpush.bf16.msra.mxu0 0
        %4374 = vmatpush.bf16.msra.mxu0 0
        %4375 = vmatpush.bf16.msra.mxu0 0
        %4376 = vmatpush.bf16.msra.mxu0 %v4367
        %4377 = vmatmul.bf16.gmra.mxu0 %v4364
        %v4378 = vpop.f32.mrf.mxu0
        %v4379 = vadd.f32 0.0, %v4378
        %v4380 = vpop.f32.mrf.mxu0
        %4381 = vdwg.mxu0
        %4382 = vrot.lane.b32.xlu0 %v2242, 64
        %v4383 = vpop.permute.xlu0 %4382
        %v4385 = vsel %vm1094, %v3317, 0
        %v4388 = vsel %vm3336, %v4383, 0
        %4390 = vmatpush.bf16.msra.mxu0 0
        %4391 = vmatpush.bf16.msra.mxu0 0
        %4392 = vmatpush.bf16.msra.mxu0 0
        %4393 = vmatpush.bf16.msra.mxu0 0
        %4394 = vmatpush.bf16.msra.mxu0 0
        %4395 = vmatpush.bf16.msra.mxu0 0
        %4396 = vmatpush.bf16.msra.mxu0 0
        %4397 = vmatpush.bf16.msra.mxu0 %v4388
        %4398 = vmatmul.bf16.gmra.mxu0 %v4385
        %v4399 = vpop.f32.mrf.mxu0
        %v4400 = vadd.f32 0.0, %v4399
        %v4401 = vpop.f32.mrf.mxu0
        %4402 = vdwg.mxu0
        %4403 = vrot.lane.b32.xlu0 %v2265, 64
        %v4404 = vpop.permute.xlu0 %4403
        %v4406 = vsel %vm1094, %v3318, 0
        %v4409 = vsel %vm3336, %v4404, 0
        %4411 = vmatpush.bf16.msra.mxu0 0
        %4412 = vmatpush.bf16.msra.mxu0 0
        %4413 = vmatpush.bf16.msra.mxu0 0
        %4414 = vmatpush.bf16.msra.mxu0 0
        %4415 = vmatpush.bf16.msra.mxu0 0
        %4416 = vmatpush.bf16.msra.mxu0 0
        %4417 = vmatpush.bf16.msra.mxu0 0
        %4418 = vmatpush.bf16.msra.mxu0 %v4409
        %4419 = vmatmul.bf16.gmra.mxu0 %v4406
        %v4420 = vpop.f32.mrf.mxu0
        %v4421 = vadd.f32 0.0, %v4420
        %v4422 = vpop.f32.mrf.mxu0
        %4423 = vdwg.mxu0
        %4424 = vrot.lane.b32.xlu0 %v2288, 64
        %v4425 = vpop.permute.xlu0 %4424
        %v4427 = vsel %vm1094, %v3319, 0
        %v4430 = vsel %vm3336, %v4425, 0
        %4432 = vmatpush.bf16.msra.mxu0 0
        %4433 = vmatpush.bf16.msra.mxu0 0
        %4434 = vmatpush.bf16.msra.mxu0 0
        %4435 = vmatpush.bf16.msra.mxu0 0
        %4436 = vmatpush.bf16.msra.mxu0 0
        %4437 = vmatpush.bf16.msra.mxu0 0
        %4438 = vmatpush.bf16.msra.mxu0 0
        %4439 = vmatpush.bf16.msra.mxu0 %v4430
        %4440 = vmatmul.bf16.gmra.mxu0 %v4427
        %v4441 = vpop.f32.mrf.mxu0
        %v4442 = vadd.f32 0.0, %v4441
        %v4443 = vpop.f32.mrf.mxu0
        %4444 = vdwg.mxu0
        %4445 = vrot.lane.b32.xlu0 %v2311, 64
        %v4446 = vpop.permute.xlu0 %4445
        %v4448 = vsel %vm1094, %v3320, 0
        %v4451 = vsel %vm3336, %v4446, 0
        %4453 = vmatpush.bf16.msra.mxu0 0
        %4454 = vmatpush.bf16.msra.mxu0 0
        %4455 = vmatpush.bf16.msra.mxu0 0
        %4456 = vmatpush.bf16.msra.mxu0 0
        %4457 = vmatpush.bf16.msra.mxu0 0
        %4458 = vmatpush.bf16.msra.mxu0 0
        %4459 = vmatpush.bf16.msra.mxu0 0
        %4460 = vmatpush.bf16.msra.mxu0 %v4451
        %4461 = vmatmul.bf16.gmra.mxu0 %v4448
        %v4462 = vpop.f32.mrf.mxu0
        %v4463 = vadd.f32 0.0, %v4462
        %v4464 = vpop.f32.mrf.mxu0
        %4465 = vdwg.mxu0
        %4466 = vrot.lane.b32.xlu0 %v2334, 64
        %v4467 = vpop.permute.xlu0 %4466
        %v4469 = vsel %vm1094, %v3321, 0
        %v4472 = vsel %vm3336, %v4467, 0
        %4474 = vmatpush.bf16.msra.mxu0 0
        %4475 = vmatpush.bf16.msra.mxu0 0
        %4476 = vmatpush.bf16.msra.mxu0 0
        %4477 = vmatpush.bf16.msra.mxu0 0
        %4478 = vmatpush.bf16.msra.mxu0 0
        %4479 = vmatpush.bf16.msra.mxu0 0
        %4480 = vmatpush.bf16.msra.mxu0 0
        %4481 = vmatpush.bf16.msra.mxu0 %v4472
        %4482 = vmatmul.bf16.gmra.mxu0 %v4469
        %v4483 = vpop.f32.mrf.mxu0
        %v4484 = vadd.f32 0.0, %v4483
        %v4485 = vpop.f32.mrf.mxu0
        %4486 = vdwg.mxu0
        %4487 = vrot.lane.b32.xlu0 %v2357, 64
        %v4488 = vpop.permute.xlu0 %4487
        %v4490 = vsel %vm1094, %v3322, 0
        %v4493 = vsel %vm3336, %v4488, 0
        %4495 = vmatpush.bf16.msra.mxu0 0
        %4496 = vmatpush.bf16.msra.mxu0 0
        %4497 = vmatpush.bf16.msra.mxu0 0
        %4498 = vmatpush.bf16.msra.mxu0 0
        %4499 = vmatpush.bf16.msra.mxu0 0
        %4500 = vmatpush.bf16.msra.mxu0 0
        %4501 = vmatpush.bf16.msra.mxu0 0
        %4502 = vmatpush.bf16.msra.mxu0 %v4493
        %4503 = vmatmul.bf16.gmra.mxu0 %v4490
        %v4504 = vpop.f32.mrf.mxu0
        %v4505 = vadd.f32 0.0, %v4504
        %v4506 = vpop.f32.mrf.mxu0
        %4507 = vdwg.mxu0
        %4508 = vrot.lane.b32.xlu0 %v2380, 64
        %v4509 = vpop.permute.xlu0 %4508
        %v4511 = vsel %vm1094, %v3323, 0
        %v4514 = vsel %vm3336, %v4509, 0
        %4516 = vmatpush.bf16.msra.mxu0 0
        %4517 = vmatpush.bf16.msra.mxu0 0
        %4518 = vmatpush.bf16.msra.mxu0 0
        %4519 = vmatpush.bf16.msra.mxu0 0
        %4520 = vmatpush.bf16.msra.mxu0 0
        %4521 = vmatpush.bf16.msra.mxu0 0
        %4522 = vmatpush.bf16.msra.mxu0 0
        %4523 = vmatpush.bf16.msra.mxu0 %v4514
        %4524 = vmatmul.bf16.gmra.mxu0 %v4511
        %v4525 = vpop.f32.mrf.mxu0
        %v4526 = vadd.f32 0.0, %v4525
        %v4527 = vpop.f32.mrf.mxu0
        %4528 = vdwg.mxu0
        %4529 = vrot.lane.b32.xlu0 %v2403, 64
        %v4530 = vpop.permute.xlu0 %4529
        %v4532 = vsel %vm1094, %v3324, 0
        %v4535 = vsel %vm3336, %v4530, 0
        %4537 = vmatpush.bf16.msra.mxu0 0
        %4538 = vmatpush.bf16.msra.mxu0 0
        %4539 = vmatpush.bf16.msra.mxu0 0
        %4540 = vmatpush.bf16.msra.mxu0 0
        %4541 = vmatpush.bf16.msra.mxu0 0
        %4542 = vmatpush.bf16.msra.mxu0 0
        %4543 = vmatpush.bf16.msra.mxu0 0
        %4544 = vmatpush.bf16.msra.mxu0 %v4535
        %4545 = vmatmul.bf16.gmra.mxu0 %v4532
        %v4546 = vpop.f32.mrf.mxu0
        %v4547 = vadd.f32 0.0, %v4546
        %v4548 = vpop.f32.mrf.mxu0
        %4549 = vdwg.mxu0
        %4550 = vrot.lane.b32.xlu0 %v2426, 64
        %v4551 = vpop.permute.xlu0 %4550
        %v4553 = vsel %vm1094, %v3325, 0
        %v4556 = vsel %vm3336, %v4551, 0
        %4558 = vmatpush.bf16.msra.mxu0 0
        %4559 = vmatpush.bf16.msra.mxu0 0
        %4560 = vmatpush.bf16.msra.mxu0 0
        %4561 = vmatpush.bf16.msra.mxu0 0
        %4562 = vmatpush.bf16.msra.mxu0 0
        %4563 = vmatpush.bf16.msra.mxu0 0
        %4564 = vmatpush.bf16.msra.mxu0 0
        %4565 = vmatpush.bf16.msra.mxu0 %v4556
        %4566 = vmatmul.bf16.gmra.mxu0 %v4553
        %v4567 = vpop.f32.mrf.mxu0
        %v4568 = vadd.f32 0.0, %v4567
        %v4569 = vpop.f32.mrf.mxu0
        %4570 = vdwg.mxu0
        %4571 = vrot.lane.b32.xlu0 %v2449, 64
        %v4572 = vpop.permute.xlu0 %4571
        %v4574 = vsel %vm1094, %v3326, 0
        %v4577 = vsel %vm3336, %v4572, 0
        %4579 = vmatpush.bf16.msra.mxu0 0
        %4580 = vmatpush.bf16.msra.mxu0 0
        %4581 = vmatpush.bf16.msra.mxu0 0
        %4582 = vmatpush.bf16.msra.mxu0 0
        %4583 = vmatpush.bf16.msra.mxu0 0
        %4584 = vmatpush.bf16.msra.mxu0 0
        %4585 = vmatpush.bf16.msra.mxu0 0
        %4586 = vmatpush.bf16.msra.mxu0 %v4577
        %4587 = vmatmul.bf16.gmra.mxu0 %v4574
        %v4588 = vpop.f32.mrf.mxu0
        %v4589 = vadd.f32 0.0, %v4588
        %v4590 = vpop.f32.mrf.mxu0
        %4591 = vdwg.mxu0
        %4592 = vrot.lane.b32.xlu0 %v2472, 64
        %v4593 = vpop.permute.xlu0 %4592
        %v4595 = vsel %vm1094, %v3327, 0
        %v4598 = vsel %vm3336, %v4593, 0
        %4600 = vmatpush.bf16.msra.mxu0 0
        %4601 = vmatpush.bf16.msra.mxu0 0
        %4602 = vmatpush.bf16.msra.mxu0 0
        %4603 = vmatpush.bf16.msra.mxu0 0
        %4604 = vmatpush.bf16.msra.mxu0 0
        %4605 = vmatpush.bf16.msra.mxu0 0
        %4606 = vmatpush.bf16.msra.mxu0 0
        %4607 = vmatpush.bf16.msra.mxu0 %v4598
        %4608 = vmatmul.bf16.gmra.mxu0 %v4595
        %v4609 = vpop.f32.mrf.mxu0
        %v4610 = vadd.f32 0.0, %v4609
        %v4611 = vpop.f32.mrf.mxu0
        %4612 = vdwg.mxu0
        %4613 = vrot.lane.b32.xlu0 %v2495, 64
        %v4614 = vpop.permute.xlu0 %4613
        %v4616 = vsel %vm1094, %v3328, 0
        %v4619 = vsel %vm3336, %v4614, 0
        %4621 = vmatpush.bf16.msra.mxu0 0
        %4622 = vmatpush.bf16.msra.mxu0 0
        %4623 = vmatpush.bf16.msra.mxu0 0
        %4624 = vmatpush.bf16.msra.mxu0 0
        %4625 = vmatpush.bf16.msra.mxu0 0
        %4626 = vmatpush.bf16.msra.mxu0 0
        %4627 = vmatpush.bf16.msra.mxu0 0
        %4628 = vmatpush.bf16.msra.mxu0 %v4619
        %4629 = vmatmul.bf16.gmra.mxu0 %v4616
        %v4630 = vpop.f32.mrf.mxu0
        %v4631 = vadd.f32 0.0, %v4630
        %v4632 = vpop.f32.mrf.mxu0
        %4633 = vdwg.mxu0
        %4634 = vrot.lane.b32.xlu0 %v2518, 64
        %v4635 = vpop.permute.xlu0 %4634
        %v4637 = vsel %vm1094, %v3329, 0
        %v4640 = vsel %vm3336, %v4635, 0
        %4642 = vmatpush.bf16.msra.mxu0 0
        %4643 = vmatpush.bf16.msra.mxu0 0
        %4644 = vmatpush.bf16.msra.mxu0 0
        %4645 = vmatpush.bf16.msra.mxu0 0
        %4646 = vmatpush.bf16.msra.mxu0 0
        %4647 = vmatpush.bf16.msra.mxu0 0
        %4648 = vmatpush.bf16.msra.mxu0 0
        %4649 = vmatpush.bf16.msra.mxu0 %v4640
        %4650 = vmatmul.bf16.gmra.mxu0 %v4637
        %v4651 = vpop.f32.mrf.mxu0
        %v4652 = vadd.f32 0.0, %v4651
        %v4653 = vpop.f32.mrf.mxu0
        %4654 = vdwg.mxu0
        %4655 = vrot.lane.b32.xlu0 %v2541, 64
        %v4656 = vpop.permute.xlu0 %4655
        %v4658 = vsel %vm1094, %v3330, 0
        %v4661 = vsel %vm3336, %v4656, 0
        %4663 = vmatpush.bf16.msra.mxu0 0
        %4664 = vmatpush.bf16.msra.mxu0 0
        %4665 = vmatpush.bf16.msra.mxu0 0
        %4666 = vmatpush.bf16.msra.mxu0 0
        %4667 = vmatpush.bf16.msra.mxu0 0
        %4668 = vmatpush.bf16.msra.mxu0 0
        %4669 = vmatpush.bf16.msra.mxu0 0
        %4670 = vmatpush.bf16.msra.mxu0 %v4661
        %4671 = vmatmul.bf16.gmra.mxu0 %v4658
        %v4672 = vpop.f32.mrf.mxu0
        %v4673 = vadd.f32 0.0, %v4672
        %v4674 = vpop.f32.mrf.mxu0
        %4675 = vdwg.mxu0
        %v4676 = vpack.c.bf16 %v3350, %v3350
        %v4677 = vpack.c.bf16 %v3371, %v3371
        %v4678 = vpack.c.bf16 %v3392, %v3392
        %v4679 = vpack.c.bf16 %v3413, %v3413
        %v4680 = vpack.c.bf16 %v3434, %v3434
        %v4681 = vpack.c.bf16 %v3455, %v3455
        %v4682 = vpack.c.bf16 %v3476, %v3476
        %v4683 = vpack.c.bf16 %v3497, %v3497
        %v4684 = vpack.c.bf16 %v3518, %v3518
        %v4685 = vpack.c.bf16 %v3539, %v3539
        %v4686 = vpack.c.bf16 %v3560, %v3560
        %v4687 = vpack.c.bf16 %v3581, %v3581
        %v4688 = vpack.c.bf16 %v3602, %v3602
        %v4689 = vpack.c.bf16 %v3623, %v3623
        %v4690 = vpack.c.bf16 %v3644, %v3644
        %v4691 = vpack.c.bf16 %v3665, %v3665
        %v4692 = vpack.c.bf16 %v3686, %v3686
        %v4693 = vpack.c.bf16 %v3707, %v3707
        %v4694 = vpack.c.bf16 %v3728, %v3728
        %v4695 = vpack.c.bf16 %v3749, %v3749
        %v4696 = vpack.c.bf16 %v3770, %v3770
        %v4697 = vpack.c.bf16 %v3791, %v3791
        %v4698 = vpack.c.bf16 %v3812, %v3812
        %v4699 = vpack.c.bf16 %v3833, %v3833
        %v4700 = vpack.c.bf16 %v3854, %v3854
        %v4701 = vpack.c.bf16 %v3875, %v3875
        %v4702 = vpack.c.bf16 %v3896, %v3896
        %v4703 = vpack.c.bf16 %v3917, %v3917
        %v4704 = vpack.c.bf16 %v3938, %v3938
        %v4705 = vpack.c.bf16 %v3959, %v3959
        %v4706 = vpack.c.bf16 %v3980, %v3980
        %v4707 = vpack.c.bf16 %v4001, %v4001
        %v4708 = vpack.c.bf16 %v4022, %v4022
        %v4709 = vpack.c.bf16 %v4043, %v4043
        %v4710 = vpack.c.bf16 %v4064, %v4064
        %v4711 = vpack.c.bf16 %v4085, %v4085
        %v4712 = vpack.c.bf16 %v4106, %v4106
        %v4713 = vpack.c.bf16 %v4127, %v4127
        %v4714 = vpack.c.bf16 %v4148, %v4148
        %v4715 = vpack.c.bf16 %v4169, %v4169
        %v4716 = vpack.c.bf16 %v4190, %v4190
        %v4717 = vpack.c.bf16 %v4211, %v4211
        %v4718 = vpack.c.bf16 %v4232, %v4232
        %v4719 = vpack.c.bf16 %v4253, %v4253
        %v4720 = vpack.c.bf16 %v4274, %v4274
        %v4721 = vpack.c.bf16 %v4295, %v4295
        %v4722 = vpack.c.bf16 %v4316, %v4316
        %v4723 = vpack.c.bf16 %v4337, %v4337
        %v4724 = vpack.c.bf16 %v4358, %v4358
        %v4725 = vpack.c.bf16 %v4379, %v4379
        %v4726 = vpack.c.bf16 %v4400, %v4400
        %v4727 = vpack.c.bf16 %v4421, %v4421
        %v4728 = vpack.c.bf16 %v4442, %v4442
        %v4729 = vpack.c.bf16 %v4463, %v4463
        %v4730 = vpack.c.bf16 %v4484, %v4484
        %v4731 = vpack.c.bf16 %v4505, %v4505
        %v4732 = vpack.c.bf16 %v4526, %v4526
        %v4733 = vpack.c.bf16 %v4547, %v4547
        %v4734 = vpack.c.bf16 %v4568, %v4568
        %v4735 = vpack.c.bf16 %v4589, %v4589
        %v4736 = vpack.c.bf16 %v4610, %v4610
        %v4737 = vpack.c.bf16 %v4631, %v4631
        %v4738 = vpack.c.bf16 %v4652, %v4652
        %v4739 = vpack.c.bf16 %v4673, %v4673
        %v4740 = vld [vmem:[%s404] sm:$0xf]
        %v4741 = vld [vmem:[%s404 + $0x4] sm:$0xf]
        %v4742 = vld [vmem:[%s404 + $0x8] sm:$0xf]
        %v4743 = vld [vmem:[%s404 + $0xc] sm:$0xf]
        %v4760 = vunpack.c.l.b16 %v4676
        %v4761 = vunpack.c.l.b16 %v4677
        %v4762 = vunpack.c.l.b16 %v4678
        %v4763 = vunpack.c.l.b16 %v4679
        %v4764 = vunpack.c.l.b16 %v4680
        %v4765 = vunpack.c.l.b16 %v4681
        %v4766 = vunpack.c.l.b16 %v4682
        %v4767 = vunpack.c.l.b16 %v4683
        %v4768 = vunpack.c.l.b16 %v4684
        %v4769 = vunpack.c.l.b16 %v4685
        %v4770 = vunpack.c.l.b16 %v4686
        %v4771 = vunpack.c.l.b16 %v4687
        %v4772 = vunpack.c.l.b16 %v4688
        %v4773 = vunpack.c.l.b16 %v4689
        %v4774 = vunpack.c.l.b16 %v4690
        %v4775 = vunpack.c.l.b16 %v4691
        %v4776 = vpack.c.b16 %v4761, %v4760
        %v4777 = vpack.c.b16 %v4763, %v4762
        %v4778 = vpack.c.b16 %v4765, %v4764
        %v4779 = vpack.c.b16 %v4767, %v4766
        %v4780 = vpack.c.b16 %v4769, %v4768
        %v4781 = vpack.c.b16 %v4771, %v4770
        %v4782 = vpack.c.b16 %v4773, %v4772
        %v4783 = vpack.c.b16 %v4775, %v4774
        %v4785 = vsel %vm1094, %v4776, 0
        %v4788 = vsel %vm1094, %v4777, 0
        %v4791 = vsel %vm1094, %v4778, 0
        %v4794 = vsel %vm1094, %v4779, 0
        %v4797 = vsel %vm1094, %v4780, 0
        %v4800 = vsel %vm1094, %v4781, 0
        %v4803 = vsel %vm1094, %v4782, 0
        %v4806 = vsel %vm1094, %v4783, 0
        %v4809 = vsel %vm3336, %v4740, 0
        %4811 = vmatpush.bf16.msra.mxu0 0
        %4812 = vmatpush.bf16.msra.mxu0 0
        %4813 = vmatpush.bf16.msra.mxu0 0
        %4814 = vmatpush.bf16.msra.mxu0 0
        %4815 = vmatpush.bf16.msra.mxu0 0
        %4816 = vmatpush.bf16.msra.mxu0 0
        %4817 = vmatpush.bf16.msra.mxu0 0
        %4818 = vmatpush.bf16.msra.mxu0 %v4809
        %4819 = vmatmul.bf16.gmra.mxu0 %v4785
        %v4820 = vpop.f32.mrf.mxu0
        %v4821 = vadd.f32 0.0, %v4820
        %v4822 = vpop.f32.mrf.mxu0
        %v4823 = vadd.f32 0.0, %v4822
        %4824 = vmatmul.bf16.gmra.mxu0 %v4788
        %v4825 = vpop.f32.mrf.mxu0
        %v4826 = vadd.f32 0.0, %v4825
        %v4827 = vpop.f32.mrf.mxu0
        %v4828 = vadd.f32 0.0, %v4827
        %4829 = vmatmul.bf16.gmra.mxu0 %v4791
        %v4830 = vpop.f32.mrf.mxu0
        %v4831 = vadd.f32 0.0, %v4830
        %v4832 = vpop.f32.mrf.mxu0
        %v4833 = vadd.f32 0.0, %v4832
        %4834 = vmatmul.bf16.gmra.mxu0 %v4794
        %v4835 = vpop.f32.mrf.mxu0
        %v4836 = vadd.f32 0.0, %v4835
        %v4837 = vpop.f32.mrf.mxu0
        %v4838 = vadd.f32 0.0, %v4837
        %4839 = vmatmul.bf16.gmra.mxu0 %v4797
        %v4840 = vpop.f32.mrf.mxu0
        %v4841 = vadd.f32 0.0, %v4840
        %v4842 = vpop.f32.mrf.mxu0
        %v4843 = vadd.f32 0.0, %v4842
        %4844 = vmatmul.bf16.gmra.mxu0 %v4800
        %v4845 = vpop.f32.mrf.mxu0
        %v4846 = vadd.f32 0.0, %v4845
        %v4847 = vpop.f32.mrf.mxu0
        %v4848 = vadd.f32 0.0, %v4847
        %4849 = vmatmul.bf16.gmra.mxu0 %v4803
        %v4850 = vpop.f32.mrf.mxu0
        %v4851 = vadd.f32 0.0, %v4850
        %v4852 = vpop.f32.mrf.mxu0
        %v4853 = vadd.f32 0.0, %v4852
        %4854 = vmatmul.bf16.gmra.mxu0 %v4806
        %v4855 = vpop.f32.mrf.mxu0
        %v4856 = vadd.f32 0.0, %v4855
        %v4857 = vpop.f32.mrf.mxu0
        %v4858 = vadd.f32 0.0, %v4857
        %4859 = vdwg.mxu0
        %v4876 = vunpack.c.l.b16 %v4692
        %v4877 = vunpack.c.l.b16 %v4693
        %v4878 = vunpack.c.l.b16 %v4694
        %v4879 = vunpack.c.l.b16 %v4695
        %v4880 = vunpack.c.l.b16 %v4696
        %v4881 = vunpack.c.l.b16 %v4697
        %v4882 = vunpack.c.l.b16 %v4698
        %v4883 = vunpack.c.l.b16 %v4699
        %v4884 = vunpack.c.l.b16 %v4700
        %v4885 = vunpack.c.l.b16 %v4701
        %v4886 = vunpack.c.l.b16 %v4702
        %v4887 = vunpack.c.l.b16 %v4703
        %v4888 = vunpack.c.l.b16 %v4704
        %v4889 = vunpack.c.l.b16 %v4705
        %v4890 = vunpack.c.l.b16 %v4706
        %v4891 = vunpack.c.l.b16 %v4707
        %v4892 = vpack.c.b16 %v4877, %v4876
        %v4893 = vpack.c.b16 %v4879, %v4878
        %v4894 = vpack.c.b16 %v4881, %v4880
        %v4895 = vpack.c.b16 %v4883, %v4882
        %v4896 = vpack.c.b16 %v4885, %v4884
        %v4897 = vpack.c.b16 %v4887, %v4886
        %v4898 = vpack.c.b16 %v4889, %v4888
        %v4899 = vpack.c.b16 %v4891, %v4890
        %v4901 = vsel %vm1094, %v4892, 0
        %v4904 = vsel %vm1094, %v4893, 0
        %v4907 = vsel %vm1094, %v4894, 0
        %v4910 = vsel %vm1094, %v4895, 0
        %v4913 = vsel %vm1094, %v4896, 0
        %v4916 = vsel %vm1094, %v4897, 0
        %v4919 = vsel %vm1094, %v4898, 0
        %v4922 = vsel %vm1094, %v4899, 0
        %v4925 = vsel %vm3336, %v4741, 0
        %4927 = vmatpush.bf16.msra.mxu0 0
        %4928 = vmatpush.bf16.msra.mxu0 0
        %4929 = vmatpush.bf16.msra.mxu0 0
        %4930 = vmatpush.bf16.msra.mxu0 0
        %4931 = vmatpush.bf16.msra.mxu0 0
        %4932 = vmatpush.bf16.msra.mxu0 0
        %4933 = vmatpush.bf16.msra.mxu0 0
        %4934 = vmatpush.bf16.msra.mxu0 %v4925
        %4935 = vmatmul.bf16.gmra.mxu0 %v4901
        %v4936 = vpop.f32.mrf.mxu0
        %v4937 = vadd.f32 0.0, %v4936
        %v4938 = vpop.f32.mrf.mxu0
        %v4939 = vadd.f32 0.0, %v4938
        %4940 = vmatmul.bf16.gmra.mxu0 %v4904
        %v4941 = vpop.f32.mrf.mxu0
        %v4942 = vadd.f32 0.0, %v4941
        %v4943 = vpop.f32.mrf.mxu0
        %v4944 = vadd.f32 0.0, %v4943
        %4945 = vmatmul.bf16.gmra.mxu0 %v4907
        %v4946 = vpop.f32.mrf.mxu0
        %v4947 = vadd.f32 0.0, %v4946
        %v4948 = vpop.f32.mrf.mxu0
        %v4949 = vadd.f32 0.0, %v4948
        %4950 = vmatmul.bf16.gmra.mxu0 %v4910
        %v4951 = vpop.f32.mrf.mxu0
        %v4952 = vadd.f32 0.0, %v4951
        %v4953 = vpop.f32.mrf.mxu0
        %v4954 = vadd.f32 0.0, %v4953
        %4955 = vmatmul.bf16.gmra.mxu0 %v4913
        %v4956 = vpop.f32.mrf.mxu0
        %v4957 = vadd.f32 0.0, %v4956
        %v4958 = vpop.f32.mrf.mxu0
        %v4959 = vadd.f32 0.0, %v4958
        %4960 = vmatmul.bf16.gmra.mxu0 %v4916
        %v4961 = vpop.f32.mrf.mxu0
        %v4962 = vadd.f32 0.0, %v4961
        %v4963 = vpop.f32.mrf.mxu0
        %v4964 = vadd.f32 0.0, %v4963
        %4965 = vmatmul.bf16.gmra.mxu0 %v4919
        %v4966 = vpop.f32.mrf.mxu0
        %v4967 = vadd.f32 0.0, %v4966
        %v4968 = vpop.f32.mrf.mxu0
        %v4969 = vadd.f32 0.0, %v4968
        %4970 = vmatmul.bf16.gmra.mxu0 %v4922
        %v4971 = vpop.f32.mrf.mxu0
        %v4972 = vadd.f32 0.0, %v4971
        %v4973 = vpop.f32.mrf.mxu0
        %v4974 = vadd.f32 0.0, %v4973
        %4975 = vdwg.mxu0
        %v4992 = vunpack.c.l.b16 %v4708
        %v4993 = vunpack.c.l.b16 %v4709
        %v4994 = vunpack.c.l.b16 %v4710
        %v4995 = vunpack.c.l.b16 %v4711
        %v4996 = vunpack.c.l.b16 %v4712
        %v4997 = vunpack.c.l.b16 %v4713
        %v4998 = vunpack.c.l.b16 %v4714
        %v4999 = vunpack.c.l.b16 %v4715
        %v5000 = vunpack.c.l.b16 %v4716
        %v5001 = vunpack.c.l.b16 %v4717
        %v5002 = vunpack.c.l.b16 %v4718
        %v5003 = vunpack.c.l.b16 %v4719
        %v5004 = vunpack.c.l.b16 %v4720
        %v5005 = vunpack.c.l.b16 %v4721
        %v5006 = vunpack.c.l.b16 %v4722
        %v5007 = vunpack.c.l.b16 %v4723
        %v5008 = vpack.c.b16 %v4993, %v4992
        %v5009 = vpack.c.b16 %v4995, %v4994
        %v5010 = vpack.c.b16 %v4997, %v4996
        %v5011 = vpack.c.b16 %v4999, %v4998
        %v5012 = vpack.c.b16 %v5001, %v5000
        %v5013 = vpack.c.b16 %v5003, %v5002
        %v5014 = vpack.c.b16 %v5005, %v5004
        %v5015 = vpack.c.b16 %v5007, %v5006
        %v5017 = vsel %vm1094, %v5008, 0
        %v5020 = vsel %vm1094, %v5009, 0
        %v5023 = vsel %vm1094, %v5010, 0
        %v5026 = vsel %vm1094, %v5011, 0
        %v5029 = vsel %vm1094, %v5012, 0
        %v5032 = vsel %vm1094, %v5013, 0
        %v5035 = vsel %vm1094, %v5014, 0
        %v5038 = vsel %vm1094, %v5015, 0
        %v5041 = vsel %vm3336, %v4742, 0
        %5043 = vmatpush.bf16.msra.mxu0 0
        %5044 = vmatpush.bf16.msra.mxu0 0
        %5045 = vmatpush.bf16.msra.mxu0 0
        %5046 = vmatpush.bf16.msra.mxu0 0
        %5047 = vmatpush.bf16.msra.mxu0 0
        %5048 = vmatpush.bf16.msra.mxu0 0
        %5049 = vmatpush.bf16.msra.mxu0 0
        %5050 = vmatpush.bf16.msra.mxu0 %v5041
        %5051 = vmatmul.bf16.gmra.mxu0 %v5017
        %v5052 = vpop.f32.mrf.mxu0
        %v5053 = vadd.f32 0.0, %v5052
        %v5054 = vpop.f32.mrf.mxu0
        %v5055 = vadd.f32 0.0, %v5054
        %5056 = vmatmul.bf16.gmra.mxu0 %v5020
        %v5057 = vpop.f32.mrf.mxu0
        %v5058 = vadd.f32 0.0, %v5057
        %v5059 = vpop.f32.mrf.mxu0
        %v5060 = vadd.f32 0.0, %v5059
        %5061 = vmatmul.bf16.gmra.mxu0 %v5023
        %v5062 = vpop.f32.mrf.mxu0
        %v5063 = vadd.f32 0.0, %v5062
        %v5064 = vpop.f32.mrf.mxu0
        %v5065 = vadd.f32 0.0, %v5064
        %5066 = vmatmul.bf16.gmra.mxu0 %v5026
        %v5067 = vpop.f32.mrf.mxu0
        %v5068 = vadd.f32 0.0, %v5067
        %v5069 = vpop.f32.mrf.mxu0
        %v5070 = vadd.f32 0.0, %v5069
        %5071 = vmatmul.bf16.gmra.mxu0 %v5029
        %v5072 = vpop.f32.mrf.mxu0
        %v5073 = vadd.f32 0.0, %v5072
        %v5074 = vpop.f32.mrf.mxu0
        %v5075 = vadd.f32 0.0, %v5074
        %5076 = vmatmul.bf16.gmra.mxu0 %v5032
        %v5077 = vpop.f32.mrf.mxu0
        %v5078 = vadd.f32 0.0, %v5077
        %v5079 = vpop.f32.mrf.mxu0
        %v5080 = vadd.f32 0.0, %v5079
        %5081 = vmatmul.bf16.gmra.mxu0 %v5035
        %v5082 = vpop.f32.mrf.mxu0
        %v5083 = vadd.f32 0.0, %v5082
        %v5084 = vpop.f32.mrf.mxu0
        %v5085 = vadd.f32 0.0, %v5084
        %5086 = vmatmul.bf16.gmra.mxu0 %v5038
        %v5087 = vpop.f32.mrf.mxu0
        %v5088 = vadd.f32 0.0, %v5087
        %v5089 = vpop.f32.mrf.mxu0
        %v5090 = vadd.f32 0.0, %v5089
        %5091 = vdwg.mxu0
        %v5108 = vunpack.c.l.b16 %v4724
        %v5109 = vunpack.c.l.b16 %v4725
        %v5110 = vunpack.c.l.b16 %v4726
        %v5111 = vunpack.c.l.b16 %v4727
        %v5112 = vunpack.c.l.b16 %v4728
        %v5113 = vunpack.c.l.b16 %v4729
        %v5114 = vunpack.c.l.b16 %v4730
        %v5115 = vunpack.c.l.b16 %v4731
        %v5116 = vunpack.c.l.b16 %v4732
        %v5117 = vunpack.c.l.b16 %v4733
        %v5118 = vunpack.c.l.b16 %v4734
        %v5119 = vunpack.c.l.b16 %v4735
        %v5120 = vunpack.c.l.b16 %v4736
        %v5121 = vunpack.c.l.b16 %v4737
        %v5122 = vunpack.c.l.b16 %v4738
        %v5123 = vunpack.c.l.b16 %v4739
        %v5124 = vpack.c.b16 %v5109, %v5108
        %v5125 = vpack.c.b16 %v5111, %v5110
        %v5126 = vpack.c.b16 %v5113, %v5112
        %v5127 = vpack.c.b16 %v5115, %v5114
        %v5128 = vpack.c.b16 %v5117, %v5116
        %v5129 = vpack.c.b16 %v5119, %v5118
        %v5130 = vpack.c.b16 %v5121, %v5120
        %v5131 = vpack.c.b16 %v5123, %v5122
        %v5133 = vsel %vm1094, %v5124, 0
        %v5136 = vsel %vm1094, %v5125, 0
        %v5139 = vsel %vm1094, %v5126, 0
        %v5142 = vsel %vm1094, %v5127, 0
        %v5145 = vsel %vm1094, %v5128, 0
        %v5148 = vsel %vm1094, %v5129, 0
        %v5151 = vsel %vm1094, %v5130, 0
        %v5154 = vsel %vm1094, %v5131, 0
        %v5157 = vsel %vm3336, %v4743, 0
        %5159 = vmatpush.bf16.msra.mxu0 0
        %5160 = vmatpush.bf16.msra.mxu0 0
        %5161 = vmatpush.bf16.msra.mxu0 0
        %5162 = vmatpush.bf16.msra.mxu0 0
        %5163 = vmatpush.bf16.msra.mxu0 0
        %5164 = vmatpush.bf16.msra.mxu0 0
        %5165 = vmatpush.bf16.msra.mxu0 0
        %5166 = vmatpush.bf16.msra.mxu0 %v5157
        %5167 = vmatmul.bf16.gmra.mxu0 %v5133
        %v5168 = vpop.f32.mrf.mxu0
        %v5169 = vadd.f32 0.0, %v5168
        %v5170 = vpop.f32.mrf.mxu0
        %v5171 = vadd.f32 0.0, %v5170
        %5172 = vmatmul.bf16.gmra.mxu0 %v5136
        %v5173 = vpop.f32.mrf.mxu0
        %v5174 = vadd.f32 0.0, %v5173
        %v5175 = vpop.f32.mrf.mxu0
        %v5176 = vadd.f32 0.0, %v5175
        %5177 = vmatmul.bf16.gmra.mxu0 %v5139
        %v5178 = vpop.f32.mrf.mxu0
        %v5179 = vadd.f32 0.0, %v5178
        %v5180 = vpop.f32.mrf.mxu0
        %v5181 = vadd.f32 0.0, %v5180
        %5182 = vmatmul.bf16.gmra.mxu0 %v5142
        %v5183 = vpop.f32.mrf.mxu0
        %v5184 = vadd.f32 0.0, %v5183
        %v5185 = vpop.f32.mrf.mxu0
        %v5186 = vadd.f32 0.0, %v5185
        %5187 = vmatmul.bf16.gmra.mxu0 %v5145
        %v5188 = vpop.f32.mrf.mxu0
        %v5189 = vadd.f32 0.0, %v5188
        %v5190 = vpop.f32.mrf.mxu0
        %v5191 = vadd.f32 0.0, %v5190
        %5192 = vmatmul.bf16.gmra.mxu0 %v5148
        %v5193 = vpop.f32.mrf.mxu0
        %v5194 = vadd.f32 0.0, %v5193
        %v5195 = vpop.f32.mrf.mxu0
        %v5196 = vadd.f32 0.0, %v5195
        %5197 = vmatmul.bf16.gmra.mxu0 %v5151
        %v5198 = vpop.f32.mrf.mxu0
        %v5199 = vadd.f32 0.0, %v5198
        %v5200 = vpop.f32.mrf.mxu0
        %v5201 = vadd.f32 0.0, %v5200
        %5202 = vmatmul.bf16.gmra.mxu0 %v5154
        %v5203 = vpop.f32.mrf.mxu0
        %v5204 = vadd.f32 0.0, %v5203
        %v5205 = vpop.f32.mrf.mxu0
        %v5206 = vadd.f32 0.0, %v5205
        %5207 = vdwg.mxu0
        %v5208 = vadd.f32 %v4821, %v4937
        %v5209 = vadd.f32 %v4823, %v4939
        %v5210 = vadd.f32 %v4826, %v4942
        %v5211 = vadd.f32 %v4828, %v4944
        %v5212 = vadd.f32 %v4831, %v4947
        %v5213 = vadd.f32 %v4833, %v4949
        %v5214 = vadd.f32 %v4836, %v4952
        %v5215 = vadd.f32 %v4838, %v4954
        %v5216 = vadd.f32 %v4841, %v4957
        %v5217 = vadd.f32 %v4843, %v4959
        %v5218 = vadd.f32 %v4846, %v4962
        %v5219 = vadd.f32 %v4848, %v4964
        %v5220 = vadd.f32 %v4851, %v4967
        %v5221 = vadd.f32 %v4853, %v4969
        %v5222 = vadd.f32 %v4856, %v4972
        %v5223 = vadd.f32 %v4858, %v4974
        %v5224 = vadd.f32 %v5208, %v5053
        %v5225 = vadd.f32 %v5209, %v5055
        %v5226 = vadd.f32 %v5210, %v5058
        %v5227 = vadd.f32 %v5211, %v5060
        %v5228 = vadd.f32 %v5212, %v5063
        %v5229 = vadd.f32 %v5213, %v5065
        %v5230 = vadd.f32 %v5214, %v5068
        %v5231 = vadd.f32 %v5215, %v5070
        %v5232 = vadd.f32 %v5216, %v5073
        %v5233 = vadd.f32 %v5217, %v5075
        %v5234 = vadd.f32 %v5218, %v5078
        %v5235 = vadd.f32 %v5219, %v5080
        %v5236 = vadd.f32 %v5220, %v5083
        %v5237 = vadd.f32 %v5221, %v5085
        %v5238 = vadd.f32 %v5222, %v5088
        %v5239 = vadd.f32 %v5223, %v5090
        %v5240 = vadd.f32 %v5224, %v5169
        %v5241 = vadd.f32 %v5225, %v5171
        %v5242 = vadd.f32 %v5226, %v5174
        %v5243 = vadd.f32 %v5227, %v5176
        %v5244 = vadd.f32 %v5228, %v5179
        %v5245 = vadd.f32 %v5229, %v5181
        %v5246 = vadd.f32 %v5230, %v5184
        %v5247 = vadd.f32 %v5231, %v5186
        %v5248 = vadd.f32 %v5232, %v5189
        %v5249 = vadd.f32 %v5233, %v5191
        %v5250 = vadd.f32 %v5234, %v5194
        %v5251 = vadd.f32 %v5235, %v5196
        %v5252 = vadd.f32 %v5236, %v5199
        %v5253 = vadd.f32 %v5237, %v5201
        %v5254 = vadd.f32 %v5238, %v5204
        %v5255 = vadd.f32 %v5239, %v5206
        %v5256 = vadd.f32 %v454, %v5240
        %v5257 = vadd.f32 %v455, %v5241
        %v5258 = vadd.f32 %v456, %v5242
        %v5259 = vadd.f32 %v457, %v5243
        %v5260 = vadd.f32 %v458, %v5244
        %v5261 = vadd.f32 %v459, %v5245
        %v5262 = vadd.f32 %v460, %v5246
        %v5263 = vadd.f32 %v461, %v5247
        %v5264 = vadd.f32 %v462, %v5248
        %v5265 = vadd.f32 %v463, %v5249
        %v5266 = vadd.f32 %v464, %v5250
        %v5267 = vadd.f32 %v465, %v5251
        %v5268 = vadd.f32 %v466, %v5252
        %v5269 = vadd.f32 %v467, %v5253
        %v5270 = vadd.f32 %v468, %v5254
        %v5271 = vadd.f32 %v469, %v5255
        %v5272 = vperm.slane %v470, 2
        %v5273 = vadd.f32 %v5256, %v5272
        %v5274 = vadd.f32 %v5257, %v5272
        %v5275 = vadd.f32 %v5258, %v5272
        %v5276 = vadd.f32 %v5259, %v5272
        %v5277 = vadd.f32 %v5260, %v5272
        %v5278 = vadd.f32 %v5261, %v5272
        %v5279 = vadd.f32 %v5262, %v5272
        %v5280 = vadd.f32 %v5263, %v5272
        %v5281 = vadd.f32 %v5264, %v5272
        %v5282 = vadd.f32 %v5265, %v5272
        %v5283 = vadd.f32 %v5266, %v5272
        %v5284 = vadd.f32 %v5267, %v5272
        %v5285 = vadd.f32 %v5268, %v5272
        %v5286 = vadd.f32 %v5269, %v5272
        %v5287 = vadd.f32 %v5270, %v5272
        %v5288 = vadd.f32 %v5271, %v5272
        %v5289 = vsel %vm471, %v5273, 0.0
        %5290 = vadd.xlane.f32.xlu0 %v5289
        %v5291 = vpop.xlane.xlu0 %5290
        %v5292 = vsel %vm471, %v5274, 0.0
        %5293 = vadd.xlane.f32.xlu0 %v5292
        %v5294 = vpop.xlane.xlu0 %5293
        %v5295 = vsel %vm471, %v5275, 0.0
        %5296 = vadd.xlane.f32.xlu0 %v5295
        %v5297 = vpop.xlane.xlu0 %5296
        %v5298 = vsel %vm471, %v5276, 0.0
        %5299 = vadd.xlane.f32.xlu0 %v5298
        %v5300 = vpop.xlane.xlu0 %5299
        %v5301 = vsel %vm471, %v5277, 0.0
        %5302 = vadd.xlane.f32.xlu0 %v5301
        %v5303 = vpop.xlane.xlu0 %5302
        %v5304 = vsel %vm471, %v5278, 0.0
        %5305 = vadd.xlane.f32.xlu0 %v5304
        %v5306 = vpop.xlane.xlu0 %5305
        %v5307 = vsel %vm471, %v5279, 0.0
        %5308 = vadd.xlane.f32.xlu0 %v5307
        %v5309 = vpop.xlane.xlu0 %5308
        %v5310 = vsel %vm471, %v5280, 0.0
        %5311 = vadd.xlane.f32.xlu0 %v5310
        %v5312 = vpop.xlane.xlu0 %5311
        %v5313 = vsel %vm471, %v5281, 0.0
        %5314 = vadd.xlane.f32.xlu0 %v5313
        %v5315 = vpop.xlane.xlu0 %5314
        %v5316 = vsel %vm471, %v5282, 0.0
        %5317 = vadd.xlane.f32.xlu0 %v5316
        %v5318 = vpop.xlane.xlu0 %5317
        %v5319 = vsel %vm471, %v5283, 0.0
        %5320 = vadd.xlane.f32.xlu0 %v5319
        %v5321 = vpop.xlane.xlu0 %5320
        %v5322 = vsel %vm471, %v5284, 0.0
        %5323 = vadd.xlane.f32.xlu0 %v5322
        %v5324 = vpop.xlane.xlu0 %5323
        %v5325 = vsel %vm471, %v5285, 0.0
        %5326 = vadd.xlane.f32.xlu0 %v5325
        %v5327 = vpop.xlane.xlu0 %5326
        %v5328 = vsel %vm471, %v5286, 0.0
        %5329 = vadd.xlane.f32.xlu0 %v5328
        %v5330 = vpop.xlane.xlu0 %5329
        %v5331 = vsel %vm471, %v5287, 0.0
        %5332 = vadd.xlane.f32.xlu0 %v5331
        %v5333 = vpop.xlane.xlu0 %5332
        %v5334 = vsel %vm471, %v5288, 0.0
        %5335 = vadd.xlane.f32.xlu0 %v5334
        %v5336 = vpop.xlane.xlu0 %5335
        %v5337 = vmul.f32 %v5291, %v526
        %v5338 = vmul.f32 %v5294, %v526
        %v5339 = vmul.f32 %v5297, %v526
        %v5340 = vmul.f32 %v5300, %v526
        %v5341 = vmul.f32 %v5303, %v526
        %v5342 = vmul.f32 %v5306, %v526
        %v5343 = vmul.f32 %v5309, %v526
        %v5344 = vmul.f32 %v5312, %v526
        %v5345 = vmul.f32 %v5315, %v526
        %v5346 = vmul.f32 %v5318, %v526
        %v5347 = vmul.f32 %v5321, %v526
        %v5348 = vmul.f32 %v5324, %v526
        %v5349 = vmul.f32 %v5327, %v526
        %v5350 = vmul.f32 %v5330, %v526
        %v5351 = vmul.f32 %v5333, %v526
        %v5352 = vmul.f32 %v5336, %v526
        %v5353 = vsub.f32 %v5273, %v5337
        %v5354 = vsub.f32 %v5274, %v5338
        %v5355 = vsub.f32 %v5275, %v5339
        %v5356 = vsub.f32 %v5276, %v5340
        %v5357 = vsub.f32 %v5277, %v5341
        %v5358 = vsub.f32 %v5278, %v5342
        %v5359 = vsub.f32 %v5279, %v5343
        %v5360 = vsub.f32 %v5280, %v5344
        %v5361 = vsub.f32 %v5281, %v5345
        %v5362 = vsub.f32 %v5282, %v5346
        %v5363 = vsub.f32 %v5283, %v5347
        %v5364 = vsub.f32 %v5284, %v5348
        %v5365 = vsub.f32 %v5285, %v5349
        %v5366 = vsub.f32 %v5286, %v5350
        %v5367 = vsub.f32 %v5287, %v5351
        %v5368 = vsub.f32 %v5288, %v5352
        %v5369 = vmul.f32 %v5353, %v5353
        %v5370 = vmul.f32 %v5354, %v5354
        %v5371 = vmul.f32 %v5355, %v5355
        %v5372 = vmul.f32 %v5356, %v5356
        %v5373 = vmul.f32 %v5357, %v5357
        %v5374 = vmul.f32 %v5358, %v5358
        %v5375 = vmul.f32 %v5359, %v5359
        %v5376 = vmul.f32 %v5360, %v5360
        %v5377 = vmul.f32 %v5361, %v5361
        %v5378 = vmul.f32 %v5362, %v5362
        %v5379 = vmul.f32 %v5363, %v5363
        %v5380 = vmul.f32 %v5364, %v5364
        %v5381 = vmul.f32 %v5365, %v5365
        %v5382 = vmul.f32 %v5366, %v5366
        %v5383 = vmul.f32 %v5367, %v5367
        %v5384 = vmul.f32 %v5368, %v5368
        %v5385 = vsel %vm471, %v5369, 0.0
        %5386 = vadd.xlane.f32.xlu0 %v5385
        %v5387 = vpop.xlane.xlu0 %5386
        %v5388 = vsel %vm471, %v5370, 0.0
        %5389 = vadd.xlane.f32.xlu0 %v5388
        %v5390 = vpop.xlane.xlu0 %5389
        %v5391 = vsel %vm471, %v5371, 0.0
        %5392 = vadd.xlane.f32.xlu0 %v5391
        %v5393 = vpop.xlane.xlu0 %5392
        %v5394 = vsel %vm471, %v5372, 0.0
        %5395 = vadd.xlane.f32.xlu0 %v5394
        %v5396 = vpop.xlane.xlu0 %5395
        %v5397 = vsel %vm471, %v5373, 0.0
        %5398 = vadd.xlane.f32.xlu0 %v5397
        %v5399 = vpop.xlane.xlu0 %5398
        %v5400 = vsel %vm471, %v5374, 0.0
        %5401 = vadd.xlane.f32.xlu0 %v5400
        %v5402 = vpop.xlane.xlu0 %5401
        %v5403 = vsel %vm471, %v5375, 0.0
        %5404 = vadd.xlane.f32.xlu0 %v5403
        %v5405 = vpop.xlane.xlu0 %5404
        %v5406 = vsel %vm471, %v5376, 0.0
        %5407 = vadd.xlane.f32.xlu0 %v5406
        %v5408 = vpop.xlane.xlu0 %5407
        %v5409 = vsel %vm471, %v5377, 0.0
        %5410 = vadd.xlane.f32.xlu0 %v5409
        %v5411 = vpop.xlane.xlu0 %5410
        %v5412 = vsel %vm471, %v5378, 0.0
        %5413 = vadd.xlane.f32.xlu0 %v5412
        %v5414 = vpop.xlane.xlu0 %5413
        %v5415 = vsel %vm471, %v5379, 0.0
        %5416 = vadd.xlane.f32.xlu0 %v5415
        %v5417 = vpop.xlane.xlu0 %5416
        %v5418 = vsel %vm471, %v5380, 0.0
        %5419 = vadd.xlane.f32.xlu0 %v5418
        %v5420 = vpop.xlane.xlu0 %5419
        %v5421 = vsel %vm471, %v5381, 0.0
        %5422 = vadd.xlane.f32.xlu0 %v5421
        %v5423 = vpop.xlane.xlu0 %5422
        %v5424 = vsel %vm471, %v5382, 0.0
        %5425 = vadd.xlane.f32.xlu0 %v5424
        %v5426 = vpop.xlane.xlu0 %5425
        %v5427 = vsel %vm471, %v5383, 0.0
        %5428 = vadd.xlane.f32.xlu0 %v5427
        %v5429 = vpop.xlane.xlu0 %5428
        %v5430 = vsel %vm471, %v5384, 0.0
        %5431 = vadd.xlane.f32.xlu0 %v5430
        %v5432 = vpop.xlane.xlu0 %5431
        %v5433 = vmul.f32 %v5387, %v526
        %v5434 = vmul.f32 %v5390, %v526
        %v5435 = vmul.f32 %v5393, %v526
        %v5436 = vmul.f32 %v5396, %v526
        %v5437 = vmul.f32 %v5399, %v526
        %v5438 = vmul.f32 %v5402, %v526
        %v5439 = vmul.f32 %v5405, %v526
        %v5440 = vmul.f32 %v5408, %v526
        %v5441 = vmul.f32 %v5411, %v526
        %v5442 = vmul.f32 %v5414, %v526
        %v5443 = vmul.f32 %v5417, %v526
        %v5444 = vmul.f32 %v5420, %v526
        %v5445 = vmul.f32 %v5423, %v526
        %v5446 = vmul.f32 %v5426, %v526
        %v5447 = vmul.f32 %v5429, %v526
        %v5448 = vmul.f32 %v5432, %v526
        %v5449 = vadd.f32 %v5433, 1e-05
        %v5450 = vadd.f32 %v5434, 1e-05
        %v5451 = vadd.f32 %v5435, 1e-05
        %v5452 = vadd.f32 %v5436, 1e-05
        %v5453 = vadd.f32 %v5437, 1e-05
        %v5454 = vadd.f32 %v5438, 1e-05
        %v5455 = vadd.f32 %v5439, 1e-05
        %v5456 = vadd.f32 %v5440, 1e-05
        %v5457 = vadd.f32 %v5441, 1e-05
        %v5458 = vadd.f32 %v5442, 1e-05
        %v5459 = vadd.f32 %v5443, 1e-05
        %v5460 = vadd.f32 %v5444, 1e-05
        %v5461 = vadd.f32 %v5445, 1e-05
        %v5462 = vadd.f32 %v5446, 1e-05
        %v5463 = vadd.f32 %v5447, 1e-05
        %v5464 = vadd.f32 %v5448, 1e-05
        %v5465 = vrsqrt.pop %v5449
        %v5466 = vmul.f32 %v5465, %v5449
        %v5467 = vmul.f32 %v5466, %v5465
        %v5468 = vmul.f32 0.5, %v5467
        %v5469 = vsub.f32 1.5, %v5468
        %v5470 = vmul.f32 %v5465, %v5469
        %vm5471 = vweird.f32 %v5449
        %vm5472 = vweird.f32 %v5465
        %vm5473 = vmor %vm5471, %vm5472
        %v5474 = vsel %vm5473, %v5465, %v5470
        %v5475 = vrsqrt.pop %v5450
        %v5476 = vmul.f32 %v5475, %v5450
        %v5477 = vmul.f32 %v5476, %v5475
        %v5478 = vmul.f32 0.5, %v5477
        %v5479 = vsub.f32 1.5, %v5478
        %v5480 = vmul.f32 %v5475, %v5479
        %vm5481 = vweird.f32 %v5450
        %vm5482 = vweird.f32 %v5475
        %vm5483 = vmor %vm5481, %vm5482
        %v5484 = vsel %vm5483, %v5475, %v5480
        %v5485 = vrsqrt.pop %v5451
        %v5486 = vmul.f32 %v5485, %v5451
        %v5487 = vmul.f32 %v5486, %v5485
        %v5488 = vmul.f32 0.5, %v5487
        %v5489 = vsub.f32 1.5, %v5488
        %v5490 = vmul.f32 %v5485, %v5489
        %vm5491 = vweird.f32 %v5451
        %vm5492 = vweird.f32 %v5485
        %vm5493 = vmor %vm5491, %vm5492
        %v5494 = vsel %vm5493, %v5485, %v5490
        %v5495 = vrsqrt.pop %v5452
        %v5496 = vmul.f32 %v5495, %v5452
        %v5497 = vmul.f32 %v5496, %v5495
        %v5498 = vmul.f32 0.5, %v5497
        %v5499 = vsub.f32 1.5, %v5498
        %v5500 = vmul.f32 %v5495, %v5499
        %vm5501 = vweird.f32 %v5452
        %vm5502 = vweird.f32 %v5495
        %vm5503 = vmor %vm5501, %vm5502
        %v5504 = vsel %vm5503, %v5495, %v5500
        %v5505 = vrsqrt.pop %v5453
        %v5506 = vmul.f32 %v5505, %v5453
        %v5507 = vmul.f32 %v5506, %v5505
        %v5508 = vmul.f32 0.5, %v5507
        %v5509 = vsub.f32 1.5, %v5508
        %v5510 = vmul.f32 %v5505, %v5509
        %vm5511 = vweird.f32 %v5453
        %vm5512 = vweird.f32 %v5505
        %vm5513 = vmor %vm5511, %vm5512
        %v5514 = vsel %vm5513, %v5505, %v5510
        %v5515 = vrsqrt.pop %v5454
        %v5516 = vmul.f32 %v5515, %v5454
        %v5517 = vmul.f32 %v5516, %v5515
        %v5518 = vmul.f32 0.5, %v5517
        %v5519 = vsub.f32 1.5, %v5518
        %v5520 = vmul.f32 %v5515, %v5519
        %vm5521 = vweird.f32 %v5454
        %vm5522 = vweird.f32 %v5515
        %vm5523 = vmor %vm5521, %vm5522
        %v5524 = vsel %vm5523, %v5515, %v5520
        %v5525 = vrsqrt.pop %v5455
        %v5526 = vmul.f32 %v5525, %v5455
        %v5527 = vmul.f32 %v5526, %v5525
        %v5528 = vmul.f32 0.5, %v5527
        %v5529 = vsub.f32 1.5, %v5528
        %v5530 = vmul.f32 %v5525, %v5529
        %vm5531 = vweird.f32 %v5455
        %vm5532 = vweird.f32 %v5525
        %vm5533 = vmor %vm5531, %vm5532
        %v5534 = vsel %vm5533, %v5525, %v5530
        %v5535 = vrsqrt.pop %v5456
        %v5536 = vmul.f32 %v5535, %v5456
        %v5537 = vmul.f32 %v5536, %v5535
        %v5538 = vmul.f32 0.5, %v5537
        %v5539 = vsub.f32 1.5, %v5538
        %v5540 = vmul.f32 %v5535, %v5539
        %vm5541 = vweird.f32 %v5456
        %vm5542 = vweird.f32 %v5535
        %vm5543 = vmor %vm5541, %vm5542
        %v5544 = vsel %vm5543, %v5535, %v5540
        %v5545 = vrsqrt.pop %v5457
        %v5546 = vmul.f32 %v5545, %v5457
        %v5547 = vmul.f32 %v5546, %v5545
        %v5548 = vmul.f32 0.5, %v5547
        %v5549 = vsub.f32 1.5, %v5548
        %v5550 = vmul.f32 %v5545, %v5549
        %vm5551 = vweird.f32 %v5457
        %vm5552 = vweird.f32 %v5545
        %vm5553 = vmor %vm5551, %vm5552
        %v5554 = vsel %vm5553, %v5545, %v5550
        %v5555 = vrsqrt.pop %v5458
        %v5556 = vmul.f32 %v5555, %v5458
        %v5557 = vmul.f32 %v5556, %v5555
        %v5558 = vmul.f32 0.5, %v5557
        %v5559 = vsub.f32 1.5, %v5558
        %v5560 = vmul.f32 %v5555, %v5559
        %vm5561 = vweird.f32 %v5458
        %vm5562 = vweird.f32 %v5555
        %vm5563 = vmor %vm5561, %vm5562
        %v5564 = vsel %vm5563, %v5555, %v5560
        %v5565 = vrsqrt.pop %v5459
        %v5566 = vmul.f32 %v5565, %v5459
        %v5567 = vmul.f32 %v5566, %v5565
        %v5568 = vmul.f32 0.5, %v5567
        %v5569 = vsub.f32 1.5, %v5568
        %v5570 = vmul.f32 %v5565, %v5569
        %vm5571 = vweird.f32 %v5459
        %vm5572 = vweird.f32 %v5565
        %vm5573 = vmor %vm5571, %vm5572
        %v5574 = vsel %vm5573, %v5565, %v5570
        %v5575 = vrsqrt.pop %v5460
        %v5576 = vmul.f32 %v5575, %v5460
        %v5577 = vmul.f32 %v5576, %v5575
        %v5578 = vmul.f32 0.5, %v5577
        %v5579 = vsub.f32 1.5, %v5578
        %v5580 = vmul.f32 %v5575, %v5579
        %vm5581 = vweird.f32 %v5460
        %vm5582 = vweird.f32 %v5575
        %vm5583 = vmor %vm5581, %vm5582
        %v5584 = vsel %vm5583, %v5575, %v5580
        %v5585 = vrsqrt.pop %v5461
        %v5586 = vmul.f32 %v5585, %v5461
        %v5587 = vmul.f32 %v5586, %v5585
        %v5588 = vmul.f32 0.5, %v5587
        %v5589 = vsub.f32 1.5, %v5588
        %v5590 = vmul.f32 %v5585, %v5589
        %vm5591 = vweird.f32 %v5461
        %vm5592 = vweird.f32 %v5585
        %vm5593 = vmor %vm5591, %vm5592
        %v5594 = vsel %vm5593, %v5585, %v5590
        %v5595 = vrsqrt.pop %v5462
        %v5596 = vmul.f32 %v5595, %v5462
        %v5597 = vmul.f32 %v5596, %v5595
        %v5598 = vmul.f32 0.5, %v5597
        %v5599 = vsub.f32 1.5, %v5598
        %v5600 = vmul.f32 %v5595, %v5599
        %vm5601 = vweird.f32 %v5462
        %vm5602 = vweird.f32 %v5595
        %vm5603 = vmor %vm5601, %vm5602
        %v5604 = vsel %vm5603, %v5595, %v5600
        %v5605 = vrsqrt.pop %v5463
        %v5606 = vmul.f32 %v5605, %v5463
        %v5607 = vmul.f32 %v5606, %v5605
        %v5608 = vmul.f32 0.5, %v5607
        %v5609 = vsub.f32 1.5, %v5608
        %v5610 = vmul.f32 %v5605, %v5609
        %vm5611 = vweird.f32 %v5463
        %vm5612 = vweird.f32 %v5605
        %vm5613 = vmor %vm5611, %vm5612
        %v5614 = vsel %vm5613, %v5605, %v5610
        %v5615 = vrsqrt.pop %v5464
        %v5616 = vmul.f32 %v5615, %v5464
        %v5617 = vmul.f32 %v5616, %v5615
        %v5618 = vmul.f32 0.5, %v5617
        %v5619 = vsub.f32 1.5, %v5618
        %v5620 = vmul.f32 %v5615, %v5619
        %vm5621 = vweird.f32 %v5464
        %vm5622 = vweird.f32 %v5615
        %vm5623 = vmor %vm5621, %vm5622
        %v5624 = vsel %vm5623, %v5615, %v5620
        %v5625 = vmul.f32 %v5353, %v5474
        %v5626 = vmul.f32 %v5354, %v5484
        %v5627 = vmul.f32 %v5355, %v5494
        %v5628 = vmul.f32 %v5356, %v5504
        %v5629 = vmul.f32 %v5357, %v5514
        %v5630 = vmul.f32 %v5358, %v5524
        %v5631 = vmul.f32 %v5359, %v5534
        %v5632 = vmul.f32 %v5360, %v5544
        %v5633 = vmul.f32 %v5361, %v5554
        %v5634 = vmul.f32 %v5362, %v5564
        %v5635 = vmul.f32 %v5363, %v5574
        %v5636 = vmul.f32 %v5364, %v5584
        %v5637 = vmul.f32 %v5365, %v5594
        %v5638 = vmul.f32 %v5366, %v5604
        %v5639 = vmul.f32 %v5367, %v5614
        %v5640 = vmul.f32 %v5368, %v5624
        %v5641 = vperm.slane %v470, 3
        %v5642 = vmul.f32 %v5625, %v5641
        %v5643 = vmul.f32 %v5626, %v5641
        %v5644 = vmul.f32 %v5627, %v5641
        %v5645 = vmul.f32 %v5628, %v5641
        %v5646 = vmul.f32 %v5629, %v5641
        %v5647 = vmul.f32 %v5630, %v5641
        %v5648 = vmul.f32 %v5631, %v5641
        %v5649 = vmul.f32 %v5632, %v5641
        %v5650 = vmul.f32 %v5633, %v5641
        %v5651 = vmul.f32 %v5634, %v5641
        %v5652 = vmul.f32 %v5635, %v5641
        %v5653 = vmul.f32 %v5636, %v5641
        %v5654 = vmul.f32 %v5637, %v5641
        %v5655 = vmul.f32 %v5638, %v5641
        %v5656 = vmul.f32 %v5639, %v5641
        %v5657 = vmul.f32 %v5640, %v5641
        %v5658 = vperm.slane %v470, 4
        %v5659 = vadd.f32 %v5642, %v5658
        %v5660 = vadd.f32 %v5643, %v5658
        %v5661 = vadd.f32 %v5644, %v5658
        %v5662 = vadd.f32 %v5645, %v5658
        %v5663 = vadd.f32 %v5646, %v5658
        %v5664 = vadd.f32 %v5647, %v5658
        %v5665 = vadd.f32 %v5648, %v5658
        %v5666 = vadd.f32 %v5649, %v5658
        %v5667 = vadd.f32 %v5650, %v5658
        %v5668 = vadd.f32 %v5651, %v5658
        %v5669 = vadd.f32 %v5652, %v5658
        %v5670 = vadd.f32 %v5653, %v5658
        %v5671 = vadd.f32 %v5654, %v5658
        %v5672 = vadd.f32 %v5655, %v5658
        %v5673 = vadd.f32 %v5656, %v5658
        %v5674 = vadd.f32 %v5657, %v5658
        %v5675 = vpack.c.bf16 %v5660, %v5659
        %v5676 = vpack.c.bf16 %v5662, %v5661
        %v5677 = vpack.c.bf16 %v5664, %v5663
        %v5678 = vpack.c.bf16 %v5666, %v5665
        %v5679 = vpack.c.bf16 %v5668, %v5667
        %v5680 = vpack.c.bf16 %v5670, %v5669
        %v5681 = vpack.c.bf16 %v5672, %v5671
        %v5682 = vpack.c.bf16 %v5674, %v5673
        %v5683 = vld [vmem:[%s409] sm:$0xf]
        %v5684 = vld [vmem:[%s409 + $0x4] sm:$0xf]
        %v5685 = vld [vmem:[%s409 + $0x8] sm:$0xf]
        %v5686 = vld [vmem:[%s409 + $0xc] sm:$0xf]
        %v5687 = vperm.slane %v470, 5
        %v5692 = vunpack.c.l.b16 %v5683
        %v5693 = vunpack.c.l.b16 %v5684
        %v5694 = vunpack.c.l.b16 %v5685
        %v5695 = vunpack.c.l.b16 %v5686
        %v5696 = vpack.c.b16 %v5693, %v5692
        %v5697 = vpack.c.b16 %v5695, %v5694
        %v5701 = vsel %vm471, %v5675, 0
        %v5704 = vsel %vm471, %v5676, 0
        %v5707 = vsel %vm471, %v5677, 0
        %v5710 = vsel %vm471, %v5678, 0
        %v5713 = vsel %vm471, %v5679, 0
        %v5716 = vsel %vm471, %v5680, 0
        %v5719 = vsel %vm471, %v5681, 0
        %v5722 = vsel %vm471, %v5682, 0
        %5724 = vmatpush.bf16.msra.mxu0 0
        %5725 = vmatpush.bf16.msra.mxu0 0
        %5726 = vmatpush.bf16.msra.mxu0 0
        %5727 = vmatpush.bf16.msra.mxu0 0
        %5728 = vmatpush.bf16.msra.mxu0 0
        %5729 = vmatpush.bf16.msra.mxu0 0
        %5730 = vmatpush.bf16.msra.mxu0 %v5697
        %5731 = vmatpush.bf16.msra.mxu0 %v5696
        %5732 = vmatmul.bf16.gmra.mxu0 %v5701
        %v5733 = vpop.f32.mrf.mxu0
        %v5734 = vadd.f32 %v5687, %v5733
        %v5735 = vpop.f32.mrf.mxu0
        %v5736 = vadd.f32 %v5687, %v5735
        %5737 = vmatmul.bf16.gmra.mxu0 %v5704
        %v5738 = vpop.f32.mrf.mxu0
        %v5739 = vadd.f32 %v5687, %v5738
        %v5740 = vpop.f32.mrf.mxu0
        %v5741 = vadd.f32 %v5687, %v5740
        %5742 = vmatmul.bf16.gmra.mxu0 %v5707
        %v5743 = vpop.f32.mrf.mxu0
        %v5744 = vadd.f32 %v5687, %v5743
        %v5745 = vpop.f32.mrf.mxu0
        %v5746 = vadd.f32 %v5687, %v5745
        %5747 = vmatmul.bf16.gmra.mxu0 %v5710
        %v5748 = vpop.f32.mrf.mxu0
        %v5749 = vadd.f32 %v5687, %v5748
        %v5750 = vpop.f32.mrf.mxu0
        %v5751 = vadd.f32 %v5687, %v5750
        %5752 = vmatmul.bf16.gmra.mxu0 %v5713
        %v5753 = vpop.f32.mrf.mxu0
        %v5754 = vadd.f32 %v5687, %v5753
        %v5755 = vpop.f32.mrf.mxu0
        %v5756 = vadd.f32 %v5687, %v5755
        %5757 = vmatmul.bf16.gmra.mxu0 %v5716
        %v5758 = vpop.f32.mrf.mxu0
        %v5759 = vadd.f32 %v5687, %v5758
        %v5760 = vpop.f32.mrf.mxu0
        %v5761 = vadd.f32 %v5687, %v5760
        %5762 = vmatmul.bf16.gmra.mxu0 %v5719
        %v5763 = vpop.f32.mrf.mxu0
        %v5764 = vadd.f32 %v5687, %v5763
        %v5765 = vpop.f32.mrf.mxu0
        %v5766 = vadd.f32 %v5687, %v5765
        %5767 = vmatmul.bf16.gmra.mxu0 %v5722
        %v5768 = vpop.f32.mrf.mxu0
        %v5769 = vadd.f32 %v5687, %v5768
        %v5770 = vpop.f32.mrf.mxu0
        %v5771 = vadd.f32 %v5687, %v5770
        %5772 = vdwg.mxu0
        %v5773 = vmul.f32 %v5734, 0.5
        %v5774 = vmul.f32 %v5736, 0.5
        %v5775 = vmul.f32 %v5739, 0.5
        %v5776 = vmul.f32 %v5741, 0.5
        %v5777 = vmul.f32 %v5744, 0.5
        %v5778 = vmul.f32 %v5746, 0.5
        %v5779 = vmul.f32 %v5749, 0.5
        %v5780 = vmul.f32 %v5751, 0.5
        %v5781 = vmul.f32 %v5754, 0.5
        %v5782 = vmul.f32 %v5756, 0.5
        %v5783 = vmul.f32 %v5759, 0.5
        %v5784 = vmul.f32 %v5761, 0.5
        %v5785 = vmul.f32 %v5764, 0.5
        %v5786 = vmul.f32 %v5766, 0.5
        %v5787 = vmul.f32 %v5769, 0.5
        %v5788 = vmul.f32 %v5771, 0.5
        %v5789 = vmul.f32 %v5734, 0.70710677
        %v5790 = vmul.f32 %v5736, 0.70710677
        %v5791 = vmul.f32 %v5739, 0.70710677
        %v5792 = vmul.f32 %v5741, 0.70710677
        %v5793 = vmul.f32 %v5744, 0.70710677
        %v5794 = vmul.f32 %v5746, 0.70710677
        %v5795 = vmul.f32 %v5749, 0.70710677
        %v5796 = vmul.f32 %v5751, 0.70710677
        %v5797 = vmul.f32 %v5754, 0.70710677
        %v5798 = vmul.f32 %v5756, 0.70710677
        %v5799 = vmul.f32 %v5759, 0.70710677
        %v5800 = vmul.f32 %v5761, 0.70710677
        %v5801 = vmul.f32 %v5764, 0.70710677
        %v5802 = vmul.f32 %v5766, 0.70710677
        %v5803 = vmul.f32 %v5769, 0.70710677
        %v5804 = vmul.f32 %v5771, 0.70710677
        %v5805 = vand.u32 2147483647, %v5789
        %v5806 = vand.u32 2147483647, %v5790
        %v5807 = vand.u32 2147483647, %v5791
        %v5808 = vand.u32 2147483647, %v5792
        %v5809 = vand.u32 2147483647, %v5793
        %v5810 = vand.u32 2147483647, %v5794
        %v5811 = vand.u32 2147483647, %v5795
        %v5812 = vand.u32 2147483647, %v5796
        %v5813 = vand.u32 2147483647, %v5797
        %v5814 = vand.u32 2147483647, %v5798
        %v5815 = vand.u32 2147483647, %v5799
        %v5816 = vand.u32 2147483647, %v5800
        %v5817 = vand.u32 2147483647, %v5801
        %v5818 = vand.u32 2147483647, %v5802
        %v5819 = vand.u32 2147483647, %v5803
        %v5820 = vand.u32 2147483647, %v5804
        %v5821 = vmul.f32 %v5805, 0.3275911
        %v5822 = vmul.f32 %v5806, 0.3275911
        %v5823 = vmul.f32 %v5807, 0.3275911
        %v5824 = vmul.f32 %v5808, 0.3275911
        %v5825 = vmul.f32 %v5809, 0.3275911
        %v5826 = vmul.f32 %v5810, 0.3275911
        %v5827 = vmul.f32 %v5811, 0.3275911
        %v5828 = vmul.f32 %v5812, 0.3275911
        %v5829 = vmul.f32 %v5813, 0.3275911
        %v5830 = vmul.f32 %v5814, 0.3275911
        %v5831 = vmul.f32 %v5815, 0.3275911
        %v5832 = vmul.f32 %v5816, 0.3275911
        %v5833 = vmul.f32 %v5817, 0.3275911
        %v5834 = vmul.f32 %v5818, 0.3275911
        %v5835 = vmul.f32 %v5819, 0.3275911
        %v5836 = vmul.f32 %v5820, 0.3275911
        %v5837 = vadd.f32 %v5821, 1.0
        %v5838 = vadd.f32 %v5822, 1.0
        %v5839 = vadd.f32 %v5823, 1.0
        %v5840 = vadd.f32 %v5824, 1.0
        %v5841 = vadd.f32 %v5825, 1.0
        %v5842 = vadd.f32 %v5826, 1.0
        %v5843 = vadd.f32 %v5827, 1.0
        %v5844 = vadd.f32 %v5828, 1.0
        %v5845 = vadd.f32 %v5829, 1.0
        %v5846 = vadd.f32 %v5830, 1.0
        %v5847 = vadd.f32 %v5831, 1.0
        %v5848 = vadd.f32 %v5832, 1.0
        %v5849 = vadd.f32 %v5833, 1.0
        %v5850 = vadd.f32 %v5834, 1.0
        %v5851 = vadd.f32 %v5835, 1.0
        %v5852 = vadd.f32 %v5836, 1.0
        %v5853 = vrcp.pop %v5837
        %v5854 = vrcp.pop %v5838
        %v5855 = vrcp.pop %v5839
        %v5856 = vrcp.pop %v5840
        %v5857 = vrcp.pop %v5841
        %v5858 = vrcp.pop %v5842
        %v5859 = vrcp.pop %v5843
        %v5860 = vrcp.pop %v5844
        %v5861 = vrcp.pop %v5845
        %v5862 = vrcp.pop %v5846
        %v5863 = vrcp.pop %v5847
        %v5864 = vrcp.pop %v5848
        %v5865 = vrcp.pop %v5849
        %v5866 = vrcp.pop %v5850
        %v5867 = vrcp.pop %v5851
        %v5868 = vrcp.pop %v5852
        %v5869 = vmul.f32 %v5853, 1.0614054
        %v5870 = vmul.f32 %v5854, 1.0614054
        %v5871 = vmul.f32 %v5855, 1.0614054
        %v5872 = vmul.f32 %v5856, 1.0614054
        %v5873 = vmul.f32 %v5857, 1.0614054
        %v5874 = vmul.f32 %v5858, 1.0614054
        %v5875 = vmul.f32 %v5859, 1.0614054
        %v5876 = vmul.f32 %v5860, 1.0614054
        %v5877 = vmul.f32 %v5861, 1.0614054
        %v5878 = vmul.f32 %v5862, 1.0614054
        %v5879 = vmul.f32 %v5863, 1.0614054
        %v5880 = vmul.f32 %v5864, 1.0614054
        %v5881 = vmul.f32 %v5865, 1.0614054
        %v5882 = vmul.f32 %v5866, 1.0614054
        %v5883 = vmul.f32 %v5867, 1.0614054
        %v5884 = vmul.f32 %v5868, 1.0614054
        %v5885 = vadd.f32 %v5869, -1.4531521
        %v5886 = vadd.f32 %v5870, -1.4531521
        %v5887 = vadd.f32 %v5871, -1.4531521
        %v5888 = vadd.f32 %v5872, -1.4531521
        %v5889 = vadd.f32 %v5873, -1.4531521
        %v5890 = vadd.f32 %v5874, -1.4531521
        %v5891 = vadd.f32 %v5875, -1.4531521
        %v5892 = vadd.f32 %v5876, -1.4531521
        %v5893 = vadd.f32 %v5877, -1.4531521
        %v5894 = vadd.f32 %v5878, -1.4531521
        %v5895 = vadd.f32 %v5879, -1.4531521
        %v5896 = vadd.f32 %v5880, -1.4531521
        %v5897 = vadd.f32 %v5881, -1.4531521
        %v5898 = vadd.f32 %v5882, -1.4531521
        %v5899 = vadd.f32 %v5883, -1.4531521
        %v5900 = vadd.f32 %v5884, -1.4531521
        %v5901 = vmul.f32 %v5885, %v5853
        %v5902 = vmul.f32 %v5886, %v5854
        %v5903 = vmul.f32 %v5887, %v5855
        %v5904 = vmul.f32 %v5888, %v5856
        %v5905 = vmul.f32 %v5889, %v5857
        %v5906 = vmul.f32 %v5890, %v5858
        %v5907 = vmul.f32 %v5891, %v5859
        %v5908 = vmul.f32 %v5892, %v5860
        %v5909 = vmul.f32 %v5893, %v5861
        %v5910 = vmul.f32 %v5894, %v5862
        %v5911 = vmul.f32 %v5895, %v5863
        %v5912 = vmul.f32 %v5896, %v5864
        %v5913 = vmul.f32 %v5897, %v5865
        %v5914 = vmul.f32 %v5898, %v5866
        %v5915 = vmul.f32 %v5899, %v5867
        %v5916 = vmul.f32 %v5900, %v5868
        %v5917 = vadd.f32 %v5901, 1.4214138
        %v5918 = vadd.f32 %v5902, 1.4214138
        %v5919 = vadd.f32 %v5903, 1.4214138
        %v5920 = vadd.f32 %v5904, 1.4214138
        %v5921 = vadd.f32 %v5905, 1.4214138
        %v5922 = vadd.f32 %v5906, 1.4214138
        %v5923 = vadd.f32 %v5907, 1.4214138
        %v5924 = vadd.f32 %v5908, 1.4214138
        %v5925 = vadd.f32 %v5909, 1.4214138
        %v5926 = vadd.f32 %v5910, 1.4214138
        %v5927 = vadd.f32 %v5911, 1.4214138
        %v5928 = vadd.f32 %v5912, 1.4214138
        %v5929 = vadd.f32 %v5913, 1.4214138
        %v5930 = vadd.f32 %v5914, 1.4214138
        %v5931 = vadd.f32 %v5915, 1.4214138
        %v5932 = vadd.f32 %v5916, 1.4214138
        %v5933 = vmul.f32 %v5917, %v5853
        %v5934 = vmul.f32 %v5918, %v5854
        %v5935 = vmul.f32 %v5919, %v5855
        %v5936 = vmul.f32 %v5920, %v5856
        %v5937 = vmul.f32 %v5921, %v5857
        %v5938 = vmul.f32 %v5922, %v5858
        %v5939 = vmul.f32 %v5923, %v5859
        %v5940 = vmul.f32 %v5924, %v5860
        %v5941 = vmul.f32 %v5925, %v5861
        %v5942 = vmul.f32 %v5926, %v5862
        %v5943 = vmul.f32 %v5927, %v5863
        %v5944 = vmul.f32 %v5928, %v5864
        %v5945 = vmul.f32 %v5929, %v5865
        %v5946 = vmul.f32 %v5930, %v5866
        %v5947 = vmul.f32 %v5931, %v5867
        %v5948 = vmul.f32 %v5932, %v5868
        %v5949 = vadd.f32 %v5933, -0.28449672
        %v5950 = vadd.f32 %v5934, -0.28449672
        %v5951 = vadd.f32 %v5935, -0.28449672
        %v5952 = vadd.f32 %v5936, -0.28449672
        %v5953 = vadd.f32 %v5937, -0.28449672
        %v5954 = vadd.f32 %v5938, -0.28449672
        %v5955 = vadd.f32 %v5939, -0.28449672
        %v5956 = vadd.f32 %v5940, -0.28449672
        %v5957 = vadd.f32 %v5941, -0.28449672
        %v5958 = vadd.f32 %v5942, -0.28449672
        %v5959 = vadd.f32 %v5943, -0.28449672
        %v5960 = vadd.f32 %v5944, -0.28449672
        %v5961 = vadd.f32 %v5945, -0.28449672
        %v5962 = vadd.f32 %v5946, -0.28449672
        %v5963 = vadd.f32 %v5947, -0.28449672
        %v5964 = vadd.f32 %v5948, -0.28449672
        %v5965 = vmul.f32 %v5949, %v5853
        %v5966 = vmul.f32 %v5950, %v5854
        %v5967 = vmul.f32 %v5951, %v5855
        %v5968 = vmul.f32 %v5952, %v5856
        %v5969 = vmul.f32 %v5953, %v5857
        %v5970 = vmul.f32 %v5954, %v5858
        %v5971 = vmul.f32 %v5955, %v5859
        %v5972 = vmul.f32 %v5956, %v5860
        %v5973 = vmul.f32 %v5957, %v5861
        %v5974 = vmul.f32 %v5958, %v5862
        %v5975 = vmul.f32 %v5959, %v5863
        %v5976 = vmul.f32 %v5960, %v5864
        %v5977 = vmul.f32 %v5961, %v5865
        %v5978 = vmul.f32 %v5962, %v5866
        %v5979 = vmul.f32 %v5963, %v5867
        %v5980 = vmul.f32 %v5964, %v5868
        %v5981 = vadd.f32 %v5965, 0.2548296
        %v5982 = vadd.f32 %v5966, 0.2548296
        %v5983 = vadd.f32 %v5967, 0.2548296
        %v5984 = vadd.f32 %v5968, 0.2548296
        %v5985 = vadd.f32 %v5969, 0.2548296
        %v5986 = vadd.f32 %v5970, 0.2548296
        %v5987 = vadd.f32 %v5971, 0.2548296
        %v5988 = vadd.f32 %v5972, 0.2548296
        %v5989 = vadd.f32 %v5973, 0.2548296
        %v5990 = vadd.f32 %v5974, 0.2548296
        %v5991 = vadd.f32 %v5975, 0.2548296
        %v5992 = vadd.f32 %v5976, 0.2548296
        %v5993 = vadd.f32 %v5977, 0.2548296
        %v5994 = vadd.f32 %v5978, 0.2548296
        %v5995 = vadd.f32 %v5979, 0.2548296
        %v5996 = vadd.f32 %v5980, 0.2548296
        %v5997 = vmul.f32 %v5981, %v5853
        %v5998 = vmul.f32 %v5982, %v5854
        %v5999 = vmul.f32 %v5983, %v5855
        %v6000 = vmul.f32 %v5984, %v5856
        %v6001 = vmul.f32 %v5985, %v5857
        %v6002 = vmul.f32 %v5986, %v5858
        %v6003 = vmul.f32 %v5987, %v5859
        %v6004 = vmul.f32 %v5988, %v5860
        %v6005 = vmul.f32 %v5989, %v5861
        %v6006 = vmul.f32 %v5990, %v5862
        %v6007 = vmul.f32 %v5991, %v5863
        %v6008 = vmul.f32 %v5992, %v5864
        %v6009 = vmul.f32 %v5993, %v5865
        %v6010 = vmul.f32 %v5994, %v5866
        %v6011 = vmul.f32 %v5995, %v5867
        %v6012 = vmul.f32 %v5996, %v5868
        %v6013 = vsub.f32 0.0, %v5805
        %v6014 = vsub.f32 0.0, %v5806
        %v6015 = vsub.f32 0.0, %v5807
        %v6016 = vsub.f32 0.0, %v5808
        %v6017 = vsub.f32 0.0, %v5809
        %v6018 = vsub.f32 0.0, %v5810
        %v6019 = vsub.f32 0.0, %v5811
        %v6020 = vsub.f32 0.0, %v5812
        %v6021 = vsub.f32 0.0, %v5813
        %v6022 = vsub.f32 0.0, %v5814
        %v6023 = vsub.f32 0.0, %v5815
        %v6024 = vsub.f32 0.0, %v5816
        %v6025 = vsub.f32 0.0, %v5817
        %v6026 = vsub.f32 0.0, %v5818
        %v6027 = vsub.f32 0.0, %v5819
        %v6028 = vsub.f32 0.0, %v5820
        %v6029 = vmul.f32 %v6013, %v5805
        %v6030 = vmul.f32 %v6014, %v5806
        %v6031 = vmul.f32 %v6015, %v5807
        %v6032 = vmul.f32 %v6016, %v5808
        %v6033 = vmul.f32 %v6017, %v5809
        %v6034 = vmul.f32 %v6018, %v5810
        %v6035 = vmul.f32 %v6019, %v5811
        %v6036 = vmul.f32 %v6020, %v5812
        %v6037 = vmul.f32 %v6021, %v5813
        %v6038 = vmul.f32 %v6022, %v5814
        %v6039 = vmul.f32 %v6023, %v5815
        %v6040 = vmul.f32 %v6024, %v5816
        %v6041 = vmul.f32 %v6025, %v5817
        %v6042 = vmul.f32 %v6026, %v5818
        %v6043 = vmul.f32 %v6027, %v5819
        %v6044 = vmul.f32 %v6028, %v5820
        %v6045 = vmul.f32 %v6029, 1.442695
        %v6046 = vpow.pop %v6045
        %v6047 = vmul.f32 %v6030, 1.442695
        %v6048 = vpow.pop %v6047
        %v6049 = vmul.f32 %v6031, 1.442695
        %v6050 = vpow.pop %v6049
        %v6051 = vmul.f32 %v6032, 1.442695
        %v6052 = vpow.pop %v6051
        %v6053 = vmul.f32 %v6033, 1.442695
        %v6054 = vpow.pop %v6053
        %v6055 = vmul.f32 %v6034, 1.442695
        %v6056 = vpow.pop %v6055
        %v6057 = vmul.f32 %v6035, 1.442695
        %v6058 = vpow.pop %v6057
        %v6059 = vmul.f32 %v6036, 1.442695
        %v6060 = vpow.pop %v6059
        %v6061 = vmul.f32 %v6037, 1.442695
        %v6062 = vpow.pop %v6061
        %v6063 = vmul.f32 %v6038, 1.442695
        %v6064 = vpow.pop %v6063
        %v6065 = vmul.f32 %v6039, 1.442695
        %v6066 = vpow.pop %v6065
        %v6067 = vmul.f32 %v6040, 1.442695
        %v6068 = vpow.pop %v6067
        %v6069 = vmul.f32 %v6041, 1.442695
        %v6070 = vpow.pop %v6069
        %v6071 = vmul.f32 %v6042, 1.442695
        %v6072 = vpow.pop %v6071
        %v6073 = vmul.f32 %v6043, 1.442695
        %v6074 = vpow.pop %v6073
        %v6075 = vmul.f32 %v6044, 1.442695
        %v6076 = vpow.pop %v6075
        %v6077 = vmul.f32 %v5997, %v6046
        %v6078 = vmul.f32 %v5998, %v6048
        %v6079 = vmul.f32 %v5999, %v6050
        %v6080 = vmul.f32 %v6000, %v6052
        %v6081 = vmul.f32 %v6001, %v6054
        %v6082 = vmul.f32 %v6002, %v6056
        %v6083 = vmul.f32 %v6003, %v6058
        %v6084 = vmul.f32 %v6004, %v6060
        %v6085 = vmul.f32 %v6005, %v6062
        %v6086 = vmul.f32 %v6006, %v6064
        %v6087 = vmul.f32 %v6007, %v6066
        %v6088 = vmul.f32 %v6008, %v6068
        %v6089 = vmul.f32 %v6009, %v6070
        %v6090 = vmul.f32 %v6010, %v6072
        %v6091 = vmul.f32 %v6011, %v6074
        %v6092 = vmul.f32 %v6012, %v6076
        %v6093 = vsub.f32 1.0, %v6077
        %v6094 = vsub.f32 1.0, %v6078
        %v6095 = vsub.f32 1.0, %v6079
        %v6096 = vsub.f32 1.0, %v6080
        %v6097 = vsub.f32 1.0, %v6081
        %v6098 = vsub.f32 1.0, %v6082
        %v6099 = vsub.f32 1.0, %v6083
        %v6100 = vsub.f32 1.0, %v6084
        %v6101 = vsub.f32 1.0, %v6085
        %v6102 = vsub.f32 1.0, %v6086
        %v6103 = vsub.f32 1.0, %v6087
        %v6104 = vsub.f32 1.0, %v6088
        %v6105 = vsub.f32 1.0, %v6089
        %v6106 = vsub.f32 1.0, %v6090
        %v6107 = vsub.f32 1.0, %v6091
        %v6108 = vsub.f32 1.0, %v6092
        %vm6109 = vcmp.ge.f32.partialorder %v5789, 0.0
        %vm6110 = vcmp.ge.f32.partialorder %v5790, 0.0
        %vm6111 = vcmp.ge.f32.partialorder %v5791, 0.0
        %vm6112 = vcmp.ge.f32.partialorder %v5792, 0.0
        %vm6113 = vcmp.ge.f32.partialorder %v5793, 0.0
        %vm6114 = vcmp.ge.f32.partialorder %v5794, 0.0
        %vm6115 = vcmp.ge.f32.partialorder %v5795, 0.0
        %vm6116 = vcmp.ge.f32.partialorder %v5796, 0.0
        %vm6117 = vcmp.ge.f32.partialorder %v5797, 0.0
        %vm6118 = vcmp.ge.f32.partialorder %v5798, 0.0
        %vm6119 = vcmp.ge.f32.partialorder %v5799, 0.0
        %vm6120 = vcmp.ge.f32.partialorder %v5800, 0.0
        %vm6121 = vcmp.ge.f32.partialorder %v5801, 0.0
        %vm6122 = vcmp.ge.f32.partialorder %v5802, 0.0
        %vm6123 = vcmp.ge.f32.partialorder %v5803, 0.0
        %vm6124 = vcmp.ge.f32.partialorder %v5804, 0.0
        %v6125 = vsub.f32 0.0, %v6093
        %v6126 = vsub.f32 0.0, %v6094
        %v6127 = vsub.f32 0.0, %v6095
        %v6128 = vsub.f32 0.0, %v6096
        %v6129 = vsub.f32 0.0, %v6097
        %v6130 = vsub.f32 0.0, %v6098
        %v6131 = vsub.f32 0.0, %v6099
        %v6132 = vsub.f32 0.0, %v6100
        %v6133 = vsub.f32 0.0, %v6101
        %v6134 = vsub.f32 0.0, %v6102
        %v6135 = vsub.f32 0.0, %v6103
        %v6136 = vsub.f32 0.0, %v6104
        %v6137 = vsub.f32 0.0, %v6105
        %v6138 = vsub.f32 0.0, %v6106
        %v6139 = vsub.f32 0.0, %v6107
        %v6140 = vsub.f32 0.0, %v6108
        %v6141 = vsel %vm6109, %v6093, %v6125
        %v6142 = vsel %vm6110, %v6094, %v6126
        %v6143 = vsel %vm6111, %v6095, %v6127
        %v6144 = vsel %vm6112, %v6096, %v6128
        %v6145 = vsel %vm6113, %v6097, %v6129
        %v6146 = vsel %vm6114, %v6098, %v6130
        %v6147 = vsel %vm6115, %v6099, %v6131
        %v6148 = vsel %vm6116, %v6100, %v6132
        %v6149 = vsel %vm6117, %v6101, %v6133
        %v6150 = vsel %vm6118, %v6102, %v6134
        %v6151 = vsel %vm6119, %v6103, %v6135
        %v6152 = vsel %vm6120, %v6104, %v6136
        %v6153 = vsel %vm6121, %v6105, %v6137
        %v6154 = vsel %vm6122, %v6106, %v6138
        %v6155 = vsel %vm6123, %v6107, %v6139
        %v6156 = vsel %vm6124, %v6108, %v6140
        %v6157 = vadd.f32 %v6141, 1.0
        %v6158 = vadd.f32 %v6142, 1.0
        %v6159 = vadd.f32 %v6143, 1.0
        %v6160 = vadd.f32 %v6144, 1.0
        %v6161 = vadd.f32 %v6145, 1.0
        %v6162 = vadd.f32 %v6146, 1.0
        %v6163 = vadd.f32 %v6147, 1.0
        %v6164 = vadd.f32 %v6148, 1.0
        %v6165 = vadd.f32 %v6149, 1.0
        %v6166 = vadd.f32 %v6150, 1.0
        %v6167 = vadd.f32 %v6151, 1.0
        %v6168 = vadd.f32 %v6152, 1.0
        %v6169 = vadd.f32 %v6153, 1.0
        %v6170 = vadd.f32 %v6154, 1.0
        %v6171 = vadd.f32 %v6155, 1.0
        %v6172 = vadd.f32 %v6156, 1.0
        %v6173 = vmul.f32 %v5773, %v6157
        %v6174 = vmul.f32 %v5774, %v6158
        %v6175 = vmul.f32 %v5775, %v6159
        %v6176 = vmul.f32 %v5776, %v6160
        %v6177 = vmul.f32 %v5777, %v6161
        %v6178 = vmul.f32 %v5778, %v6162
        %v6179 = vmul.f32 %v5779, %v6163
        %v6180 = vmul.f32 %v5780, %v6164
        %v6181 = vmul.f32 %v5781, %v6165
        %v6182 = vmul.f32 %v5782, %v6166
        %v6183 = vmul.f32 %v5783, %v6167
        %v6184 = vmul.f32 %v5784, %v6168
        %v6185 = vmul.f32 %v5785, %v6169
        %v6186 = vmul.f32 %v5786, %v6170
        %v6187 = vmul.f32 %v5787, %v6171
        %v6188 = vmul.f32 %v5788, %v6172
        %v6189 = vpack.c.bf16 %v6174, %v6173
        %v6190 = vpack.c.bf16 %v6176, %v6175
        %v6191 = vpack.c.bf16 %v6178, %v6177
        %v6192 = vpack.c.bf16 %v6180, %v6179
        %v6193 = vpack.c.bf16 %v6182, %v6181
        %v6194 = vpack.c.bf16 %v6184, %v6183
        %v6195 = vpack.c.bf16 %v6186, %v6185
        %v6196 = vpack.c.bf16 %v6188, %v6187
        %v6197 = vld [vmem:[%s414] sm:$0xf]
        %v6198 = vld [vmem:[%s414 + $0x4] sm:$0xf]
        %v6199 = vld [vmem:[%s414 + $0x8] sm:$0xf]
        %v6200 = vld [vmem:[%s414 + $0xc] sm:$0xf]
        %v6201 = vld [vmem:[%s414 + $0x10] sm:$0xf]
        %v6202 = vld [vmem:[%s414 + $0x14] sm:$0xf]
        %v6203 = vld [vmem:[%s414 + $0x18] sm:$0xf]
        %v6204 = vld [vmem:[%s414 + $0x1c] sm:$0xf]
        %v6205 = vperm.slane %v470, 6
        %v6214 = vunpack.c.l.b16 %v6197
        %v6215 = vunpack.c.l.b16 %v6198
        %v6216 = vunpack.c.l.b16 %v6199
        %v6217 = vunpack.c.l.b16 %v6200
        %v6218 = vunpack.c.l.b16 %v6201
        %v6219 = vunpack.c.l.b16 %v6202
        %v6220 = vunpack.c.l.b16 %v6203
        %v6221 = vunpack.c.l.b16 %v6204
        %v6222 = vpack.c.b16 %v6215, %v6214
        %v6223 = vpack.c.b16 %v6217, %v6216
        %v6224 = vpack.c.b16 %v6219, %v6218
        %v6225 = vpack.c.b16 %v6221, %v6220
        %vm6230 = vcmask 523264
        %v6232 = vsel %vm6230, %v6189, 0
        %v6235 = vsel %vm6230, %v6190, 0
        %v6238 = vsel %vm6230, %v6191, 0
        %v6241 = vsel %vm6230, %v6192, 0
        %v6244 = vsel %vm6230, %v6193, 0
        %v6247 = vsel %vm6230, %v6194, 0
        %v6250 = vsel %vm6230, %v6195, 0
        %v6253 = vsel %vm6230, %v6196, 0
        %6255 = vmatpush.bf16.msra.mxu0 0
        %6256 = vmatpush.bf16.msra.mxu0 0
        %6257 = vmatpush.bf16.msra.mxu0 0
        %6258 = vmatpush.bf16.msra.mxu0 0
        %6259 = vmatpush.bf16.msra.mxu0 %v6225
        %6260 = vmatpush.bf16.msra.mxu0 %v6224
        %6261 = vmatpush.bf16.msra.mxu0 %v6223
        %6262 = vmatpush.bf16.msra.mxu0 %v6222
        %6263 = vmatmul.bf16.gmra.mxu0 %v6232
        %v6264 = vpop.f32.mrf.mxu0
        %v6265 = vadd.f32 %v6205, %v6264
        %v6266 = vpop.f32.mrf.mxu0
        %v6267 = vadd.f32 %v6205, %v6266
        %6268 = vmatmul.bf16.gmra.mxu0 %v6235
        %v6269 = vpop.f32.mrf.mxu0
        %v6270 = vadd.f32 %v6205, %v6269
        %v6271 = vpop.f32.mrf.mxu0
        %v6272 = vadd.f32 %v6205, %v6271
        %6273 = vmatmul.bf16.gmra.mxu0 %v6238
        %v6274 = vpop.f32.mrf.mxu0
        %v6275 = vadd.f32 %v6205, %v6274
        %v6276 = vpop.f32.mrf.mxu0
        %v6277 = vadd.f32 %v6205, %v6276
        %6278 = vmatmul.bf16.gmra.mxu0 %v6241
        %v6279 = vpop.f32.mrf.mxu0
        %v6280 = vadd.f32 %v6205, %v6279
        %v6281 = vpop.f32.mrf.mxu0
        %v6282 = vadd.f32 %v6205, %v6281
        %6283 = vmatmul.bf16.gmra.mxu0 %v6244
        %v6284 = vpop.f32.mrf.mxu0
        %v6285 = vadd.f32 %v6205, %v6284
        %v6286 = vpop.f32.mrf.mxu0
        %v6287 = vadd.f32 %v6205, %v6286
        %6288 = vmatmul.bf16.gmra.mxu0 %v6247
        %v6289 = vpop.f32.mrf.mxu0
        %v6290 = vadd.f32 %v6205, %v6289
        %v6291 = vpop.f32.mrf.mxu0
        %v6292 = vadd.f32 %v6205, %v6291
        %6293 = vmatmul.bf16.gmra.mxu0 %v6250
        %v6294 = vpop.f32.mrf.mxu0
        %v6295 = vadd.f32 %v6205, %v6294
        %v6296 = vpop.f32.mrf.mxu0
        %v6297 = vadd.f32 %v6205, %v6296
        %6298 = vmatmul.bf16.gmra.mxu0 %v6253
        %v6299 = vpop.f32.mrf.mxu0
        %v6300 = vadd.f32 %v6205, %v6299
        %v6301 = vpop.f32.mrf.mxu0
        %v6302 = vadd.f32 %v6205, %v6301
        %6303 = vdwg.mxu0
        %v6304 = vadd.f32 %v5273, %v6265
        %v6305 = vadd.f32 %v5274, %v6267
        %v6306 = vadd.f32 %v5275, %v6270
        %v6307 = vadd.f32 %v5276, %v6272
        %v6308 = vadd.f32 %v5277, %v6275
        %v6309 = vadd.f32 %v5278, %v6277
        %v6310 = vadd.f32 %v5279, %v6280
        %v6311 = vadd.f32 %v5280, %v6282
        %v6312 = vadd.f32 %v5281, %v6285
        %v6313 = vadd.f32 %v5282, %v6287
        %v6314 = vadd.f32 %v5283, %v6290
        %v6315 = vadd.f32 %v5284, %v6292
        %v6316 = vadd.f32 %v5285, %v6295
        %v6317 = vadd.f32 %v5286, %v6297
        %v6318 = vadd.f32 %v5287, %v6300
        %v6319 = vadd.f32 %v5288, %v6302
        %6320 = vst.msk [vmem:[#allocation2] sm:$0xff] %vm471, %v6304
        %6321 = vst.msk [vmem:[#allocation2 + $0x8] sm:$0xff] %vm471, %v6305
        %6322 = vst.msk [vmem:[#allocation2 + $0x10] sm:$0xff] %vm471, %v6306
        %6323 = vst.msk [vmem:[#allocation2 + $0x18] sm:$0xff] %vm471, %v6307
        %6324 = vst.msk [vmem:[#allocation2 + $0x20] sm:$0xff] %vm471, %v6308
        %6325 = vst.msk [vmem:[#allocation2 + $0x28] sm:$0xff] %vm471, %v6309
        %6326 = vst.msk [vmem:[#allocation2 + $0x30] sm:$0xff] %vm471, %v6310
        %6327 = vst.msk [vmem:[#allocation2 + $0x38] sm:$0xff] %vm471, %v6311
        %6328 = vst.msk [vmem:[#allocation2 + $0x40] sm:$0xff] %vm471, %v6312
        %6329 = vst.msk [vmem:[#allocation2 + $0x48] sm:$0xff] %vm471, %v6313
        %6330 = vst.msk [vmem:[#allocation2 + $0x50] sm:$0xff] %vm471, %v6314
        %6331 = vst.msk [vmem:[#allocation2 + $0x58] sm:$0xff] %vm471, %v6315
        %6332 = vst.msk [vmem:[#allocation2 + $0x60] sm:$0xff] %vm471, %v6316
        %6333 = vst.msk [vmem:[#allocation2 + $0x68] sm:$0xff] %vm471, %v6317
        %6334 = vst.msk [vmem:[#allocation2 + $0x70] sm:$0xff] %vm471, %v6318
        %6335 = vst.msk [vmem:[#allocation2 + $0x78] sm:$0xff] %vm471, %v6319
        %p6336 = scmp.eq.s32.totalorder %s27, 1
        // Predicated region
        $region57: #{tpu_custom_call.1} parent=51 // pred_check
          %p6337 = pneg %p6336
        $region58: #{tpu_custom_call.1} parent=51 // pred_check_branch
          %6339 = sbr.rel (%p6337) target = $region60
        $region59: #{tpu_custom_call.1} parent=51 // pred_region
          %v6340 = vld [vmem:[%s6] sm:$0xff]
          %v6357 = vrot.slane %v6305, 7
          %vm6358 = vcmask 1041409
          %v6359 = vsel %vm6358, %v6357, %v6304
          %v6360 = vrot.slane %v6306, 6
          %vm6361 = vcmask 1042434
          %v6362 = vsel %vm6361, %v6360, %v6359
          %v6363 = vrot.slane %v6307, 5
          %vm6364 = vcmask 1043459
          %v6365 = vsel %vm6364, %v6363, %v6362
          %v6366 = vrot.slane %v6308, 4
          %vm6367 = vcmask 1044484
          %v6368 = vsel %vm6367, %v6366, %v6365
          %v6369 = vrot.slane %v6309, 3
          %vm6370 = vcmask 1045509
          %v6371 = vsel %vm6370, %v6369, %v6368
          %v6372 = vrot.slane %v6310, 2
          %vm6373 = vcmask 1046534
          %v6374 = vsel %vm6373, %v6372, %v6371
          %v6375 = vrot.slane %v6311, 1
          %vm6376 = vcmask 1047559
          %v6377 = vsel %vm6376, %v6375, %v6374
          %v6378 = vrot.slane %v6313, 7
          %v6379 = vsel %vm6358, %v6378, %v6312
          %v6380 = vrot.slane %v6314, 6
          %v6381 = vsel %vm6361, %v6380, %v6379
          %v6382 = vrot.slane %v6315, 5
          %v6383 = vsel %vm6364, %v6382, %v6381
          %v6384 = vrot.slane %v6316, 4
          %v6385 = vsel %vm6367, %v6384, %v6383
          %v6386 = vrot.slane %v6317, 3
          %v6387 = vsel %vm6370, %v6386, %v6385
          %v6388 = vrot.slane %v6318, 2
          %v6389 = vsel %vm6373, %v6388, %v6387
          %v6390 = vrot.slane %v6319, 1
          %v6391 = vsel %vm6376, %v6390, %v6389
          %v6394 = vsel %vm471, %v6377, 0.0
          %6395 = vadd.xlane.f32.xlu0 %v6394
          %v6396 = vpop.xlane.xlu0 %6395
          %v6397 = vsel %vm471, %v6391, 0.0
          %6398 = vadd.xlane.f32.xlu0 %v6397
          %v6399 = vpop.xlane.xlu0 %6398
          %v6400 = vmul.f32 %v6396, %v526
          %v6401 = vmul.f32 %v6399, %v526
          %v6404 = vrot.slane %v6400, 1
          %v6405 = vrot.slane %v6400, 2
          %v6406 = vrot.slane %v6400, 3
          %v6407 = vrot.slane %v6400, 4
          %v6408 = vrot.slane %v6400, 5
          %v6409 = vrot.slane %v6400, 6
          %v6410 = vrot.slane %v6400, 7
          %v6411 = vrot.slane %v6401, 1
          %v6412 = vrot.slane %v6401, 2
          %v6413 = vrot.slane %v6401, 3
          %v6414 = vrot.slane %v6401, 4
          %v6415 = vrot.slane %v6401, 5
          %v6416 = vrot.slane %v6401, 6
          %v6417 = vrot.slane %v6401, 7
          %v6434 = vsub.f32 %v6304, %v6400
          %v6435 = vsub.f32 %v6305, %v6404
          %v6436 = vsub.f32 %v6306, %v6405
          %v6437 = vsub.f32 %v6307, %v6406
          %v6438 = vsub.f32 %v6308, %v6407
          %v6439 = vsub.f32 %v6309, %v6408
          %v6440 = vsub.f32 %v6310, %v6409
          %v6441 = vsub.f32 %v6311, %v6410
          %v6442 = vsub.f32 %v6312, %v6401
          %v6443 = vsub.f32 %v6313, %v6411
          %v6444 = vsub.f32 %v6314, %v6412
          %v6445 = vsub.f32 %v6315, %v6413
          %v6446 = vsub.f32 %v6316, %v6414
          %v6447 = vsub.f32 %v6317, %v6415
          %v6448 = vsub.f32 %v6318, %v6416
          %v6449 = vsub.f32 %v6319, %v6417
          %v6450 = vmul.f32 %v6434, %v6434
          %v6451 = vmul.f32 %v6435, %v6435
          %v6452 = vmul.f32 %v6436, %v6436
          %v6453 = vmul.f32 %v6437, %v6437
          %v6454 = vmul.f32 %v6438, %v6438
          %v6455 = vmul.f32 %v6439, %v6439
          %v6456 = vmul.f32 %v6440, %v6440
          %v6457 = vmul.f32 %v6441, %v6441
          %v6458 = vmul.f32 %v6442, %v6442
          %v6459 = vmul.f32 %v6443, %v6443
          %v6460 = vmul.f32 %v6444, %v6444
          %v6461 = vmul.f32 %v6445, %v6445
          %v6462 = vmul.f32 %v6446, %v6446
          %v6463 = vmul.f32 %v6447, %v6447
          %v6464 = vmul.f32 %v6448, %v6448
          %v6465 = vmul.f32 %v6449, %v6449
          %v6482 = vrot.slane %v6451, 7
          %v6483 = vsel %vm6358, %v6482, %v6450
          %v6484 = vrot.slane %v6452, 6
          %v6485 = vsel %vm6361, %v6484, %v6483
          %v6486 = vrot.slane %v6453, 5
          %v6487 = vsel %vm6364, %v6486, %v6485
          %v6488 = vrot.slane %v6454, 4
          %v6489 = vsel %vm6367, %v6488, %v6487
          %v6490 = vrot.slane %v6455, 3
          %v6491 = vsel %vm6370, %v6490, %v6489
          %v6492 = vrot.slane %v6456, 2
          %v6493 = vsel %vm6373, %v6492, %v6491
          %v6494 = vrot.slane %v6457, 1
          %v6495 = vsel %vm6376, %v6494, %v6493
          %v6496 = vrot.slane %v6459, 7
          %v6497 = vsel %vm6358, %v6496, %v6458
          %v6498 = vrot.slane %v6460, 6
          %v6499 = vsel %vm6361, %v6498, %v6497
          %v6500 = vrot.slane %v6461, 5
          %v6501 = vsel %vm6364, %v6500, %v6499
          %v6502 = vrot.slane %v6462, 4
          %v6503 = vsel %vm6367, %v6502, %v6501
          %v6504 = vrot.slane %v6463, 3
          %v6505 = vsel %vm6370, %v6504, %v6503
          %v6506 = vrot.slane %v6464, 2
          %v6507 = vsel %vm6373, %v6506, %v6505
          %v6508 = vrot.slane %v6465, 1
          %v6509 = vsel %vm6376, %v6508, %v6507
          %v6512 = vsel %vm471, %v6495, 0.0
          %6513 = vadd.xlane.f32.xlu0 %v6512
          %v6514 = vpop.xlane.xlu0 %6513
          %v6515 = vsel %vm471, %v6509, 0.0
          %6516 = vadd.xlane.f32.xlu0 %v6515
          %v6517 = vpop.xlane.xlu0 %6516
          %v6518 = vmul.f32 %v6514, %v526
          %v6519 = vmul.f32 %v6517, %v526
          %v6520 = vadd.f32 %v6518, 1e-05
          %v6521 = vadd.f32 %v6519, 1e-05
          %v6522 = vrsqrt.pop %v6520
          %v6523 = vmul.f32 %v6522, %v6520
          %v6524 = vmul.f32 %v6523, %v6522
          %v6525 = vmul.f32 0.5, %v6524
          %v6526 = vsub.f32 1.5, %v6525
          %v6527 = vmul.f32 %v6522, %v6526
          %vm6528 = vweird.f32 %v6520
          %vm6529 = vweird.f32 %v6522
          %vm6530 = vmor %vm6528, %vm6529
          %v6531 = vsel %vm6530, %v6522, %v6527
          %v6532 = vrsqrt.pop %v6521
          %v6533 = vmul.f32 %v6532, %v6521
          %v6534 = vmul.f32 %v6533, %v6532
          %v6535 = vmul.f32 0.5, %v6534
          %v6536 = vsub.f32 1.5, %v6535
          %v6537 = vmul.f32 %v6532, %v6536
          %vm6538 = vweird.f32 %v6521
          %vm6539 = vweird.f32 %v6532
          %vm6540 = vmor %vm6538, %vm6539
          %v6541 = vsel %vm6540, %v6532, %v6537
          %v6544 = vrot.slane %v6531, 1
          %v6545 = vrot.slane %v6531, 2
          %v6546 = vrot.slane %v6531, 3
          %v6547 = vrot.slane %v6531, 4
          %v6548 = vrot.slane %v6531, 5
          %v6549 = vrot.slane %v6531, 6
          %v6550 = vrot.slane %v6531, 7
          %v6551 = vrot.slane %v6541, 1
          %v6552 = vrot.slane %v6541, 2
          %v6553 = vrot.slane %v6541, 3
          %v6554 = vrot.slane %v6541, 4
          %v6555 = vrot.slane %v6541, 5
          %v6556 = vrot.slane %v6541, 6
          %v6557 = vrot.slane %v6541, 7
          %v6574 = vmul.f32 %v6434, %v6531
          %v6575 = vmul.f32 %v6435, %v6544
          %v6576 = vmul.f32 %v6436, %v6545
          %v6577 = vmul.f32 %v6437, %v6546
          %v6578 = vmul.f32 %v6438, %v6547
          %v6579 = vmul.f32 %v6439, %v6548
          %v6580 = vmul.f32 %v6440, %v6549
          %v6581 = vmul.f32 %v6441, %v6550
          %v6582 = vmul.f32 %v6442, %v6541
          %v6583 = vmul.f32 %v6443, %v6551
          %v6584 = vmul.f32 %v6444, %v6552
          %v6585 = vmul.f32 %v6445, %v6553
          %v6586 = vmul.f32 %v6446, %v6554
          %v6587 = vmul.f32 %v6447, %v6555
          %v6588 = vmul.f32 %v6448, %v6556
          %v6589 = vmul.f32 %v6449, %v6557
          %v6590 = vperm.slane %v6340, 0
          %v6591 = vmul.f32 %v6574, %v6590
          %v6592 = vmul.f32 %v6575, %v6590
          %v6593 = vmul.f32 %v6576, %v6590
          %v6594 = vmul.f32 %v6577, %v6590
          %v6595 = vmul.f32 %v6578, %v6590
          %v6596 = vmul.f32 %v6579, %v6590
          %v6597 = vmul.f32 %v6580, %v6590
          %v6598 = vmul.f32 %v6581, %v6590
          %v6599 = vmul.f32 %v6582, %v6590
          %v6600 = vmul.f32 %v6583, %v6590
          %v6601 = vmul.f32 %v6584, %v6590
          %v6602 = vmul.f32 %v6585, %v6590
          %v6603 = vmul.f32 %v6586, %v6590
          %v6604 = vmul.f32 %v6587, %v6590
          %v6605 = vmul.f32 %v6588, %v6590
          %v6606 = vmul.f32 %v6589, %v6590
          %v6607 = vperm.slane %v6340, 1
          %v6608 = vadd.f32 %v6591, %v6607
          %v6609 = vadd.f32 %v6592, %v6607
          %v6610 = vadd.f32 %v6593, %v6607
          %v6611 = vadd.f32 %v6594, %v6607
          %v6612 = vadd.f32 %v6595, %v6607
          %v6613 = vadd.f32 %v6596, %v6607
          %v6614 = vadd.f32 %v6597, %v6607
          %v6615 = vadd.f32 %v6598, %v6607
          %v6616 = vadd.f32 %v6599, %v6607
          %v6617 = vadd.f32 %v6600, %v6607
          %v6618 = vadd.f32 %v6601, %v6607
          %v6619 = vadd.f32 %v6602, %v6607
          %v6620 = vadd.f32 %v6603, %v6607
          %v6621 = vadd.f32 %v6604, %v6607
          %v6622 = vadd.f32 %v6605, %v6607
          %v6623 = vadd.f32 %v6606, %v6607
          %v6624 = vpack.c.bf16 %v6608, %v6608
          %v6625 = vpack.c.bf16 %v6609, %v6609
          %v6626 = vpack.c.bf16 %v6610, %v6610
          %v6627 = vpack.c.bf16 %v6611, %v6611
          %v6628 = vpack.c.bf16 %v6612, %v6612
          %v6629 = vpack.c.bf16 %v6613, %v6613
          %v6630 = vpack.c.bf16 %v6614, %v6614
          %v6631 = vpack.c.bf16 %v6615, %v6615
          %v6632 = vpack.c.bf16 %v6616, %v6616
          %v6633 = vpack.c.bf16 %v6617, %v6617
          %v6634 = vpack.c.bf16 %v6618, %v6618
          %v6635 = vpack.c.bf16 %v6619, %v6619
          %v6636 = vpack.c.bf16 %v6620, %v6620
          %v6637 = vpack.c.bf16 %v6621, %v6621
          %v6638 = vpack.c.bf16 %v6622, %v6622
          %v6639 = vpack.c.bf16 %v6623, %v6623
          %v6640 = vld [vmem:[%s7] sm:$0xf]
          %v6641 = vld [vmem:[%s7 + $0x4] sm:$0xf]
          %v6642 = vld [vmem:[%s7 + $0x8] sm:$0xf]
          %v6643 = vld [vmem:[%s7 + $0xc] sm:$0xf]
          %v6644 = vperm.slane %v6340, 2
          %v6661 = vunpack.c.l.b16 %v6624
          %v6662 = vunpack.c.l.b16 %v6625
          %v6663 = vunpack.c.l.b16 %v6626
          %v6664 = vunpack.c.l.b16 %v6627
          %v6665 = vunpack.c.l.b16 %v6628
          %v6666 = vunpack.c.l.b16 %v6629
          %v6667 = vunpack.c.l.b16 %v6630
          %v6668 = vunpack.c.l.b16 %v6631
          %v6669 = vunpack.c.l.b16 %v6632
          %v6670 = vunpack.c.l.b16 %v6633
          %v6671 = vunpack.c.l.b16 %v6634
          %v6672 = vunpack.c.l.b16 %v6635
          %v6673 = vunpack.c.l.b16 %v6636
          %v6674 = vunpack.c.l.b16 %v6637
          %v6675 = vunpack.c.l.b16 %v6638
          %v6676 = vunpack.c.l.b16 %v6639
          %v6677 = vrot.slane %v6662, 7
          %v6678 = vsel %vm6358, %v6677, %v6661
          %v6679 = vrot.slane %v6663, 6
          %v6680 = vsel %vm6361, %v6679, %v6678
          %v6681 = vrot.slane %v6664, 5
          %v6682 = vsel %vm6364, %v6681, %v6680
          %v6683 = vrot.slane %v6665, 4
          %v6684 = vsel %vm6367, %v6683, %v6682
          %v6685 = vrot.slane %v6666, 3
          %v6686 = vsel %vm6370, %v6685, %v6684
          %v6687 = vrot.slane %v6667, 2
          %v6688 = vsel %vm6373, %v6687, %v6686
          %v6689 = vrot.slane %v6668, 1
          %v6690 = vsel %vm6376, %v6689, %v6688
          %v6691 = vrot.slane %v6670, 7
          %v6692 = vsel %vm6358, %v6691, %v6669
          %v6693 = vrot.slane %v6671, 6
          %v6694 = vsel %vm6361, %v6693, %v6692
          %v6695 = vrot.slane %v6672, 5
          %v6696 = vsel %vm6364, %v6695, %v6694
          %v6697 = vrot.slane %v6673, 4
          %v6698 = vsel %vm6367, %v6697, %v6696
          %v6699 = vrot.slane %v6674, 3
          %v6700 = vsel %vm6370, %v6699, %v6698
          %v6701 = vrot.slane %v6675, 2
          %v6702 = vsel %vm6373, %v6701, %v6700
          %v6703 = vrot.slane %v6676, 1
          %v6704 = vsel %vm6376, %v6703, %v6702
          %v6705 = vpack.c.b16 %v6704, %v6690
          %v6710 = vunpack.c.l.b16 %v6640
          %v6711 = vunpack.c.l.b16 %v6641
          %v6712 = vunpack.c.l.b16 %v6642
          %v6713 = vunpack.c.l.b16 %v6643
          %v6714 = vpack.c.b16 %v6711, %v6710
          %v6715 = vpack.c.b16 %v6713, %v6712
          %v6719 = vsel %vm471, %v6705, 0
          %6721 = vmatpush.bf16.msra.mxu0 0
          %6722 = vmatpush.bf16.msra.mxu0 0
          %6723 = vmatpush.bf16.msra.mxu0 0
          %6724 = vmatpush.bf16.msra.mxu0 0
          %6725 = vmatpush.bf16.msra.mxu0 0
          %6726 = vmatpush.bf16.msra.mxu0 0
          %6727 = vmatpush.bf16.msra.mxu0 %v6715
          %6728 = vmatpush.bf16.msra.mxu0 %v6714
          %6729 = vmatmul.bf16.gmra.mxu0 %v6719
          %v6730 = vpop.f32.mrf.mxu0
          %v6731 = vadd.f32 %v6644, %v6730
          %v6732 = vpop.f32.mrf.mxu0
          %v6733 = vadd.f32 %v6644, %v6732
          %6734 = vdwg.mxu0
          %6735 = vst [vmem:[%s384] sm:$0xff] %v6731
          %6736 = vst [vmem:[%s384 + $0x8] sm:$0xff] %v6733
        $region60: #{tpu_custom_call.1} parent=51 // pred_fallthru
          _
        %s6737 = sand.u32 %s240, 1
        %s6738 = scalar_lea.sflag [#allocation4], %s6737
        %s6739 = sand.u32 %s240, 1
        %s6740 = smul.addr %s6739, 16
        %s6741 = scalar_lea.vmem [#allocation3], %s6740
        // Predicated region
        $region61: #{tpu_custom_call.1} parent=51 // pred_check
          %p6742 = pneg %p250
        $region62: #{tpu_custom_call.1} parent=51 // pred_check_branch
          %6744 = sbr.rel (%p6742) target = $region64
        $region63: #{tpu_custom_call.1} parent=51 // pred_region
          %s6745 = smul.u32 2, %s26
          %6747 = vsyncadd %s6738, 0
          %s6748 = smul.addr %s6745, 8
          %s6749 = scalar_lea.hbm %s8, %s6748
          %s6750 = sshll.u32 %s6741, 4
          %s6751 = int_to_ptr.vmem [resolvable:$true] %s6750
          %s6752 = sshll.u32 %s6749, 4
          %s6753 = int_to_ptr.hbm [resolvable:$true] %s6752
          %6758 = dma.vmem_to_hbm [thread:$0]  %s6751, 256, %s6753, %s6738, 128, 128, 8
        $region64: #{tpu_custom_call.1} parent=51 // pred_fallthru
          _
      $region52: #{tpu_custom_call.1} parent=5 // pred_fallthru
        _
      %p6759 = scmp.le.s32.totalorder 2, %s17
      // Predicated region
      $region65: #{tpu_custom_call.1} parent=5 // pred_check
        %p6760 = pneg %p6759
      $region66: #{tpu_custom_call.1} parent=5 // pred_check_branch
        %6762 = sbr.rel (%p6760) target = $region68
      $region67: #{tpu_custom_call.1} parent=5 // pred_region
        %s6763 = ssub.s32 %s17, 2
        // Predicated region
        $region69: #{tpu_custom_call.1} parent=67 // pred_check
          %p6764 = pneg %p256
        $region70: #{tpu_custom_call.1} parent=67 // pred_check_branch
          %6766 = sbr.rel (%p6764) target = $region72
        $region71: #{tpu_custom_call.1} parent=67 // pred_region
          %s6767 = sand.u32 %s241, 1
          %s6768 = scalar_lea.sflag [#allocation4], %s6767
          %s6769 = sand.u32 %s241, 1
          %s6770 = smul.addr %s6769, 16
          %s6771 = scalar_lea.vmem [#allocation3], %s6770
          %6773 = dma.done %s6768, 256
        $region72: #{tpu_custom_call.1} parent=67 // pred_fallthru
          _
      $region68: #{tpu_custom_call.1} parent=5 // pred_fallthru
        _
    $region6: #{tpu_custom_call.1} parent=1 // loop_footer
      %s21 = sadd.s32 1, %s17
    $region7: #{tpu_custom_call.1} parent=1 // loop_footer_branch
      %16 = sbr.rel target = $region3
    $region8: #{tpu_custom_call.1} parent=1 // loop_exit
      _
    %6774 = vsyncpa [#allocation4], 1
    %s6775 = scalar_lea.sflag [#allocation4], 1
    %6776 = vsyncpa %s6775, 1

</llo_original>
